<compile_context>
chip_gen: v7x
topology: tpu7x:2x2x1
jax: 0.10.0
libtpu: 0.0.40
codegen_flags: <defaults>
</compile_context>

<pallas_src>
import functools
import math

import jax
import jax.numpy as jnp
from jax.experimental import pallas as pl
from jax.experimental.pallas import tpu as pltpu

# ----------------------------- configuration --------------------------------
MASK_RATIO = 0.5
PATCH = 2          # patch_size
ENC_DIM = 48       # encoder_dim (!= dim -> enc_to_dec is a real Linear)
DIM = 32           # decoder dim
DEPTH = 2
HEADS = 2
DIM_HEAD = 16
MLP_RATIO = 2.0
MLP_DIM = int(DIM * MLP_RATIO)
GRID = 4           # grid_size -> L = 16 patches
WAVE_DIM = 128     # fixed in module __init__
NUM_LATENT = 128   # fixed in module __init__
WAVES_HEADS = 4    # nn.TransformerEncoderLayer nhead used by WavesTransformer
WAVES_FFN = 2048   # nn.TransformerEncoderLayer default dim_feedforward


# ----------------------------- in-kernel math helpers ------------------------
def _layernorm(v, g, b, eps=1e-5):
    mu = jnp.mean(v, axis=-1, keepdims=True)
    var = jnp.mean((v - mu) ** 2, axis=-1, keepdims=True)
    return (v - mu) * jax.lax.rsqrt(var + eps) * g + b


def _erf_f32(x):
    # Abramowitz & Stegun 7.1.26 rational approximation, |err| <= 1.5e-7.
    # Exact f32 divide kept (review: approx recip here would degrade accuracy).
    a1, a2, a3, a4, a5 = (0.254829592, -0.284496736, 1.421413741,
                          -1.453152027, 1.061405429)
    p = 0.3275911
    ax = jnp.abs(x)
    t = 1.0 / (1.0 + p * ax)
    poly = ((((a5 * t + a4) * t + a3) * t + a2) * t + a1) * t
    y = 1.0 - poly * jnp.exp(-ax * ax)
    return jnp.where(x < 0.0, -y, y)


def _gelu_exact(x):
    # Exact-erf GELU matching torch.nn.GELU()/F.gelu default.
    return 0.5 * x * (1.0 + _erf_f32(x * 0.7071067811865476))


def _mha(q, k, v, heads, dim_head, scale):
    """Head-batched attention.  q:(Nq,H*dh)  k,v:(Nk,H*dh)  f32 -> (Nq,H*dh) f32.

    Heads are stacked along a leading batch axis (cheap leading-dim concat of
    lane slices) so the score/PV matmuls and the softmax run once for all
    heads (no per-head duplicated max/exp/reciprocal, no per-head relayouts).
    Matmul operands are bf16; accumulation and softmax stay in f32.
    """
    def stack_heads(a):
        return jnp.stack(
            [a[:, h * dim_head:(h + 1) * dim_head] for h in range(heads)], axis=0)

    qh = stack_heads(q).astype(jnp.bfloat16)
    kh = stack_heads(k).astype(jnp.bfloat16)
    vh = stack_heads(v).astype(jnp.bfloat16)
    s = jnp.einsum("hnd,hmd->hnm", qh, kh,
                   preferred_element_type=jnp.float32) * scale
    s = s - jnp.max(s, axis=-1, keepdims=True)
    p = jnp.exp(s)
    # Exact reciprocal (tiny (H,Nq,1) array) to keep softmax faithful.
    p = p * pl.reciprocal(jnp.sum(p, axis=-1, keepdims=True), approx=False)
    ctx = jnp.einsum("hnm,hmd->hnd", p.astype(jnp.bfloat16), vh,
                     preferred_element_type=jnp.float32)
    return jnp.concatenate([ctx[h] for h in range(heads)], axis=-1)


# ----------------------------- Pallas kernel 1 -------------------------------
def _decoder_transformer_kernel(x_ref, attn_w_ref, w1_ref, b1_ref, w2_ref,
                                vec_ref, lnf_ref, o_ref, *,
                                depth, heads, dim_head):
    """Fused Clay Transformer for ONE batch element (grid axis = batch):
    depth x (prenorm attn + prenorm MLP) + final LayerNorm.

      attn_w_ref : (depth, D, 4D) bf16 = [Wq|Wk|Wv|Wo] packed along lanes
                   (head-major columns inside each D-wide block).
      vec_ref    : (depth, 8, D) f32   = [ln1_g, ln1_b, ln2_g, ln2_b, mlp_b2, pad..]
      lnf_ref    : (2, D) f32          = [lnf_g, lnf_b]
    """
    dim = heads * dim_head
    scale = dim_head ** -0.5
    x = x_ref[0]                                     # (N, D) f32
    for l in range(depth):
        vec = vec_ref[l]                             # (8, D)
        wl = attn_w_ref[l]                           # (D, 4D) bf16
        # ---- pre-norm attention: ONE fused projection matmul per layer ----
        h = _layernorm(x, vec[0:1], vec[1:2])
        qkv = jnp.dot(h.astype(jnp.bfloat16), wl,
                      preferred_element_type=jnp.float32)   # (N,4D); last D cols unused
        q = qkv[:, 0:dim]
        k = qkv[:, dim:2 * dim]
        v = qkv[:, 2 * dim:3 * dim]
        ctx = _mha(q, k, v, heads, dim_head, scale)          # (N, D)
        x = x + jnp.dot(ctx.astype(jnp.bfloat16), wl[:, 3 * dim:4 * dim],
                        preferred_element_type=jnp.float32)
        # ---- pre-norm MLP ----
        h2 = _layernorm(x, vec[2:3], vec[3:4])
        hid = jnp.dot(h2.astype(jnp.bfloat16), w1_ref[l],
                      preferred_element_type=jnp.float32) + b1_ref[l]
        hid = _gelu_exact(hid)
        x = x + jnp.dot(hid.astype(jnp.bfloat16), w2_ref[l],
                        preferred_element_type=jnp.float32) + vec[4:5]
    lnf = lnf_ref[...]
    o_ref[0] = _layernorm(x, lnf[0:1], lnf[1:2])


def decoder_transformer(x, p):
    """x: (B, N, D) -> (B, N, D), one fused Pallas kernel, grid=(B,) 'parallel'."""
    B, N, D = x.shape
    depth = p["attn_w"].shape[0]
    dim_head = D // HEADS
    kernel = functools.partial(_decoder_transformer_kernel,
                               depth=depth, heads=HEADS, dim_head=dim_head)
    flops = B * depth * (2 * N * D * 4 * D        # fused qkv(+junk Wo) projection
                         + 4 * N * N * D          # scores + P.V over heads
                         + 2 * N * D * D          # out projection
                         + 4 * N * D * MLP_DIM)   # MLP
    trans = B * depth * (N * MLP_DIM + 2 * HEADS * N * N)
    bytes_acc = (2 * B * N * D * 4
                 + depth * (D * 4 * D + D * MLP_DIM + MLP_DIM * D) * 2
                 + depth * (MLP_DIM + 8 * D) * 4 + 2 * D * 4)
    out = pl.pallas_call(
        kernel,
        grid=(B,),
        in_specs=[
            pl.BlockSpec((1, N, D), lambda b: (b, 0, 0)),
            pl.BlockSpec((depth, D, 4 * D), lambda b: (0, 0, 0)),
            pl.BlockSpec((depth, D, MLP_DIM), lambda b: (0, 0, 0)),
            pl.BlockSpec((depth, 1, MLP_DIM), lambda b: (0, 0, 0)),
            pl.BlockSpec((depth, MLP_DIM, D), lambda b: (0, 0, 0)),
            pl.BlockSpec((depth, 8, D), lambda b: (0, 0, 0)),
            pl.BlockSpec((2, D), lambda b: (0, 0)),
        ],
        out_specs=pl.BlockSpec((1, N, D), lambda b: (b, 0, 0)),
        out_shape=jax.ShapeDtypeStruct((B, N, D), jnp.float32),
        compiler_params=pltpu.CompilerParams(dimension_semantics=("parallel",)),
        cost_estimate=pl.CostEstimate(flops=int(flops), transcendentals=int(trans),
                                      bytes_accessed=int(bytes_acc)),
    )(x.astype(jnp.float32), p["attn_w"], p["w1"], p["b1"], p["w2"],
      p["vecs"], p["lnf"])
    return out


# ----------------------------- Pallas kernel 2 -------------------------------
def _waves_encoder_kernel(x_ref, wq_ref, wkv_ref, bkv_ref, wo_ref, w1_ref,
                          b1_ref, w2_ref, fcw_ref, vec_ref, o_ref, *,
                          nheads, num_latent, n_waves):
    """nn.TransformerEncoderLayer (post-norm, gelu, dropout=0) + fc_weight epilogue.

    Only the K/V projection sees all S = num_latent + n_waves + 1 rows; Q,
    attention output, both LayerNorms, the 128->2048->128 FFN, the GELU and
    the fc_weight epilogue run only on the n_waves output rows (post-norm =>
    q/k/v come from raw x, per-row ops are independent -> identical results).

      vec_ref : (8, 128) f32 = [ln1_g, ln1_b, ln2_g, ln2_b, attn_out_b,
                                ffn_b2, fc_b, q_bias]
    """
    S, E = x_ref.shape
    hd = E // nheads
    scale = hd ** -0.5
    vec = vec_ref[...]
    x = x_ref[...]                                      # (S, E) f32
    xw = x[num_latent:num_latent + n_waves]             # (n, E) wave-token rows
    # ---- K/V over all rows (bf16 operands, f32 accumulation) ----
    kv = jnp.dot(x.astype(jnp.bfloat16), wkv_ref[...],
                 preferred_element_type=jnp.float32) + bkv_ref[...]   # (S, 2E)
    k = kv[:, 0:E]
    v = kv[:, E:2 * E]
    # ---- Q / attention / Wo only for the n_waves output rows ----
    q = jnp.dot(xw.astype(jnp.bfloat16), wq_ref[...],
                preferred_element_type=jnp.float32) + vec[7:8]        # (n, E)
    ctx = _mha(q, k, v, nheads, hd, scale)                            # (n, E)
    sa = jnp.dot(ctx.astype(jnp.bfloat16), wo_ref[...],
                 preferred_element_type=jnp.float32) + vec[4:5]
    y = _layernorm(xw + sa, vec[0:1], vec[1:2])                       # post-norm 1
    # ---- FFN (now only n rows instead of 132) ----
    hid = jnp.dot(y.astype(jnp.bfloat16), w1_ref[...],
                  preferred_element_type=jnp.float32) + b1_ref[...]   # (n, FFN)
    hid = _gelu_exact(hid)
    ff = jnp.dot(hid.astype(jnp.bfloat16), w2_ref[...],
                 preferred_element_type=jnp.float32) + vec[5:6]
    y = _layernorm(y + ff, vec[2:3], vec[3:4])                        # post-norm 2
    # ---- fc_weight(out[L:-1] + x[L:-1]); is_decoder=True => no dynamic bias ----
    o_ref[...] = jnp.dot(y + xw, fcw_ref[...],
                         preferred_element_type=jnp.float32) + vec[6:7]


def waves_transformer(wave_feat, p, patch_size, embed_dim):
    """WavesTransformer (is_decoder=True): returns dynamic weight (C*P*P, D)."""
    num_latent = p["weight_tokens"].shape[0]
    n_waves = wave_feat.shape[0]
    E = WAVE_DIM
    x = jnp.concatenate([p["weight_tokens"], wave_feat, p["bias_token"]],
                        axis=0).astype(jnp.float32)
    S = x.shape[0]
    out_dim = patch_size * patch_size * embed_dim            # == 128 here
    kernel = functools.partial(_waves_encoder_kernel, nheads=WAVES_HEADS,
                               num_latent=num_latent, n_waves=n_waves)
    flops = (4 * S * E * E                        # K/V projection (all rows)
             + 2 * n_waves * E * E                # Q projection
             + 4 * n_waves * S * E                # scores + P.V over heads
             + 2 * n_waves * E * E                # Wo
             + 4 * n_waves * E * WAVES_FFN        # FFN
             + 2 * n_waves * E * out_dim)         # fc_weight epilogue
    trans = n_waves * WAVES_FFN + WAVES_HEADS * n_waves * S
    bytes_acc = (S * E * 4 + (E * E + 2 * E * E + E * E) * 2
                 + 2 * (E * WAVES_FFN + WAVES_FFN * E)
                 + E * out_dim * 4 + (2 * E + WAVES_FFN + 8 * E) * 4
                 + n_waves * out_dim * 4)
    weights = pl.pallas_call(
        kernel,
        out_shape=jax.ShapeDtypeStruct((n_waves, out_dim), jnp.float32),
        cost_estimate=pl.CostEstimate(flops=int(flops), transcendentals=int(trans),
                                      bytes_accessed=int(bytes_acc)),
    )(x, p["wq"], p["wkv"], p["bkv"], p["wo"], p["w1"], p["b1"], p["w2"],
      p["fc_weight_w"], p["vecs"])
    # rearrange "cin (k1 k2 cout) -> (cin k1 k2) cout"
    dyn_w = weights.reshape(n_waves, patch_size, patch_size, embed_dim)
    return dyn_w.reshape(n_waves * patch_size * patch_size, embed_dim)


# ----------------------------- plain-JAX glue --------------------------------
def posemb_sincos_2d_with_gsd(h, w, dim, gsd, temperature=10000.0):
    y, x = jnp.meshgrid(jnp.arange(h, dtype=jnp.float32),
                        jnp.arange(w, dtype=jnp.float32), indexing="ij")
    assert dim % 4 == 0
    omega = jnp.arange(dim // 4, dtype=jnp.float32) / (dim // 4 - 1)
    omega = 1.0 / (temperature ** (2 * omega / dim)) * (gsd / 1.0)
    y = y.reshape(-1)[:, None] * omega[None, :]
    x = x.reshape(-1)[:, None] * omega[None, :]
    return jnp.concatenate(
        [jnp.sin(x), jnp.cos(x), jnp.sin(y), jnp.cos(y)], axis=1)


def posemb_sincos_1d(pos, dim, temperature=10000.0):
    assert dim % 2 == 0
    omega = jnp.arange(dim // 2, dtype=jnp.float32) / (dim // 2 - 1)
    omega = 1.0 / (temperature ** omega)
    scaled = pos[:, None] * omega[None, :]
    return jnp.concatenate([jnp.sin(scaled), jnp.cos(scaled)], axis=1)


def fcblock(x, p):
    # FCBlock: x + gelu(l2(gelu(l1(x)))) -- tiny (3,128)@(128,128); left to XLA.
    y = jax.nn.gelu(x @ p["l1_w"] + p["l1_b"], approximate=False)
    y = jax.nn.gelu(y @ p["l2_w"] + p["l2_b"], approximate=False)
    return x + y


# ----------------------------- full forward ----------------------------------
def clay_decoder_forward(params, encoded_unmasked_patches, unmasked_indices,
                         masked_indices, masked_matrix, time, latlon, gsd, waves):
    B, L = masked_matrix.shape
    grid_size = int(math.sqrt(L))
    num_patches = grid_size ** 2
    dim = DIM

    # enc_to_dec (Linear since encoder_dim != dim) -- tiny, plain jnp, XLA fuses.
    x = encoded_unmasked_patches @ params["enc_to_dec_w"] + params["enc_to_dec_b"]

    # _reconstruct_and_add_encoding (data-dependent gather/scatter stays in JAX)
    cls_tokens, unmasked = x[:, :1, :], x[:, 1:, :]
    pos = posemb_sincos_2d_with_gsd(grid_size, grid_size, dim - 8, gsd)  # (L, dim-8)
    time_latlon = jnp.concatenate([time, latlon], axis=-1)               # (B, 8)
    pme = jnp.concatenate(
        [jnp.broadcast_to(pos[None], (B, L, dim - 8)),
         jnp.broadcast_to(time_latlon[:, None, :], (B, L, 8))], axis=-1)  # (B, L, dim)
    batch_idx = jnp.arange(B)[:, None]
    masked_patches = params["mask_patch"][None, None, :] + pme[batch_idx, masked_indices]
    unmasked = unmasked + pme[batch_idx, unmasked_indices]
    dec = jnp.zeros((B, num_patches, dim), jnp.float32)
    dec = dec.at[batch_idx, unmasked_indices].set(unmasked)
    dec = dec.at[batch_idx, masked_indices].set(masked_patches)
    dec = jnp.concatenate([cls_tokens, dec], axis=1)                     # (B, L+1, D)

    # Fused Pallas decoder Transformer, grid=(B,) "parallel" (both v7x cores).
    decoded = decoder_transformer(dec, params["transformer"])

    # DynamicEmbedding (is_decoder=True): hyper-network -> dynamic linear.
    wave_pe = posemb_sincos_1d(waves, WAVE_DIM)
    wave_feat = fcblock(wave_pe, params["fclayer"])
    dyn_w = waves_transformer(wave_feat, params["waves_tr"], PATCH, dim)  # (C*P*P, D)
    pixels = decoded.reshape(-1, dim) @ (0.02 * dyn_w).T                  # F.linear, no bias
    pixels = pixels.reshape(B, num_patches + 1, -1)[:, 1:, :]
    return pixels, wave_feat


# ----------------------------- parameters ------------------------------------
def init_params(key):
    keys = iter(jax.random.split(key, 32))
    bf = jnp.bfloat16

    def nrm(shape, s=0.02, dtype=jnp.float32):
        return (jax.random.normal(next(keys), shape, jnp.float32) * s).astype(dtype)

    # Packed per-layer vectors for the decoder transformer (one (8, D) slab):
    #   rows = [ln1_g, ln1_b, ln2_g, ln2_b, mlp_b2, pad, pad, pad]
    vecs = jnp.zeros((DEPTH, 8, DIM), jnp.float32)
    vecs = vecs.at[:, 0].set(1.0).at[:, 2].set(1.0)
    lnf = jnp.stack([jnp.ones((DIM,), jnp.float32),
                     jnp.zeros((DIM,), jnp.float32)], axis=0)            # (2, D)

    # Packed width-128 vectors for the waves encoder layer:
    #   rows = [ln1_g, ln1_b, ln2_g, ln2_b, attn_out_b, ffn_b2, fc_b, q_bias]
    waves_vecs = jnp.zeros((8, WAVE_DIM), jnp.float32)
    waves_vecs = waves_vecs.at[0].set(1.0).at[2].set(1.0)

    p = {
        "enc_to_dec_w": nrm((ENC_DIM, DIM)),
        "enc_to_dec_b": jnp.zeros((DIM,), jnp.float32),
        "mask_patch": nrm((DIM,), 1.0),                      # torch.randn(dim)
        "transformer": {
            # attn_w[l] = [Wq | Wk | Wv | Wo] packed along lanes; Q/K/V columns
            # are head-major (head h -> cols h*DIM_HEAD:(h+1)*DIM_HEAD),
            # matching to_qkv chunking.  Stored bf16 (MXU operands).
            "attn_w": nrm((DEPTH, DIM, 4 * DIM), dtype=bf),
            "w1": nrm((DEPTH, DIM, MLP_DIM), dtype=bf),
            "b1": jnp.zeros((DEPTH, 1, MLP_DIM), jnp.float32),
            "w2": nrm((DEPTH, MLP_DIM, DIM), dtype=bf),
            "vecs": vecs,
            "lnf": lnf,
        },
        "fclayer": {
            "l1_w": nrm((WAVE_DIM, WAVE_DIM)), "l1_b": jnp.zeros((WAVE_DIM,), jnp.float32),
            "l2_w": nrm((WAVE_DIM, WAVE_DIM)), "l2_b": jnp.zeros((WAVE_DIM,), jnp.float32),
        },
        "waves_tr": {
            "weight_tokens": nrm((NUM_LATENT, WAVE_DIM)),
            "bias_token": nrm((1, WAVE_DIM)),
            # MHA in-proj split into Q and KV so the kernel can restrict Q to
            # the n_waves output rows while K/V see all rows.  Stored bf16.
            "wq": nrm((WAVE_DIM, WAVE_DIM), dtype=bf),
            "wkv": nrm((WAVE_DIM, 2 * WAVE_DIM), dtype=bf),
            "bkv": jnp.zeros((1, 2 * WAVE_DIM), jnp.float32),
            "wo": nrm((WAVE_DIM, WAVE_DIM), dtype=bf),
            "w1": nrm((WAVE_DIM, WAVES_FFN), dtype=bf),
            "b1": jnp.zeros((1, WAVES_FFN), jnp.float32),
            "w2": nrm((WAVES_FFN, WAVE_DIM), dtype=bf),
            "fc_weight_w": nrm((WAVE_DIM, PATCH * PATCH * DIM)),  # f32 epilogue
            "vecs": waves_vecs,
        },
    }
    return p


# ----------------------------- main -------------------------------------------
if __name__ == "__main__":
    key = jax.random.PRNGKey(0)
    kp, kx, kperm, kt, kl = jax.random.split(key, 5)
    params = init_params(kp)

    B = 2
    L = GRID * GRID                       # 16 patches
    num_masked = int(MASK_RATIO * L)      # 8
    num_unmasked = L - num_masked         # 8

    encoded = jax.random.normal(kx, (B, 1 + num_unmasked, ENC_DIM), jnp.float32)
    perms = jnp.stack(
        [jax.random.permutation(jax.random.fold_in(kperm, b), L) for b in range(B)])
    unmasked_indices = perms[:, :num_unmasked].astype(jnp.int32)
    masked_indices = perms[:, num_unmasked:].astype(jnp.int32)
    masked_matrix = jnp.zeros((B, L), jnp.float32)  # used for shape only (as in reference)
    time = jax.random.normal(kt, (B, 4), jnp.float32)
    latlon = jax.random.normal(kl, (B, 4), jnp.float32)
    gsd = jnp.float32(10.0)
    waves = jnp.array([0.665, 0.56, 0.49], jnp.float32)  # 3 bands

    fwd = jax.jit(clay_decoder_forward)
    pixels, wave_feat = fwd(params, encoded, unmasked_indices, masked_indices,
                            masked_matrix, time, latlon, gsd, waves)
    jax.block_until_ready((pixels, wave_feat))

    assert pixels.shape == (B, L, waves.shape[0] * PATCH * PATCH), pixels.shape
    assert wave_feat.shape == (waves.shape[0], WAVE_DIM), wave_feat.shape
    print("KERNEL_OK")
</pallas_src>

<mosaic_0001>
module attributes {stable_mosaic.version = 11 : i64} {
  func.func @_waves_encoder_kernel(%arg0: memref<132x128xf32, #tpu.memory_space<vmem>>, %arg1: memref<128x128xbf16, #tpu.memory_space<vmem>>, %arg2: memref<128x256xbf16, #tpu.memory_space<vmem>>, %arg3: memref<1x256xf32, #tpu.memory_space<vmem>>, %arg4: memref<128x128xbf16, #tpu.memory_space<vmem>>, %arg5: memref<128x2048xbf16, #tpu.memory_space<vmem>>, %arg6: memref<1x2048xf32, #tpu.memory_space<vmem>>, %arg7: memref<2048x128xbf16, #tpu.memory_space<vmem>>, %arg8: memref<128x128xf32, #tpu.memory_space<vmem>>, %arg9: memref<8x128xf32, #tpu.memory_space<vmem>>, %arg10: memref<3x128xf32, #tpu.memory_space<vmem>>) attributes {dimension_semantics = [], scalar_prefetch = 0 : i64, scratch_operands = 0 : i64, tpu.core_type = #tpu.core_type<tc>} {
    %c0 = arith.constant 0 : index
    %c0_0 = arith.constant 0 : index
    %0 = vector.load %arg9[%c0, %c0_0] : memref<8x128xf32, #tpu.memory_space<vmem>>, vector<8x128xf32>
    %c0_1 = arith.constant 0 : index
    %c0_2 = arith.constant 0 : index
    %1 = vector.load %arg0[%c0_1, %c0_2] : memref<132x128xf32, #tpu.memory_space<vmem>>, vector<132x128xf32>
    %2 = vector.extract_strided_slice %1 {offsets = [128, 0], sizes = [3, 128], strides = [1, 1]} : vector<132x128xf32> to vector<3x128xf32>
    %3 = arith.truncf %1 : vector<132x128xf32> to vector<132x128xbf16>
    %c0_3 = arith.constant 0 : index
    %c0_4 = arith.constant 0 : index
    %4 = vector.load %arg2[%c0_3, %c0_4] : memref<128x256xbf16, #tpu.memory_space<vmem>>, vector<128x256xbf16>
    %cst = arith.constant dense<0.000000e+00> : vector<132x256xf32>
    %5 = tpu.matmul %3, %4, %cst {dimension_numbers = #tpu.dot_dimension_numbers<[1], [0], [0], [1], [0, 0, 1, 1], [], []>} : vector<132x128xbf16>, vector<128x256xbf16>, vector<132x256xf32> -> vector<132x256xf32>
    %c0_5 = arith.constant 0 : index
    %c0_6 = arith.constant 0 : index
    %6 = vector.load %arg3[%c0_5, %c0_6] : memref<1x256xf32, #tpu.memory_space<vmem>>, vector<1x256xf32>
    %7 = vector.broadcast %6 : vector<1x256xf32> to vector<132x256xf32>
    %8 = arith.addf %5, %7 : vector<132x256xf32>
    %9 = vector.extract_strided_slice %8 {offsets = [0, 0], sizes = [132, 128], strides = [1, 1]} : vector<132x256xf32> to vector<132x128xf32>
    %10 = vector.extract_strided_slice %8 {offsets = [0, 128], sizes = [132, 128], strides = [1, 1]} : vector<132x256xf32> to vector<132x128xf32>
    %11 = arith.truncf %2 : vector<3x128xf32> to vector<3x128xbf16>
    %c0_7 = arith.constant 0 : index
    %c0_8 = arith.constant 0 : index
    %12 = vector.load %arg1[%c0_7, %c0_8] : memref<128x128xbf16, #tpu.memory_space<vmem>>, vector<128x128xbf16>
    %cst_9 = arith.constant dense<0.000000e+00> : vector<3x128xf32>
    %13 = tpu.matmul %11, %12, %cst_9 {dimension_numbers = #tpu.dot_dimension_numbers<[1], [0], [0], [1], [0, 0, 1, 1], [], []>} : vector<3x128xbf16>, vector<128x128xbf16>, vector<3x128xf32> -> vector<3x128xf32>
    %14 = vector.extract_strided_slice %0 {offsets = [7, 0], sizes = [1, 128], strides = [1, 1]} : vector<8x128xf32> to vector<1x128xf32>
    %15 = vector.broadcast %14 : vector<1x128xf32> to vector<3x128xf32>
    %16 = arith.addf %13, %15 : vector<3x128xf32>
    %17 = vector.extract_strided_slice %16 {offsets = [0, 0], sizes = [3, 32], strides = [1, 1]} : vector<3x128xf32> to vector<3x32xf32>
    %18 = vector.extract_strided_slice %16 {offsets = [0, 32], sizes = [3, 32], strides = [1, 1]} : vector<3x128xf32> to vector<3x32xf32>
    %19 = vector.extract_strided_slice %16 {offsets = [0, 64], sizes = [3, 32], strides = [1, 1]} : vector<3x128xf32> to vector<3x32xf32>
    %20 = vector.extract_strided_slice %16 {offsets = [0, 96], sizes = [3, 32], strides = [1, 1]} : vector<3x128xf32> to vector<3x32xf32>
    %21 = vector.shape_cast %17 : vector<3x32xf32> to vector<1x3x32xf32>
    %22 = vector.shape_cast %18 : vector<3x32xf32> to vector<1x3x32xf32>
    %23 = vector.shape_cast %19 : vector<3x32xf32> to vector<1x3x32xf32>
    %24 = vector.shape_cast %20 : vector<3x32xf32> to vector<1x3x32xf32>
    %25 = tpu.concatenate %21, %22, %23, %24 in 0 : vector<1x3x32xf32>, vector<1x3x32xf32>, vector<1x3x32xf32>, vector<1x3x32xf32> -> vector<4x3x32xf32>
    %26 = arith.truncf %25 : vector<4x3x32xf32> to vector<4x3x32xbf16>
    %27 = vector.extract_strided_slice %9 {offsets = [0, 0], sizes = [132, 32], strides = [1, 1]} : vector<132x128xf32> to vector<132x32xf32>
    %28 = vector.extract_strided_slice %9 {offsets = [0, 32], sizes = [132, 32], strides = [1, 1]} : vector<132x128xf32> to vector<132x32xf32>
    %29 = vector.extract_strided_slice %9 {offsets = [0, 64], sizes = [132, 32], strides = [1, 1]} : vector<132x128xf32> to vector<132x32xf32>
    %30 = vector.extract_strided_slice %9 {offsets = [0, 96], sizes = [132, 32], strides = [1, 1]} : vector<132x128xf32> to vector<132x32xf32>
    %31 = vector.shape_cast %27 : vector<132x32xf32> to vector<1x132x32xf32>
    %32 = vector.shape_cast %28 : vector<132x32xf32> to vector<1x132x32xf32>
    %33 = vector.shape_cast %29 : vector<132x32xf32> to vector<1x132x32xf32>
    %34 = vector.shape_cast %30 : vector<132x32xf32> to vector<1x132x32xf32>
    %35 = tpu.concatenate %31, %32, %33, %34 in 0 : vector<1x132x32xf32>, vector<1x132x32xf32>, vector<1x132x32xf32>, vector<1x132x32xf32> -> vector<4x132x32xf32>
    %36 = arith.truncf %35 : vector<4x132x32xf32> to vector<4x132x32xbf16>
    %37 = vector.extract_strided_slice %10 {offsets = [0, 0], sizes = [132, 32], strides = [1, 1]} : vector<132x128xf32> to vector<132x32xf32>
    %38 = vector.extract_strided_slice %10 {offsets = [0, 32], sizes = [132, 32], strides = [1, 1]} : vector<132x128xf32> to vector<132x32xf32>
    %39 = vector.extract_strided_slice %10 {offsets = [0, 64], sizes = [132, 32], strides = [1, 1]} : vector<132x128xf32> to vector<132x32xf32>
    %40 = vector.extract_strided_slice %10 {offsets = [0, 96], sizes = [132, 32], strides = [1, 1]} : vector<132x128xf32> to vector<132x32xf32>
    %41 = vector.shape_cast %37 : vector<132x32xf32> to vector<1x132x32xf32>
    %42 = vector.shape_cast %38 : vector<132x32xf32> to vector<1x132x32xf32>
    %43 = vector.shape_cast %39 : vector<132x32xf32> to vector<1x132x32xf32>
    %44 = vector.shape_cast %40 : vector<132x32xf32> to vector<1x132x32xf32>
    %45 = tpu.concatenate %41, %42, %43, %44 in 0 : vector<1x132x32xf32>, vector<1x132x32xf32>, vector<1x132x32xf32>, vector<1x132x32xf32> -> vector<4x132x32xf32>
    %46 = arith.truncf %45 : vector<4x132x32xf32> to vector<4x132x32xbf16>
    "tpu.trace_start"() <{level = 10 : i32, message = "hnd,hmd->hnm"}> : () -> ()
    %cst_10 = arith.constant dense<0.000000e+00> : vector<4x3x132xf32>
    %47 = tpu.matmul %26, %36, %cst_10 {dimension_numbers = #tpu.dot_dimension_numbers<[2], [2], [1], [1], [0, 0, 0, 1, 1, 1], [0], [0]>} : vector<4x3x32xbf16>, vector<4x132x32xbf16>, vector<4x3x132xf32> -> vector<4x3x132xf32>
    "tpu.trace_stop"() : () -> ()
    %cst_11 = arith.constant 0.176776692 : f32
    %48 = vector.broadcast %cst_11 : f32 to vector<4x3x132xf32>
    %49 = arith.mulf %47, %48 : vector<4x3x132xf32>
    %cst_12 = arith.constant dense<0xFF800000> : vector<4x3xf32>
    %50 = vector.multi_reduction <maximumf>, %49, %cst_12 [2] : vector<4x3x132xf32> to vector<4x3xf32>
    %51 = vector.shape_cast %50 : vector<4x3xf32> to vector<4x3x1xf32>
    %52 = vector.broadcast %51 : vector<4x3x1xf32> to vector<4x3x132xf32>
    %53 = arith.subf %49, %52 : vector<4x3x132xf32>
    %54 = math.exp %53 : vector<4x3x132xf32>
    %cst_13 = arith.constant dense<0.000000e+00> : vector<4x3xf32>
    %55 = vector.multi_reduction <add>, %54, %cst_13 [2] : vector<4x3x132xf32> to vector<4x3xf32>
    %56 = vector.shape_cast %55 : vector<4x3xf32> to vector<4x3x1xf32>
    %57 = tpu.reciprocal %56 : vector<4x3x1xf32> -> vector<4x3x1xf32>
    %58 = vector.broadcast %57 : vector<4x3x1xf32> to vector<4x3x132xf32>
    %59 = arith.mulf %54, %58 : vector<4x3x132xf32>
    %60 = arith.truncf %59 : vector<4x3x132xf32> to vector<4x3x132xbf16>
    "tpu.trace_start"() <{level = 10 : i32, message = "hnm,hmd->hnd"}> : () -> ()
    %cst_14 = arith.constant dense<0.000000e+00> : vector<4x3x32xf32>
    %61 = tpu.matmul %60, %46, %cst_14 {dimension_numbers = #tpu.dot_dimension_numbers<[2], [1], [1], [2], [0, 0, 0, 1, 1, 2], [0], [0]>} : vector<4x3x132xbf16>, vector<4x132x32xbf16>, vector<4x3x32xf32> -> vector<4x3x32xf32>
    "tpu.trace_stop"() : () -> ()
    %62 = vector.extract_strided_slice %61 {offsets = [0, 0, 0], sizes = [1, 3, 32], strides = [1, 1, 1]} : vector<4x3x32xf32> to vector<1x3x32xf32>
    %63 = vector.shape_cast %62 : vector<1x3x32xf32> to vector<3x32xf32>
    %64 = vector.extract_strided_slice %61 {offsets = [1, 0, 0], sizes = [1, 3, 32], strides = [1, 1, 1]} : vector<4x3x32xf32> to vector<1x3x32xf32>
    %65 = vector.shape_cast %64 : vector<1x3x32xf32> to vector<3x32xf32>
    %66 = vector.extract_strided_slice %61 {offsets = [2, 0, 0], sizes = [1, 3, 32], strides = [1, 1, 1]} : vector<4x3x32xf32> to vector<1x3x32xf32>
    %67 = vector.shape_cast %66 : vector<1x3x32xf32> to vector<3x32xf32>
    %68 = vector.extract_strided_slice %61 {offsets = [3, 0, 0], sizes = [1, 3, 32], strides = [1, 1, 1]} : vector<4x3x32xf32> to vector<1x3x32xf32>
    %69 = vector.shape_cast %68 : vector<1x3x32xf32> to vector<3x32xf32>
    %70 = tpu.concatenate %63, %65, %67, %69 in 1 : vector<3x32xf32>, vector<3x32xf32>, vector<3x32xf32>, vector<3x32xf32> -> vector<3x128xf32>
    %71 = arith.truncf %70 : vector<3x128xf32> to vector<3x128xbf16>
    %c0_15 = arith.constant 0 : index
    %c0_16 = arith.constant 0 : index
    %72 = vector.load %arg4[%c0_15, %c0_16] : memref<128x128xbf16, #tpu.memory_space<vmem>>, vector<128x128xbf16>
    %cst_17 = arith.constant dense<0.000000e+00> : vector<3x128xf32>
    %73 = tpu.matmul %71, %72, %cst_17 {dimension_numbers = #tpu.dot_dimension_numbers<[1], [0], [0], [1], [0, 0, 1, 1], [], []>} : vector<3x128xbf16>, vector<128x128xbf16>, vector<3x128xf32> -> vector<3x128xf32>
    %74 = vector.extract_strided_slice %0 {offsets = [4, 0], sizes = [1, 128], strides = [1, 1]} : vector<8x128xf32> to vector<1x128xf32>
    %75 = vector.broadcast %74 : vector<1x128xf32> to vector<3x128xf32>
    %76 = arith.addf %73, %75 : vector<3x128xf32>
    %77 = arith.addf %2, %76 : vector<3x128xf32>
    %78 = vector.extract_strided_slice %0 {offsets = [0, 0], sizes = [1, 128], strides = [1, 1]} : vector<8x128xf32> to vector<1x128xf32>
    %79 = vector.extract_strided_slice %0 {offsets = [1, 0], sizes = [1, 128], strides = [1, 1]} : vector<8x128xf32> to vector<1x128xf32>
    %cst_18 = arith.constant dense<0.000000e+00> : vector<3xf32>
    %80 = vector.multi_reduction <add>, %77, %cst_18 [1] : vector<3x128xf32> to vector<3xf32>
    %81 = vector.shape_cast %80 : vector<3xf32> to vector<3x1xf32>
    %cst_19 = arith.constant 1.280000e+02 : f32
    %82 = vector.broadcast %cst_19 : f32 to vector<3x1xf32>
    %83 = arith.divf %81, %82 : vector<3x1xf32>
    %84 = vector.broadcast %83 : vector<3x1xf32> to vector<3x128xf32>
    %85 = arith.subf %77, %84 : vector<3x128xf32>
    %86 = arith.mulf %85, %85 : vector<3x128xf32>
    %cst_20 = arith.constant dense<0.000000e+00> : vector<3xf32>
    %87 = vector.multi_reduction <add>, %86, %cst_20 [1] : vector<3x128xf32> to vector<3xf32>
    %88 = vector.shape_cast %87 : vector<3xf32> to vector<3x1xf32>
    %cst_21 = arith.constant 1.280000e+02 : f32
    %89 = vector.broadcast %cst_21 : f32 to vector<3x1xf32>
    %90 = arith.divf %88, %89 : vector<3x1xf32>
    %91 = vector.broadcast %83 : vector<3x1xf32> to vector<3x128xf32>
    %92 = arith.subf %77, %91 : vector<3x128xf32>
    %cst_22 = arith.constant 9.99999974E-6 : f32
    %93 = vector.broadcast %cst_22 : f32 to vector<3x1xf32>
    %94 = arith.addf %90, %93 : vector<3x1xf32>
    %95 = math.rsqrt %94 : vector<3x1xf32>
    %96 = vector.broadcast %95 : vector<3x1xf32> to vector<3x128xf32>
    %97 = arith.mulf %92, %96 : vector<3x128xf32>
    %98 = vector.broadcast %78 : vector<1x128xf32> to vector<3x128xf32>
    %99 = arith.mulf %97, %98 : vector<3x128xf32>
    %100 = vector.broadcast %79 : vector<1x128xf32> to vector<3x128xf32>
    %101 = arith.addf %99, %100 : vector<3x128xf32>
    %102 = arith.truncf %101 : vector<3x128xf32> to vector<3x128xbf16>
    %c0_23 = arith.constant 0 : index
    %c0_24 = arith.constant 0 : index
    %103 = vector.load %arg5[%c0_23, %c0_24] : memref<128x2048xbf16, #tpu.memory_space<vmem>>, vector<128x2048xbf16>
    %cst_25 = arith.constant dense<0.000000e+00> : vector<3x2048xf32>
    %104 = tpu.matmul %102, %103, %cst_25 {dimension_numbers = #tpu.dot_dimension_numbers<[1], [0], [0], [1], [0, 0, 1, 1], [], []>} : vector<3x128xbf16>, vector<128x2048xbf16>, vector<3x2048xf32> -> vector<3x2048xf32>
    %c0_26 = arith.constant 0 : index
    %c0_27 = arith.constant 0 : index
    %105 = vector.load %arg6[%c0_26, %c0_27] : memref<1x2048xf32, #tpu.memory_space<vmem>>, vector<1x2048xf32>
    %106 = vector.broadcast %105 : vector<1x2048xf32> to vector<3x2048xf32>
    %107 = arith.addf %104, %106 : vector<3x2048xf32>
    %cst_28 = arith.constant 5.000000e-01 : f32
    %108 = vector.broadcast %cst_28 : f32 to vector<3x2048xf32>
    %109 = arith.mulf %108, %107 : vector<3x2048xf32>
    %cst_29 = arith.constant 0.707106769 : f32
    %110 = vector.broadcast %cst_29 : f32 to vector<3x2048xf32>
    %111 = arith.mulf %107, %110 : vector<3x2048xf32>
    %112 = math.absf %111 : vector<3x2048xf32>
    %cst_30 = arith.constant 0.327591091 : f32
    %113 = vector.broadcast %cst_30 : f32 to vector<3x2048xf32>
    %114 = arith.mulf %113, %112 : vector<3x2048xf32>
    %cst_31 = arith.constant 1.000000e+00 : f32
    %115 = vector.broadcast %cst_31 : f32 to vector<3x2048xf32>
    %116 = arith.addf %115, %114 : vector<3x2048xf32>
    %cst_32 = arith.constant 1.000000e+00 : f32
    %117 = vector.broadcast %cst_32 : f32 to vector<3x2048xf32>
    %118 = arith.divf %117, %116 : vector<3x2048xf32>
    %cst_33 = arith.constant 1.06140542 : f32
    %119 = vector.broadcast %cst_33 : f32 to vector<3x2048xf32>
    %120 = arith.mulf %119, %118 : vector<3x2048xf32>
    %cst_34 = arith.constant -1.45315206 : f32
    %121 = vector.broadcast %cst_34 : f32 to vector<3x2048xf32>
    %122 = arith.addf %120, %121 : vector<3x2048xf32>
    %123 = arith.mulf %122, %118 : vector<3x2048xf32>
    %cst_35 = arith.constant 1.42141378 : f32
    %124 = vector.broadcast %cst_35 : f32 to vector<3x2048xf32>
    %125 = arith.addf %123, %124 : vector<3x2048xf32>
    %126 = arith.mulf %125, %118 : vector<3x2048xf32>
    %cst_36 = arith.constant -0.284496725 : f32
    %127 = vector.broadcast %cst_36 : f32 to vector<3x2048xf32>
    %128 = arith.addf %126, %127 : vector<3x2048xf32>
    %129 = arith.mulf %128, %118 : vector<3x2048xf32>
    %cst_37 = arith.constant 0.254829586 : f32
    %130 = vector.broadcast %cst_37 : f32 to vector<3x2048xf32>
    %131 = arith.addf %129, %130 : vector<3x2048xf32>
    %132 = arith.mulf %131, %118 : vector<3x2048xf32>
    %cst_38 = arith.constant 0.000000e+00 : f32
    %133 = vector.broadcast %cst_38 : f32 to vector<3x2048xf32>
    %134 = arith.subf %133, %112 : vector<3x2048xf32>
    %135 = arith.mulf %134, %112 : vector<3x2048xf32>
    %136 = math.exp %135 : vector<3x2048xf32>
    %137 = arith.mulf %132, %136 : vector<3x2048xf32>
    %cst_39 = arith.constant 1.000000e+00 : f32
    %138 = vector.broadcast %cst_39 : f32 to vector<3x2048xf32>
    %139 = arith.subf %138, %137 : vector<3x2048xf32>
    %cst_40 = arith.constant 0.000000e+00 : f32
    %140 = vector.broadcast %cst_40 : f32 to vector<3x2048xf32>
    %141 = arith.cmpf olt, %111, %140 : vector<3x2048xf32>
    %cst_41 = arith.constant 0.000000e+00 : f32
    %142 = vector.broadcast %cst_41 : f32 to vector<3x2048xf32>
    %143 = arith.subf %142, %139 : vector<3x2048xf32>
    %144 = arith.select %141, %143, %139 : vector<3x2048xi1>, vector<3x2048xf32>
    %cst_42 = arith.constant 1.000000e+00 : f32
    %145 = vector.broadcast %cst_42 : f32 to vector<3x2048xf32>
    %146 = arith.addf %145, %144 : vector<3x2048xf32>
    %147 = arith.mulf %109, %146 : vector<3x2048xf32>
    %148 = arith.truncf %147 : vector<3x2048xf32> to vector<3x2048xbf16>
    %c0_43 = arith.constant 0 : index
    %c0_44 = arith.constant 0 : index
    %149 = vector.load %arg7[%c0_43, %c0_44] : memref<2048x128xbf16, #tpu.memory_space<vmem>>, vector<2048x128xbf16>
    %cst_45 = arith.constant dense<0.000000e+00> : vector<3x128xf32>
    %150 = tpu.matmul %148, %149, %cst_45 {dimension_numbers = #tpu.dot_dimension_numbers<[1], [0], [0], [1], [0, 0, 1, 1], [], []>} : vector<3x2048xbf16>, vector<2048x128xbf16>, vector<3x128xf32> -> vector<3x128xf32>
    %151 = vector.extract_strided_slice %0 {offsets = [5, 0], sizes = [1, 128], strides = [1, 1]} : vector<8x128xf32> to vector<1x128xf32>
    %152 = vector.broadcast %151 : vector<1x128xf32> to vector<3x128xf32>
    %153 = arith.addf %150, %152 : vector<3x128xf32>
    %154 = arith.addf %101, %153 : vector<3x128xf32>
    %155 = vector.extract_strided_slice %0 {offsets = [2, 0], sizes = [1, 128], strides = [1, 1]} : vector<8x128xf32> to vector<1x128xf32>
    %156 = vector.extract_strided_slice %0 {offsets = [3, 0], sizes = [1, 128], strides = [1, 1]} : vector<8x128xf32> to vector<1x128xf32>
    %cst_46 = arith.constant dense<0.000000e+00> : vector<3xf32>
    %157 = vector.multi_reduction <add>, %154, %cst_46 [1] : vector<3x128xf32> to vector<3xf32>
    %158 = vector.shape_cast %157 : vector<3xf32> to vector<3x1xf32>
    %cst_47 = arith.constant 1.280000e+02 : f32
    %159 = vector.broadcast %cst_47 : f32 to vector<3x1xf32>
    %160 = arith.divf %158, %159 : vector<3x1xf32>
    %161 = vector.broadcast %160 : vector<3x1xf32> to vector<3x128xf32>
    %162 = arith.subf %154, %161 : vector<3x128xf32>
    %163 = arith.mulf %162, %162 : vector<3x128xf32>
    %cst_48 = arith.constant dense<0.000000e+00> : vector<3xf32>
    %164 = vector.multi_reduction <add>, %163, %cst_48 [1] : vector<3x128xf32> to vector<3xf32>
    %165 = vector.shape_cast %164 : vector<3xf32> to vector<3x1xf32>
    %cst_49 = arith.constant 1.280000e+02 : f32
    %166 = vector.broadcast %cst_49 : f32 to vector<3x1xf32>
    %167 = arith.divf %165, %166 : vector<3x1xf32>
    %168 = vector.broadcast %160 : vector<3x1xf32> to vector<3x128xf32>
    %169 = arith.subf %154, %168 : vector<3x128xf32>
    %cst_50 = arith.constant 9.99999974E-6 : f32
    %170 = vector.broadcast %cst_50 : f32 to vector<3x1xf32>
    %171 = arith.addf %167, %170 : vector<3x1xf32>
    %172 = math.rsqrt %171 : vector<3x1xf32>
    %173 = vector.broadcast %172 : vector<3x1xf32> to vector<3x128xf32>
    %174 = arith.mulf %169, %173 : vector<3x128xf32>
    %175 = vector.broadcast %155 : vector<1x128xf32> to vector<3x128xf32>
    %176 = arith.mulf %174, %175 : vector<3x128xf32>
    %177 = vector.broadcast %156 : vector<1x128xf32> to vector<3x128xf32>
    %178 = arith.addf %176, %177 : vector<3x128xf32>
    %179 = arith.addf %178, %2 : vector<3x128xf32>
    %c0_51 = arith.constant 0 : index
    %c0_52 = arith.constant 0 : index
    %180 = vector.load %arg8[%c0_51, %c0_52] : memref<128x128xf32, #tpu.memory_space<vmem>>, vector<128x128xf32>
    %cst_53 = arith.constant dense<0.000000e+00> : vector<3x128xf32>
    %181 = tpu.matmul %179, %180, %cst_53 {dimension_numbers = #tpu.dot_dimension_numbers<[1], [0], [0], [1], [0, 0, 1, 1], [], []>} : vector<3x128xf32>, vector<128x128xf32>, vector<3x128xf32> -> vector<3x128xf32>
    %182 = vector.extract_strided_slice %0 {offsets = [6, 0], sizes = [1, 128], strides = [1, 1]} : vector<8x128xf32> to vector<1x128xf32>
    %183 = vector.broadcast %182 : vector<1x128xf32> to vector<3x128xf32>
    %184 = arith.addf %181, %183 : vector<3x128xf32>
    %c0_54 = arith.constant 0 : index
    %c0_55 = arith.constant 0 : index
    %185 = vector.load %arg10[%c0_54, %c0_55] : memref<3x128xf32, #tpu.memory_space<vmem>>, vector<3x128xf32>
    tpu.vector_store %arg10[%c0_54, %c0_55], %184 {strides = array<i32>} : memref<3x128xf32, #tpu.memory_space<vmem>>, vector<3x128xf32>,
    return
  }
}

module attributes {stable_mosaic.version = 11 : i64} {
  func.func @_decoder_transformer_kernel(%arg0: i32, %arg1: memref<1x17x32xf32, #tpu.memory_space<vmem>>, %arg2: memref<2x32x128xbf16, #tpu.memory_space<vmem>>, %arg3: memref<2x32x64xbf16, #tpu.memory_space<vmem>>, %arg4: memref<2x1x64xf32, #tpu.memory_space<vmem>>, %arg5: memref<2x64x32xbf16, #tpu.memory_space<vmem>>, %arg6: memref<2x8x32xf32, #tpu.memory_space<vmem>>, %arg7: memref<2x32xf32, #tpu.memory_space<vmem>>, %arg8: memref<1x17x32xf32, #tpu.memory_space<vmem>>) attributes {dimension_semantics = [#tpu.dimension_semantics<parallel>], iteration_bounds = array<i64: 2>, scalar_prefetch = 0 : i64, scratch_operands = 0 : i64, tpu.core_type = #tpu.core_type<tc>, window_params = [{transform_indices = @transform_0, window_bounds = array<i64: 1, 17, 32>}, {pipeline_mode = #tpu.pipeline_mode<synchronous>, transform_indices = @transform_1, window_bounds = array<i64: 2, 32, 128>}, {pipeline_mode = #tpu.pipeline_mode<synchronous>, transform_indices = @transform_2, window_bounds = array<i64: 2, 32, 64>}, {pipeline_mode = #tpu.pipeline_mode<synchronous>, transform_indices = @transform_3, window_bounds = array<i64: 2, 1, 64>}, {pipeline_mode = #tpu.pipeline_mode<synchronous>, transform_indices = @transform_4, window_bounds = array<i64: 2, 64, 32>}, {pipeline_mode = #tpu.pipeline_mode<synchronous>, transform_indices = @transform_5, window_bounds = array<i64: 2, 8, 32>}, {pipeline_mode = #tpu.pipeline_mode<synchronous>, transform_indices = @transform_6, window_bounds = array<i64: 2, 32>}, {transform_indices = @transform_7, window_bounds = array<i64: 1, 17, 32>}]} {
    %c0 = arith.constant 0 : index
    %c0_0 = arith.constant 0 : index
    %c0_1 = arith.constant 0 : index
    %0 = vector.load %arg1[%c0, %c0_0, %c0_1] : memref<1x17x32xf32, #tpu.memory_space<vmem>>, vector<1x17x32xf32>
    %1 = vector.shape_cast %0 : vector<1x17x32xf32> to vector<17x32xf32>
    %c0_2 = arith.constant 0 : index
    %c0_3 = arith.constant 0 : index
    %c0_4 = arith.constant 0 : index
    %2 = vector.load %arg6[%c0_2, %c0_3, %c0_4] : memref<2x8x32xf32, #tpu.memory_space<vmem>>, vector<1x8x32xf32>
    %3 = vector.shape_cast %2 : vector<1x8x32xf32> to vector<8x32xf32>
    %c0_5 = arith.constant 0 : index
    %c0_6 = arith.constant 0 : index
    %c0_7 = arith.constant 0 : index
    %4 = vector.load %arg2[%c0_5, %c0_6, %c0_7] : memref<2x32x128xbf16, #tpu.memory_space<vmem>>, vector<1x32x128xbf16>
    %5 = vector.shape_cast %4 : vector<1x32x128xbf16> to vector<32x128xbf16>
    %6 = vector.extract_strided_slice %3 {offsets = [0, 0], sizes = [1, 32], strides = [1, 1]} : vector<8x32xf32> to vector<1x32xf32>
    %7 = vector.extract_strided_slice %3 {offsets = [1, 0], sizes = [1, 32], strides = [1, 1]} : vector<8x32xf32> to vector<1x32xf32>
    %cst = arith.constant dense<0.000000e+00> : vector<17xf32>
    %8 = vector.multi_reduction <add>, %1, %cst [1] : vector<17x32xf32> to vector<17xf32>
    %9 = vector.shape_cast %8 : vector<17xf32> to vector<17x1xf32>
    %cst_8 = arith.constant 3.200000e+01 : f32
    %10 = vector.broadcast %cst_8 : f32 to vector<17x1xf32>
    %11 = arith.divf %9, %10 : vector<17x1xf32>
    %12 = vector.broadcast %11 : vector<17x1xf32> to vector<17x32xf32>
    %13 = arith.subf %1, %12 : vector<17x32xf32>
    %14 = arith.mulf %13, %13 : vector<17x32xf32>
    %cst_9 = arith.constant dense<0.000000e+00> : vector<17xf32>
    %15 = vector.multi_reduction <add>, %14, %cst_9 [1] : vector<17x32xf32> to vector<17xf32>
    %16 = vector.shape_cast %15 : vector<17xf32> to vector<17x1xf32>
    %cst_10 = arith.constant 3.200000e+01 : f32
    %17 = vector.broadcast %cst_10 : f32 to vector<17x1xf32>
    %18 = arith.divf %16, %17 : vector<17x1xf32>
    %19 = vector.broadcast %11 : vector<17x1xf32> to vector<17x32xf32>
    %20 = arith.subf %1, %19 : vector<17x32xf32>
    %cst_11 = arith.constant 9.99999974E-6 : f32
    %21 = vector.broadcast %cst_11 : f32 to vector<17x1xf32>
    %22 = arith.addf %18, %21 : vector<17x1xf32>
    %23 = math.rsqrt %22 : vector<17x1xf32>
    %24 = vector.broadcast %23 : vector<17x1xf32> to vector<17x32xf32>
    %25 = arith.mulf %20, %24 : vector<17x32xf32>
    %26 = vector.broadcast %6 : vector<1x32xf32> to vector<17x32xf32>
    %27 = arith.mulf %25, %26 : vector<17x32xf32>
    %28 = vector.broadcast %7 : vector<1x32xf32> to vector<17x32xf32>
    %29 = arith.addf %27, %28 : vector<17x32xf32>
    %30 = arith.truncf %29 : vector<17x32xf32> to vector<17x32xbf16>
    %cst_12 = arith.constant dense<0.000000e+00> : vector<17x128xf32>
    %31 = tpu.matmul %30, %5, %cst_12 {dimension_numbers = #tpu.dot_dimension_numbers<[1], [0], [0], [1], [0, 0, 1, 1], [], []>} : vector<17x32xbf16>, vector<32x128xbf16>, vector<17x128xf32> -> vector<17x128xf32>
    %32 = vector.extract_strided_slice %31 {offsets = [0, 0], sizes = [17, 32], strides = [1, 1]} : vector<17x128xf32> to vector<17x32xf32>
    %33 = vector.extract_strided_slice %31 {offsets = [0, 32], sizes = [17, 32], strides = [1, 1]} : vector<17x128xf32> to vector<17x32xf32>
    %34 = vector.extract_strided_slice %31 {offsets = [0, 64], sizes = [17, 32], strides = [1, 1]} : vector<17x128xf32> to vector<17x32xf32>
    %35 = vector.extract_strided_slice %32 {offsets = [0, 0], sizes = [17, 16], strides = [1, 1]} : vector<17x32xf32> to vector<17x16xf32>
    %36 = vector.extract_strided_slice %32 {offsets = [0, 16], sizes = [17, 16], strides = [1, 1]} : vector<17x32xf32> to vector<17x16xf32>
    %37 = vector.shape_cast %35 : vector<17x16xf32> to vector<1x17x16xf32>
    %38 = vector.shape_cast %36 : vector<17x16xf32> to vector<1x17x16xf32>
    %39 = tpu.concatenate %37, %38 in 0 : vector<1x17x16xf32>, vector<1x17x16xf32> -> vector<2x17x16xf32>
    %40 = arith.truncf %39 : vector<2x17x16xf32> to vector<2x17x16xbf16>
    %41 = vector.extract_strided_slice %33 {offsets = [0, 0], sizes = [17, 16], strides = [1, 1]} : vector<17x32xf32> to vector<17x16xf32>
    %42 = vector.extract_strided_slice %33 {offsets = [0, 16], sizes = [17, 16], strides = [1, 1]} : vector<17x32xf32> to vector<17x16xf32>
    %43 = vector.shape_cast %41 : vector<17x16xf32> to vector<1x17x16xf32>
    %44 = vector.shape_cast %42 : vector<17x16xf32> to vector<1x17x16xf32>
    %45 = tpu.concatenate %43, %44 in 0 : vector<1x17x16xf32>, vector<1x17x16xf32> -> vector<2x17x16xf32>
    %46 = arith.truncf %45 : vector<2x17x16xf32> to vector<2x17x16xbf16>
    %47 = vector.extract_strided_slice %34 {offsets = [0, 0], sizes = [17, 16], strides = [1, 1]} : vector<17x32xf32> to vector<17x16xf32>
    %48 = vector.extract_strided_slice %34 {offsets = [0, 16], sizes = [17, 16], strides = [1, 1]} : vector<17x32xf32> to vector<17x16xf32>
    %49 = vector.shape_cast %47 : vector<17x16xf32> to vector<1x17x16xf32>
    %50 = vector.shape_cast %48 : vector<17x16xf32> to vector<1x17x16xf32>
    %51 = tpu.concatenate %49, %50 in 0 : vector<1x17x16xf32>, vector<1x17x16xf32> -> vector<2x17x16xf32>
    %52 = arith.truncf %51 : vector<2x17x16xf32> to vector<2x17x16xbf16>
    "tpu.trace_start"() <{level = 10 : i32, message = "hnd,hmd->hnm"}> : () -> ()
    %cst_13 = arith.constant dense<0.000000e+00> : vector<2x17x17xf32>
    %53 = tpu.matmul %40, %46, %cst_13 {dimension_numbers = #tpu.dot_dimension_numbers<[2], [2], [1], [1], [0, 0, 0, 1, 1, 1], [0], [0]>} : vector<2x17x16xbf16>, vector<2x17x16xbf16>, vector<2x17x17xf32> -> vector<2x17x17xf32>
    "tpu.trace_stop"() : () -> ()
    %cst_14 = arith.constant 2.500000e-01 : f32
    %54 = vector.broadcast %cst_14 : f32 to vector<2x17x17xf32>
    %55 = arith.mulf %53, %54 : vector<2x17x17xf32>
    %cst_15 = arith.constant dense<0xFF800000> : vector<2x17xf32>
    %56 = vector.multi_reduction <maximumf>, %55, %cst_15 [2] : vector<2x17x17xf32> to vector<2x17xf32>
    %57 = vector.shape_cast %56 : vector<2x17xf32> to vector<2x17x1xf32>
    %58 = vector.broadcast %57 : vector<2x17x1xf32> to vector<2x17x17xf32>
    %59 = arith.subf %55, %58 : vector<2x17x17xf32>
    %60 = math.exp %59 : vector<2x17x17xf32>
    %cst_16 = arith.constant dense<0.000000e+00> : vector<2x17xf32>
    %61 = vector.multi_reduction <add>, %60, %cst_16 [2] : vector<2x17x17xf32> to vector<2x17xf32>
    %62 = vector.shape_cast %61 : vector<2x17xf32> to vector<2x17x1xf32>
    %63 = tpu.reciprocal %62 : vector<2x17x1xf32> -> vector<2x17x1xf32>
    %64 = vector.broadcast %63 : vector<2x17x1xf32> to vector<2x17x17xf32>
    %65 = arith.mulf %60, %64 : vector<2x17x17xf32>
    %66 = arith.truncf %65 : vector<2x17x17xf32> to vector<2x17x17xbf16>
    "tpu.trace_start"() <{level = 10 : i32, message = "hnm,hmd->hnd"}> : () -> ()
    %cst_17 = arith.constant dense<0.000000e+00> : vector<2x17x16xf32>
    %67 = tpu.matmul %66, %52, %cst_17 {dimension_numbers = #tpu.dot_dimension_numbers<[2], [1], [1], [2], [0, 0, 0, 1, 1, 2], [0], [0]>} : vector<2x17x17xbf16>, vector<2x17x16xbf16>, vector<2x17x16xf32> -> vector<2x17x16xf32>
    "tpu.trace_stop"() : () -> ()
    %68 = vector.extract_strided_slice %67 {offsets = [0, 0, 0], sizes = [1, 17, 16], strides = [1, 1, 1]} : vector<2x17x16xf32> to vector<1x17x16xf32>
    %69 = vector.shape_cast %68 : vector<1x17x16xf32> to vector<17x16xf32>
    %70 = vector.extract_strided_slice %67 {offsets = [1, 0, 0], sizes = [1, 17, 16], strides = [1, 1, 1]} : vector<2x17x16xf32> to vector<1x17x16xf32>
    %71 = vector.shape_cast %70 : vector<1x17x16xf32> to vector<17x16xf32>
    %72 = tpu.concatenate %69, %71 in 1 : vector<17x16xf32>, vector<17x16xf32> -> vector<17x32xf32>
    %73 = arith.truncf %72 : vector<17x32xf32> to vector<17x32xbf16>
    %74 = vector.extract_strided_slice %5 {offsets = [0, 96], sizes = [32, 32], strides = [1, 1]} : vector<32x128xbf16> to vector<32x32xbf16>
    %cst_18 = arith.constant dense<0.000000e+00> : vector<17x32xf32>
    %75 = tpu.matmul %73, %74, %cst_18 {dimension_numbers = #tpu.dot_dimension_numbers<[1], [0], [0], [1], [0, 0, 1, 1], [], []>} : vector<17x32xbf16>, vector<32x32xbf16>, vector<17x32xf32> -> vector<17x32xf32>
    %76 = arith.addf %1, %75 : vector<17x32xf32>
    %77 = vector.extract_strided_slice %3 {offsets = [2, 0], sizes = [1, 32], strides = [1, 1]} : vector<8x32xf32> to vector<1x32xf32>
    %78 = vector.extract_strided_slice %3 {offsets = [3, 0], sizes = [1, 32], strides = [1, 1]} : vector<8x32xf32> to vector<1x32xf32>
    %cst_19 = arith.constant dense<0.000000e+00> : vector<17xf32>
    %79 = vector.multi_reduction <add>, %76, %cst_19 [1] : vector<17x32xf32> to vector<17xf32>
    %80 = vector.shape_cast %79 : vector<17xf32> to vector<17x1xf32>
    %cst_20 = arith.constant 3.200000e+01 : f32
    %81 = vector.broadcast %cst_20 : f32 to vector<17x1xf32>
    %82 = arith.divf %80, %81 : vector<17x1xf32>
    %83 = vector.broadcast %82 : vector<17x1xf32> to vector<17x32xf32>
    %84 = arith.subf %76, %83 : vector<17x32xf32>
    %85 = arith.mulf %84, %84 : vector<17x32xf32>
    %cst_21 = arith.constant dense<0.000000e+00> : vector<17xf32>
    %86 = vector.multi_reduction <add>, %85, %cst_21 [1] : vector<17x32xf32> to vector<17xf32>
    %87 = vector.shape_cast %86 : vector<17xf32> to vector<17x1xf32>
    %cst_22 = arith.constant 3.200000e+01 : f32
    %88 = vector.broadcast %cst_22 : f32 to vector<17x1xf32>
    %89 = arith.divf %87, %88 : vector<17x1xf32>
    %90 = vector.broadcast %82 : vector<17x1xf32> to vector<17x32xf32>
    %91 = arith.subf %76, %90 : vector<17x32xf32>
    %cst_23 = arith.constant 9.99999974E-6 : f32
    %92 = vector.broadcast %cst_23 : f32 to vector<17x1xf32>
    %93 = arith.addf %89, %92 : vector<17x1xf32>
    %94 = math.rsqrt %93 : vector<17x1xf32>
    %95 = vector.broadcast %94 : vector<17x1xf32> to vector<17x32xf32>
    %96 = arith.mulf %91, %95 : vector<17x32xf32>
    %97 = vector.broadcast %77 : vector<1x32xf32> to vector<17x32xf32>
    %98 = arith.mulf %96, %97 : vector<17x32xf32>
    %99 = vector.broadcast %78 : vector<1x32xf32> to vector<17x32xf32>
    %100 = arith.addf %98, %99 : vector<17x32xf32>
    %101 = arith.truncf %100 : vector<17x32xf32> to vector<17x32xbf16>
    %c0_24 = arith.constant 0 : index
    %c0_25 = arith.constant 0 : index
    %c0_26 = arith.constant 0 : index
    %102 = vector.load %arg3[%c0_24, %c0_25, %c0_26] : memref<2x32x64xbf16, #tpu.memory_space<vmem>>, vector<1x32x64xbf16>
    %103 = vector.shape_cast %102 : vector<1x32x64xbf16> to vector<32x64xbf16>
    %cst_27 = arith.constant dense<0.000000e+00> : vector<17x64xf32>
    %104 = tpu.matmul %101, %103, %cst_27 {dimension_numbers = #tpu.dot_dimension_numbers<[1], [0], [0], [1], [0, 0, 1, 1], [], []>} : vector<17x32xbf16>, vector<32x64xbf16>, vector<17x64xf32> -> vector<17x64xf32>
    %c0_28 = arith.constant 0 : index
    %c0_29 = arith.constant 0 : index
    %c0_30 = arith.constant 0 : index
    %105 = vector.load %arg4[%c0_28, %c0_29, %c0_30] : memref<2x1x64xf32, #tpu.memory_space<vmem>>, vector<1x1x64xf32>
    %106 = vector.shape_cast %105 : vector<1x1x64xf32> to vector<1x64xf32>
    %107 = vector.broadcast %106 : vector<1x64xf32> to vector<17x64xf32>
    %108 = arith.addf %104, %107 : vector<17x64xf32>
    %cst_31 = arith.constant 5.000000e-01 : f32
    %109 = vector.broadcast %cst_31 : f32 to vector<17x64xf32>
    %110 = arith.mulf %109, %108 : vector<17x64xf32>
    %cst_32 = arith.constant 0.707106769 : f32
    %111 = vector.broadcast %cst_32 : f32 to vector<17x64xf32>
    %112 = arith.mulf %108, %111 : vector<17x64xf32>
    %113 = math.absf %112 : vector<17x64xf32>
    %cst_33 = arith.constant 0.327591091 : f32
    %114 = vector.broadcast %cst_33 : f32 to vector<17x64xf32>
    %115 = arith.mulf %114, %113 : vector<17x64xf32>
    %cst_34 = arith.constant 1.000000e+00 : f32
    %116 = vector.broadcast %cst_34 : f32 to vector<17x64xf32>
    %117 = arith.addf %116, %115 : vector<17x64xf32>
    %cst_35 = arith.constant 1.000000e+00 : f32
    %118 = vector.broadcast %cst_35 : f32 to vector<17x64xf32>
    %119 = arith.divf %118, %117 : vector<17x64xf32>
    %cst_36 = arith.constant 1.06140542 : f32
    %120 = vector.broadcast %cst_36 : f32 to vector<17x64xf32>
    %121 = arith.mulf %120, %119 : vector<17x64xf32>
    %cst_37 = arith.constant -1.45315206 : f32
    %122 = vector.broadcast %cst_37 : f32 to vector<17x64xf32>
    %123 = arith.addf %121, %122 : vector<17x64xf32>
    %124 = arith.mulf %123, %119 : vector<17x64xf32>
    %cst_38 = arith.constant 1.42141378 : f32
    %125 = vector.broadcast %cst_38 : f32 to vector<17x64xf32>
    %126 = arith.addf %124, %125 : vector<17x64xf32>
    %127 = arith.mulf %126, %119 : vector<17x64xf32>
    %cst_39 = arith.constant -0.284496725 : f32
    %128 = vector.broadcast %cst_39 : f32 to vector<17x64xf32>
    %129 = arith.addf %127, %128 : vector<17x64xf32>
    %130 = arith.mulf %129, %119 : vector<17x64xf32>
    %cst_40 = arith.constant 0.254829586 : f32
    %131 = vector.broadcast %cst_40 : f32 to vector<17x64xf32>
    %132 = arith.addf %130, %131 : vector<17x64xf32>
    %133 = arith.mulf %132, %119 : vector<17x64xf32>
    %cst_41 = arith.constant 0.000000e+00 : f32
    %134 = vector.broadcast %cst_41 : f32 to vector<17x64xf32>
    %135 = arith.subf %134, %113 : vector<17x64xf32>
    %136 = arith.mulf %135, %113 : vector<17x64xf32>
    %137 = math.exp %136 : vector<17x64xf32>
    %138 = arith.mulf %133, %137 : vector<17x64xf32>
    %cst_42 = arith.constant 1.000000e+00 : f32
    %139 = vector.broadcast %cst_42 : f32 to vector<17x64xf32>
    %140 = arith.subf %139, %138 : vector<17x64xf32>
    %cst_43 = arith.constant 0.000000e+00 : f32
    %141 = vector.broadcast %cst_43 : f32 to vector<17x64xf32>
    %142 = arith.cmpf olt, %112, %141 : vector<17x64xf32>
    %cst_44 = arith.constant 0.000000e+00 : f32
    %143 = vector.broadcast %cst_44 : f32 to vector<17x64xf32>
    %144 = arith.subf %143, %140 : vector<17x64xf32>
    %145 = arith.select %142, %144, %140 : vector<17x64xi1>, vector<17x64xf32>
    %cst_45 = arith.constant 1.000000e+00 : f32
    %146 = vector.broadcast %cst_45 : f32 to vector<17x64xf32>
    %147 = arith.addf %146, %145 : vector<17x64xf32>
    %148 = arith.mulf %110, %147 : vector<17x64xf32>
    %149 = arith.truncf %148 : vector<17x64xf32> to vector<17x64xbf16>
    %c0_46 = arith.constant 0 : index
    %c0_47 = arith.constant 0 : index
    %c0_48 = arith.constant 0 : index
    %150 = vector.load %arg5[%c0_46, %c0_47, %c0_48] : memref<2x64x32xbf16, #tpu.memory_space<vmem>>, vector<1x64x32xbf16>
    %151 = vector.shape_cast %150 : vector<1x64x32xbf16> to vector<64x32xbf16>
    %cst_49 = arith.constant dense<0.000000e+00> : vector<17x32xf32>
    %152 = tpu.matmul %149, %151, %cst_49 {dimension_numbers = #tpu.dot_dimension_numbers<[1], [0], [0], [1], [0, 0, 1, 1], [], []>} : vector<17x64xbf16>, vector<64x32xbf16>, vector<17x32xf32> -> vector<17x32xf32>
    %153 = arith.addf %76, %152 : vector<17x32xf32>
    %154 = vector.extract_strided_slice %3 {offsets = [4, 0], sizes = [1, 32], strides = [1, 1]} : vector<8x32xf32> to vector<1x32xf32>
    %155 = vector.broadcast %154 : vector<1x32xf32> to vector<17x32xf32>
    %156 = arith.addf %153, %155 : vector<17x32xf32>
    %c1 = arith.constant 1 : index
    %c0_50 = arith.constant 0 : index
    %c0_51 = arith.constant 0 : index
    %157 = vector.load %arg6[%c1, %c0_50, %c0_51] : memref<2x8x32xf32, #tpu.memory_space<vmem>>, vector<1x8x32xf32>
    %158 = vector.shape_cast %157 : vector<1x8x32xf32> to vector<8x32xf32>
    %c1_52 = arith.constant 1 : index
    %c0_53 = arith.constant 0 : index
    %c0_54 = arith.constant 0 : index
    %159 = vector.load %arg2[%c1_52, %c0_53, %c0_54] : memref<2x32x128xbf16, #tpu.memory_space<vmem>>, vector<1x32x128xbf16>
    %160 = vector.shape_cast %159 : vector<1x32x128xbf16> to vector<32x128xbf16>
    %161 = vector.extract_strided_slice %158 {offsets = [0, 0], sizes = [1, 32], strides = [1, 1]} : vector<8x32xf32> to vector<1x32xf32>
    %162 = vector.extract_strided_slice %158 {offsets = [1, 0], sizes = [1, 32], strides = [1, 1]} : vector<8x32xf32> to vector<1x32xf32>
    %cst_55 = arith.constant dense<0.000000e+00> : vector<17xf32>
    %163 = vector.multi_reduction <add>, %156, %cst_55 [1] : vector<17x32xf32> to vector<17xf32>
    %164 = vector.shape_cast %163 : vector<17xf32> to vector<17x1xf32>
    %cst_56 = arith.constant 3.200000e+01 : f32
    %165 = vector.broadcast %cst_56 : f32 to vector<17x1xf32>
    %166 = arith.divf %164, %165 : vector<17x1xf32>
    %167 = vector.broadcast %166 : vector<17x1xf32> to vector<17x32xf32>
    %168 = arith.subf %156, %167 : vector<17x32xf32>
    %169 = arith.mulf %168, %168 : vector<17x32xf32>
    %cst_57 = arith.constant dense<0.000000e+00> : vector<17xf32>
    %170 = vector.multi_reduction <add>, %169, %cst_57 [1] : vector<17x32xf32> to vector<17xf32>
    %171 = vector.shape_cast %170 : vector<17xf32> to vector<17x1xf32>
    %cst_58 = arith.constant 3.200000e+01 : f32
    %172 = vector.broadcast %cst_58 : f32 to vector<17x1xf32>
    %173 = arith.divf %171, %172 : vector<17x1xf32>
    %174 = vector.broadcast %166 : vector<17x1xf32> to vector<17x32xf32>
    %175 = arith.subf %156, %174 : vector<17x32xf32>
    %cst_59 = arith.constant 9.99999974E-6 : f32
    %176 = vector.broadcast %cst_59 : f32 to vector<17x1xf32>
    %177 = arith.addf %173, %176 : vector<17x1xf32>
    %178 = math.rsqrt %177 : vector<17x1xf32>
    %179 = vector.broadcast %178 : vector<17x1xf32> to vector<17x32xf32>
    %180 = arith.mulf %175, %179 : vector<17x32xf32>
    %181 = vector.broadcast %161 : vector<1x32xf32> to vector<17x32xf32>
    %182 = arith.mulf %180, %181 : vector<17x32xf32>
    %183 = vector.broadcast %162 : vector<1x32xf32> to vector<17x32xf32>
    %184 = arith.addf %182, %183 : vector<17x32xf32>
    %185 = arith.truncf %184 : vector<17x32xf32> to vector<17x32xbf16>
    %cst_60 = arith.constant dense<0.000000e+00> : vector<17x128xf32>
    %186 = tpu.matmul %185, %160, %cst_60 {dimension_numbers = #tpu.dot_dimension_numbers<[1], [0], [0], [1], [0, 0, 1, 1], [], []>} : vector<17x32xbf16>, vector<32x128xbf16>, vector<17x128xf32> -> vector<17x128xf32>
    %187 = vector.extract_strided_slice %186 {offsets = [0, 0], sizes = [17, 32], strides = [1, 1]} : vector<17x128xf32> to vector<17x32xf32>
    %188 = vector.extract_strided_slice %186 {offsets = [0, 32], sizes = [17, 32], strides = [1, 1]} : vector<17x128xf32> to vector<17x32xf32>
    %189 = vector.extract_strided_slice %186 {offsets = [0, 64], sizes = [17, 32], strides = [1, 1]} : vector<17x128xf32> to vector<17x32xf32>
    %190 = vector.extract_strided_slice %187 {offsets = [0, 0], sizes = [17, 16], strides = [1, 1]} : vector<17x32xf32> to vector<17x16xf32>
    %191 = vector.extract_strided_slice %187 {offsets = [0, 16], sizes = [17, 16], strides = [1, 1]} : vector<17x32xf32> to vector<17x16xf32>
    %192 = vector.shape_cast %190 : vector<17x16xf32> to vector<1x17x16xf32>
    %193 = vector.shape_cast %191 : vector<17x16xf32> to vector<1x17x16xf32>
    %194 = tpu.concatenate %192, %193 in 0 : vector<1x17x16xf32>, vector<1x17x16xf32> -> vector<2x17x16xf32>
    %195 = arith.truncf %194 : vector<2x17x16xf32> to vector<2x17x16xbf16>
    %196 = vector.extract_strided_slice %188 {offsets = [0, 0], sizes = [17, 16], strides = [1, 1]} : vector<17x32xf32> to vector<17x16xf32>
    %197 = vector.extract_strided_slice %188 {offsets = [0, 16], sizes = [17, 16], strides = [1, 1]} : vector<17x32xf32> to vector<17x16xf32>
    %198 = vector.shape_cast %196 : vector<17x16xf32> to vector<1x17x16xf32>
    %199 = vector.shape_cast %197 : vector<17x16xf32> to vector<1x17x16xf32>
    %200 = tpu.concatenate %198, %199 in 0 : vector<1x17x16xf32>, vector<1x17x16xf32> -> vector<2x17x16xf32>
    %201 = arith.truncf %200 : vector<2x17x16xf32> to vector<2x17x16xbf16>
    %202 = vector.extract_strided_slice %189 {offsets = [0, 0], sizes = [17, 16], strides = [1, 1]} : vector<17x32xf32> to vector<17x16xf32>
    %203 = vector.extract_strided_slice %189 {offsets = [0, 16], sizes = [17, 16], strides = [1, 1]} : vector<17x32xf32> to vector<17x16xf32>
    %204 = vector.shape_cast %202 : vector<17x16xf32> to vector<1x17x16xf32>
    %205 = vector.shape_cast %203 : vector<17x16xf32> to vector<1x17x16xf32>
    %206 = tpu.concatenate %204, %205 in 0 : vector<1x17x16xf32>, vector<1x17x16xf32> -> vector<2x17x16xf32>
    %207 = arith.truncf %206 : vector<2x17x16xf32> to vector<2x17x16xbf16>
    "tpu.trace_start"() <{level = 10 : i32, message = "hnd,hmd->hnm"}> : () -> ()
    %cst_61 = arith.constant dense<0.000000e+00> : vector<2x17x17xf32>
    %208 = tpu.matmul %195, %201, %cst_61 {dimension_numbers = #tpu.dot_dimension_numbers<[2], [2], [1], [1], [0, 0, 0, 1, 1, 1], [0], [0]>} : vector<2x17x16xbf16>, vector<2x17x16xbf16>, vector<2x17x17xf32> -> vector<2x17x17xf32>
    "tpu.trace_stop"() : () -> ()
    %cst_62 = arith.constant 2.500000e-01 : f32
    %209 = vector.broadcast %cst_62 : f32 to vector<2x17x17xf32>
    %210 = arith.mulf %208, %209 : vector<2x17x17xf32>
    %cst_63 = arith.constant dense<0xFF800000> : vector<2x17xf32>
    %211 = vector.multi_reduction <maximumf>, %210, %cst_63 [2] : vector<2x17x17xf32> to vector<2x17xf32>
    %212 = vector.shape_cast %211 : vector<2x17xf32> to vector<2x17x1xf32>
    %213 = vector.broadcast %212 : vector<2x17x1xf32> to vector<2x17x17xf32>
    %214 = arith.subf %210, %213 : vector<2x17x17xf32>
    %215 = math.exp %214 : vector<2x17x17xf32>
    %cst_64 = arith.constant dense<0.000000e+00> : vector<2x17xf32>
    %216 = vector.multi_reduction <add>, %215, %cst_64 [2] : vector<2x17x17xf32> to vector<2x17xf32>
    %217 = vector.shape_cast %216 : vector<2x17xf32> to vector<2x17x1xf32>
    %218 = tpu.reciprocal %217 : vector<2x17x1xf32> -> vector<2x17x1xf32>
    %219 = vector.broadcast %218 : vector<2x17x1xf32> to vector<2x17x17xf32>
    %220 = arith.mulf %215, %219 : vector<2x17x17xf32>
    %221 = arith.truncf %220 : vector<2x17x17xf32> to vector<2x17x17xbf16>
    "tpu.trace_start"() <{level = 10 : i32, message = "hnm,hmd->hnd"}> : () -> ()
    %cst_65 = arith.constant dense<0.000000e+00> : vector<2x17x16xf32>
    %222 = tpu.matmul %221, %207, %cst_65 {dimension_numbers = #tpu.dot_dimension_numbers<[2], [1], [1], [2], [0, 0, 0, 1, 1, 2], [0], [0]>} : vector<2x17x17xbf16>, vector<2x17x16xbf16>, vector<2x17x16xf32> -> vector<2x17x16xf32>
    "tpu.trace_stop"() : () -> ()
    %223 = vector.extract_strided_slice %222 {offsets = [0, 0, 0], sizes = [1, 17, 16], strides = [1, 1, 1]} : vector<2x17x16xf32> to vector<1x17x16xf32>
    %224 = vector.shape_cast %223 : vector<1x17x16xf32> to vector<17x16xf32>
    %225 = vector.extract_strided_slice %222 {offsets = [1, 0, 0], sizes = [1, 17, 16], strides = [1, 1, 1]} : vector<2x17x16xf32> to vector<1x17x16xf32>
    %226 = vector.shape_cast %225 : vector<1x17x16xf32> to vector<17x16xf32>
    %227 = tpu.concatenate %224, %226 in 1 : vector<17x16xf32>, vector<17x16xf32> -> vector<17x32xf32>
    %228 = arith.truncf %227 : vector<17x32xf32> to vector<17x32xbf16>
    %229 = vector.extract_strided_slice %160 {offsets = [0, 96], sizes = [32, 32], strides = [1, 1]} : vector<32x128xbf16> to vector<32x32xbf16>
    %cst_66 = arith.constant dense<0.000000e+00> : vector<17x32xf32>
    %230 = tpu.matmul %228, %229, %cst_66 {dimension_numbers = #tpu.dot_dimension_numbers<[1], [0], [0], [1], [0, 0, 1, 1], [], []>} : vector<17x32xbf16>, vector<32x32xbf16>, vector<17x32xf32> -> vector<17x32xf32>
    %231 = arith.addf %156, %230 : vector<17x32xf32>
    %232 = vector.extract_strided_slice %158 {offsets = [2, 0], sizes = [1, 32], strides = [1, 1]} : vector<8x32xf32> to vector<1x32xf32>
    %233 = vector.extract_strided_slice %158 {offsets = [3, 0], sizes = [1, 32], strides = [1, 1]} : vector<8x32xf32> to vector<1x32xf32>
    %cst_67 = arith.constant dense<0.000000e+00> : vector<17xf32>
    %234 = vector.multi_reduction <add>, %231, %cst_67 [1] : vector<17x32xf32> to vector<17xf32>
    %235 = vector.shape_cast %234 : vector<17xf32> to vector<17x1xf32>
    %cst_68 = arith.constant 3.200000e+01 : f32
    %236 = vector.broadcast %cst_68 : f32 to vector<17x1xf32>
    %237 = arith.divf %235, %236 : vector<17x1xf32>
    %238 = vector.broadcast %237 : vector<17x1xf32> to vector<17x32xf32>
    %239 = arith.subf %231, %238 : vector<17x32xf32>
    %240 = arith.mulf %239, %239 : vector<17x32xf32>
    %cst_69 = arith.constant dense<0.000000e+00> : vector<17xf32>
    %241 = vector.multi_reduction <add>, %240, %cst_69 [1] : vector<17x32xf32> to vector<17xf32>
    %242 = vector.shape_cast %241 : vector<17xf32> to vector<17x1xf32>
    %cst_70 = arith.constant 3.200000e+01 : f32
    %243 = vector.broadcast %cst_70 : f32 to vector<17x1xf32>
    %244 = arith.divf %242, %243 : vector<17x1xf32>
    %245 = vector.broadcast %237 : vector<17x1xf32> to vector<17x32xf32>
    %246 = arith.subf %231, %245 : vector<17x32xf32>
    %cst_71 = arith.constant 9.99999974E-6 : f32
    %247 = vector.broadcast %cst_71 : f32 to vector<17x1xf32>
    %248 = arith.addf %244, %247 : vector<17x1xf32>
    %249 = math.rsqrt %248 : vector<17x1xf32>
    %250 = vector.broadcast %249 : vector<17x1xf32> to vector<17x32xf32>
    %251 = arith.mulf %246, %250 : vector<17x32xf32>
    %252 = vector.broadcast %232 : vector<1x32xf32> to vector<17x32xf32>
    %253 = arith.mulf %251, %252 : vector<17x32xf32>
    %254 = vector.broadcast %233 : vector<1x32xf32> to vector<17x32xf32>
    %255 = arith.addf %253, %254 : vector<17x32xf32>
    %256 = arith.truncf %255 : vector<17x32xf32> to vector<17x32xbf16>
    %c1_72 = arith.constant 1 : index
    %c0_73 = arith.constant 0 : index
    %c0_74 = arith.constant 0 : index
    %257 = vector.load %arg3[%c1_72, %c0_73, %c0_74] : memref<2x32x64xbf16, #tpu.memory_space<vmem>>, vector<1x32x64xbf16>
    %258 = vector.shape_cast %257 : vector<1x32x64xbf16> to vector<32x64xbf16>
    %cst_75 = arith.constant dense<0.000000e+00> : vector<17x64xf32>
    %259 = tpu.matmul %256, %258, %cst_75 {dimension_numbers = #tpu.dot_dimension_numbers<[1], [0], [0], [1], [0, 0, 1, 1], [], []>} : vector<17x32xbf16>, vector<32x64xbf16>, vector<17x64xf32> -> vector<17x64xf32>
    %c1_76 = arith.constant 1 : index
    %c0_77 = arith.constant 0 : index
    %c0_78 = arith.constant 0 : index
    %260 = vector.load %arg4[%c1_76, %c0_77, %c0_78] : memref<2x1x64xf32, #tpu.memory_space<vmem>>, vector<1x1x64xf32>
    %261 = vector.shape_cast %260 : vector<1x1x64xf32> to vector<1x64xf32>
    %262 = vector.broadcast %261 : vector<1x64xf32> to vector<17x64xf32>
    %263 = arith.addf %259, %262 : vector<17x64xf32>
    %cst_79 = arith.constant 5.000000e-01 : f32
    %264 = vector.broadcast %cst_79 : f32 to vector<17x64xf32>
    %265 = arith.mulf %264, %263 : vector<17x64xf32>
    %cst_80 = arith.constant 0.707106769 : f32
    %266 = vector.broadcast %cst_80 : f32 to vector<17x64xf32>
    %267 = arith.mulf %263, %266 : vector<17x64xf32>
    %268 = math.absf %267 : vector<17x64xf32>
    %cst_81 = arith.constant 0.327591091 : f32
    %269 = vector.broadcast %cst_81 : f32 to vector<17x64xf32>
    %270 = arith.mulf %269, %268 : vector<17x64xf32>
    %cst_82 = arith.constant 1.000000e+00 : f32
    %271 = vector.broadcast %cst_82 : f32 to vector<17x64xf32>
    %272 = arith.addf %271, %270 : vector<17x64xf32>
    %cst_83 = arith.constant 1.000000e+00 : f32
    %273 = vector.broadcast %cst_83 : f32 to vector<17x64xf32>
    %274 = arith.divf %273, %272 : vector<17x64xf32>
    %cst_84 = arith.constant 1.06140542 : f32
    %275 = vector.broadcast %cst_84 : f32 to vector<17x64xf32>
    %276 = arith.mulf %275, %274 : vector<17x64xf32>
    %cst_85 = arith.constant -1.45315206 : f32
    %277 = vector.broadcast %cst_85 : f32 to vector<17x64xf32>
    %278 = arith.addf %276, %277 : vector<17x64xf32>
    %279 = arith.mulf %278, %274 : vector<17x64xf32>
    %cst_86 = arith.constant 1.42141378 : f32
    %280 = vector.broadcast %cst_86 : f32 to vector<17x64xf32>
    %281 = arith.addf %279, %280 : vector<17x64xf32>
    %282 = arith.mulf %281, %274 : vector<17x64xf32>
    %cst_87 = arith.constant -0.284496725 : f32
    %283 = vector.broadcast %cst_87 : f32 to vector<17x64xf32>
    %284 = arith.addf %282, %283 : vector<17x64xf32>
    %285 = arith.mulf %284, %274 : vector<17x64xf32>
    %cst_88 = arith.constant 0.254829586 : f32
    %286 = vector.broadcast %cst_88 : f32 to vector<17x64xf32>
    %287 = arith.addf %285, %286 : vector<17x64xf32>
    %288 = arith.mulf %287, %274 : vector<17x64xf32>
    %cst_89 = arith.constant 0.000000e+00 : f32
    %289 = vector.broadcast %cst_89 : f32 to vector<17x64xf32>
    %290 = arith.subf %289, %268 : vector<17x64xf32>
    %291 = arith.mulf %290, %268 : vector<17x64xf32>
    %292 = math.exp %291 : vector<17x64xf32>
    %293 = arith.mulf %288, %292 : vector<17x64xf32>
    %cst_90 = arith.constant 1.000000e+00 : f32
    %294 = vector.broadcast %cst_90 : f32 to vector<17x64xf32>
    %295 = arith.subf %294, %293 : vector<17x64xf32>
    %cst_91 = arith.constant 0.000000e+00 : f32
    %296 = vector.broadcast %cst_91 : f32 to vector<17x64xf32>
    %297 = arith.cmpf olt, %267, %296 : vector<17x64xf32>
    %cst_92 = arith.constant 0.000000e+00 : f32
    %298 = vector.broadcast %cst_92 : f32 to vector<17x64xf32>
    %299 = arith.subf %298, %295 : vector<17x64xf32>
    %300 = arith.select %297, %299, %295 : vector<17x64xi1>, vector<17x64xf32>
    %cst_93 = arith.constant 1.000000e+00 : f32
    %301 = vector.broadcast %cst_93 : f32 to vector<17x64xf32>
    %302 = arith.addf %301, %300 : vector<17x64xf32>
    %303 = arith.mulf %265, %302 : vector<17x64xf32>
    %304 = arith.truncf %303 : vector<17x64xf32> to vector<17x64xbf16>
    %c1_94 = arith.constant 1 : index
    %c0_95 = arith.constant 0 : index
    %c0_96 = arith.constant 0 : index
    %305 = vector.load %arg5[%c1_94, %c0_95, %c0_96] : memref<2x64x32xbf16, #tpu.memory_space<vmem>>, vector<1x64x32xbf16>
    %306 = vector.shape_cast %305 : vector<1x64x32xbf16> to vector<64x32xbf16>
    %cst_97 = arith.constant dense<0.000000e+00> : vector<17x32xf32>
    %307 = tpu.matmul %304, %306, %cst_97 {dimension_numbers = #tpu.dot_dimension_numbers<[1], [0], [0], [1], [0, 0, 1, 1], [], []>} : vector<17x64xbf16>, vector<64x32xbf16>, vector<17x32xf32> -> vector<17x32xf32>
    %308 = arith.addf %231, %307 : vector<17x32xf32>
    %309 = vector.extract_strided_slice %158 {offsets = [4, 0], sizes = [1, 32], strides = [1, 1]} : vector<8x32xf32> to vector<1x32xf32>
    %310 = vector.broadcast %309 : vector<1x32xf32> to vector<17x32xf32>
    %311 = arith.addf %308, %310 : vector<17x32xf32>
    %c0_98 = arith.constant 0 : index
    %c0_99 = arith.constant 0 : index
    %312 = vector.load %arg7[%c0_98, %c0_99] : memref<2x32xf32, #tpu.memory_space<vmem>>, vector<2x32xf32>
    %313 = vector.extract_strided_slice %312 {offsets = [0, 0], sizes = [1, 32], strides = [1, 1]} : vector<2x32xf32> to vector<1x32xf32>
    %314 = vector.extract_strided_slice %312 {offsets = [1, 0], sizes = [1, 32], strides = [1, 1]} : vector<2x32xf32> to vector<1x32xf32>
    %cst_100 = arith.constant dense<0.000000e+00> : vector<17xf32>
    %315 = vector.multi_reduction <add>, %311, %cst_100 [1] : vector<17x32xf32> to vector<17xf32>
    %316 = vector.shape_cast %315 : vector<17xf32> to vector<17x1xf32>
    %cst_101 = arith.constant 3.200000e+01 : f32
    %317 = vector.broadcast %cst_101 : f32 to vector<17x1xf32>
    %318 = arith.divf %316, %317 : vector<17x1xf32>
    %319 = vector.broadcast %318 : vector<17x1xf32> to vector<17x32xf32>
    %320 = arith.subf %311, %319 : vector<17x32xf32>
    %321 = arith.mulf %320, %320 : vector<17x32xf32>
    %cst_102 = arith.constant dense<0.000000e+00> : vector<17xf32>
    %322 = vector.multi_reduction <add>, %321, %cst_102 [1] : vector<17x32xf32> to vector<17xf32>
    %323 = vector.shape_cast %322 : vector<17xf32> to vector<17x1xf32>
    %cst_103 = arith.constant 3.200000e+01 : f32
    %324 = vector.broadcast %cst_103 : f32 to vector<17x1xf32>
    %325 = arith.divf %323, %324 : vector<17x1xf32>
    %326 = vector.broadcast %318 : vector<17x1xf32> to vector<17x32xf32>
    %327 = arith.subf %311, %326 : vector<17x32xf32>
    %cst_104 = arith.constant 9.99999974E-6 : f32
    %328 = vector.broadcast %cst_104 : f32 to vector<17x1xf32>
    %329 = arith.addf %325, %328 : vector<17x1xf32>
    %330 = math.rsqrt %329 : vector<17x1xf32>
    %331 = vector.broadcast %330 : vector<17x1xf32> to vector<17x32xf32>
    %332 = arith.mulf %327, %331 : vector<17x32xf32>
    %333 = vector.broadcast %313 : vector<1x32xf32> to vector<17x32xf32>
    %334 = arith.mulf %332, %333 : vector<17x32xf32>
    %335 = vector.broadcast %314 : vector<1x32xf32> to vector<17x32xf32>
    %336 = arith.addf %334, %335 : vector<17x32xf32>
    %c0_105 = arith.constant 0 : index
    %c0_106 = arith.constant 0 : index
    %c0_107 = arith.constant 0 : index
    %337 = vector.load %arg8[%c0_105, %c0_106, %c0_107] : memref<1x17x32xf32, #tpu.memory_space<vmem>>, vector<1x17x32xf32>
    %338 = vector.shape_cast %337 : vector<1x17x32xf32> to vector<17x32xf32>
    %339 = vector.shape_cast %336 : vector<17x32xf32> to vector<1x17x32xf32>
    tpu.vector_store %arg8[%c0_105, %c0_106, %c0_107], %339 {strides = array<i32>} : memref<1x17x32xf32, #tpu.memory_space<vmem>>, vector<1x17x32xf32>,
    return
  }
  func.func @transform_0(%arg0: i32) -> (i32, i32, i32) {
    %c0_i32 = arith.constant 0 : i32
    %c0_i32_0 = arith.constant 0 : i32
    %c0_i32_1 = arith.constant 0 : i32
    return %arg0, %c0_i32, %c0_i32_0 : i32, i32, i32
  }
  func.func @transform_1(%arg0: i32) -> (i32, i32, i32) {
    %c0_i32 = arith.constant 0 : i32
    %c0_i32_0 = arith.constant 0 : i32
    %c0_i32_1 = arith.constant 0 : i32
    %c0_i32_2 = arith.constant 0 : i32
    return %c0_i32, %c0_i32_0, %c0_i32_1 : i32, i32, i32
  }
  func.func @transform_2(%arg0: i32) -> (i32, i32, i32) {
    %c0_i32 = arith.constant 0 : i32
    %c0_i32_0 = arith.constant 0 : i32
    %c0_i32_1 = arith.constant 0 : i32
    %c0_i32_2 = arith.constant 0 : i32
    return %c0_i32, %c0_i32_0, %c0_i32_1 : i32, i32, i32
  }
  func.func @transform_3(%arg0: i32) -> (i32, i32, i32) {
    %c0_i32 = arith.constant 0 : i32
    %c0_i32_0 = arith.constant 0 : i32
    %c0_i32_1 = arith.constant 0 : i32
    %c0_i32_2 = arith.constant 0 : i32
    return %c0_i32, %c0_i32_0, %c0_i32_1 : i32, i32, i32
  }
  func.func @transform_4(%arg0: i32) -> (i32, i32, i32) {
    %c0_i32 = arith.constant 0 : i32
    %c0_i32_0 = arith.constant 0 : i32
    %c0_i32_1 = arith.constant 0 : i32
    %c0_i32_2 = arith.constant 0 : i32
    return %c0_i32, %c0_i32_0, %c0_i32_1 : i32, i32, i32
  }
  func.func @transform_5(%arg0: i32) -> (i32, i32, i32) {
    %c0_i32 = arith.constant 0 : i32
    %c0_i32_0 = arith.constant 0 : i32
    %c0_i32_1 = arith.constant 0 : i32
    %c0_i32_2 = arith.constant 0 : i32
    return %c0_i32, %c0_i32_0, %c0_i32_1 : i32, i32, i32
  }
  func.func @transform_6(%arg0: i32) -> (i32, i32) {
    %c0_i32 = arith.constant 0 : i32
    %c0_i32_0 = arith.constant 0 : i32
    %c0_i32_1 = arith.constant 0 : i32
    return %c0_i32, %c0_i32_0 : i32, i32
  }
  func.func @transform_7(%arg0: i32) -> (i32, i32, i32) {
    %c0_i32 = arith.constant 0 : i32
    %c0_i32_0 = arith.constant 0 : i32
    %c0_i32_1 = arith.constant 0 : i32
    return %arg0, %c0_i32, %c0_i32_0 : i32, i32, i32
  }
}

</mosaic_0001>

<llo_original>
// kernel: mul.44
$region0: #{mul.44}
  %s0 = inlined_call_operand.vmem [shape: f32[4,4], index: 0, kind: input, shape index: {}]
  %s1 = inlined_call_operand.vmem [shape: f32[16], index: 1, kind: output, shape index: {}]
  $region1: #{mul.44} parent=0
    #allocation0 [shape = 'u8[4096]{0}', space=vmem, size = 0x1000, scoped, tag = 'scoped mem for output reshape']
    #allocation1 [shape = 'u8[4096]{0}', space=vmem, size = 0x1000, scoped, tag = 'scoped mem for input reshape']
    %s3 = sshllo.u32 0, 4
    %v4 = vld [vmem:[%s0] sm:%s3]
    %5 = vst [vmem:[#allocation1] sm:%s3] %v4
    %v6 = vld [vmem:[#allocation1] sm:$0x1]
    %vm7 = vcmask 31744
    %8 = vst.msk [vmem:[#allocation0] sm:$0x1] %vm7, %v6
    %s9 = scalar_lea.vmem [#allocation1], 3
    %v10 = vld [vmem:[%s9] sm:$0x1]
    %11 = vrot.lane.b32.xlu0 %v10, 12
    %v12 = vpop.permute.xlu0 %11
    %vm13 = vcmask 130144
    %14 = vst.msk [vmem:[#allocation0] sm:$0x1] %vm13, %v12
    %s15 = scalar_lea.vmem [#allocation1], 2
    %v16 = vld [vmem:[%s15] sm:$0x1]
    %17 = vrot.lane.b32.xlu0 %v16, 8
    %v18 = vpop.permute.xlu0 %17
    %vm19 = vcmask 97344
    %20 = vst.msk [vmem:[#allocation0] sm:$0x1] %vm19, %v18
    %s21 = scalar_lea.vmem [#allocation1], 1
    %v22 = vld [vmem:[%s21] sm:$0x1]
    %23 = vrot.lane.b32.xlu0 %v22, 4
    %v24 = vpop.permute.xlu0 %23
    %vm25 = vcmask 64544
    %26 = vst.msk [vmem:[#allocation0] sm:$0x1] %vm25, %v24
    %s28 = sshllo.u32 0, 1
    %v30 = vld [vmem:[#allocation0] sm:%s28]
    %s31 = sshllo.u32 0, 1
    %32 = vst [vmem:[%s1] sm:%s31] %v30

// kernel: clay_decoder_forward.2
$region0: #{clay_decoder_forward.2}
  #allocation0 [shape = 'u32[]', space=smem, size = 0x4, offset = 0x4, fixed_abs, tag = 'smem constant byte address 0x4 - core index']
  #allocation1 [shape = 'u32[144,128]{1,0:T(1,128)}', space=vmem, size = 0x12000, scoped, tag = 'internal scratch']
  %s0 = inlined_call_operand.vmem [shape: f32[2,17,32], index: 0, kind: input, shape index: {}]
  %s1 = inlined_call_operand.vmem [shape: bf16[2,32,128], index: 1, kind: input, shape index: {}]
  %s2 = inlined_call_operand.vmem [shape: bf16[2,32,64], index: 2, kind: input, shape index: {}]
  %s3 = inlined_call_operand.vmem [shape: f32[2,1,64], index: 3, kind: input, shape index: {}]
  %s4 = inlined_call_operand.vmem [shape: bf16[2,64,32], index: 4, kind: input, shape index: {}]
  %s5 = inlined_call_operand.vmem [shape: f32[2,8,32], index: 5, kind: input, shape index: {}]
  %s6 = inlined_call_operand.vmem [shape: f32[2,32], index: 6, kind: input, shape index: {}]
  %s7 = inlined_call_operand.vmem [shape: f32[2,17,32], index: 7, kind: output, shape index: {}]
  %s8 = sld [smem:[#allocation0]]
  $region61: #{clay_decoder_forward.2} parent=0
    _
  %s10 = ssub.s32 1, %s8
  %s11 = scalar_select 0, %s10, %s8
  loop: start=0, step=1, limit=4
  $region2: #{clay_decoder_forward.2} parent=0 // loop_pre_header
    _
  $region3: #{clay_decoder_forward.2} parent=0 // loop_header
    %s13 = sphi 0, %s17
    %p14 = scmp.ge.s32.totalorder %s13, 4
    %s23 = sphi 0, %s25
    %s26 = sphi 0, %s23
    %s27 = sphi 0, %s26
    %s43 = sphi 0, %s27
    %s47 = sphi 0, %s47
    %s49 = sphi 0, %s47
    %s50 = sphi 0, %s49
    %s64 = sphi 0, %s50
    %s68 = sphi 0, %s68
    %s70 = sphi 0, %s68
    %s71 = sphi 0, %s70
    %s85 = sphi 0, %s71
    %s89 = sphi 0, %s89
    %s91 = sphi 0, %s89
    %s92 = sphi 0, %s91
    %s106 = sphi 0, %s92
    %s110 = sphi 0, %s110
    %s112 = sphi 0, %s110
    %s113 = sphi 0, %s112
    %s127 = sphi 0, %s113
    %s131 = sphi 0, %s131
    %s133 = sphi 0, %s131
    %s134 = sphi 0, %s133
    %s148 = sphi 0, %s134
    %s152 = sphi 0, %s152
    %s154 = sphi 0, %s152
    %s155 = sphi 0, %s154
    %s169 = sphi 0, %s155
    %s175 = sphi 0, %s177
    %s178 = sphi 0, %s175
    %s179 = sphi 0, %s178
    %s195 = sphi 0, %s179
  $region4: #{clay_decoder_forward.2} parent=0 // loop_header_branch
    %16 = sbr.rel (%p14) target = $region8
  $region5: #{clay_decoder_forward.2} parent=0 // loop_body
    %s18 = ssub.s32 %s13, 1
    %s19 = ssub.s32 %s13, 2
    %s20 = sadd.s32 %s13, 1
    %s21 = ssub.s32 %s13, %s20
    %p22 = scmp.eq.s32.totalorder %s21, 0
    %s24 = sadd.s32 %s23, 1
    %s25 = scalar_select %p22, %s23, %s24
    %p28 = pneg %p22
    %p29 = scmp.eq.s32.totalorder %s13, 1
    %p30 = por %p28, %p29
    %p31 = scmp.ne.s32.totalorder %s23, %s26
    %p32 = scmp.eq.s32.totalorder %s13, 0
    %p33 = por %p31, %p32
    %p34 = scmp.ne.s32.totalorder %s23, %s26
    %p35 = scmp.eq.s32.totalorder %s18, 1
    %p36 = por %p34, %p35
    %p37 = scmp.ne.s32.totalorder %s26, %s27
    %p38 = scmp.eq.s32.totalorder %s18, 0
    %p39 = por %p37, %p38
    %p40 = scmp.ne.s32.totalorder %s26, %s27
    %p41 = scmp.eq.s32.totalorder %s19, 1
    %p42 = por %p40, %p41
    %p44 = scmp.ne.s32.totalorder %s27, %s43
    %p45 = scmp.eq.s32.totalorder %s19, 0
    %p46 = por %p44, %p45
    %s48 = sadd.s32 %s47, 1
    %p51 = scmp.eq.s32.totalorder %s13, 1
    %p52 = scmp.ne.s32.totalorder %s47, %s49
    %p53 = scmp.eq.s32.totalorder %s13, 0
    %p54 = por %p52, %p53
    %p55 = scmp.ne.s32.totalorder %s47, %s49
    %p56 = scmp.eq.s32.totalorder %s18, 1
    %p57 = por %p55, %p56
    %p58 = scmp.ne.s32.totalorder %s49, %s50
    %p59 = scmp.eq.s32.totalorder %s18, 0
    %p60 = por %p58, %p59
    %p61 = scmp.ne.s32.totalorder %s49, %s50
    %p62 = scmp.eq.s32.totalorder %s19, 1
    %p63 = por %p61, %p62
    %p65 = scmp.ne.s32.totalorder %s50, %s64
    %p66 = scmp.eq.s32.totalorder %s19, 0
    %p67 = por %p65, %p66
    %s69 = sadd.s32 %s68, 1
    %p72 = scmp.eq.s32.totalorder %s13, 1
    %p73 = scmp.ne.s32.totalorder %s68, %s70
    %p74 = scmp.eq.s32.totalorder %s13, 0
    %p75 = por %p73, %p74
    %p76 = scmp.ne.s32.totalorder %s68, %s70
    %p77 = scmp.eq.s32.totalorder %s18, 1
    %p78 = por %p76, %p77
    %p79 = scmp.ne.s32.totalorder %s70, %s71
    %p80 = scmp.eq.s32.totalorder %s18, 0
    %p81 = por %p79, %p80
    %p82 = scmp.ne.s32.totalorder %s70, %s71
    %p83 = scmp.eq.s32.totalorder %s19, 1
    %p84 = por %p82, %p83
    %p86 = scmp.ne.s32.totalorder %s71, %s85
    %p87 = scmp.eq.s32.totalorder %s19, 0
    %p88 = por %p86, %p87
    %s90 = sadd.s32 %s89, 1
    %p93 = scmp.eq.s32.totalorder %s13, 1
    %p94 = scmp.ne.s32.totalorder %s89, %s91
    %p95 = scmp.eq.s32.totalorder %s13, 0
    %p96 = por %p94, %p95
    %p97 = scmp.ne.s32.totalorder %s89, %s91
    %p98 = scmp.eq.s32.totalorder %s18, 1
    %p99 = por %p97, %p98
    %p100 = scmp.ne.s32.totalorder %s91, %s92
    %p101 = scmp.eq.s32.totalorder %s18, 0
    %p102 = por %p100, %p101
    %p103 = scmp.ne.s32.totalorder %s91, %s92
    %p104 = scmp.eq.s32.totalorder %s19, 1
    %p105 = por %p103, %p104
    %p107 = scmp.ne.s32.totalorder %s92, %s106
    %p108 = scmp.eq.s32.totalorder %s19, 0
    %p109 = por %p107, %p108
    %s111 = sadd.s32 %s110, 1
    %p114 = scmp.eq.s32.totalorder %s13, 1
    %p115 = scmp.ne.s32.totalorder %s110, %s112
    %p116 = scmp.eq.s32.totalorder %s13, 0
    %p117 = por %p115, %p116
    %p118 = scmp.ne.s32.totalorder %s110, %s112
    %p119 = scmp.eq.s32.totalorder %s18, 1
    %p120 = por %p118, %p119
    %p121 = scmp.ne.s32.totalorder %s112, %s113
    %p122 = scmp.eq.s32.totalorder %s18, 0
    %p123 = por %p121, %p122
    %p124 = scmp.ne.s32.totalorder %s112, %s113
    %p125 = scmp.eq.s32.totalorder %s19, 1
    %p126 = por %p124, %p125
    %p128 = scmp.ne.s32.totalorder %s113, %s127
    %p129 = scmp.eq.s32.totalorder %s19, 0
    %p130 = por %p128, %p129
    %s132 = sadd.s32 %s131, 1
    %p135 = scmp.eq.s32.totalorder %s13, 1
    %p136 = scmp.ne.s32.totalorder %s131, %s133
    %p137 = scmp.eq.s32.totalorder %s13, 0
    %p138 = por %p136, %p137
    %p139 = scmp.ne.s32.totalorder %s131, %s133
    %p140 = scmp.eq.s32.totalorder %s18, 1
    %p141 = por %p139, %p140
    %p142 = scmp.ne.s32.totalorder %s133, %s134
    %p143 = scmp.eq.s32.totalorder %s18, 0
    %p144 = por %p142, %p143
    %p145 = scmp.ne.s32.totalorder %s133, %s134
    %p146 = scmp.eq.s32.totalorder %s19, 1
    %p147 = por %p145, %p146
    %p149 = scmp.ne.s32.totalorder %s134, %s148
    %p150 = scmp.eq.s32.totalorder %s19, 0
    %p151 = por %p149, %p150
    %s153 = sadd.s32 %s152, 1
    %p156 = scmp.eq.s32.totalorder %s13, 1
    %p157 = scmp.ne.s32.totalorder %s152, %s154
    %p158 = scmp.eq.s32.totalorder %s13, 0
    %p159 = por %p157, %p158
    %p160 = scmp.ne.s32.totalorder %s152, %s154
    %p161 = scmp.eq.s32.totalorder %s18, 1
    %p162 = por %p160, %p161
    %p163 = scmp.ne.s32.totalorder %s154, %s155
    %p164 = scmp.eq.s32.totalorder %s18, 0
    %p165 = por %p163, %p164
    %p166 = scmp.ne.s32.totalorder %s154, %s155
    %p167 = scmp.eq.s32.totalorder %s19, 1
    %p168 = por %p166, %p167
    %p170 = scmp.ne.s32.totalorder %s155, %s169
    %p171 = scmp.eq.s32.totalorder %s19, 0
    %p172 = por %p170, %p171
    %s173 = ssub.s32 %s13, %s20
    %p174 = scmp.eq.s32.totalorder %s173, 0
    %s176 = sadd.s32 %s175, 1
    %s177 = scalar_select %p174, %s175, %s176
    %p180 = pneg %p174
    %p181 = scmp.eq.s32.totalorder %s13, 1
    %p182 = por %p180, %p181
    %p183 = scmp.ne.s32.totalorder %s175, %s178
    %p184 = scmp.eq.s32.totalorder %s13, 0
    %p185 = por %p183, %p184
    %p186 = scmp.ne.s32.totalorder %s175, %s178
    %p187 = scmp.eq.s32.totalorder %s18, 1
    %p188 = por %p186, %p187
    %p189 = scmp.ne.s32.totalorder %s178, %s179
    %p190 = scmp.eq.s32.totalorder %s18, 0
    %p191 = por %p189, %p190
    %p192 = scmp.ne.s32.totalorder %s178, %s179
    %p193 = scmp.eq.s32.totalorder %s19, 1
    %p194 = por %p192, %p193
    %p196 = scmp.ne.s32.totalorder %s179, %s195
    %p197 = scmp.eq.s32.totalorder %s19, 0
    %p198 = por %p196, %p197
    %p199 = scmp.le.s32.totalorder 1, %s13
    %p200 = scmp.lt.s32.totalorder %s13, 3
    %p201 = pnand %p199, %p200
    %p202 = pneg %p201
    // Predicated region
    $region9: #{clay_decoder_forward.2} parent=5 // pred_check
      _
    $region10: #{clay_decoder_forward.2} parent=5 // pred_check_branch
      %204 = sbr.rel (%p201) target = $region12
    $region11: #{clay_decoder_forward.2} parent=5 // pred_region
      %s205 = ssub.s32 %s13, 1
      // Predicated region
      $region13: #{clay_decoder_forward.2} parent=11 // pred_check
        %p206 = pneg %p60
      $region14: #{clay_decoder_forward.2} parent=11 // pred_check_branch
        %208 = sbr.rel (%p206) target = $region16
      $region15: #{clay_decoder_forward.2} parent=11 // pred_region
        _
      $region16: #{clay_decoder_forward.2} parent=11 // pred_fallthru
        _
      // Predicated region
      $region17: #{clay_decoder_forward.2} parent=11 // pred_check
        %p209 = pneg %p81
      $region18: #{clay_decoder_forward.2} parent=11 // pred_check_branch
        %211 = sbr.rel (%p209) target = $region20
      $region19: #{clay_decoder_forward.2} parent=11 // pred_region
        _
      $region20: #{clay_decoder_forward.2} parent=11 // pred_fallthru
        _
      // Predicated region
      $region21: #{clay_decoder_forward.2} parent=11 // pred_check
        %p212 = pneg %p102
      $region22: #{clay_decoder_forward.2} parent=11 // pred_check_branch
        %214 = sbr.rel (%p212) target = $region24
      $region23: #{clay_decoder_forward.2} parent=11 // pred_region
        _
      $region24: #{clay_decoder_forward.2} parent=11 // pred_fallthru
        _
      // Predicated region
      $region25: #{clay_decoder_forward.2} parent=11 // pred_check
        %p215 = pneg %p123
      $region26: #{clay_decoder_forward.2} parent=11 // pred_check_branch
        %217 = sbr.rel (%p215) target = $region28
      $region27: #{clay_decoder_forward.2} parent=11 // pred_region
        _
      $region28: #{clay_decoder_forward.2} parent=11 // pred_fallthru
        _
      // Predicated region
      $region29: #{clay_decoder_forward.2} parent=11 // pred_check
        %p218 = pneg %p144
      $region30: #{clay_decoder_forward.2} parent=11 // pred_check_branch
        %220 = sbr.rel (%p218) target = $region32
      $region31: #{clay_decoder_forward.2} parent=11 // pred_region
        _
      $region32: #{clay_decoder_forward.2} parent=11 // pred_fallthru
        _
      // Predicated region
      $region33: #{clay_decoder_forward.2} parent=11 // pred_check
        %p221 = pneg %p165
      $region34: #{clay_decoder_forward.2} parent=11 // pred_check_branch
        %223 = sbr.rel (%p221) target = $region36
      $region35: #{clay_decoder_forward.2} parent=11 // pred_region
        _
      $region36: #{clay_decoder_forward.2} parent=11 // pred_fallthru
        _
    $region12: #{clay_decoder_forward.2} parent=5 // pred_fallthru
      _
    %p224 = scmp.lt.s32.totalorder %s13, 2
    // Predicated region
    $region37: #{clay_decoder_forward.2} parent=5 // pred_check
      %p225 = pneg %p224
    $region38: #{clay_decoder_forward.2} parent=5 // pred_check_branch
      %227 = sbr.rel (%p225) target = $region40
    $region39: #{clay_decoder_forward.2} parent=5 // pred_region
      // Predicated region
      $region41: #{clay_decoder_forward.2} parent=39 // pred_check
        %p228 = pneg %p33
      $region42: #{clay_decoder_forward.2} parent=39 // pred_check_branch
        %230 = sbr.rel (%p228) target = $region44
      $region43: #{clay_decoder_forward.2} parent=39 // pred_region
        %p231 = scmp.lt.s32.totalorder %s13, 1
        %s232 = scalar_select %p231, %s13, 1
        %s233 = smul.addr %s232, 3
        %s234 = smul.addr %s233, 8
        %s235 = scalar_lea.vmem %s0, %s234
      $region44: #{clay_decoder_forward.2} parent=39 // pred_fallthru
        _
    $region40: #{clay_decoder_forward.2} parent=5 // pred_fallthru
      _
    %p236 = scmp.le.s32.totalorder 1, %s13
    %p237 = scmp.lt.s32.totalorder %s13, 3
    %p238 = pnand %p236, %p237
    %p239 = pneg %p238
    // Predicated region
    $region45: #{clay_decoder_forward.2} parent=5 // pred_check
      _
    $region46: #{clay_decoder_forward.2} parent=5 // pred_check_branch
      %241 = sbr.rel (%p238) target = $region48
    $region47: #{clay_decoder_forward.2} parent=5 // pred_region
      %s242 = ssub.s32 %s13, 1
      %p243 = scmp.lt.s32.totalorder %s18, 1
      %s244 = scalar_select %p243, %s18, 1
      %s245 = smul.addr %s244, 3
      %s246 = smul.addr %s245, 8
      %s247 = scalar_lea.vmem %s0, %s246
      %p248 = pneg %p39
      %p249 = pneg %p36
      %p250 = pneg %p60
      %p251 = pneg %p57
      %p252 = pneg %p81
      %p253 = pneg %p78
      %p254 = pneg %p102
      %p255 = pneg %p99
      %p256 = pneg %p123
      %p257 = pneg %p120
      %p258 = pneg %p144
      %p259 = pneg %p141
      %p260 = pneg %p165
      %p261 = pneg %p162
      %p262 = pneg %p191
      %p263 = pneg %p188
      %p264 = scmp.lt.s32.totalorder %s18, 1
      %s265 = scalar_select %p264, %s18, 1
      %s266 = smul.addr %s265, 3
      %s267 = smul.addr %s266, 8
      %s268 = scalar_lea.vmem %s7, %s267
      %p269 = scmp.lt.s32.totalorder %s18, 1
      %s270 = scalar_select %p269, %s18, 1
      %s271 = smul.addr %s270, 3
      %s272 = smul.addr %s271, 8
      %s273 = scalar_lea.vmem %s0, %s272
      %p274 = scmp.lt.s32.totalorder %s18, 1
      %s275 = scalar_select %p274, %s18, 1
      %s276 = smul.addr %s275, 3
      %s277 = smul.addr %s276, 8
      %s278 = scalar_lea.vmem %s7, %s277
      %v280 = vld [vmem:[%s273] sm:$0xff]
      %v281 = vld [vmem:[%s273 + $0x8] sm:$0xff]
      %v282 = vld [vmem:[%s273 + $0x10] sm:$0x1]
      %v283 = vld [vmem:[%s5] sm:$0xff]
      %v284 = vld [vmem:[%s1] sm:$0xf]
      %v285 = vld [vmem:[%s1 + $0x4] sm:$0xf]
      %v286 = vld [vmem:[%s1 + $0x8] sm:$0xf]
      %v287 = vld [vmem:[%s1 + $0xc] sm:$0xf]
      %vm288 = vcmask 261120
      %v289 = vsel %vm288, %v280, 0.0
      %290 = vadd.xlane.f32.xlu0 %v289
      %v291 = vpop.xlane.xlu0 %290
      %v292 = vsel %vm288, %v281, 0.0
      %293 = vadd.xlane.f32.xlu0 %v292
      %v294 = vpop.xlane.xlu0 %293
      %vm295 = vcmask 253952
      %v296 = vsel %vm295, %v282, 0.0
      %297 = vadd.xlane.f32.xlu0 %v296
      %v298 = vpop.xlane.xlu0 %297
      %v299 = vrcp.pop 32.0
      %v300 = vmul.f32 %v291, %v299
      %v301 = vmul.f32 %v294, %v299
      %v302 = vmul.f32 %v298, %v299
      %v303 = vsub.f32 %v280, %v300
      %v304 = vsub.f32 %v281, %v301
      %v305 = vsub.f32 %v282, %v302
      %v306 = vmul.f32 %v303, %v303
      %v307 = vmul.f32 %v304, %v304
      %v308 = vmul.f32 %v305, %v305
      %v309 = vsel %vm288, %v306, 0.0
      %310 = vadd.xlane.f32.xlu0 %v309
      %v311 = vpop.xlane.xlu0 %310
      %v312 = vsel %vm288, %v307, 0.0
      %313 = vadd.xlane.f32.xlu0 %v312
      %v314 = vpop.xlane.xlu0 %313
      %v315 = vsel %vm295, %v308, 0.0
      %316 = vadd.xlane.f32.xlu0 %v315
      %v317 = vpop.xlane.xlu0 %316
      %v318 = vmul.f32 %v311, %v299
      %v319 = vmul.f32 %v314, %v299
      %v320 = vmul.f32 %v317, %v299
      %v321 = vadd.f32 %v318, 1e-05
      %v322 = vadd.f32 %v319, 1e-05
      %v323 = vadd.f32 %v320, 1e-05
      %v324 = vrsqrt.pop %v321
      %v325 = vrsqrt.pop %v322
      %v326 = vrsqrt.pop %v323
      %v327 = vmul.f32 %v303, %v324
      %v328 = vmul.f32 %v304, %v325
      %v329 = vmul.f32 %v305, %v326
      %v330 = vlaneseq
      %v331 = vshrl.u32 %v330, 7
      %v332 = vsub.s32 0, %v331
      %v333 = vrot.slane %v283, %v332
      %v334 = vmul.f32 %v327, %v333
      %v335 = vmul.f32 %v328, %v333
      %v336 = vmul.f32 %v329, %v333
      %v337 = vlaneseq
      %v338 = vshrl.u32 %v337, 7
      %v339 = vsub.s32 1, %v338
      %v340 = vrot.slane %v283, %v339
      %v341 = vadd.f32 %v334, %v340
      %v342 = vadd.f32 %v335, %v340
      %v343 = vadd.f32 %v336, %v340
      %v344 = vpack.c.bf16 %v342, %v341
      %v345 = vpack.c.bf16 %v343, %v343
      %v350 = vunpack.c.l.b16 %v284
      %v351 = vunpack.c.l.b16 %v285
      %v352 = vunpack.c.l.b16 %v286
      %v353 = vunpack.c.l.b16 %v287
      %v354 = vpack.c.b16 %v351, %v350
      %v355 = vpack.c.b16 %v353, %v352
      %v359 = vsel %vm288, %v344, 0
      %v362 = vsel %vm288, %v345, 0
      %364 = vmatprep.subr.bf16.mxu0 0
      %365 = vmatpush1.bf16.msra.mxu0 %v354
      %366 = vmatprep.subr.bf16.mxu0 0
      %367 = vmatpush1.bf16.msra.mxu0 %v355
      %368 = vmatprep.subr.bf16.mxu0 0
      %369 = vmatpush1.bf16.msra.mxu0 0
      %370 = vmatprep.subr.bf16.mxu0 0
      %371 = vmatpush1.bf16.msra.mxu0 0
      %372 = vmatprep.subr.bf16.mxu0 0
      %373 = vmatpush1.bf16.msra.mxu0 0
      %374 = vmatprep.subr.bf16.mxu0 0
      %375 = vmatpush1.bf16.msra.mxu0 0
      %376 = vmatprep.subr.bf16.mxu0 0
      %377 = vmatpush1.bf16.msra.mxu0 0
      %378 = vmatprep.subr.bf16.mxu0 0
      %379 = vmatpush1.bf16.msra.mxu0 0
      %380 = vmatprep.subr.bf16.mxu0 0
      %381 = vmatpush1.bf16.msra.mxu0 0
      %382 = vmatprep.subr.bf16.mxu0 0
      %383 = vmatpush1.bf16.msra.mxu0 0
      %384 = vmatprep.subr.bf16.mxu0 0
      %385 = vmatpush1.bf16.msra.mxu0 0
      %386 = vmatprep.subr.bf16.mxu0 0
      %387 = vmatpush1.bf16.msra.mxu0 0
      %388 = vmatprep.subr.bf16.mxu0 0
      %389 = vmatpush1.bf16.msra.mxu0 0
      %390 = vmatprep.subr.bf16.mxu0 0
      %391 = vmatpush1.bf16.msra.mxu0 0
      %392 = vmatprep.subr.bf16.mxu0 0
      %393 = vmatpush1.bf16.msra.mxu0 0
      %394 = vmatprep.subr.bf16.mxu0 0
      %395 = vmatpush1.bf16.msra.mxu0 0
      %396 = vmatprep.mubr.bf16.mxu0 0
      %397 = vmatmul.mubr.bf16.gmra.mrb[0].mxu0 %v359
      %v398 = vpop.f32.mrb[0].mxu0
      %v399 = vadd.f32 0.0, %v398
      %v400 = vpop.f32.mrb[0].mxu0
      %v401 = vpop.f32.mrb[0].mxu0
      %v402 = vadd.f32 0.0, %v401
      %v403 = vpop.f32.mrb[0].mxu0
      %404 = vmatprep.mubr.bf16.mxu0 0
      %405 = vmatmul.mubr.bf16.gmra.mrb[0].mxu0 %v362
      %v406 = vpop.f32.mrb[0].mxu0
      %v407 = vadd.f32 0.0, %v406
      %v408 = vpop.f32.mrb[0].mxu0
      %v409 = vpop.f32.mrb[0].mxu0
      %v410 = vpop.f32.mrb[0].mxu0
      %411 = vdwg.mxu0
      %415 = vrot.lane.b32.xlu0 %v399, 112
      %v416 = vpop.permute.xlu0 %415
      %417 = vrot.lane.b32.xlu0 %v402, 112
      %v418 = vpop.permute.xlu0 %417
      %419 = vrot.lane.b32.xlu0 %v407, 112
      %v420 = vpop.permute.xlu0 %419
      %v424 = vpack.c.bf16 %v402, %v399
      %v425 = vpack.c.bf16 %v407, %v407
      %v426 = vpack.c.bf16 %v418, %v416
      %v427 = vpack.c.bf16 %v420, %v420
      %430 = vrot.lane.b32.xlu0 %v424, 96
      %v431 = vpop.permute.xlu0 %430
      %432 = vrot.lane.b32.xlu0 %v425, 96
      %v433 = vpop.permute.xlu0 %432
      %vm434 = vcmask 130048
      %v436 = vsel %vm434, %v424, 0
      %v439 = vsel %vm434, %v425, 0
      %v442 = vsel %vm434, %v431, 0
      %v445 = vsel %vm434, %v433, 0
      %447 = vmatprep.subr.bf16.mxu0 0
      %448 = vmatpush1.bf16.xpose.msra.mxu0 %v442
      %449 = vmatprep.subr.bf16.mxu0 0
      %450 = vmatpush1.bf16.xpose.msra.mxu0 %v445
      %451 = vmatprep.subr.bf16.mxu0 0
      %452 = vmatpush1.bf16.xpose.msra.mxu0 0
      %453 = vmatprep.subr.bf16.mxu0 0
      %454 = vmatpush1.bf16.xpose.msra.mxu0 0
      %455 = vmatprep.subr.bf16.mxu0 0
      %456 = vmatpush1.bf16.xpose.msra.mxu0 0
      %457 = vmatprep.subr.bf16.mxu0 0
      %458 = vmatpush1.bf16.xpose.msra.mxu0 0
      %459 = vmatprep.subr.bf16.mxu0 0
      %460 = vmatpush1.bf16.xpose.msra.mxu0 0
      %461 = vmatprep.subr.bf16.mxu0 0
      %462 = vmatpush1.bf16.xpose.msra.mxu0 0
      %463 = vmatprep.subr.bf16.mxu0 0
      %464 = vmatpush1.bf16.xpose.msra.mxu0 0
      %465 = vmatprep.subr.bf16.mxu0 0
      %466 = vmatpush1.bf16.xpose.msra.mxu0 0
      %467 = vmatprep.subr.bf16.mxu0 0
      %468 = vmatpush1.bf16.xpose.msra.mxu0 0
      %469 = vmatprep.subr.bf16.mxu0 0
      %470 = vmatpush1.bf16.xpose.msra.mxu0 0
      %471 = vmatprep.subr.bf16.mxu0 0
      %472 = vmatpush1.bf16.xpose.msra.mxu0 0
      %473 = vmatprep.subr.bf16.mxu0 0
      %474 = vmatpush1.bf16.xpose.msra.mxu0 0
      %475 = vmatprep.subr.bf16.mxu0 0
      %476 = vmatpush1.bf16.xpose.msra.mxu0 0
      %477 = vmatprep.subr.bf16.mxu0 0
      %478 = vmatpush1.bf16.xpose.msra.mxu0 0
      %479 = vmatprep.mubr.bf16.mxu0 0
      %480 = vmatmul.mubr.bf16.gmra.mrb[0].mxu0 %v436
      %v481 = vpop.f32.mrb[0].mxu0
      %v482 = vadd.f32 0.0, %v481
      %v483 = vpop.f32.mrb[0].mxu0
      %v484 = vpop.f32.mrb[0].mxu0
      %v485 = vadd.f32 0.0, %v484
      %v486 = vpop.f32.mrb[0].mxu0
      %487 = vmatprep.mubr.bf16.mxu0 0
      %488 = vmatmul.mubr.bf16.gmra.mrb[0].mxu0 %v439
      %v489 = vpop.f32.mrb[0].mxu0
      %v490 = vadd.f32 0.0, %v489
      %v491 = vpop.f32.mrb[0].mxu0
      %v492 = vpop.f32.mrb[0].mxu0
      %v493 = vpop.f32.mrb[0].mxu0
      %494 = vdwg.mxu0
      %497 = vrot.lane.b32.xlu0 %v426, 96
      %v498 = vpop.permute.xlu0 %497
      %499 = vrot.lane.b32.xlu0 %v427, 96
      %v500 = vpop.permute.xlu0 %499
      %v502 = vsel %vm434, %v426, 0
      %v505 = vsel %vm434, %v427, 0
      %v508 = vsel %vm434, %v498, 0
      %v511 = vsel %vm434, %v500, 0
      %513 = vmatprep.subr.bf16.mxu0 0
      %514 = vmatpush1.bf16.xpose.msra.mxu0 %v508
      %515 = vmatprep.subr.bf16.mxu0 0
      %516 = vmatpush1.bf16.xpose.msra.mxu0 %v511
      %517 = vmatprep.subr.bf16.mxu0 0
      %518 = vmatpush1.bf16.xpose.msra.mxu0 0
      %519 = vmatprep.subr.bf16.mxu0 0
      %520 = vmatpush1.bf16.xpose.msra.mxu0 0
      %521 = vmatprep.subr.bf16.mxu0 0
      %522 = vmatpush1.bf16.xpose.msra.mxu0 0
      %523 = vmatprep.subr.bf16.mxu0 0
      %524 = vmatpush1.bf16.xpose.msra.mxu0 0
      %525 = vmatprep.subr.bf16.mxu0 0
      %526 = vmatpush1.bf16.xpose.msra.mxu0 0
      %527 = vmatprep.subr.bf16.mxu0 0
      %528 = vmatpush1.bf16.xpose.msra.mxu0 0
      %529 = vmatprep.subr.bf16.mxu0 0
      %530 = vmatpush1.bf16.xpose.msra.mxu0 0
      %531 = vmatprep.subr.bf16.mxu0 0
      %532 = vmatpush1.bf16.xpose.msra.mxu0 0
      %533 = vmatprep.subr.bf16.mxu0 0
      %534 = vmatpush1.bf16.xpose.msra.mxu0 0
      %535 = vmatprep.subr.bf16.mxu0 0
      %536 = vmatpush1.bf16.xpose.msra.mxu0 0
      %537 = vmatprep.subr.bf16.mxu0 0
      %538 = vmatpush1.bf16.xpose.msra.mxu0 0
      %539 = vmatprep.subr.bf16.mxu0 0
      %540 = vmatpush1.bf16.xpose.msra.mxu0 0
      %541 = vmatprep.subr.bf16.mxu0 0
      %542 = vmatpush1.bf16.xpose.msra.mxu0 0
      %543 = vmatprep.subr.bf16.mxu0 0
      %544 = vmatpush1.bf16.xpose.msra.mxu0 0
      %545 = vmatprep.mubr.bf16.mxu0 0
      %546 = vmatmul.mubr.bf16.gmra.mrb[0].mxu0 %v502
      %v547 = vpop.f32.mrb[0].mxu0
      %v548 = vadd.f32 0.0, %v547
      %v549 = vpop.f32.mrb[0].mxu0
      %v550 = vpop.f32.mrb[0].mxu0
      %v551 = vadd.f32 0.0, %v550
      %v552 = vpop.f32.mrb[0].mxu0
      %553 = vmatprep.mubr.bf16.mxu0 0
      %554 = vmatmul.mubr.bf16.gmra.mrb[0].mxu0 %v505
      %v555 = vpop.f32.mrb[0].mxu0
      %v556 = vadd.f32 0.0, %v555
      %v557 = vpop.f32.mrb[0].mxu0
      %v558 = vpop.f32.mrb[0].mxu0
      %v559 = vpop.f32.mrb[0].mxu0
      %560 = vdwg.mxu0
      %v561 = vmul.f32 %v482, 0.25
      %v562 = vmul.f32 %v485, 0.25
      %v563 = vmul.f32 %v490, 0.25
      %v564 = vmul.f32 %v548, 0.25
      %v565 = vmul.f32 %v551, 0.25
      %v566 = vmul.f32 %v556, 0.25
      %vm567 = vcmask 138240
      %v568 = vsel %vm567, %v561, -inf
      %569 = vmax.xlane.f32.xlu0 %v568
      %v570 = vpop.xlane.xlu0 %569
      %v571 = vsel %vm567, %v562, -inf
      %572 = vmax.xlane.f32.xlu0 %v571
      %v573 = vpop.xlane.xlu0 %572
      %vm574 = vcmask 131072
      %v575 = vsel %vm574, %v563, -inf
      %576 = vmax.xlane.f32.xlu0 %v575
      %v577 = vpop.xlane.xlu0 %576
      %v578 = vsel %vm567, %v564, -inf
      %579 = vmax.xlane.f32.xlu0 %v578
      %v580 = vpop.xlane.xlu0 %579
      %v581 = vsel %vm567, %v565, -inf
      %582 = vmax.xlane.f32.xlu0 %v581
      %v583 = vpop.xlane.xlu0 %582
      %v584 = vsel %vm574, %v566, -inf
      %585 = vmax.xlane.f32.xlu0 %v584
      %v586 = vpop.xlane.xlu0 %585
      %v587 = vsub.f32 %v561, %v570
      %v588 = vsub.f32 %v562, %v573
      %v589 = vsub.f32 %v563, %v577
      %v590 = vsub.f32 %v564, %v580
      %v591 = vsub.f32 %v565, %v583
      %v592 = vsub.f32 %v566, %v586
      %v593 = vmul.f32 %v587, 1.442695
      %v594 = vpow.pop %v593
      %v595 = vmul.f32 %v588, 1.442695
      %v596 = vpow.pop %v595
      %v597 = vmul.f32 %v589, 1.442695
      %v598 = vpow.pop %v597
      %v599 = vmul.f32 %v590, 1.442695
      %v600 = vpow.pop %v599
      %v601 = vmul.f32 %v591, 1.442695
      %v602 = vpow.pop %v601
      %v603 = vmul.f32 %v592, 1.442695
      %v604 = vpow.pop %v603
      %v605 = vsel %vm567, %v594, 0.0
      %606 = vadd.xlane.f32.xlu0 %v605
      %v607 = vpop.xlane.xlu0 %606
      %v608 = vsel %vm567, %v596, 0.0
      %609 = vadd.xlane.f32.xlu0 %v608
      %v610 = vpop.xlane.xlu0 %609
      %v611 = vsel %vm574, %v598, 0.0
      %612 = vadd.xlane.f32.xlu0 %v611
      %v613 = vpop.xlane.xlu0 %612
      %v614 = vsel %vm567, %v600, 0.0
      %615 = vadd.xlane.f32.xlu0 %v614
      %v616 = vpop.xlane.xlu0 %615
      %v617 = vsel %vm567, %v602, 0.0
      %618 = vadd.xlane.f32.xlu0 %v617
      %v619 = vpop.xlane.xlu0 %618
      %v620 = vsel %vm574, %v604, 0.0
      %621 = vadd.xlane.f32.xlu0 %v620
      %v622 = vpop.xlane.xlu0 %621
      %v623 = vrcp.pop %v607
      %v624 = vrcp.pop %v610
      %v625 = vrcp.pop %v613
      %v626 = vrcp.pop %v616
      %v627 = vrcp.pop %v619
      %v628 = vrcp.pop %v622
      %v629 = vmul.f32 %v594, %v623
      %v630 = vmul.f32 %v596, %v624
      %v631 = vmul.f32 %v598, %v625
      %v632 = vmul.f32 %v600, %v626
      %v633 = vmul.f32 %v602, %v627
      %v634 = vmul.f32 %v604, %v628
      %v635 = vpack.c.bf16 %v630, %v629
      %v636 = vpack.c.bf16 %v631, %v631
      %v637 = vpack.c.bf16 %v633, %v632
      %v638 = vpack.c.bf16 %v634, %v634
      %639 = vrot.lane.b32.xlu0 %v424, 64
      %v640 = vpop.permute.xlu0 %639
      %641 = vrot.lane.b32.xlu0 %v425, 64
      %v642 = vpop.permute.xlu0 %641
      %v645 = vsel %vm567, %v635, 0
      %v648 = vsel %vm567, %v636, 0
      %vm650 = vcmask 1040384
      %v651 = vsel 0, 4294967295, 65535
      %v652 = vsel %vm650, %v651, 0
      %v654 = vand.u32 %v642, %v652
      %656 = vmatprep.subr.bf16.mxu0 0
      %657 = vmatpush1.bf16.msra.mxu0 %v640
      %658 = vmatprep.subr.bf16.mxu0 0
      %659 = vmatpush1.bf16.msra.mxu0 %v654
      %660 = vmatprep.subr.bf16.mxu0 0
      %661 = vmatpush1.bf16.msra.mxu0 0
      %662 = vmatprep.subr.bf16.mxu0 0
      %663 = vmatpush1.bf16.msra.mxu0 0
      %664 = vmatprep.subr.bf16.mxu0 0
      %665 = vmatpush1.bf16.msra.mxu0 0
      %666 = vmatprep.subr.bf16.mxu0 0
      %667 = vmatpush1.bf16.msra.mxu0 0
      %668 = vmatprep.subr.bf16.mxu0 0
      %669 = vmatpush1.bf16.msra.mxu0 0
      %670 = vmatprep.subr.bf16.mxu0 0
      %671 = vmatpush1.bf16.msra.mxu0 0
      %672 = vmatprep.subr.bf16.mxu0 0
      %673 = vmatpush1.bf16.msra.mxu0 0
      %674 = vmatprep.subr.bf16.mxu0 0
      %675 = vmatpush1.bf16.msra.mxu0 0
      %676 = vmatprep.subr.bf16.mxu0 0
      %677 = vmatpush1.bf16.msra.mxu0 0
      %678 = vmatprep.subr.bf16.mxu0 0
      %679 = vmatpush1.bf16.msra.mxu0 0
      %680 = vmatprep.subr.bf16.mxu0 0
      %681 = vmatpush1.bf16.msra.mxu0 0
      %682 = vmatprep.subr.bf16.mxu0 0
      %683 = vmatpush1.bf16.msra.mxu0 0
      %684 = vmatprep.subr.bf16.mxu0 0
      %685 = vmatpush1.bf16.msra.mxu0 0
      %686 = vmatprep.subr.bf16.mxu0 0
      %687 = vmatpush1.bf16.msra.mxu0 0
      %688 = vmatprep.mubr.bf16.mxu0 0
      %689 = vmatmul.mubr.bf16.gmra.mrb[0].mxu0 %v645
      %v690 = vpop.f32.mrb[0].mxu0
      %v691 = vadd.f32 0.0, %v690
      %v692 = vpop.f32.mrb[0].mxu0
      %v693 = vpop.f32.mrb[0].mxu0
      %v694 = vadd.f32 0.0, %v693
      %v695 = vpop.f32.mrb[0].mxu0
      %696 = vmatprep.mubr.bf16.mxu0 0
      %697 = vmatmul.mubr.bf16.gmra.mrb[0].mxu0 %v648
      %v698 = vpop.f32.mrb[0].mxu0
      %v699 = vadd.f32 0.0, %v698
      %v700 = vpop.f32.mrb[0].mxu0
      %v701 = vpop.f32.mrb[0].mxu0
      %v702 = vpop.f32.mrb[0].mxu0
      %703 = vdwg.mxu0
      %704 = vrot.lane.b32.xlu0 %v426, 64
      %v705 = vpop.permute.xlu0 %704
      %706 = vrot.lane.b32.xlu0 %v427, 64
      %v707 = vpop.permute.xlu0 %706
      %v710 = vsel %vm567, %v637, 0
      %v713 = vsel %vm567, %v638, 0
      %v716 = vand.u32 %v707, %v652
      %718 = vmatprep.subr.bf16.mxu0 0
      %719 = vmatpush1.bf16.msra.mxu0 %v705
      %720 = vmatprep.subr.bf16.mxu0 0
      %721 = vmatpush1.bf16.msra.mxu0 %v716
      %722 = vmatprep.subr.bf16.mxu0 0
      %723 = vmatpush1.bf16.msra.mxu0 0
      %724 = vmatprep.subr.bf16.mxu0 0
      %725 = vmatpush1.bf16.msra.mxu0 0
      %726 = vmatprep.subr.bf16.mxu0 0
      %727 = vmatpush1.bf16.msra.mxu0 0
      %728 = vmatprep.subr.bf16.mxu0 0
      %729 = vmatpush1.bf16.msra.mxu0 0
      %730 = vmatprep.subr.bf16.mxu0 0
      %731 = vmatpush1.bf16.msra.mxu0 0
      %732 = vmatprep.subr.bf16.mxu0 0
      %733 = vmatpush1.bf16.msra.mxu0 0
      %734 = vmatprep.subr.bf16.mxu0 0
      %735 = vmatpush1.bf16.msra.mxu0 0
      %736 = vmatprep.subr.bf16.mxu0 0
      %737 = vmatpush1.bf16.msra.mxu0 0
      %738 = vmatprep.subr.bf16.mxu0 0
      %739 = vmatpush1.bf16.msra.mxu0 0
      %740 = vmatprep.subr.bf16.mxu0 0
      %741 = vmatpush1.bf16.msra.mxu0 0
      %742 = vmatprep.subr.bf16.mxu0 0
      %743 = vmatpush1.bf16.msra.mxu0 0
      %744 = vmatprep.subr.bf16.mxu0 0
      %745 = vmatpush1.bf16.msra.mxu0 0
      %746 = vmatprep.subr.bf16.mxu0 0
      %747 = vmatpush1.bf16.msra.mxu0 0
      %748 = vmatprep.subr.bf16.mxu0 0
      %749 = vmatpush1.bf16.msra.mxu0 0
      %750 = vmatprep.mubr.bf16.mxu0 0
      %751 = vmatmul.mubr.bf16.gmra.mrb[0].mxu0 %v710
      %v752 = vpop.f32.mrb[0].mxu0
      %v753 = vadd.f32 0.0, %v752
      %v754 = vpop.f32.mrb[0].mxu0
      %v755 = vpop.f32.mrb[0].mxu0
      %v756 = vadd.f32 0.0, %v755
      %v757 = vpop.f32.mrb[0].mxu0
      %758 = vmatprep.mubr.bf16.mxu0 0
      %759 = vmatmul.mubr.bf16.gmra.mrb[0].mxu0 %v713
      %v760 = vpop.f32.mrb[0].mxu0
      %v761 = vadd.f32 0.0, %v760
      %v762 = vpop.f32.mrb[0].mxu0
      %v763 = vpop.f32.mrb[0].mxu0
      %v764 = vpop.f32.mrb[0].mxu0
      %765 = vdwg.mxu0
      %769 = vrot.lane.b32.xlu0 %v753, 16
      %v770 = vpop.permute.xlu0 %769
      %771 = vrot.lane.b32.xlu0 %v756, 16
      %v772 = vpop.permute.xlu0 %771
      %773 = vrot.lane.b32.xlu0 %v761, 16
      %v774 = vpop.permute.xlu0 %773
      %v778 = vsel %vm434, %v691, %v770
      %v779 = vsel %vm434, %v694, %v772
      %v780 = vsel %vm434, %v699, %v774
      %v781 = vpack.c.bf16 %v779, %v778
      %v782 = vpack.c.bf16 %v780, %v780
      %783 = vrot.lane.b32.xlu0 %v354, 32
      %v784 = vpop.permute.xlu0 %783
      %785 = vrot.lane.b32.xlu0 %v355, 32
      %v786 = vpop.permute.xlu0 %785
      %v790 = vsel %vm288, %v781, 0
      %v793 = vsel %vm288, %v782, 0
      %795 = vmatprep.subr.bf16.mxu0 0
      %796 = vmatpush1.bf16.msra.mxu0 %v784
      %797 = vmatprep.subr.bf16.mxu0 0
      %798 = vmatpush1.bf16.msra.mxu0 %v786
      %799 = vmatprep.subr.bf16.mxu0 0
      %800 = vmatpush1.bf16.msra.mxu0 0
      %801 = vmatprep.subr.bf16.mxu0 0
      %802 = vmatpush1.bf16.msra.mxu0 0
      %803 = vmatprep.subr.bf16.mxu0 0
      %804 = vmatpush1.bf16.msra.mxu0 0
      %805 = vmatprep.subr.bf16.mxu0 0
      %806 = vmatpush1.bf16.msra.mxu0 0
      %807 = vmatprep.subr.bf16.mxu0 0
      %808 = vmatpush1.bf16.msra.mxu0 0
      %809 = vmatprep.subr.bf16.mxu0 0
      %810 = vmatpush1.bf16.msra.mxu0 0
      %811 = vmatprep.subr.bf16.mxu0 0
      %812 = vmatpush1.bf16.msra.mxu0 0
      %813 = vmatprep.subr.bf16.mxu0 0
      %814 = vmatpush1.bf16.msra.mxu0 0
      %815 = vmatprep.subr.bf16.mxu0 0
      %816 = vmatpush1.bf16.msra.mxu0 0
      %817 = vmatprep.subr.bf16.mxu0 0
      %818 = vmatpush1.bf16.msra.mxu0 0
      %819 = vmatprep.subr.bf16.mxu0 0
      %820 = vmatpush1.bf16.msra.mxu0 0
      %821 = vmatprep.subr.bf16.mxu0 0
      %822 = vmatpush1.bf16.msra.mxu0 0
      %823 = vmatprep.subr.bf16.mxu0 0
      %824 = vmatpush1.bf16.msra.mxu0 0
      %825 = vmatprep.subr.bf16.mxu0 0
      %826 = vmatpush1.bf16.msra.mxu0 0
      %827 = vmatprep.mubr.bf16.mxu0 0
      %828 = vmatmul.mubr.bf16.gmra.mrb[0].mxu0 %v790
      %v829 = vpop.f32.mrb[0].mxu0
      %v830 = vadd.f32 0.0, %v829
      %v831 = vpop.f32.mrb[0].mxu0
      %v832 = vpop.f32.mrb[0].mxu0
      %v833 = vadd.f32 0.0, %v832
      %v834 = vpop.f32.mrb[0].mxu0
      %835 = vmatprep.mubr.bf16.mxu0 0
      %836 = vmatmul.mubr.bf16.gmra.mrb[0].mxu0 %v793
      %v837 = vpop.f32.mrb[0].mxu0
      %v838 = vadd.f32 0.0, %v837
      %v839 = vpop.f32.mrb[0].mxu0
      %v840 = vpop.f32.mrb[0].mxu0
      %v841 = vpop.f32.mrb[0].mxu0
      %842 = vdwg.mxu0
      %v843 = vadd.f32 %v280, %v830
      %v844 = vadd.f32 %v281, %v833
      %v845 = vadd.f32 %v282, %v838
      %v846 = vsel %vm288, %v843, 0.0
      %847 = vadd.xlane.f32.xlu0 %v846
      %v848 = vpop.xlane.xlu0 %847
      %v849 = vsel %vm288, %v844, 0.0
      %850 = vadd.xlane.f32.xlu0 %v849
      %v851 = vpop.xlane.xlu0 %850
      %v852 = vsel %vm295, %v845, 0.0
      %853 = vadd.xlane.f32.xlu0 %v852
      %v854 = vpop.xlane.xlu0 %853
      %v855 = vmul.f32 %v848, %v299
      %v856 = vmul.f32 %v851, %v299
      %v857 = vmul.f32 %v854, %v299
      %v858 = vsub.f32 %v843, %v855
      %v859 = vsub.f32 %v844, %v856
      %v860 = vsub.f32 %v845, %v857
      %v861 = vmul.f32 %v858, %v858
      %v862 = vmul.f32 %v859, %v859
      %v863 = vmul.f32 %v860, %v860
      %v864 = vsel %vm288, %v861, 0.0
      %865 = vadd.xlane.f32.xlu0 %v864
      %v866 = vpop.xlane.xlu0 %865
      %v867 = vsel %vm288, %v862, 0.0
      %868 = vadd.xlane.f32.xlu0 %v867
      %v869 = vpop.xlane.xlu0 %868
      %v870 = vsel %vm295, %v863, 0.0
      %871 = vadd.xlane.f32.xlu0 %v870
      %v872 = vpop.xlane.xlu0 %871
      %v873 = vmul.f32 %v866, %v299
      %v874 = vmul.f32 %v869, %v299
      %v875 = vmul.f32 %v872, %v299
      %v876 = vadd.f32 %v873, 1e-05
      %v877 = vadd.f32 %v874, 1e-05
      %v878 = vadd.f32 %v875, 1e-05
      %v879 = vrsqrt.pop %v876
      %v880 = vrsqrt.pop %v877
      %v881 = vrsqrt.pop %v878
      %v882 = vmul.f32 %v858, %v879
      %v883 = vmul.f32 %v859, %v880
      %v884 = vmul.f32 %v860, %v881
      %v885 = vlaneseq
      %v886 = vshrl.u32 %v885, 7
      %v887 = vsub.s32 2, %v886
      %v888 = vrot.slane %v283, %v887
      %v889 = vmul.f32 %v882, %v888
      %v890 = vmul.f32 %v883, %v888
      %v891 = vmul.f32 %v884, %v888
      %v892 = vlaneseq
      %v893 = vshrl.u32 %v892, 7
      %v894 = vsub.s32 3, %v893
      %v895 = vrot.slane %v283, %v894
      %v896 = vadd.f32 %v889, %v895
      %v897 = vadd.f32 %v890, %v895
      %v898 = vadd.f32 %v891, %v895
      %v899 = vpack.c.bf16 %v897, %v896
      %v900 = vpack.c.bf16 %v898, %v898
      %v901 = vld [vmem:[%s2] sm:$0xf]
      %v902 = vld [vmem:[%s2 + $0x4] sm:$0xf]
      %v903 = vld [vmem:[%s2 + $0x8] sm:$0xf]
      %v904 = vld [vmem:[%s2 + $0xc] sm:$0xf]
      %v905 = vld [vmem:[%s3] sm:$0x1]
      %v907 = vlaneseq
      %v908 = vshrl.u32 %v907, 7
      %v909 = vsub.s32 0, %v908
      %v910 = vrot.slane %v905, %v909
      %v916 = vunpack.c.l.b16 %v901
      %v917 = vunpack.c.l.b16 %v902
      %v918 = vunpack.c.l.b16 %v903
      %v919 = vunpack.c.l.b16 %v904
      %v920 = vpack.c.b16 %v917, %v916
      %v921 = vpack.c.b16 %v919, %v918
      %v925 = vsel %vm288, %v899, 0
      %v928 = vsel %vm288, %v900, 0
      %930 = vmatprep.subr.bf16.mxu0 0
      %931 = vmatpush1.bf16.msra.mxu0 %v920
      %932 = vmatprep.subr.bf16.mxu0 0
      %933 = vmatpush1.bf16.msra.mxu0 %v921
      %934 = vmatprep.subr.bf16.mxu0 0
      %935 = vmatpush1.bf16.msra.mxu0 0
      %936 = vmatprep.subr.bf16.mxu0 0
      %937 = vmatpush1.bf16.msra.mxu0 0
      %938 = vmatprep.subr.bf16.mxu0 0
      %939 = vmatpush1.bf16.msra.mxu0 0
      %940 = vmatprep.subr.bf16.mxu0 0
      %941 = vmatpush1.bf16.msra.mxu0 0
      %942 = vmatprep.subr.bf16.mxu0 0
      %943 = vmatpush1.bf16.msra.mxu0 0
      %944 = vmatprep.subr.bf16.mxu0 0
      %945 = vmatpush1.bf16.msra.mxu0 0
      %946 = vmatprep.subr.bf16.mxu0 0
      %947 = vmatpush1.bf16.msra.mxu0 0
      %948 = vmatprep.subr.bf16.mxu0 0
      %949 = vmatpush1.bf16.msra.mxu0 0
      %950 = vmatprep.subr.bf16.mxu0 0
      %951 = vmatpush1.bf16.msra.mxu0 0
      %952 = vmatprep.subr.bf16.mxu0 0
      %953 = vmatpush1.bf16.msra.mxu0 0
      %954 = vmatprep.subr.bf16.mxu0 0
      %955 = vmatpush1.bf16.msra.mxu0 0
      %956 = vmatprep.subr.bf16.mxu0 0
      %957 = vmatpush1.bf16.msra.mxu0 0
      %958 = vmatprep.subr.bf16.mxu0 0
      %959 = vmatpush1.bf16.msra.mxu0 0
      %960 = vmatprep.subr.bf16.mxu0 0
      %961 = vmatpush1.bf16.msra.mxu0 0
      %962 = vmatprep.mubr.bf16.mxu0 0
      %963 = vmatmul.mubr.bf16.gmra.mrb[0].mxu0 %v925
      %v964 = vpop.f32.mrb[0].mxu0
      %v965 = vadd.f32 %v910, %v964
      %v966 = vpop.f32.mrb[0].mxu0
      %v967 = vpop.f32.mrb[0].mxu0
      %v968 = vadd.f32 %v910, %v967
      %v969 = vpop.f32.mrb[0].mxu0
      %970 = vmatprep.mubr.bf16.mxu0 0
      %971 = vmatmul.mubr.bf16.gmra.mrb[0].mxu0 %v928
      %v972 = vpop.f32.mrb[0].mxu0
      %v973 = vadd.f32 %v910, %v972
      %v974 = vpop.f32.mrb[0].mxu0
      %v975 = vpop.f32.mrb[0].mxu0
      %v976 = vpop.f32.mrb[0].mxu0
      %977 = vdwg.mxu0
      %v978 = vmul.f32 %v965, 0.5
      %v979 = vmul.f32 %v968, 0.5
      %v980 = vmul.f32 %v973, 0.5
      %v981 = vmul.f32 %v965, 0.70710677
      %v982 = vmul.f32 %v968, 0.70710677
      %v983 = vmul.f32 %v973, 0.70710677
      %v984 = vand.u32 2147483647, %v981
      %v985 = vand.u32 2147483647, %v982
      %v986 = vand.u32 2147483647, %v983
      %v987 = vmul.f32 %v984, 0.3275911
      %v988 = vmul.f32 %v985, 0.3275911
      %v989 = vmul.f32 %v986, 0.3275911
      %v990 = vadd.f32 %v987, 1.0
      %v991 = vadd.f32 %v988, 1.0
      %v992 = vadd.f32 %v989, 1.0
      %v993 = vrcp.pop %v990
      %v994 = vmul.f32 1.0, %v993
      %v995 = vrcp.pop %v991
      %v996 = vmul.f32 1.0, %v995
      %v997 = vrcp.pop %v992
      %v998 = vmul.f32 1.0, %v997
      %v999 = vmul.f32 %v994, 1.0614054
      %v1000 = vmul.f32 %v996, 1.0614054
      %v1001 = vmul.f32 %v998, 1.0614054
      %v1002 = vadd.f32 %v999, -1.4531521
      %v1003 = vadd.f32 %v1000, -1.4531521
      %v1004 = vadd.f32 %v1001, -1.4531521
      %v1005 = vmul.f32 %v1002, %v994
      %v1006 = vmul.f32 %v1003, %v996
      %v1007 = vmul.f32 %v1004, %v998
      %v1008 = vadd.f32 %v1005, 1.4214138
      %v1009 = vadd.f32 %v1006, 1.4214138
      %v1010 = vadd.f32 %v1007, 1.4214138
      %v1011 = vmul.f32 %v1008, %v994
      %v1012 = vmul.f32 %v1009, %v996
      %v1013 = vmul.f32 %v1010, %v998
      %v1014 = vadd.f32 %v1011, -0.28449672
      %v1015 = vadd.f32 %v1012, -0.28449672
      %v1016 = vadd.f32 %v1013, -0.28449672
      %v1017 = vmul.f32 %v1014, %v994
      %v1018 = vmul.f32 %v1015, %v996
      %v1019 = vmul.f32 %v1016, %v998
      %v1020 = vadd.f32 %v1017, 0.2548296
      %v1021 = vadd.f32 %v1018, 0.2548296
      %v1022 = vadd.f32 %v1019, 0.2548296
      %v1023 = vmul.f32 %v1020, %v994
      %v1024 = vmul.f32 %v1021, %v996
      %v1025 = vmul.f32 %v1022, %v998
      %v1026 = vsub.f32 0.0, %v984
      %v1027 = vsub.f32 0.0, %v985
      %v1028 = vsub.f32 0.0, %v986
      %v1029 = vmul.f32 %v1026, %v984
      %v1030 = vmul.f32 %v1027, %v985
      %v1031 = vmul.f32 %v1028, %v986
      %v1032 = vmul.f32 %v1029, 1.442695
      %v1033 = vpow.pop %v1032
      %v1034 = vmul.f32 %v1030, 1.442695
      %v1035 = vpow.pop %v1034
      %v1036 = vmul.f32 %v1031, 1.442695
      %v1037 = vpow.pop %v1036
      %v1038 = vmul.f32 %v1023, %v1033
      %v1039 = vmul.f32 %v1024, %v1035
      %v1040 = vmul.f32 %v1025, %v1037
      %v1041 = vsub.f32 1.0, %v1038
      %v1042 = vsub.f32 1.0, %v1039
      %v1043 = vsub.f32 1.0, %v1040
      %vm1044 = vcmp.lt.f32.partialorder %v981, 0.0
      %vm1045 = vcmp.lt.f32.partialorder %v982, 0.0
      %vm1046 = vcmp.lt.f32.partialorder %v983, 0.0
      %v1047 = vsub.f32 0.0, %v1041
      %v1048 = vsub.f32 0.0, %v1042
      %v1049 = vsub.f32 0.0, %v1043
      %v1050 = vsel %vm1044, %v1047, %v1041
      %v1051 = vsel %vm1045, %v1048, %v1042
      %v1052 = vsel %vm1046, %v1049, %v1043
      %v1053 = vadd.f32 %v1050, 1.0
      %v1054 = vadd.f32 %v1051, 1.0
      %v1055 = vadd.f32 %v1052, 1.0
      %v1056 = vmul.f32 %v978, %v1053
      %v1057 = vmul.f32 %v979, %v1054
      %v1058 = vmul.f32 %v980, %v1055
      %v1059 = vpack.c.bf16 %v1057, %v1056
      %v1060 = vpack.c.bf16 %v1058, %v1058
      %v1061 = vld [vmem:[%s4] sm:$0xf]
      %v1062 = vld [vmem:[%s4 + $0x4] sm:$0xf]
      %v1063 = vld [vmem:[%s4 + $0x8] sm:$0xf]
      %v1064 = vld [vmem:[%s4 + $0xc] sm:$0xf]
      %v1065 = vld [vmem:[%s4 + $0x10] sm:$0xf]
      %v1066 = vld [vmem:[%s4 + $0x14] sm:$0xf]
      %v1067 = vld [vmem:[%s4 + $0x18] sm:$0xf]
      %v1068 = vld [vmem:[%s4 + $0x1c] sm:$0xf]
      %v1077 = vunpack.c.l.b16 %v1061
      %v1078 = vunpack.c.l.b16 %v1062
      %v1079 = vunpack.c.l.b16 %v1063
      %v1080 = vunpack.c.l.b16 %v1064
      %v1081 = vunpack.c.l.b16 %v1065
      %v1082 = vunpack.c.l.b16 %v1066
      %v1083 = vunpack.c.l.b16 %v1067
      %v1084 = vunpack.c.l.b16 %v1068
      %v1085 = vpack.c.b16 %v1078, %v1077
      %v1086 = vpack.c.b16 %v1080, %v1079
      %v1087 = vpack.c.b16 %v1082, %v1081
      %v1088 = vpack.c.b16 %v1084, %v1083
      %vm1093 = vcmask 523264
      %v1095 = vsel %vm1093, %v1059, 0
      %v1098 = vsel %vm1093, %v1060, 0
      %1100 = vmatprep.subr.bf16.mxu0 0
      %1101 = vmatpush1.bf16.msra.mxu0 %v1085
      %1102 = vmatprep.subr.bf16.mxu0 0
      %1103 = vmatpush1.bf16.msra.mxu0 %v1086
      %1104 = vmatprep.subr.bf16.mxu0 0
      %1105 = vmatpush1.bf16.msra.mxu0 %v1087
      %1106 = vmatprep.subr.bf16.mxu0 0
      %1107 = vmatpush1.bf16.msra.mxu0 %v1088
      %1108 = vmatprep.subr.bf16.mxu0 0
      %1109 = vmatpush1.bf16.msra.mxu0 0
      %1110 = vmatprep.subr.bf16.mxu0 0
      %1111 = vmatpush1.bf16.msra.mxu0 0
      %1112 = vmatprep.subr.bf16.mxu0 0
      %1113 = vmatpush1.bf16.msra.mxu0 0
      %1114 = vmatprep.subr.bf16.mxu0 0
      %1115 = vmatpush1.bf16.msra.mxu0 0
      %1116 = vmatprep.subr.bf16.mxu0 0
      %1117 = vmatpush1.bf16.msra.mxu0 0
      %1118 = vmatprep.subr.bf16.mxu0 0
      %1119 = vmatpush1.bf16.msra.mxu0 0
      %1120 = vmatprep.subr.bf16.mxu0 0
      %1121 = vmatpush1.bf16.msra.mxu0 0
      %1122 = vmatprep.subr.bf16.mxu0 0
      %1123 = vmatpush1.bf16.msra.mxu0 0
      %1124 = vmatprep.subr.bf16.mxu0 0
      %1125 = vmatpush1.bf16.msra.mxu0 0
      %1126 = vmatprep.subr.bf16.mxu0 0
      %1127 = vmatpush1.bf16.msra.mxu0 0
      %1128 = vmatprep.subr.bf16.mxu0 0
      %1129 = vmatpush1.bf16.msra.mxu0 0
      %1130 = vmatprep.subr.bf16.mxu0 0
      %1131 = vmatpush1.bf16.msra.mxu0 0
      %1132 = vmatprep.mubr.bf16.mxu0 0
      %1133 = vmatmul.mubr.bf16.gmra.mrb[0].mxu0 %v1095
      %v1134 = vpop.f32.mrb[0].mxu0
      %v1135 = vadd.f32 0.0, %v1134
      %v1136 = vpop.f32.mrb[0].mxu0
      %v1137 = vpop.f32.mrb[0].mxu0
      %v1138 = vadd.f32 0.0, %v1137
      %v1139 = vpop.f32.mrb[0].mxu0
      %1140 = vmatprep.mubr.bf16.mxu0 0
      %1141 = vmatmul.mubr.bf16.gmra.mrb[0].mxu0 %v1098
      %v1142 = vpop.f32.mrb[0].mxu0
      %v1143 = vadd.f32 0.0, %v1142
      %v1144 = vpop.f32.mrb[0].mxu0
      %v1145 = vpop.f32.mrb[0].mxu0
      %v1146 = vpop.f32.mrb[0].mxu0
      %1147 = vdwg.mxu0
      %v1148 = vadd.f32 %v843, %v1135
      %v1149 = vadd.f32 %v844, %v1138
      %v1150 = vadd.f32 %v845, %v1143
      %v1151 = vlaneseq
      %v1152 = vshrl.u32 %v1151, 7
      %v1153 = vsub.s32 4, %v1152
      %v1154 = vrot.slane %v283, %v1153
      %v1155 = vadd.f32 %v1148, %v1154
      %v1156 = vadd.f32 %v1149, %v1154
      %v1157 = vadd.f32 %v1150, %v1154
      %s1158 = scalar_lea.vmem %s5, 8
      %v1159 = vld [vmem:[%s1158] sm:$0xff]
      %s1160 = scalar_lea.vmem %s1, 16
      %v1161 = vld [vmem:[%s1160] sm:$0xf]
      %v1162 = vld [vmem:[%s1160 + $0x4] sm:$0xf]
      %v1163 = vld [vmem:[%s1160 + $0x8] sm:$0xf]
      %v1164 = vld [vmem:[%s1160 + $0xc] sm:$0xf]
      %v1165 = vsel %vm288, %v1155, 0.0
      %1166 = vadd.xlane.f32.xlu0 %v1165
      %v1167 = vpop.xlane.xlu0 %1166
      %v1168 = vsel %vm288, %v1156, 0.0
      %1169 = vadd.xlane.f32.xlu0 %v1168
      %v1170 = vpop.xlane.xlu0 %1169
      %v1171 = vsel %vm295, %v1157, 0.0
      %1172 = vadd.xlane.f32.xlu0 %v1171
      %v1173 = vpop.xlane.xlu0 %1172
      %v1174 = vmul.f32 %v1167, %v299
      %v1175 = vmul.f32 %v1170, %v299
      %v1176 = vmul.f32 %v1173, %v299
      %v1177 = vsub.f32 %v1155, %v1174
      %v1178 = vsub.f32 %v1156, %v1175
      %v1179 = vsub.f32 %v1157, %v1176
      %v1180 = vmul.f32 %v1177, %v1177
      %v1181 = vmul.f32 %v1178, %v1178
      %v1182 = vmul.f32 %v1179, %v1179
      %v1183 = vsel %vm288, %v1180, 0.0
      %1184 = vadd.xlane.f32.xlu0 %v1183
      %v1185 = vpop.xlane.xlu0 %1184
      %v1186 = vsel %vm288, %v1181, 0.0
      %1187 = vadd.xlane.f32.xlu0 %v1186
      %v1188 = vpop.xlane.xlu0 %1187
      %v1189 = vsel %vm295, %v1182, 0.0
      %1190 = vadd.xlane.f32.xlu0 %v1189
      %v1191 = vpop.xlane.xlu0 %1190
      %v1192 = vmul.f32 %v1185, %v299
      %v1193 = vmul.f32 %v1188, %v299
      %v1194 = vmul.f32 %v1191, %v299
      %v1195 = vadd.f32 %v1192, 1e-05
      %v1196 = vadd.f32 %v1193, 1e-05
      %v1197 = vadd.f32 %v1194, 1e-05
      %v1198 = vrsqrt.pop %v1195
      %v1199 = vrsqrt.pop %v1196
      %v1200 = vrsqrt.pop %v1197
      %v1201 = vmul.f32 %v1177, %v1198
      %v1202 = vmul.f32 %v1178, %v1199
      %v1203 = vmul.f32 %v1179, %v1200
      %v1204 = vlaneseq
      %v1205 = vshrl.u32 %v1204, 7
      %v1206 = vsub.s32 0, %v1205
      %v1207 = vrot.slane %v1159, %v1206
      %v1208 = vmul.f32 %v1201, %v1207
      %v1209 = vmul.f32 %v1202, %v1207
      %v1210 = vmul.f32 %v1203, %v1207
      %v1211 = vlaneseq
      %v1212 = vshrl.u32 %v1211, 7
      %v1213 = vsub.s32 1, %v1212
      %v1214 = vrot.slane %v1159, %v1213
      %v1215 = vadd.f32 %v1208, %v1214
      %v1216 = vadd.f32 %v1209, %v1214
      %v1217 = vadd.f32 %v1210, %v1214
      %v1218 = vpack.c.bf16 %v1216, %v1215
      %v1219 = vpack.c.bf16 %v1217, %v1217
      %v1224 = vunpack.c.l.b16 %v1161
      %v1225 = vunpack.c.l.b16 %v1162
      %v1226 = vunpack.c.l.b16 %v1163
      %v1227 = vunpack.c.l.b16 %v1164
      %v1228 = vpack.c.b16 %v1225, %v1224
      %v1229 = vpack.c.b16 %v1227, %v1226
      %v1233 = vsel %vm288, %v1218, 0
      %v1236 = vsel %vm288, %v1219, 0
      %1238 = vmatprep.subr.bf16.mxu0 0
      %1239 = vmatpush1.bf16.msra.mxu0 %v1228
      %1240 = vmatprep.subr.bf16.mxu0 0
      %1241 = vmatpush1.bf16.msra.mxu0 %v1229
      %1242 = vmatprep.subr.bf16.mxu0 0
      %1243 = vmatpush1.bf16.msra.mxu0 0
      %1244 = vmatprep.subr.bf16.mxu0 0
      %1245 = vmatpush1.bf16.msra.mxu0 0
      %1246 = vmatprep.subr.bf16.mxu0 0
      %1247 = vmatpush1.bf16.msra.mxu0 0
      %1248 = vmatprep.subr.bf16.mxu0 0
      %1249 = vmatpush1.bf16.msra.mxu0 0
      %1250 = vmatprep.subr.bf16.mxu0 0
      %1251 = vmatpush1.bf16.msra.mxu0 0
      %1252 = vmatprep.subr.bf16.mxu0 0
      %1253 = vmatpush1.bf16.msra.mxu0 0
      %1254 = vmatprep.subr.bf16.mxu0 0
      %1255 = vmatpush1.bf16.msra.mxu0 0
      %1256 = vmatprep.subr.bf16.mxu0 0
      %1257 = vmatpush1.bf16.msra.mxu0 0
      %1258 = vmatprep.subr.bf16.mxu0 0
      %1259 = vmatpush1.bf16.msra.mxu0 0
      %1260 = vmatprep.subr.bf16.mxu0 0
      %1261 = vmatpush1.bf16.msra.mxu0 0
      %1262 = vmatprep.subr.bf16.mxu0 0
      %1263 = vmatpush1.bf16.msra.mxu0 0
      %1264 = vmatprep.subr.bf16.mxu0 0
      %1265 = vmatpush1.bf16.msra.mxu0 0
      %1266 = vmatprep.subr.bf16.mxu0 0
      %1267 = vmatpush1.bf16.msra.mxu0 0
      %1268 = vmatprep.subr.bf16.mxu0 0
      %1269 = vmatpush1.bf16.msra.mxu0 0
      %1270 = vmatprep.mubr.bf16.mxu0 0
      %1271 = vmatmul.mubr.bf16.gmra.mrb[0].mxu0 %v1233
      %v1272 = vpop.f32.mrb[0].mxu0
      %v1273 = vadd.f32 0.0, %v1272
      %v1274 = vpop.f32.mrb[0].mxu0
      %v1275 = vpop.f32.mrb[0].mxu0
      %v1276 = vadd.f32 0.0, %v1275
      %v1277 = vpop.f32.mrb[0].mxu0
      %1278 = vmatprep.mubr.bf16.mxu0 0
      %1279 = vmatmul.mubr.bf16.gmra.mrb[0].mxu0 %v1236
      %v1280 = vpop.f32.mrb[0].mxu0
      %v1281 = vadd.f32 0.0, %v1280
      %v1282 = vpop.f32.mrb[0].mxu0
      %v1283 = vpop.f32.mrb[0].mxu0
      %v1284 = vpop.f32.mrb[0].mxu0
      %1285 = vdwg.mxu0
      %1289 = vrot.lane.b32.xlu0 %v1273, 112
      %v1290 = vpop.permute.xlu0 %1289
      %1291 = vrot.lane.b32.xlu0 %v1276, 112
      %v1292 = vpop.permute.xlu0 %1291
      %1293 = vrot.lane.b32.xlu0 %v1281, 112
      %v1294 = vpop.permute.xlu0 %1293
      %v1298 = vpack.c.bf16 %v1276, %v1273
      %v1299 = vpack.c.bf16 %v1281, %v1281
      %v1300 = vpack.c.bf16 %v1292, %v1290
      %v1301 = vpack.c.bf16 %v1294, %v1294
      %1304 = vrot.lane.b32.xlu0 %v1298, 96
      %v1305 = vpop.permute.xlu0 %1304
      %1306 = vrot.lane.b32.xlu0 %v1299, 96
      %v1307 = vpop.permute.xlu0 %1306
      %v1309 = vsel %vm434, %v1298, 0
      %v1312 = vsel %vm434, %v1299, 0
      %v1315 = vsel %vm434, %v1305, 0
      %v1318 = vsel %vm434, %v1307, 0
      %1320 = vmatprep.subr.bf16.mxu0 0
      %1321 = vmatpush1.bf16.xpose.msra.mxu0 %v1315
      %1322 = vmatprep.subr.bf16.mxu0 0
      %1323 = vmatpush1.bf16.xpose.msra.mxu0 %v1318
      %1324 = vmatprep.subr.bf16.mxu0 0
      %1325 = vmatpush1.bf16.xpose.msra.mxu0 0
      %1326 = vmatprep.subr.bf16.mxu0 0
      %1327 = vmatpush1.bf16.xpose.msra.mxu0 0
      %1328 = vmatprep.subr.bf16.mxu0 0
      %1329 = vmatpush1.bf16.xpose.msra.mxu0 0
      %1330 = vmatprep.subr.bf16.mxu0 0
      %1331 = vmatpush1.bf16.xpose.msra.mxu0 0
      %1332 = vmatprep.subr.bf16.mxu0 0
      %1333 = vmatpush1.bf16.xpose.msra.mxu0 0
      %1334 = vmatprep.subr.bf16.mxu0 0
      %1335 = vmatpush1.bf16.xpose.msra.mxu0 0
      %1336 = vmatprep.subr.bf16.mxu0 0
      %1337 = vmatpush1.bf16.xpose.msra.mxu0 0
      %1338 = vmatprep.subr.bf16.mxu0 0
      %1339 = vmatpush1.bf16.xpose.msra.mxu0 0
      %1340 = vmatprep.subr.bf16.mxu0 0
      %1341 = vmatpush1.bf16.xpose.msra.mxu0 0
      %1342 = vmatprep.subr.bf16.mxu0 0
      %1343 = vmatpush1.bf16.xpose.msra.mxu0 0
      %1344 = vmatprep.subr.bf16.mxu0 0
      %1345 = vmatpush1.bf16.xpose.msra.mxu0 0
      %1346 = vmatprep.subr.bf16.mxu0 0
      %1347 = vmatpush1.bf16.xpose.msra.mxu0 0
      %1348 = vmatprep.subr.bf16.mxu0 0
      %1349 = vmatpush1.bf16.xpose.msra.mxu0 0
      %1350 = vmatprep.subr.bf16.mxu0 0
      %1351 = vmatpush1.bf16.xpose.msra.mxu0 0
      %1352 = vmatprep.mubr.bf16.mxu0 0
      %1353 = vmatmul.mubr.bf16.gmra.mrb[0].mxu0 %v1309
      %v1354 = vpop.f32.mrb[0].mxu0
      %v1355 = vadd.f32 0.0, %v1354
      %v1356 = vpop.f32.mrb[0].mxu0
      %v1357 = vpop.f32.mrb[0].mxu0
      %v1358 = vadd.f32 0.0, %v1357
      %v1359 = vpop.f32.mrb[0].mxu0
      %1360 = vmatprep.mubr.bf16.mxu0 0
      %1361 = vmatmul.mubr.bf16.gmra.mrb[0].mxu0 %v1312
      %v1362 = vpop.f32.mrb[0].mxu0
      %v1363 = vadd.f32 0.0, %v1362
      %v1364 = vpop.f32.mrb[0].mxu0
      %v1365 = vpop.f32.mrb[0].mxu0
      %v1366 = vpop.f32.mrb[0].mxu0
      %1367 = vdwg.mxu0
      %1370 = vrot.lane.b32.xlu0 %v1300, 96
      %v1371 = vpop.permute.xlu0 %1370
      %1372 = vrot.lane.b32.xlu0 %v1301, 96
      %v1373 = vpop.permute.xlu0 %1372
      %v1375 = vsel %vm434, %v1300, 0
      %v1378 = vsel %vm434, %v1301, 0
      %v1381 = vsel %vm434, %v1371, 0
      %v1384 = vsel %vm434, %v1373, 0
      %1386 = vmatprep.subr.bf16.mxu0 0
      %1387 = vmatpush1.bf16.xpose.msra.mxu0 %v1381
      %1388 = vmatprep.subr.bf16.mxu0 0
      %1389 = vmatpush1.bf16.xpose.msra.mxu0 %v1384
      %1390 = vmatprep.subr.bf16.mxu0 0
      %1391 = vmatpush1.bf16.xpose.msra.mxu0 0
      %1392 = vmatprep.subr.bf16.mxu0 0
      %1393 = vmatpush1.bf16.xpose.msra.mxu0 0
      %1394 = vmatprep.subr.bf16.mxu0 0
      %1395 = vmatpush1.bf16.xpose.msra.mxu0 0
      %1396 = vmatprep.subr.bf16.mxu0 0
      %1397 = vmatpush1.bf16.xpose.msra.mxu0 0
      %1398 = vmatprep.subr.bf16.mxu0 0
      %1399 = vmatpush1.bf16.xpose.msra.mxu0 0
      %1400 = vmatprep.subr.bf16.mxu0 0
      %1401 = vmatpush1.bf16.xpose.msra.mxu0 0
      %1402 = vmatprep.subr.bf16.mxu0 0
      %1403 = vmatpush1.bf16.xpose.msra.mxu0 0
      %1404 = vmatprep.subr.bf16.mxu0 0
      %1405 = vmatpush1.bf16.xpose.msra.mxu0 0
      %1406 = vmatprep.subr.bf16.mxu0 0
      %1407 = vmatpush1.bf16.xpose.msra.mxu0 0
      %1408 = vmatprep.subr.bf16.mxu0 0
      %1409 = vmatpush1.bf16.xpose.msra.mxu0 0
      %1410 = vmatprep.subr.bf16.mxu0 0
      %1411 = vmatpush1.bf16.xpose.msra.mxu0 0
      %1412 = vmatprep.subr.bf16.mxu0 0
      %1413 = vmatpush1.bf16.xpose.msra.mxu0 0
      %1414 = vmatprep.subr.bf16.mxu0 0
      %1415 = vmatpush1.bf16.xpose.msra.mxu0 0
      %1416 = vmatprep.subr.bf16.mxu0 0
      %1417 = vmatpush1.bf16.xpose.msra.mxu0 0
      %1418 = vmatprep.mubr.bf16.mxu0 0
      %1419 = vmatmul.mubr.bf16.gmra.mrb[0].mxu0 %v1375
      %v1420 = vpop.f32.mrb[0].mxu0
      %v1421 = vadd.f32 0.0, %v1420
      %v1422 = vpop.f32.mrb[0].mxu0
      %v1423 = vpop.f32.mrb[0].mxu0
      %v1424 = vadd.f32 0.0, %v1423
      %v1425 = vpop.f32.mrb[0].mxu0
      %1426 = vmatprep.mubr.bf16.mxu0 0
      %1427 = vmatmul.mubr.bf16.gmra.mrb[0].mxu0 %v1378
      %v1428 = vpop.f32.mrb[0].mxu0
      %v1429 = vadd.f32 0.0, %v1428
      %v1430 = vpop.f32.mrb[0].mxu0
      %v1431 = vpop.f32.mrb[0].mxu0
      %v1432 = vpop.f32.mrb[0].mxu0
      %1433 = vdwg.mxu0
      %v1434 = vmul.f32 %v1355, 0.25
      %v1435 = vmul.f32 %v1358, 0.25
      %v1436 = vmul.f32 %v1363, 0.25
      %v1437 = vmul.f32 %v1421, 0.25
      %v1438 = vmul.f32 %v1424, 0.25
      %v1439 = vmul.f32 %v1429, 0.25
      %v1440 = vsel %vm567, %v1434, -inf
      %1441 = vmax.xlane.f32.xlu0 %v1440
      %v1442 = vpop.xlane.xlu0 %1441
      %v1443 = vsel %vm567, %v1435, -inf
      %1444 = vmax.xlane.f32.xlu0 %v1443
      %v1445 = vpop.xlane.xlu0 %1444
      %v1446 = vsel %vm574, %v1436, -inf
      %1447 = vmax.xlane.f32.xlu0 %v1446
      %v1448 = vpop.xlane.xlu0 %1447
      %v1449 = vsel %vm567, %v1437, -inf
      %1450 = vmax.xlane.f32.xlu0 %v1449
      %v1451 = vpop.xlane.xlu0 %1450
      %v1452 = vsel %vm567, %v1438, -inf
      %1453 = vmax.xlane.f32.xlu0 %v1452
      %v1454 = vpop.xlane.xlu0 %1453
      %v1455 = vsel %vm574, %v1439, -inf
      %1456 = vmax.xlane.f32.xlu0 %v1455
      %v1457 = vpop.xlane.xlu0 %1456
      %v1458 = vsub.f32 %v1434, %v1442
      %v1459 = vsub.f32 %v1435, %v1445
      %v1460 = vsub.f32 %v1436, %v1448
      %v1461 = vsub.f32 %v1437, %v1451
      %v1462 = vsub.f32 %v1438, %v1454
      %v1463 = vsub.f32 %v1439, %v1457
      %v1464 = vmul.f32 %v1458, 1.442695
      %v1465 = vpow.pop %v1464
      %v1466 = vmul.f32 %v1459, 1.442695
      %v1467 = vpow.pop %v1466
      %v1468 = vmul.f32 %v1460, 1.442695
      %v1469 = vpow.pop %v1468
      %v1470 = vmul.f32 %v1461, 1.442695
      %v1471 = vpow.pop %v1470
      %v1472 = vmul.f32 %v1462, 1.442695
      %v1473 = vpow.pop %v1472
      %v1474 = vmul.f32 %v1463, 1.442695
      %v1475 = vpow.pop %v1474
      %v1476 = vsel %vm567, %v1465, 0.0
      %1477 = vadd.xlane.f32.xlu0 %v1476
      %v1478 = vpop.xlane.xlu0 %1477
      %v1479 = vsel %vm567, %v1467, 0.0
      %1480 = vadd.xlane.f32.xlu0 %v1479
      %v1481 = vpop.xlane.xlu0 %1480
      %v1482 = vsel %vm574, %v1469, 0.0
      %1483 = vadd.xlane.f32.xlu0 %v1482
      %v1484 = vpop.xlane.xlu0 %1483
      %v1485 = vsel %vm567, %v1471, 0.0
      %1486 = vadd.xlane.f32.xlu0 %v1485
      %v1487 = vpop.xlane.xlu0 %1486
      %v1488 = vsel %vm567, %v1473, 0.0
      %1489 = vadd.xlane.f32.xlu0 %v1488
      %v1490 = vpop.xlane.xlu0 %1489
      %v1491 = vsel %vm574, %v1475, 0.0
      %1492 = vadd.xlane.f32.xlu0 %v1491
      %v1493 = vpop.xlane.xlu0 %1492
      %v1494 = vrcp.pop %v1478
      %v1495 = vrcp.pop %v1481
      %v1496 = vrcp.pop %v1484
      %v1497 = vrcp.pop %v1487
      %v1498 = vrcp.pop %v1490
      %v1499 = vrcp.pop %v1493
      %v1500 = vmul.f32 %v1465, %v1494
      %v1501 = vmul.f32 %v1467, %v1495
      %v1502 = vmul.f32 %v1469, %v1496
      %v1503 = vmul.f32 %v1471, %v1497
      %v1504 = vmul.f32 %v1473, %v1498
      %v1505 = vmul.f32 %v1475, %v1499
      %v1506 = vpack.c.bf16 %v1501, %v1500
      %v1507 = vpack.c.bf16 %v1502, %v1502
      %v1508 = vpack.c.bf16 %v1504, %v1503
      %v1509 = vpack.c.bf16 %v1505, %v1505
      %1510 = vrot.lane.b32.xlu0 %v1298, 64
      %v1511 = vpop.permute.xlu0 %1510
      %1512 = vrot.lane.b32.xlu0 %v1299, 64
      %v1513 = vpop.permute.xlu0 %1512
      %v1516 = vsel %vm567, %v1506, 0
      %v1519 = vsel %vm567, %v1507, 0
      %v1522 = vand.u32 %v1513, %v652
      %1524 = vmatprep.subr.bf16.mxu0 0
      %1525 = vmatpush1.bf16.msra.mxu0 %v1511
      %1526 = vmatprep.subr.bf16.mxu0 0
      %1527 = vmatpush1.bf16.msra.mxu0 %v1522
      %1528 = vmatprep.subr.bf16.mxu0 0
      %1529 = vmatpush1.bf16.msra.mxu0 0
      %1530 = vmatprep.subr.bf16.mxu0 0
      %1531 = vmatpush1.bf16.msra.mxu0 0
      %1532 = vmatprep.subr.bf16.mxu0 0
      %1533 = vmatpush1.bf16.msra.mxu0 0
      %1534 = vmatprep.subr.bf16.mxu0 0
      %1535 = vmatpush1.bf16.msra.mxu0 0
      %1536 = vmatprep.subr.bf16.mxu0 0
      %1537 = vmatpush1.bf16.msra.mxu0 0
      %1538 = vmatprep.subr.bf16.mxu0 0
      %1539 = vmatpush1.bf16.msra.mxu0 0
      %1540 = vmatprep.subr.bf16.mxu0 0
      %1541 = vmatpush1.bf16.msra.mxu0 0
      %1542 = vmatprep.subr.bf16.mxu0 0
      %1543 = vmatpush1.bf16.msra.mxu0 0
      %1544 = vmatprep.subr.bf16.mxu0 0
      %1545 = vmatpush1.bf16.msra.mxu0 0
      %1546 = vmatprep.subr.bf16.mxu0 0
      %1547 = vmatpush1.bf16.msra.mxu0 0
      %1548 = vmatprep.subr.bf16.mxu0 0
      %1549 = vmatpush1.bf16.msra.mxu0 0
      %1550 = vmatprep.subr.bf16.mxu0 0
      %1551 = vmatpush1.bf16.msra.mxu0 0
      %1552 = vmatprep.subr.bf16.mxu0 0
      %1553 = vmatpush1.bf16.msra.mxu0 0
      %1554 = vmatprep.subr.bf16.mxu0 0
      %1555 = vmatpush1.bf16.msra.mxu0 0
      %1556 = vmatprep.mubr.bf16.mxu0 0
      %1557 = vmatmul.mubr.bf16.gmra.mrb[0].mxu0 %v1516
      %v1558 = vpop.f32.mrb[0].mxu0
      %v1559 = vadd.f32 0.0, %v1558
      %v1560 = vpop.f32.mrb[0].mxu0
      %v1561 = vpop.f32.mrb[0].mxu0
      %v1562 = vadd.f32 0.0, %v1561
      %v1563 = vpop.f32.mrb[0].mxu0
      %1564 = vmatprep.mubr.bf16.mxu0 0
      %1565 = vmatmul.mubr.bf16.gmra.mrb[0].mxu0 %v1519
      %v1566 = vpop.f32.mrb[0].mxu0
      %v1567 = vadd.f32 0.0, %v1566
      %v1568 = vpop.f32.mrb[0].mxu0
      %v1569 = vpop.f32.mrb[0].mxu0
      %v1570 = vpop.f32.mrb[0].mxu0
      %1571 = vdwg.mxu0
      %1572 = vrot.lane.b32.xlu0 %v1300, 64
      %v1573 = vpop.permute.xlu0 %1572
      %1574 = vrot.lane.b32.xlu0 %v1301, 64
      %v1575 = vpop.permute.xlu0 %1574
      %v1578 = vsel %vm567, %v1508, 0
      %v1581 = vsel %vm567, %v1509, 0
      %v1584 = vand.u32 %v1575, %v652
      %1586 = vmatprep.subr.bf16.mxu0 0
      %1587 = vmatpush1.bf16.msra.mxu0 %v1573
      %1588 = vmatprep.subr.bf16.mxu0 0
      %1589 = vmatpush1.bf16.msra.mxu0 %v1584
      %1590 = vmatprep.subr.bf16.mxu0 0
      %1591 = vmatpush1.bf16.msra.mxu0 0
      %1592 = vmatprep.subr.bf16.mxu0 0
      %1593 = vmatpush1.bf16.msra.mxu0 0
      %1594 = vmatprep.subr.bf16.mxu0 0
      %1595 = vmatpush1.bf16.msra.mxu0 0
      %1596 = vmatprep.subr.bf16.mxu0 0
      %1597 = vmatpush1.bf16.msra.mxu0 0
      %1598 = vmatprep.subr.bf16.mxu0 0
      %1599 = vmatpush1.bf16.msra.mxu0 0
      %1600 = vmatprep.subr.bf16.mxu0 0
      %1601 = vmatpush1.bf16.msra.mxu0 0
      %1602 = vmatprep.subr.bf16.mxu0 0
      %1603 = vmatpush1.bf16.msra.mxu0 0
      %1604 = vmatprep.subr.bf16.mxu0 0
      %1605 = vmatpush1.bf16.msra.mxu0 0
      %1606 = vmatprep.subr.bf16.mxu0 0
      %1607 = vmatpush1.bf16.msra.mxu0 0
      %1608 = vmatprep.subr.bf16.mxu0 0
      %1609 = vmatpush1.bf16.msra.mxu0 0
      %1610 = vmatprep.subr.bf16.mxu0 0
      %1611 = vmatpush1.bf16.msra.mxu0 0
      %1612 = vmatprep.subr.bf16.mxu0 0
      %1613 = vmatpush1.bf16.msra.mxu0 0
      %1614 = vmatprep.subr.bf16.mxu0 0
      %1615 = vmatpush1.bf16.msra.mxu0 0
      %1616 = vmatprep.subr.bf16.mxu0 0
      %1617 = vmatpush1.bf16.msra.mxu0 0
      %1618 = vmatprep.mubr.bf16.mxu0 0
      %1619 = vmatmul.mubr.bf16.gmra.mrb[0].mxu0 %v1578
      %v1620 = vpop.f32.mrb[0].mxu0
      %v1621 = vadd.f32 0.0, %v1620
      %v1622 = vpop.f32.mrb[0].mxu0
      %v1623 = vpop.f32.mrb[0].mxu0
      %v1624 = vadd.f32 0.0, %v1623
      %v1625 = vpop.f32.mrb[0].mxu0
      %1626 = vmatprep.mubr.bf16.mxu0 0
      %1627 = vmatmul.mubr.bf16.gmra.mrb[0].mxu0 %v1581
      %v1628 = vpop.f32.mrb[0].mxu0
      %v1629 = vadd.f32 0.0, %v1628
      %v1630 = vpop.f32.mrb[0].mxu0
      %v1631 = vpop.f32.mrb[0].mxu0
      %v1632 = vpop.f32.mrb[0].mxu0
      %1633 = vdwg.mxu0
      %1637 = vrot.lane.b32.xlu0 %v1621, 16
      %v1638 = vpop.permute.xlu0 %1637
      %1639 = vrot.lane.b32.xlu0 %v1624, 16
      %v1640 = vpop.permute.xlu0 %1639
      %1641 = vrot.lane.b32.xlu0 %v1629, 16
      %v1642 = vpop.permute.xlu0 %1641
      %v1646 = vsel %vm434, %v1559, %v1638
      %v1647 = vsel %vm434, %v1562, %v1640
      %v1648 = vsel %vm434, %v1567, %v1642
      %v1649 = vpack.c.bf16 %v1647, %v1646
      %v1650 = vpack.c.bf16 %v1648, %v1648
      %1651 = vrot.lane.b32.xlu0 %v1228, 32
      %v1652 = vpop.permute.xlu0 %1651
      %1653 = vrot.lane.b32.xlu0 %v1229, 32
      %v1654 = vpop.permute.xlu0 %1653
      %v1658 = vsel %vm288, %v1649, 0
      %v1661 = vsel %vm288, %v1650, 0
      %1663 = vmatprep.subr.bf16.mxu0 0
      %1664 = vmatpush1.bf16.msra.mxu0 %v1652
      %1665 = vmatprep.subr.bf16.mxu0 0
      %1666 = vmatpush1.bf16.msra.mxu0 %v1654
      %1667 = vmatprep.subr.bf16.mxu0 0
      %1668 = vmatpush1.bf16.msra.mxu0 0
      %1669 = vmatprep.subr.bf16.mxu0 0
      %1670 = vmatpush1.bf16.msra.mxu0 0
      %1671 = vmatprep.subr.bf16.mxu0 0
      %1672 = vmatpush1.bf16.msra.mxu0 0
      %1673 = vmatprep.subr.bf16.mxu0 0
      %1674 = vmatpush1.bf16.msra.mxu0 0
      %1675 = vmatprep.subr.bf16.mxu0 0
      %1676 = vmatpush1.bf16.msra.mxu0 0
      %1677 = vmatprep.subr.bf16.mxu0 0
      %1678 = vmatpush1.bf16.msra.mxu0 0
      %1679 = vmatprep.subr.bf16.mxu0 0
      %1680 = vmatpush1.bf16.msra.mxu0 0
      %1681 = vmatprep.subr.bf16.mxu0 0
      %1682 = vmatpush1.bf16.msra.mxu0 0
      %1683 = vmatprep.subr.bf16.mxu0 0
      %1684 = vmatpush1.bf16.msra.mxu0 0
      %1685 = vmatprep.subr.bf16.mxu0 0
      %1686 = vmatpush1.bf16.msra.mxu0 0
      %1687 = vmatprep.subr.bf16.mxu0 0
      %1688 = vmatpush1.bf16.msra.mxu0 0
      %1689 = vmatprep.subr.bf16.mxu0 0
      %1690 = vmatpush1.bf16.msra.mxu0 0
      %1691 = vmatprep.subr.bf16.mxu0 0
      %1692 = vmatpush1.bf16.msra.mxu0 0
      %1693 = vmatprep.subr.bf16.mxu0 0
      %1694 = vmatpush1.bf16.msra.mxu0 0
      %1695 = vmatprep.mubr.bf16.mxu0 0
      %1696 = vmatmul.mubr.bf16.gmra.mrb[0].mxu0 %v1658
      %v1697 = vpop.f32.mrb[0].mxu0
      %v1698 = vadd.f32 0.0, %v1697
      %v1699 = vpop.f32.mrb[0].mxu0
      %v1700 = vpop.f32.mrb[0].mxu0
      %v1701 = vadd.f32 0.0, %v1700
      %v1702 = vpop.f32.mrb[0].mxu0
      %1703 = vmatprep.mubr.bf16.mxu0 0
      %1704 = vmatmul.mubr.bf16.gmra.mrb[0].mxu0 %v1661
      %v1705 = vpop.f32.mrb[0].mxu0
      %v1706 = vadd.f32 0.0, %v1705
      %v1707 = vpop.f32.mrb[0].mxu0
      %v1708 = vpop.f32.mrb[0].mxu0
      %v1709 = vpop.f32.mrb[0].mxu0
      %1710 = vdwg.mxu0
      %v1711 = vadd.f32 %v1155, %v1698
      %v1712 = vadd.f32 %v1156, %v1701
      %v1713 = vadd.f32 %v1157, %v1706
      %v1714 = vsel %vm288, %v1711, 0.0
      %1715 = vadd.xlane.f32.xlu0 %v1714
      %v1716 = vpop.xlane.xlu0 %1715
      %v1717 = vsel %vm288, %v1712, 0.0
      %1718 = vadd.xlane.f32.xlu0 %v1717
      %v1719 = vpop.xlane.xlu0 %1718
      %v1720 = vsel %vm295, %v1713, 0.0
      %1721 = vadd.xlane.f32.xlu0 %v1720
      %v1722 = vpop.xlane.xlu0 %1721
      %v1723 = vmul.f32 %v1716, %v299
      %v1724 = vmul.f32 %v1719, %v299
      %v1725 = vmul.f32 %v1722, %v299
      %v1726 = vsub.f32 %v1711, %v1723
      %v1727 = vsub.f32 %v1712, %v1724
      %v1728 = vsub.f32 %v1713, %v1725
      %v1729 = vmul.f32 %v1726, %v1726
      %v1730 = vmul.f32 %v1727, %v1727
      %v1731 = vmul.f32 %v1728, %v1728
      %v1732 = vsel %vm288, %v1729, 0.0
      %1733 = vadd.xlane.f32.xlu0 %v1732
      %v1734 = vpop.xlane.xlu0 %1733
      %v1735 = vsel %vm288, %v1730, 0.0
      %1736 = vadd.xlane.f32.xlu0 %v1735
      %v1737 = vpop.xlane.xlu0 %1736
      %v1738 = vsel %vm295, %v1731, 0.0
      %1739 = vadd.xlane.f32.xlu0 %v1738
      %v1740 = vpop.xlane.xlu0 %1739
      %v1741 = vmul.f32 %v1734, %v299
      %v1742 = vmul.f32 %v1737, %v299
      %v1743 = vmul.f32 %v1740, %v299
      %v1744 = vadd.f32 %v1741, 1e-05
      %v1745 = vadd.f32 %v1742, 1e-05
      %v1746 = vadd.f32 %v1743, 1e-05
      %v1747 = vrsqrt.pop %v1744
      %v1748 = vrsqrt.pop %v1745
      %v1749 = vrsqrt.pop %v1746
      %v1750 = vmul.f32 %v1726, %v1747
      %v1751 = vmul.f32 %v1727, %v1748
      %v1752 = vmul.f32 %v1728, %v1749
      %v1753 = vlaneseq
      %v1754 = vshrl.u32 %v1753, 7
      %v1755 = vsub.s32 2, %v1754
      %v1756 = vrot.slane %v1159, %v1755
      %v1757 = vmul.f32 %v1750, %v1756
      %v1758 = vmul.f32 %v1751, %v1756
      %v1759 = vmul.f32 %v1752, %v1756
      %v1760 = vlaneseq
      %v1761 = vshrl.u32 %v1760, 7
      %v1762 = vsub.s32 3, %v1761
      %v1763 = vrot.slane %v1159, %v1762
      %v1764 = vadd.f32 %v1757, %v1763
      %v1765 = vadd.f32 %v1758, %v1763
      %v1766 = vadd.f32 %v1759, %v1763
      %v1767 = vpack.c.bf16 %v1765, %v1764
      %v1768 = vpack.c.bf16 %v1766, %v1766
      %s1769 = scalar_lea.vmem %s2, 16
      %v1770 = vld [vmem:[%s1769] sm:$0xf]
      %v1771 = vld [vmem:[%s1769 + $0x4] sm:$0xf]
      %v1772 = vld [vmem:[%s1769 + $0x8] sm:$0xf]
      %v1773 = vld [vmem:[%s1769 + $0xc] sm:$0xf]
      %s1774 = scalar_lea.vmem %s3, 1
      %v1775 = vld [vmem:[%s1774] sm:$0x1]
      %v1777 = vlaneseq
      %v1778 = vshrl.u32 %v1777, 7
      %v1779 = vsub.s32 0, %v1778
      %v1780 = vrot.slane %v1775, %v1779
      %v1786 = vunpack.c.l.b16 %v1770
      %v1787 = vunpack.c.l.b16 %v1771
      %v1788 = vunpack.c.l.b16 %v1772
      %v1789 = vunpack.c.l.b16 %v1773
      %v1790 = vpack.c.b16 %v1787, %v1786
      %v1791 = vpack.c.b16 %v1789, %v1788
      %v1795 = vsel %vm288, %v1767, 0
      %v1798 = vsel %vm288, %v1768, 0
      %1800 = vmatprep.subr.bf16.mxu0 0
      %1801 = vmatpush1.bf16.msra.mxu0 %v1790
      %1802 = vmatprep.subr.bf16.mxu0 0
      %1803 = vmatpush1.bf16.msra.mxu0 %v1791
      %1804 = vmatprep.subr.bf16.mxu0 0
      %1805 = vmatpush1.bf16.msra.mxu0 0
      %1806 = vmatprep.subr.bf16.mxu0 0
      %1807 = vmatpush1.bf16.msra.mxu0 0
      %1808 = vmatprep.subr.bf16.mxu0 0
      %1809 = vmatpush1.bf16.msra.mxu0 0
      %1810 = vmatprep.subr.bf16.mxu0 0
      %1811 = vmatpush1.bf16.msra.mxu0 0
      %1812 = vmatprep.subr.bf16.mxu0 0
      %1813 = vmatpush1.bf16.msra.mxu0 0
      %1814 = vmatprep.subr.bf16.mxu0 0
      %1815 = vmatpush1.bf16.msra.mxu0 0
      %1816 = vmatprep.subr.bf16.mxu0 0
      %1817 = vmatpush1.bf16.msra.mxu0 0
      %1818 = vmatprep.subr.bf16.mxu0 0
      %1819 = vmatpush1.bf16.msra.mxu0 0
      %1820 = vmatprep.subr.bf16.mxu0 0
      %1821 = vmatpush1.bf16.msra.mxu0 0
      %1822 = vmatprep.subr.bf16.mxu0 0
      %1823 = vmatpush1.bf16.msra.mxu0 0
      %1824 = vmatprep.subr.bf16.mxu0 0
      %1825 = vmatpush1.bf16.msra.mxu0 0
      %1826 = vmatprep.subr.bf16.mxu0 0
      %1827 = vmatpush1.bf16.msra.mxu0 0
      %1828 = vmatprep.subr.bf16.mxu0 0
      %1829 = vmatpush1.bf16.msra.mxu0 0
      %1830 = vmatprep.subr.bf16.mxu0 0
      %1831 = vmatpush1.bf16.msra.mxu0 0
      %1832 = vmatprep.mubr.bf16.mxu0 0
      %1833 = vmatmul.mubr.bf16.gmra.mrb[0].mxu0 %v1795
      %v1834 = vpop.f32.mrb[0].mxu0
      %v1835 = vadd.f32 %v1780, %v1834
      %v1836 = vpop.f32.mrb[0].mxu0
      %v1837 = vpop.f32.mrb[0].mxu0
      %v1838 = vadd.f32 %v1780, %v1837
      %v1839 = vpop.f32.mrb[0].mxu0
      %1840 = vmatprep.mubr.bf16.mxu0 0
      %1841 = vmatmul.mubr.bf16.gmra.mrb[0].mxu0 %v1798
      %v1842 = vpop.f32.mrb[0].mxu0
      %v1843 = vadd.f32 %v1780, %v1842
      %v1844 = vpop.f32.mrb[0].mxu0
      %v1845 = vpop.f32.mrb[0].mxu0
      %v1846 = vpop.f32.mrb[0].mxu0
      %1847 = vdwg.mxu0
      %v1848 = vmul.f32 %v1835, 0.5
      %v1849 = vmul.f32 %v1838, 0.5
      %v1850 = vmul.f32 %v1843, 0.5
      %v1851 = vmul.f32 %v1835, 0.70710677
      %v1852 = vmul.f32 %v1838, 0.70710677
      %v1853 = vmul.f32 %v1843, 0.70710677
      %v1854 = vand.u32 2147483647, %v1851
      %v1855 = vand.u32 2147483647, %v1852
      %v1856 = vand.u32 2147483647, %v1853
      %v1857 = vmul.f32 %v1854, 0.3275911
      %v1858 = vmul.f32 %v1855, 0.3275911
      %v1859 = vmul.f32 %v1856, 0.3275911
      %v1860 = vadd.f32 %v1857, 1.0
      %v1861 = vadd.f32 %v1858, 1.0
      %v1862 = vadd.f32 %v1859, 1.0
      %v1863 = vrcp.pop %v1860
      %v1864 = vmul.f32 1.0, %v1863
      %v1865 = vrcp.pop %v1861
      %v1866 = vmul.f32 1.0, %v1865
      %v1867 = vrcp.pop %v1862
      %v1868 = vmul.f32 1.0, %v1867
      %v1869 = vmul.f32 %v1864, 1.0614054
      %v1870 = vmul.f32 %v1866, 1.0614054
      %v1871 = vmul.f32 %v1868, 1.0614054
      %v1872 = vadd.f32 %v1869, -1.4531521
      %v1873 = vadd.f32 %v1870, -1.4531521
      %v1874 = vadd.f32 %v1871, -1.4531521
      %v1875 = vmul.f32 %v1872, %v1864
      %v1876 = vmul.f32 %v1873, %v1866
      %v1877 = vmul.f32 %v1874, %v1868
      %v1878 = vadd.f32 %v1875, 1.4214138
      %v1879 = vadd.f32 %v1876, 1.4214138
      %v1880 = vadd.f32 %v1877, 1.4214138
      %v1881 = vmul.f32 %v1878, %v1864
      %v1882 = vmul.f32 %v1879, %v1866
      %v1883 = vmul.f32 %v1880, %v1868
      %v1884 = vadd.f32 %v1881, -0.28449672
      %v1885 = vadd.f32 %v1882, -0.28449672
      %v1886 = vadd.f32 %v1883, -0.28449672
      %v1887 = vmul.f32 %v1884, %v1864
      %v1888 = vmul.f32 %v1885, %v1866
      %v1889 = vmul.f32 %v1886, %v1868
      %v1890 = vadd.f32 %v1887, 0.2548296
      %v1891 = vadd.f32 %v1888, 0.2548296
      %v1892 = vadd.f32 %v1889, 0.2548296
      %v1893 = vmul.f32 %v1890, %v1864
      %v1894 = vmul.f32 %v1891, %v1866
      %v1895 = vmul.f32 %v1892, %v1868
      %v1896 = vsub.f32 0.0, %v1854
      %v1897 = vsub.f32 0.0, %v1855
      %v1898 = vsub.f32 0.0, %v1856
      %v1899 = vmul.f32 %v1896, %v1854
      %v1900 = vmul.f32 %v1897, %v1855
      %v1901 = vmul.f32 %v1898, %v1856
      %v1902 = vmul.f32 %v1899, 1.442695
      %v1903 = vpow.pop %v1902
      %v1904 = vmul.f32 %v1900, 1.442695
      %v1905 = vpow.pop %v1904
      %v1906 = vmul.f32 %v1901, 1.442695
      %v1907 = vpow.pop %v1906
      %v1908 = vmul.f32 %v1893, %v1903
      %v1909 = vmul.f32 %v1894, %v1905
      %v1910 = vmul.f32 %v1895, %v1907
      %v1911 = vsub.f32 1.0, %v1908
      %v1912 = vsub.f32 1.0, %v1909
      %v1913 = vsub.f32 1.0, %v1910
      %vm1914 = vcmp.lt.f32.partialorder %v1851, 0.0
      %vm1915 = vcmp.lt.f32.partialorder %v1852, 0.0
      %vm1916 = vcmp.lt.f32.partialorder %v1853, 0.0
      %v1917 = vsub.f32 0.0, %v1911
      %v1918 = vsub.f32 0.0, %v1912
      %v1919 = vsub.f32 0.0, %v1913
      %v1920 = vsel %vm1914, %v1917, %v1911
      %v1921 = vsel %vm1915, %v1918, %v1912
      %v1922 = vsel %vm1916, %v1919, %v1913
      %v1923 = vadd.f32 %v1920, 1.0
      %v1924 = vadd.f32 %v1921, 1.0
      %v1925 = vadd.f32 %v1922, 1.0
      %v1926 = vmul.f32 %v1848, %v1923
      %v1927 = vmul.f32 %v1849, %v1924
      %v1928 = vmul.f32 %v1850, %v1925
      %v1929 = vpack.c.bf16 %v1927, %v1926
      %v1930 = vpack.c.bf16 %v1928, %v1928
      %s1931 = scalar_lea.vmem %s4, 32
      %v1932 = vld [vmem:[%s1931] sm:$0xf]
      %v1933 = vld [vmem:[%s1931 + $0x4] sm:$0xf]
      %v1934 = vld [vmem:[%s1931 + $0x8] sm:$0xf]
      %v1935 = vld [vmem:[%s1931 + $0xc] sm:$0xf]
      %v1936 = vld [vmem:[%s1931 + $0x10] sm:$0xf]
      %v1937 = vld [vmem:[%s1931 + $0x14] sm:$0xf]
      %v1938 = vld [vmem:[%s1931 + $0x18] sm:$0xf]
      %v1939 = vld [vmem:[%s1931 + $0x1c] sm:$0xf]
      %v1948 = vunpack.c.l.b16 %v1932
      %v1949 = vunpack.c.l.b16 %v1933
      %v1950 = vunpack.c.l.b16 %v1934
      %v1951 = vunpack.c.l.b16 %v1935
      %v1952 = vunpack.c.l.b16 %v1936
      %v1953 = vunpack.c.l.b16 %v1937
      %v1954 = vunpack.c.l.b16 %v1938
      %v1955 = vunpack.c.l.b16 %v1939
      %v1956 = vpack.c.b16 %v1949, %v1948
      %v1957 = vpack.c.b16 %v1951, %v1950
      %v1958 = vpack.c.b16 %v1953, %v1952
      %v1959 = vpack.c.b16 %v1955, %v1954
      %v1965 = vsel %vm1093, %v1929, 0
      %v1968 = vsel %vm1093, %v1930, 0
      %1970 = vmatprep.subr.bf16.mxu0 0
      %1971 = vmatpush1.bf16.msra.mxu0 %v1956
      %1972 = vmatprep.subr.bf16.mxu0 0
      %1973 = vmatpush1.bf16.msra.mxu0 %v1957
      %1974 = vmatprep.subr.bf16.mxu0 0
      %1975 = vmatpush1.bf16.msra.mxu0 %v1958
      %1976 = vmatprep.subr.bf16.mxu0 0
      %1977 = vmatpush1.bf16.msra.mxu0 %v1959
      %1978 = vmatprep.subr.bf16.mxu0 0
      %1979 = vmatpush1.bf16.msra.mxu0 0
      %1980 = vmatprep.subr.bf16.mxu0 0
      %1981 = vmatpush1.bf16.msra.mxu0 0
      %1982 = vmatprep.subr.bf16.mxu0 0
      %1983 = vmatpush1.bf16.msra.mxu0 0
      %1984 = vmatprep.subr.bf16.mxu0 0
      %1985 = vmatpush1.bf16.msra.mxu0 0
      %1986 = vmatprep.subr.bf16.mxu0 0
      %1987 = vmatpush1.bf16.msra.mxu0 0
      %1988 = vmatprep.subr.bf16.mxu0 0
      %1989 = vmatpush1.bf16.msra.mxu0 0
      %1990 = vmatprep.subr.bf16.mxu0 0
      %1991 = vmatpush1.bf16.msra.mxu0 0
      %1992 = vmatprep.subr.bf16.mxu0 0
      %1993 = vmatpush1.bf16.msra.mxu0 0
      %1994 = vmatprep.subr.bf16.mxu0 0
      %1995 = vmatpush1.bf16.msra.mxu0 0
      %1996 = vmatprep.subr.bf16.mxu0 0
      %1997 = vmatpush1.bf16.msra.mxu0 0
      %1998 = vmatprep.subr.bf16.mxu0 0
      %1999 = vmatpush1.bf16.msra.mxu0 0
      %2000 = vmatprep.subr.bf16.mxu0 0
      %2001 = vmatpush1.bf16.msra.mxu0 0
      %2002 = vmatprep.mubr.bf16.mxu0 0
      %2003 = vmatmul.mubr.bf16.gmra.mrb[0].mxu0 %v1965
      %v2004 = vpop.f32.mrb[0].mxu0
      %v2005 = vadd.f32 0.0, %v2004
      %v2006 = vpop.f32.mrb[0].mxu0
      %v2007 = vpop.f32.mrb[0].mxu0
      %v2008 = vadd.f32 0.0, %v2007
      %v2009 = vpop.f32.mrb[0].mxu0
      %2010 = vmatprep.mubr.bf16.mxu0 0
      %2011 = vmatmul.mubr.bf16.gmra.mrb[0].mxu0 %v1968
      %v2012 = vpop.f32.mrb[0].mxu0
      %v2013 = vadd.f32 0.0, %v2012
      %v2014 = vpop.f32.mrb[0].mxu0
      %v2015 = vpop.f32.mrb[0].mxu0
      %v2016 = vpop.f32.mrb[0].mxu0
      %2017 = vdwg.mxu0
      %v2018 = vadd.f32 %v1711, %v2005
      %v2019 = vadd.f32 %v1712, %v2008
      %v2020 = vadd.f32 %v1713, %v2013
      %v2021 = vlaneseq
      %v2022 = vshrl.u32 %v2021, 7
      %v2023 = vsub.s32 4, %v2022
      %v2024 = vrot.slane %v1159, %v2023
      %v2025 = vadd.f32 %v2018, %v2024
      %v2026 = vadd.f32 %v2019, %v2024
      %v2027 = vadd.f32 %v2020, %v2024
      %v2028 = vld [vmem:[%s6] sm:$0x3]
      %v2029 = vsel %vm288, %v2025, 0.0
      %2030 = vadd.xlane.f32.xlu0 %v2029
      %v2031 = vpop.xlane.xlu0 %2030
      %v2032 = vsel %vm288, %v2026, 0.0
      %2033 = vadd.xlane.f32.xlu0 %v2032
      %v2034 = vpop.xlane.xlu0 %2033
      %v2035 = vsel %vm295, %v2027, 0.0
      %2036 = vadd.xlane.f32.xlu0 %v2035
      %v2037 = vpop.xlane.xlu0 %2036
      %v2038 = vmul.f32 %v2031, %v299
      %v2039 = vmul.f32 %v2034, %v299
      %v2040 = vmul.f32 %v2037, %v299
      %v2041 = vsub.f32 %v2025, %v2038
      %v2042 = vsub.f32 %v2026, %v2039
      %v2043 = vsub.f32 %v2027, %v2040
      %v2044 = vmul.f32 %v2041, %v2041
      %v2045 = vmul.f32 %v2042, %v2042
      %v2046 = vmul.f32 %v2043, %v2043
      %v2047 = vsel %vm288, %v2044, 0.0
      %2048 = vadd.xlane.f32.xlu0 %v2047
      %v2049 = vpop.xlane.xlu0 %2048
      %v2050 = vsel %vm288, %v2045, 0.0
      %2051 = vadd.xlane.f32.xlu0 %v2050
      %v2052 = vpop.xlane.xlu0 %2051
      %v2053 = vsel %vm295, %v2046, 0.0
      %2054 = vadd.xlane.f32.xlu0 %v2053
      %v2055 = vpop.xlane.xlu0 %2054
      %v2056 = vmul.f32 %v2049, %v299
      %v2057 = vmul.f32 %v2052, %v299
      %v2058 = vmul.f32 %v2055, %v299
      %v2059 = vadd.f32 %v2056, 1e-05
      %v2060 = vadd.f32 %v2057, 1e-05
      %v2061 = vadd.f32 %v2058, 1e-05
      %v2062 = vrsqrt.pop %v2059
      %v2063 = vrsqrt.pop %v2060
      %v2064 = vrsqrt.pop %v2061
      %v2065 = vmul.f32 %v2041, %v2062
      %v2066 = vmul.f32 %v2042, %v2063
      %v2067 = vmul.f32 %v2043, %v2064
      %v2068 = vlaneseq
      %v2069 = vshrl.u32 %v2068, 7
      %v2070 = vsub.s32 0, %v2069
      %v2071 = vrot.slane %v2028, %v2070
      %v2072 = vmul.f32 %v2065, %v2071
      %v2073 = vmul.f32 %v2066, %v2071
      %v2074 = vmul.f32 %v2067, %v2071
      %v2075 = vlaneseq
      %v2076 = vshrl.u32 %v2075, 7
      %v2077 = vsub.s32 1, %v2076
      %v2078 = vrot.slane %v2028, %v2077
      %v2079 = vadd.f32 %v2072, %v2078
      %v2080 = vadd.f32 %v2073, %v2078
      %v2081 = vadd.f32 %v2074, %v2078
      %2082 = vst.msk [vmem:[%s278] sm:$0xff] %vm288, %v2079
      %2083 = vst.msk [vmem:[%s278 + $0x8] sm:$0xff] %vm288, %v2080
      %2084 = vst.msk [vmem:[%s278 + $0x10] sm:$0x1] %vm295, %v2081
      %p2085 = scmp.lt.s32.totalorder %s18, 1
      %s2086 = scalar_select %p2085, %s18, 1
      %s2087 = smul.addr %s2086, 3
      %s2088 = smul.addr %s2087, 8
      %s2089 = scalar_lea.vmem %s7, %s2088
      // Predicated region
      $region49: #{clay_decoder_forward.2} parent=47 // pred_check
        %p2090 = pneg %p188
      $region50: #{clay_decoder_forward.2} parent=47 // pred_check_branch
        %2092 = sbr.rel (%p2090) target = $region52
      $region51: #{clay_decoder_forward.2} parent=47 // pred_region
        _
      $region52: #{clay_decoder_forward.2} parent=47 // pred_fallthru
        _
    $region48: #{clay_decoder_forward.2} parent=5 // pred_fallthru
      _
    %p2093 = scmp.le.s32.totalorder 2, %s13
    // Predicated region
    $region53: #{clay_decoder_forward.2} parent=5 // pred_check
      %p2094 = pneg %p2093
    $region54: #{clay_decoder_forward.2} parent=5 // pred_check_branch
      %2096 = sbr.rel (%p2094) target = $region56
    $region55: #{clay_decoder_forward.2} parent=5 // pred_region
      %s2097 = ssub.s32 %s13, 2
      // Predicated region
      $region57: #{clay_decoder_forward.2} parent=55 // pred_check
        %p2098 = pneg %p194
      $region58: #{clay_decoder_forward.2} parent=55 // pred_check_branch
        %2100 = sbr.rel (%p2098) target = $region60
      $region59: #{clay_decoder_forward.2} parent=55 // pred_region
        %p2101 = scmp.lt.s32.totalorder %s19, 1
        %s2102 = scalar_select %p2101, %s19, 1
        %s2103 = smul.addr %s2102, 3
        %s2104 = smul.addr %s2103, 8
        %s2105 = scalar_lea.vmem %s7, %s2104
      $region60: #{clay_decoder_forward.2} parent=55 // pred_fallthru
        _
    $region56: #{clay_decoder_forward.2} parent=5 // pred_fallthru
      _
  $region6: #{clay_decoder_forward.2} parent=0 // loop_footer
    %s17 = sadd.s32 1, %s13
  $region7: #{clay_decoder_forward.2} parent=0 // loop_footer_branch
    %12 = sbr.rel target = $region3
  $region8: #{clay_decoder_forward.2} parent=0 // loop_exit
    _

// kernel: clay_decoder_forward.3
$region0: #{clay_decoder_forward.3}
  #allocation0 [shape = 'u32[]', space=smem, size = 0x4, offset = 0x4, fixed_abs, tag = 'smem constant byte address 0x4 - core index']
  #allocation1 [shape = 'u32[144,128]{1,0:T(1,128)}', space=vmem, size = 0x12000, scoped, tag = 'internal scratch']
  %s0 = inlined_call_operand.vmem [shape: f32[132,128], index: 0, kind: input, shape index: {}]
  %s1 = inlined_call_operand.vmem [shape: bf16[128,128], index: 1, kind: input, shape index: {}]
  %s2 = inlined_call_operand.vmem [shape: bf16[128,256], index: 2, kind: input, shape index: {}]
  %s3 = inlined_call_operand.vmem [shape: f32[1,256], index: 3, kind: input, shape index: {}]
  %s4 = inlined_call_operand.vmem [shape: bf16[128,128], index: 4, kind: input, shape index: {}]
  %s5 = inlined_call_operand.hbm [shape: bf16[128,2048], index: 5, kind: input, shape index: {}]
  %s6 = inlined_call_operand.vmem [shape: f32[1,2048], index: 6, kind: input, shape index: {}]
  %s7 = inlined_call_operand.hbm [shape: bf16[2048,128], index: 7, kind: input, shape index: {}]
  %s8 = inlined_call_operand.vmem [shape: f32[128,128], index: 8, kind: input, shape index: {}]
  %s9 = inlined_call_operand.vmem [shape: f32[8,128], index: 9, kind: input, shape index: {}]
  %s10 = inlined_call_operand.vmem [shape: f32[3,128], index: 10, kind: output, shape index: {}]
  %s11 = sld [smem:[#allocation0]]
  $region58: #{clay_decoder_forward.3} parent=0
    _
  %s13 = ssub.s32 1, %s11
  %s14 = scalar_select 0, %s13, %s11
  $region1: #{clay_decoder_forward.3} parent=0
    #allocation2 [shape = 'u8[524288]{0}', space=vmem, size = 0x80000, scoped, tag = 'input window, operand 5, single buffered']
    #allocation3 [shape = 's32[1]{0}', space=sflag, size = 0x4, scoped, tag = 'scoped memory for clay_decoder_forward.3']
    #allocation4 [shape = 'u8[524288]{0}', space=vmem, size = 0x80000, scoped, tag = 'input window, operand 7, single buffered']
    #allocation5 [shape = 's32[1]{0}', space=sflag, size = 0x4, scoped, tag = 'scoped memory for clay_decoder_forward.3']
    %15 = vsyncpa [#allocation3], 0
    %16 = vsyncpa [#allocation5], 0
    // Predicated region
    $region2: #{clay_decoder_forward.3} parent=1 // pred_check
      _
    $region3: #{clay_decoder_forward.3} parent=1 // pred_check_branch
      %18 = sbr.rel (0) target = $region5
    $region4: #{clay_decoder_forward.3} parent=1 // pred_region
      _
    $region5: #{clay_decoder_forward.3} parent=1 // pred_fallthru
      _
    // Predicated region
    $region6: #{clay_decoder_forward.3} parent=1 // pred_check
      _
    $region7: #{clay_decoder_forward.3} parent=1 // pred_check_branch
      %20 = sbr.rel (0) target = $region9
    $region8: #{clay_decoder_forward.3} parent=1 // pred_region
      _
    $region9: #{clay_decoder_forward.3} parent=1 // pred_fallthru
      _
    // Predicated region
    $region10: #{clay_decoder_forward.3} parent=1 // pred_check
      _
    $region11: #{clay_decoder_forward.3} parent=1 // pred_check_branch
      %22 = sbr.rel (0) target = $region13
    $region12: #{clay_decoder_forward.3} parent=1 // pred_region
      _
    $region13: #{clay_decoder_forward.3} parent=1 // pred_fallthru
      _
    // Predicated region
    $region14: #{clay_decoder_forward.3} parent=1 // pred_check
      _
    $region15: #{clay_decoder_forward.3} parent=1 // pred_check_branch
      %24 = sbr.rel (0) target = $region17
    $region16: #{clay_decoder_forward.3} parent=1 // pred_region
      _
    $region17: #{clay_decoder_forward.3} parent=1 // pred_fallthru
      _
    // Predicated region
    $region18: #{clay_decoder_forward.3} parent=1 // pred_check
      _
    $region19: #{clay_decoder_forward.3} parent=1 // pred_check_branch
      %26 = sbr.rel (0) target = $region21
    $region20: #{clay_decoder_forward.3} parent=1 // pred_region
      _
    $region21: #{clay_decoder_forward.3} parent=1 // pred_fallthru
      _
    // Predicated region
    $region22: #{clay_decoder_forward.3} parent=1 // pred_check
      _
    $region23: #{clay_decoder_forward.3} parent=1 // pred_check_branch
      %28 = sbr.rel (0) target = $region25
    $region24: #{clay_decoder_forward.3} parent=1 // pred_region
      %s30 = ssub.s32 16384, 16384
      %31 = vsyncadd [#allocation3], %s30
      %s32 = sshll.u32 [#allocation2], 4
      %s33 = int_to_ptr.vmem [resolvable:$true] %s32
      %38 = dma.hbm_to_vmem [thread:$0]  %s5, 16384, %s33, [#allocation3], 1024, 1024, 64
    $region25: #{clay_decoder_forward.3} parent=1 // pred_fallthru
      _
    // Predicated region
    $region26: #{clay_decoder_forward.3} parent=1 // pred_check
      _
    $region27: #{clay_decoder_forward.3} parent=1 // pred_check_branch
      %40 = sbr.rel (0) target = $region29
    $region28: #{clay_decoder_forward.3} parent=1 // pred_region
      _
    $region29: #{clay_decoder_forward.3} parent=1 // pred_fallthru
      _
    // Predicated region
    $region30: #{clay_decoder_forward.3} parent=1 // pred_check
      _
    $region31: #{clay_decoder_forward.3} parent=1 // pred_check_branch
      %42 = sbr.rel (0) target = $region33
    $region32: #{clay_decoder_forward.3} parent=1 // pred_region
      %s44 = ssub.s32 16384, 16384
      %45 = vsyncadd [#allocation5], %s44
      %s46 = sshll.u32 [#allocation4], 4
      %s47 = int_to_ptr.vmem [resolvable:$true] %s46
      %52 = dma.hbm_to_vmem [thread:$0]  %s7, 16384, %s47, [#allocation5], 64, 64, 4
    $region33: #{clay_decoder_forward.3} parent=1 // pred_fallthru
      _
    // Predicated region
    $region34: #{clay_decoder_forward.3} parent=1 // pred_check
      _
    $region35: #{clay_decoder_forward.3} parent=1 // pred_check_branch
      %54 = sbr.rel (0) target = $region37
    $region36: #{clay_decoder_forward.3} parent=1 // pred_region
      _
    $region37: #{clay_decoder_forward.3} parent=1 // pred_fallthru
      _
    // Predicated region
    $region38: #{clay_decoder_forward.3} parent=1 // pred_check
      _
    $region39: #{clay_decoder_forward.3} parent=1 // pred_check_branch
      %56 = sbr.rel (0) target = $region41
    $region40: #{clay_decoder_forward.3} parent=1 // pred_region
      _
    $region41: #{clay_decoder_forward.3} parent=1 // pred_fallthru
      _
    // Predicated region
    $region42: #{clay_decoder_forward.3} parent=1 // pred_check
      _
    $region43: #{clay_decoder_forward.3} parent=1 // pred_check_branch
      %58 = sbr.rel (0) target = $region45
    $region44: #{clay_decoder_forward.3} parent=1 // pred_region
      %59 = dma.done [#allocation3], 16384
    $region45: #{clay_decoder_forward.3} parent=1 // pred_fallthru
      _
    // Predicated region
    $region46: #{clay_decoder_forward.3} parent=1 // pred_check
      _
    $region47: #{clay_decoder_forward.3} parent=1 // pred_check_branch
      %61 = sbr.rel (0) target = $region49
    $region48: #{clay_decoder_forward.3} parent=1 // pred_region
      %62 = dma.done [#allocation5], 16384
    $region49: #{clay_decoder_forward.3} parent=1 // pred_fallthru
      _
    %v64 = vld [vmem:[%s9] sm:$0xff]
    %v65 = vld [vmem:[%s0] sm:$0xff]
    %v66 = vld [vmem:[%s0 + $0x8] sm:$0xff]
    %v67 = vld [vmem:[%s0 + $0x10] sm:$0xff]
    %v68 = vld [vmem:[%s0 + $0x18] sm:$0xff]
    %v69 = vld [vmem:[%s0 + $0x20] sm:$0xff]
    %v70 = vld [vmem:[%s0 + $0x28] sm:$0xff]
    %v71 = vld [vmem:[%s0 + $0x30] sm:$0xff]
    %v72 = vld [vmem:[%s0 + $0x38] sm:$0xff]
    %v73 = vld [vmem:[%s0 + $0x40] sm:$0xff]
    %v74 = vld [vmem:[%s0 + $0x48] sm:$0xff]
    %v75 = vld [vmem:[%s0 + $0x50] sm:$0xff]
    %v76 = vld [vmem:[%s0 + $0x58] sm:$0xff]
    %v77 = vld [vmem:[%s0 + $0x60] sm:$0xff]
    %v78 = vld [vmem:[%s0 + $0x68] sm:$0xff]
    %v79 = vld [vmem:[%s0 + $0x70] sm:$0xff]
    %v80 = vld [vmem:[%s0 + $0x78] sm:$0xff]
    %v81 = vld [vmem:[%s0 + $0x80] sm:$0xf]
    %v82 = vpack.c.bf16 %v66, %v65
    %v83 = vpack.c.bf16 %v68, %v67
    %v84 = vpack.c.bf16 %v70, %v69
    %v85 = vpack.c.bf16 %v72, %v71
    %v86 = vpack.c.bf16 %v74, %v73
    %v87 = vpack.c.bf16 %v76, %v75
    %v88 = vpack.c.bf16 %v78, %v77
    %v89 = vpack.c.bf16 %v80, %v79
    %v90 = vpack.c.bf16 %v81, %v81
    %v91 = vld [vmem:[%s2] sm:$0xff]
    %v92 = vld [vmem:[%s2 + $0x8] sm:$0xff]
    %v93 = vld [vmem:[%s2 + $0x10] sm:$0xff]
    %v94 = vld [vmem:[%s2 + $0x18] sm:$0xff]
    %v95 = vld [vmem:[%s2 + $0x20] sm:$0xff]
    %v96 = vld [vmem:[%s2 + $0x28] sm:$0xff]
    %v97 = vld [vmem:[%s2 + $0x30] sm:$0xff]
    %v98 = vld [vmem:[%s2 + $0x38] sm:$0xff]
    %v99 = vld [vmem:[%s2 + $0x40] sm:$0xff]
    %v100 = vld [vmem:[%s2 + $0x48] sm:$0xff]
    %v101 = vld [vmem:[%s2 + $0x50] sm:$0xff]
    %v102 = vld [vmem:[%s2 + $0x58] sm:$0xff]
    %v103 = vld [vmem:[%s2 + $0x60] sm:$0xff]
    %v104 = vld [vmem:[%s2 + $0x68] sm:$0xff]
    %v105 = vld [vmem:[%s2 + $0x70] sm:$0xff]
    %v106 = vld [vmem:[%s2 + $0x78] sm:$0xff]
    %v107 = vld [vmem:[%s3] sm:$0x3]
    %v109 = vlaneseq
    %v110 = vshrl.u32 %v109, 7
    %v111 = vsub.s32 0, %v110
    %v112 = vrot.slane %v107, %v111
    %v113 = vlaneseq
    %v114 = vshrl.u32 %v113, 7
    %v115 = vsub.s32 1, %v114
    %v116 = vrot.slane %v107, %v115
    %v135 = vunpack.c.l.b16 %v91
    %v136 = vunpack.c.h.b16 %v91
    %v137 = vunpack.c.l.b16 %v92
    %v138 = vunpack.c.h.b16 %v92
    %v139 = vunpack.c.l.b16 %v93
    %v140 = vunpack.c.h.b16 %v93
    %v141 = vunpack.c.l.b16 %v94
    %v142 = vunpack.c.h.b16 %v94
    %v143 = vunpack.c.l.b16 %v95
    %v144 = vunpack.c.h.b16 %v95
    %v145 = vunpack.c.l.b16 %v96
    %v146 = vunpack.c.h.b16 %v96
    %v147 = vunpack.c.l.b16 %v97
    %v148 = vunpack.c.h.b16 %v97
    %v149 = vunpack.c.l.b16 %v98
    %v150 = vunpack.c.h.b16 %v98
    %v151 = vunpack.c.l.b16 %v99
    %v152 = vunpack.c.h.b16 %v99
    %v153 = vunpack.c.l.b16 %v100
    %v154 = vunpack.c.h.b16 %v100
    %v155 = vunpack.c.l.b16 %v101
    %v156 = vunpack.c.h.b16 %v101
    %v157 = vunpack.c.l.b16 %v102
    %v158 = vunpack.c.h.b16 %v102
    %v159 = vunpack.c.l.b16 %v103
    %v160 = vunpack.c.h.b16 %v103
    %v161 = vunpack.c.l.b16 %v104
    %v162 = vunpack.c.h.b16 %v104
    %v163 = vunpack.c.l.b16 %v105
    %v164 = vunpack.c.h.b16 %v105
    %v165 = vunpack.c.l.b16 %v106
    %v166 = vunpack.c.h.b16 %v106
    %v167 = vpack.c.b16 %v137, %v135
    %v168 = vpack.c.b16 %v138, %v136
    %v169 = vpack.c.b16 %v141, %v139
    %v170 = vpack.c.b16 %v142, %v140
    %v171 = vpack.c.b16 %v145, %v143
    %v172 = vpack.c.b16 %v146, %v144
    %v173 = vpack.c.b16 %v149, %v147
    %v174 = vpack.c.b16 %v150, %v148
    %v175 = vpack.c.b16 %v153, %v151
    %v176 = vpack.c.b16 %v154, %v152
    %v177 = vpack.c.b16 %v157, %v155
    %v178 = vpack.c.b16 %v158, %v156
    %v179 = vpack.c.b16 %v161, %v159
    %v180 = vpack.c.b16 %v162, %v160
    %v181 = vpack.c.b16 %v165, %v163
    %v182 = vpack.c.b16 %v166, %v164
    %199 = vmatprep.subr.bf16.mxu0 %v168
    %200 = vmatpush1.bf16.msra.mxu0 %v167
    %201 = vmatprep.subr.bf16.mxu0 %v170
    %202 = vmatpush1.bf16.msra.mxu0 %v169
    %203 = vmatprep.subr.bf16.mxu0 %v172
    %204 = vmatpush1.bf16.msra.mxu0 %v171
    %205 = vmatprep.subr.bf16.mxu0 %v174
    %206 = vmatpush1.bf16.msra.mxu0 %v173
    %207 = vmatprep.subr.bf16.mxu0 %v176
    %208 = vmatpush1.bf16.msra.mxu0 %v175
    %209 = vmatprep.subr.bf16.mxu0 %v178
    %210 = vmatpush1.bf16.msra.mxu0 %v177
    %211 = vmatprep.subr.bf16.mxu0 %v180
    %212 = vmatpush1.bf16.msra.mxu0 %v179
    %213 = vmatprep.subr.bf16.mxu0 %v182
    %214 = vmatpush1.bf16.msra.mxu0 %v181
    %215 = vmatprep.subr.bf16.mxu0 0
    %216 = vmatpush1.bf16.msra.mxu0 0
    %217 = vmatprep.subr.bf16.mxu0 0
    %218 = vmatpush1.bf16.msra.mxu0 0
    %219 = vmatprep.subr.bf16.mxu0 0
    %220 = vmatpush1.bf16.msra.mxu0 0
    %221 = vmatprep.subr.bf16.mxu0 0
    %222 = vmatpush1.bf16.msra.mxu0 0
    %223 = vmatprep.subr.bf16.mxu0 0
    %224 = vmatpush1.bf16.msra.mxu0 0
    %225 = vmatprep.subr.bf16.mxu0 0
    %226 = vmatpush1.bf16.msra.mxu0 0
    %227 = vmatprep.subr.bf16.mxu0 0
    %228 = vmatpush1.bf16.msra.mxu0 0
    %229 = vmatprep.subr.bf16.mxu0 0
    %230 = vmatpush1.bf16.msra.mxu0 0
    %231 = vmatprep.mubr.bf16.mxu0 0
    %232 = vmatmul.mubr.bf16.gmra.mrb[0].mxu0 %v82
    %v233 = vpop.f32.mrb[0].mxu0
    %v234 = vadd.f32 %v112, %v233
    %v235 = vpop.f32.mrb[0].mxu0
    %v236 = vadd.f32 %v116, %v235
    %v237 = vpop.f32.mrb[0].mxu0
    %v238 = vadd.f32 %v112, %v237
    %v239 = vpop.f32.mrb[0].mxu0
    %v240 = vadd.f32 %v116, %v239
    %241 = vmatprep.mubr.bf16.mxu0 0
    %242 = vmatmul.mubr.bf16.gmra.mrb[0].mxu0 %v83
    %v243 = vpop.f32.mrb[0].mxu0
    %v244 = vadd.f32 %v112, %v243
    %v245 = vpop.f32.mrb[0].mxu0
    %v246 = vadd.f32 %v116, %v245
    %v247 = vpop.f32.mrb[0].mxu0
    %v248 = vadd.f32 %v112, %v247
    %v249 = vpop.f32.mrb[0].mxu0
    %v250 = vadd.f32 %v116, %v249
    %251 = vmatprep.mubr.bf16.mxu0 0
    %252 = vmatmul.mubr.bf16.gmra.mrb[0].mxu0 %v84
    %v253 = vpop.f32.mrb[0].mxu0
    %v254 = vadd.f32 %v112, %v253
    %v255 = vpop.f32.mrb[0].mxu0
    %v256 = vadd.f32 %v116, %v255
    %v257 = vpop.f32.mrb[0].mxu0
    %v258 = vadd.f32 %v112, %v257
    %v259 = vpop.f32.mrb[0].mxu0
    %v260 = vadd.f32 %v116, %v259
    %261 = vmatprep.mubr.bf16.mxu0 0
    %262 = vmatmul.mubr.bf16.gmra.mrb[0].mxu0 %v85
    %v263 = vpop.f32.mrb[0].mxu0
    %v264 = vadd.f32 %v112, %v263
    %v265 = vpop.f32.mrb[0].mxu0
    %v266 = vadd.f32 %v116, %v265
    %v267 = vpop.f32.mrb[0].mxu0
    %v268 = vadd.f32 %v112, %v267
    %v269 = vpop.f32.mrb[0].mxu0
    %v270 = vadd.f32 %v116, %v269
    %271 = vmatprep.mubr.bf16.mxu0 0
    %272 = vmatmul.mubr.bf16.gmra.mrb[0].mxu0 %v86
    %v273 = vpop.f32.mrb[0].mxu0
    %v274 = vadd.f32 %v112, %v273
    %v275 = vpop.f32.mrb[0].mxu0
    %v276 = vadd.f32 %v116, %v275
    %v277 = vpop.f32.mrb[0].mxu0
    %v278 = vadd.f32 %v112, %v277
    %v279 = vpop.f32.mrb[0].mxu0
    %v280 = vadd.f32 %v116, %v279
    %281 = vmatprep.mubr.bf16.mxu0 0
    %282 = vmatmul.mubr.bf16.gmra.mrb[0].mxu0 %v87
    %v283 = vpop.f32.mrb[0].mxu0
    %v284 = vadd.f32 %v112, %v283
    %v285 = vpop.f32.mrb[0].mxu0
    %v286 = vadd.f32 %v116, %v285
    %v287 = vpop.f32.mrb[0].mxu0
    %v288 = vadd.f32 %v112, %v287
    %v289 = vpop.f32.mrb[0].mxu0
    %v290 = vadd.f32 %v116, %v289
    %291 = vmatprep.mubr.bf16.mxu0 0
    %292 = vmatmul.mubr.bf16.gmra.mrb[0].mxu0 %v88
    %v293 = vpop.f32.mrb[0].mxu0
    %v294 = vadd.f32 %v112, %v293
    %v295 = vpop.f32.mrb[0].mxu0
    %v296 = vadd.f32 %v116, %v295
    %v297 = vpop.f32.mrb[0].mxu0
    %v298 = vadd.f32 %v112, %v297
    %v299 = vpop.f32.mrb[0].mxu0
    %v300 = vadd.f32 %v116, %v299
    %301 = vmatprep.mubr.bf16.mxu0 0
    %302 = vmatmul.mubr.bf16.gmra.mrb[0].mxu0 %v89
    %v303 = vpop.f32.mrb[0].mxu0
    %v304 = vadd.f32 %v112, %v303
    %v305 = vpop.f32.mrb[0].mxu0
    %v306 = vadd.f32 %v116, %v305
    %v307 = vpop.f32.mrb[0].mxu0
    %v308 = vadd.f32 %v112, %v307
    %v309 = vpop.f32.mrb[0].mxu0
    %v310 = vadd.f32 %v116, %v309
    %311 = vmatprep.mubr.bf16.mxu0 0
    %312 = vmatmul.mubr.bf16.gmra.mrb[0].mxu0 %v90
    %v313 = vpop.f32.mrb[0].mxu0
    %v314 = vadd.f32 %v112, %v313
    %v315 = vpop.f32.mrb[0].mxu0
    %v316 = vadd.f32 %v116, %v315
    %v317 = vpop.f32.mrb[0].mxu0
    %v318 = vpop.f32.mrb[0].mxu0
    %319 = vdwg.mxu0
    %v320 = vld [vmem:[%s1] sm:$0xf]
    %v321 = vld [vmem:[%s1 + $0x4] sm:$0xf]
    %v322 = vld [vmem:[%s1 + $0x8] sm:$0xf]
    %v323 = vld [vmem:[%s1 + $0xc] sm:$0xf]
    %v324 = vld [vmem:[%s1 + $0x10] sm:$0xf]
    %v325 = vld [vmem:[%s1 + $0x14] sm:$0xf]
    %v326 = vld [vmem:[%s1 + $0x18] sm:$0xf]
    %v327 = vld [vmem:[%s1 + $0x1c] sm:$0xf]
    %v328 = vld [vmem:[%s1 + $0x20] sm:$0xf]
    %v329 = vld [vmem:[%s1 + $0x24] sm:$0xf]
    %v330 = vld [vmem:[%s1 + $0x28] sm:$0xf]
    %v331 = vld [vmem:[%s1 + $0x2c] sm:$0xf]
    %v332 = vld [vmem:[%s1 + $0x30] sm:$0xf]
    %v333 = vld [vmem:[%s1 + $0x34] sm:$0xf]
    %v334 = vld [vmem:[%s1 + $0x38] sm:$0xf]
    %v335 = vld [vmem:[%s1 + $0x3c] sm:$0xf]
    %v336 = vlaneseq
    %v337 = vshrl.u32 %v336, 7
    %v338 = vsub.s32 7, %v337
    %v339 = vrot.slane %v64, %v338
    %v356 = vunpack.c.l.b16 %v320
    %v357 = vunpack.c.l.b16 %v321
    %v358 = vunpack.c.l.b16 %v322
    %v359 = vunpack.c.l.b16 %v323
    %v360 = vunpack.c.l.b16 %v324
    %v361 = vunpack.c.l.b16 %v325
    %v362 = vunpack.c.l.b16 %v326
    %v363 = vunpack.c.l.b16 %v327
    %v364 = vunpack.c.l.b16 %v328
    %v365 = vunpack.c.l.b16 %v329
    %v366 = vunpack.c.l.b16 %v330
    %v367 = vunpack.c.l.b16 %v331
    %v368 = vunpack.c.l.b16 %v332
    %v369 = vunpack.c.l.b16 %v333
    %v370 = vunpack.c.l.b16 %v334
    %v371 = vunpack.c.l.b16 %v335
    %v372 = vpack.c.b16 %v357, %v356
    %v373 = vpack.c.b16 %v359, %v358
    %v374 = vpack.c.b16 %v361, %v360
    %v375 = vpack.c.b16 %v363, %v362
    %v376 = vpack.c.b16 %v365, %v364
    %v377 = vpack.c.b16 %v367, %v366
    %v378 = vpack.c.b16 %v369, %v368
    %v379 = vpack.c.b16 %v371, %v370
    %388 = vmatprep.subr.bf16.mxu0 0
    %389 = vmatpush1.bf16.msra.mxu0 %v372
    %390 = vmatprep.subr.bf16.mxu0 0
    %391 = vmatpush1.bf16.msra.mxu0 %v373
    %392 = vmatprep.subr.bf16.mxu0 0
    %393 = vmatpush1.bf16.msra.mxu0 %v374
    %394 = vmatprep.subr.bf16.mxu0 0
    %395 = vmatpush1.bf16.msra.mxu0 %v375
    %396 = vmatprep.subr.bf16.mxu0 0
    %397 = vmatpush1.bf16.msra.mxu0 %v376
    %398 = vmatprep.subr.bf16.mxu0 0
    %399 = vmatpush1.bf16.msra.mxu0 %v377
    %400 = vmatprep.subr.bf16.mxu0 0
    %401 = vmatpush1.bf16.msra.mxu0 %v378
    %402 = vmatprep.subr.bf16.mxu0 0
    %403 = vmatpush1.bf16.msra.mxu0 %v379
    %404 = vmatprep.subr.bf16.mxu0 0
    %405 = vmatpush1.bf16.msra.mxu0 0
    %406 = vmatprep.subr.bf16.mxu0 0
    %407 = vmatpush1.bf16.msra.mxu0 0
    %408 = vmatprep.subr.bf16.mxu0 0
    %409 = vmatpush1.bf16.msra.mxu0 0
    %410 = vmatprep.subr.bf16.mxu0 0
    %411 = vmatpush1.bf16.msra.mxu0 0
    %412 = vmatprep.subr.bf16.mxu0 0
    %413 = vmatpush1.bf16.msra.mxu0 0
    %414 = vmatprep.subr.bf16.mxu0 0
    %415 = vmatpush1.bf16.msra.mxu0 0
    %416 = vmatprep.subr.bf16.mxu0 0
    %417 = vmatpush1.bf16.msra.mxu0 0
    %418 = vmatprep.subr.bf16.mxu0 0
    %419 = vmatpush1.bf16.msra.mxu0 0
    %420 = vmatprep.mubr.bf16.mxu0 0
    %421 = vmatmul.mubr.bf16.gmra.mrb[0].mxu0 %v90
    %v422 = vpop.f32.mrb[0].mxu0
    %v423 = vadd.f32 %v339, %v422
    %v424 = vpop.f32.mrb[0].mxu0
    %v425 = vpop.f32.mrb[0].mxu0
    %v426 = vpop.f32.mrb[0].mxu0
    %427 = vdwg.mxu0
    %429 = vrot.lane.b32.xlu0 %v423, 96
    %v430 = vpop.permute.xlu0 %429
    %432 = vrot.lane.b32.xlu0 %v423, 64
    %v433 = vpop.permute.xlu0 %432
    %435 = vrot.lane.b32.xlu0 %v423, 32
    %v436 = vpop.permute.xlu0 %435
    %v438 = vpack.c.bf16 %v423, %v423
    %v439 = vpack.c.bf16 %v430, %v430
    %v440 = vpack.c.bf16 %v433, %v433
    %v441 = vpack.c.bf16 %v436, %v436
    %459 = vrot.lane.b32.xlu0 %v234, 96
    %v460 = vpop.permute.xlu0 %459
    %461 = vrot.lane.b32.xlu0 %v238, 96
    %v462 = vpop.permute.xlu0 %461
    %463 = vrot.lane.b32.xlu0 %v244, 96
    %v464 = vpop.permute.xlu0 %463
    %465 = vrot.lane.b32.xlu0 %v248, 96
    %v466 = vpop.permute.xlu0 %465
    %467 = vrot.lane.b32.xlu0 %v254, 96
    %v468 = vpop.permute.xlu0 %467
    %469 = vrot.lane.b32.xlu0 %v258, 96
    %v470 = vpop.permute.xlu0 %469
    %471 = vrot.lane.b32.xlu0 %v264, 96
    %v472 = vpop.permute.xlu0 %471
    %473 = vrot.lane.b32.xlu0 %v268, 96
    %v474 = vpop.permute.xlu0 %473
    %475 = vrot.lane.b32.xlu0 %v274, 96
    %v476 = vpop.permute.xlu0 %475
    %477 = vrot.lane.b32.xlu0 %v278, 96
    %v478 = vpop.permute.xlu0 %477
    %479 = vrot.lane.b32.xlu0 %v284, 96
    %v480 = vpop.permute.xlu0 %479
    %481 = vrot.lane.b32.xlu0 %v288, 96
    %v482 = vpop.permute.xlu0 %481
    %483 = vrot.lane.b32.xlu0 %v294, 96
    %v484 = vpop.permute.xlu0 %483
    %485 = vrot.lane.b32.xlu0 %v298, 96
    %v486 = vpop.permute.xlu0 %485
    %487 = vrot.lane.b32.xlu0 %v304, 96
    %v488 = vpop.permute.xlu0 %487
    %489 = vrot.lane.b32.xlu0 %v308, 96
    %v490 = vpop.permute.xlu0 %489
    %491 = vrot.lane.b32.xlu0 %v314, 96
    %v492 = vpop.permute.xlu0 %491
    %510 = vrot.lane.b32.xlu0 %v234, 64
    %v511 = vpop.permute.xlu0 %510
    %512 = vrot.lane.b32.xlu0 %v238, 64
    %v513 = vpop.permute.xlu0 %512
    %514 = vrot.lane.b32.xlu0 %v244, 64
    %v515 = vpop.permute.xlu0 %514
    %516 = vrot.lane.b32.xlu0 %v248, 64
    %v517 = vpop.permute.xlu0 %516
    %518 = vrot.lane.b32.xlu0 %v254, 64
    %v519 = vpop.permute.xlu0 %518
    %520 = vrot.lane.b32.xlu0 %v258, 64
    %v521 = vpop.permute.xlu0 %520
    %522 = vrot.lane.b32.xlu0 %v264, 64
    %v523 = vpop.permute.xlu0 %522
    %524 = vrot.lane.b32.xlu0 %v268, 64
    %v525 = vpop.permute.xlu0 %524
    %526 = vrot.lane.b32.xlu0 %v274, 64
    %v527 = vpop.permute.xlu0 %526
    %528 = vrot.lane.b32.xlu0 %v278, 64
    %v529 = vpop.permute.xlu0 %528
    %530 = vrot.lane.b32.xlu0 %v284, 64
    %v531 = vpop.permute.xlu0 %530
    %532 = vrot.lane.b32.xlu0 %v288, 64
    %v533 = vpop.permute.xlu0 %532
    %534 = vrot.lane.b32.xlu0 %v294, 64
    %v535 = vpop.permute.xlu0 %534
    %536 = vrot.lane.b32.xlu0 %v298, 64
    %v537 = vpop.permute.xlu0 %536
    %538 = vrot.lane.b32.xlu0 %v304, 64
    %v539 = vpop.permute.xlu0 %538
    %540 = vrot.lane.b32.xlu0 %v308, 64
    %v541 = vpop.permute.xlu0 %540
    %542 = vrot.lane.b32.xlu0 %v314, 64
    %v543 = vpop.permute.xlu0 %542
    %561 = vrot.lane.b32.xlu0 %v234, 32
    %v562 = vpop.permute.xlu0 %561
    %563 = vrot.lane.b32.xlu0 %v238, 32
    %v564 = vpop.permute.xlu0 %563
    %565 = vrot.lane.b32.xlu0 %v244, 32
    %v566 = vpop.permute.xlu0 %565
    %567 = vrot.lane.b32.xlu0 %v248, 32
    %v568 = vpop.permute.xlu0 %567
    %569 = vrot.lane.b32.xlu0 %v254, 32
    %v570 = vpop.permute.xlu0 %569
    %571 = vrot.lane.b32.xlu0 %v258, 32
    %v572 = vpop.permute.xlu0 %571
    %573 = vrot.lane.b32.xlu0 %v264, 32
    %v574 = vpop.permute.xlu0 %573
    %575 = vrot.lane.b32.xlu0 %v268, 32
    %v576 = vpop.permute.xlu0 %575
    %577 = vrot.lane.b32.xlu0 %v274, 32
    %v578 = vpop.permute.xlu0 %577
    %579 = vrot.lane.b32.xlu0 %v278, 32
    %v580 = vpop.permute.xlu0 %579
    %581 = vrot.lane.b32.xlu0 %v284, 32
    %v582 = vpop.permute.xlu0 %581
    %583 = vrot.lane.b32.xlu0 %v288, 32
    %v584 = vpop.permute.xlu0 %583
    %585 = vrot.lane.b32.xlu0 %v294, 32
    %v586 = vpop.permute.xlu0 %585
    %587 = vrot.lane.b32.xlu0 %v298, 32
    %v588 = vpop.permute.xlu0 %587
    %589 = vrot.lane.b32.xlu0 %v304, 32
    %v590 = vpop.permute.xlu0 %589
    %591 = vrot.lane.b32.xlu0 %v308, 32
    %v592 = vpop.permute.xlu0 %591
    %593 = vrot.lane.b32.xlu0 %v314, 32
    %v594 = vpop.permute.xlu0 %593
    %v612 = vpack.c.bf16 %v238, %v234
    %v613 = vpack.c.bf16 %v248, %v244
    %v614 = vpack.c.bf16 %v258, %v254
    %v615 = vpack.c.bf16 %v268, %v264
    %v616 = vpack.c.bf16 %v278, %v274
    %v617 = vpack.c.bf16 %v288, %v284
    %v618 = vpack.c.bf16 %v298, %v294
    %v619 = vpack.c.bf16 %v308, %v304
    %v620 = vpack.c.bf16 %v314, %v314
    %v621 = vpack.c.bf16 %v462, %v460
    %v622 = vpack.c.bf16 %v466, %v464
    %v623 = vpack.c.bf16 %v470, %v468
    %v624 = vpack.c.bf16 %v474, %v472
    %v625 = vpack.c.bf16 %v478, %v476
    %v626 = vpack.c.bf16 %v482, %v480
    %v627 = vpack.c.bf16 %v486, %v484
    %v628 = vpack.c.bf16 %v490, %v488
    %v629 = vpack.c.bf16 %v492, %v492
    %v630 = vpack.c.bf16 %v513, %v511
    %v631 = vpack.c.bf16 %v517, %v515
    %v632 = vpack.c.bf16 %v521, %v519
    %v633 = vpack.c.bf16 %v525, %v523
    %v634 = vpack.c.bf16 %v529, %v527
    %v635 = vpack.c.bf16 %v533, %v531
    %v636 = vpack.c.bf16 %v537, %v535
    %v637 = vpack.c.bf16 %v541, %v539
    %v638 = vpack.c.bf16 %v543, %v543
    %v639 = vpack.c.bf16 %v564, %v562
    %v640 = vpack.c.bf16 %v568, %v566
    %v641 = vpack.c.bf16 %v572, %v570
    %v642 = vpack.c.bf16 %v576, %v574
    %v643 = vpack.c.bf16 %v580, %v578
    %v644 = vpack.c.bf16 %v584, %v582
    %v645 = vpack.c.bf16 %v588, %v586
    %v646 = vpack.c.bf16 %v592, %v590
    %v647 = vpack.c.bf16 %v594, %v594
    %665 = vrot.lane.b32.xlu0 %v236, 96
    %v666 = vpop.permute.xlu0 %665
    %667 = vrot.lane.b32.xlu0 %v240, 96
    %v668 = vpop.permute.xlu0 %667
    %669 = vrot.lane.b32.xlu0 %v246, 96
    %v670 = vpop.permute.xlu0 %669
    %671 = vrot.lane.b32.xlu0 %v250, 96
    %v672 = vpop.permute.xlu0 %671
    %673 = vrot.lane.b32.xlu0 %v256, 96
    %v674 = vpop.permute.xlu0 %673
    %675 = vrot.lane.b32.xlu0 %v260, 96
    %v676 = vpop.permute.xlu0 %675
    %677 = vrot.lane.b32.xlu0 %v266, 96
    %v678 = vpop.permute.xlu0 %677
    %679 = vrot.lane.b32.xlu0 %v270, 96
    %v680 = vpop.permute.xlu0 %679
    %681 = vrot.lane.b32.xlu0 %v276, 96
    %v682 = vpop.permute.xlu0 %681
    %683 = vrot.lane.b32.xlu0 %v280, 96
    %v684 = vpop.permute.xlu0 %683
    %685 = vrot.lane.b32.xlu0 %v286, 96
    %v686 = vpop.permute.xlu0 %685
    %687 = vrot.lane.b32.xlu0 %v290, 96
    %v688 = vpop.permute.xlu0 %687
    %689 = vrot.lane.b32.xlu0 %v296, 96
    %v690 = vpop.permute.xlu0 %689
    %691 = vrot.lane.b32.xlu0 %v300, 96
    %v692 = vpop.permute.xlu0 %691
    %693 = vrot.lane.b32.xlu0 %v306, 96
    %v694 = vpop.permute.xlu0 %693
    %695 = vrot.lane.b32.xlu0 %v310, 96
    %v696 = vpop.permute.xlu0 %695
    %697 = vrot.lane.b32.xlu0 %v316, 96
    %v698 = vpop.permute.xlu0 %697
    %716 = vrot.lane.b32.xlu0 %v236, 64
    %v717 = vpop.permute.xlu0 %716
    %718 = vrot.lane.b32.xlu0 %v240, 64
    %v719 = vpop.permute.xlu0 %718
    %720 = vrot.lane.b32.xlu0 %v246, 64
    %v721 = vpop.permute.xlu0 %720
    %722 = vrot.lane.b32.xlu0 %v250, 64
    %v723 = vpop.permute.xlu0 %722
    %724 = vrot.lane.b32.xlu0 %v256, 64
    %v725 = vpop.permute.xlu0 %724
    %726 = vrot.lane.b32.xlu0 %v260, 64
    %v727 = vpop.permute.xlu0 %726
    %728 = vrot.lane.b32.xlu0 %v266, 64
    %v729 = vpop.permute.xlu0 %728
    %730 = vrot.lane.b32.xlu0 %v270, 64
    %v731 = vpop.permute.xlu0 %730
    %732 = vrot.lane.b32.xlu0 %v276, 64
    %v733 = vpop.permute.xlu0 %732
    %734 = vrot.lane.b32.xlu0 %v280, 64
    %v735 = vpop.permute.xlu0 %734
    %736 = vrot.lane.b32.xlu0 %v286, 64
    %v737 = vpop.permute.xlu0 %736
    %738 = vrot.lane.b32.xlu0 %v290, 64
    %v739 = vpop.permute.xlu0 %738
    %740 = vrot.lane.b32.xlu0 %v296, 64
    %v741 = vpop.permute.xlu0 %740
    %742 = vrot.lane.b32.xlu0 %v300, 64
    %v743 = vpop.permute.xlu0 %742
    %744 = vrot.lane.b32.xlu0 %v306, 64
    %v745 = vpop.permute.xlu0 %744
    %746 = vrot.lane.b32.xlu0 %v310, 64
    %v747 = vpop.permute.xlu0 %746
    %748 = vrot.lane.b32.xlu0 %v316, 64
    %v749 = vpop.permute.xlu0 %748
    %767 = vrot.lane.b32.xlu0 %v236, 32
    %v768 = vpop.permute.xlu0 %767
    %769 = vrot.lane.b32.xlu0 %v240, 32
    %v770 = vpop.permute.xlu0 %769
    %771 = vrot.lane.b32.xlu0 %v246, 32
    %v772 = vpop.permute.xlu0 %771
    %773 = vrot.lane.b32.xlu0 %v250, 32
    %v774 = vpop.permute.xlu0 %773
    %775 = vrot.lane.b32.xlu0 %v256, 32
    %v776 = vpop.permute.xlu0 %775
    %777 = vrot.lane.b32.xlu0 %v260, 32
    %v778 = vpop.permute.xlu0 %777
    %779 = vrot.lane.b32.xlu0 %v266, 32
    %v780 = vpop.permute.xlu0 %779
    %781 = vrot.lane.b32.xlu0 %v270, 32
    %v782 = vpop.permute.xlu0 %781
    %783 = vrot.lane.b32.xlu0 %v276, 32
    %v784 = vpop.permute.xlu0 %783
    %785 = vrot.lane.b32.xlu0 %v280, 32
    %v786 = vpop.permute.xlu0 %785
    %787 = vrot.lane.b32.xlu0 %v286, 32
    %v788 = vpop.permute.xlu0 %787
    %789 = vrot.lane.b32.xlu0 %v290, 32
    %v790 = vpop.permute.xlu0 %789
    %791 = vrot.lane.b32.xlu0 %v296, 32
    %v792 = vpop.permute.xlu0 %791
    %793 = vrot.lane.b32.xlu0 %v300, 32
    %v794 = vpop.permute.xlu0 %793
    %795 = vrot.lane.b32.xlu0 %v306, 32
    %v796 = vpop.permute.xlu0 %795
    %797 = vrot.lane.b32.xlu0 %v310, 32
    %v798 = vpop.permute.xlu0 %797
    %799 = vrot.lane.b32.xlu0 %v316, 32
    %v800 = vpop.permute.xlu0 %799
    %v818 = vpack.c.bf16 %v240, %v236
    %v819 = vpack.c.bf16 %v250, %v246
    %v820 = vpack.c.bf16 %v260, %v256
    %v821 = vpack.c.bf16 %v270, %v266
    %v822 = vpack.c.bf16 %v280, %v276
    %v823 = vpack.c.bf16 %v290, %v286
    %v824 = vpack.c.bf16 %v300, %v296
    %v825 = vpack.c.bf16 %v310, %v306
    %v826 = vpack.c.bf16 %v316, %v316
    %v827 = vpack.c.bf16 %v668, %v666
    %v828 = vpack.c.bf16 %v672, %v670
    %v829 = vpack.c.bf16 %v676, %v674
    %v830 = vpack.c.bf16 %v680, %v678
    %v831 = vpack.c.bf16 %v684, %v682
    %v832 = vpack.c.bf16 %v688, %v686
    %v833 = vpack.c.bf16 %v692, %v690
    %v834 = vpack.c.bf16 %v696, %v694
    %v835 = vpack.c.bf16 %v698, %v698
    %v836 = vpack.c.bf16 %v719, %v717
    %v837 = vpack.c.bf16 %v723, %v721
    %v838 = vpack.c.bf16 %v727, %v725
    %v839 = vpack.c.bf16 %v731, %v729
    %v840 = vpack.c.bf16 %v735, %v733
    %v841 = vpack.c.bf16 %v739, %v737
    %v842 = vpack.c.bf16 %v743, %v741
    %v843 = vpack.c.bf16 %v747, %v745
    %v844 = vpack.c.bf16 %v749, %v749
    %v845 = vpack.c.bf16 %v770, %v768
    %v846 = vpack.c.bf16 %v774, %v772
    %v847 = vpack.c.bf16 %v778, %v776
    %v848 = vpack.c.bf16 %v782, %v780
    %v849 = vpack.c.bf16 %v786, %v784
    %v850 = vpack.c.bf16 %v790, %v788
    %v851 = vpack.c.bf16 %v794, %v792
    %v852 = vpack.c.bf16 %v798, %v796
    %v853 = vpack.c.bf16 %v800, %v800
    %vm854 = vcmask 261120
    %v856 = vsel %vm854, %v438, 0
    %v859 = vsel %vm854, %v612, 0
    %v862 = vsel %vm854, %v613, 0
    %v865 = vsel %vm854, %v614, 0
    %v868 = vsel %vm854, %v615, 0
    %v871 = vsel %vm854, %v616, 0
    %v874 = vsel %vm854, %v617, 0
    %v877 = vsel %vm854, %v618, 0
    %v880 = vsel %vm854, %v619, 0
    %v883 = vsel %vm854, %v620, 0
    %885 = vmatprep.subr.bf16.mxu0 0
    %886 = vmatpush1.bf16.xpose.msra.mxu0 %v859
    %887 = vmatprep.subr.bf16.mxu0 0
    %888 = vmatpush1.bf16.xpose.msra.mxu0 %v862
    %889 = vmatprep.subr.bf16.mxu0 0
    %890 = vmatpush1.bf16.xpose.msra.mxu0 %v865
    %891 = vmatprep.subr.bf16.mxu0 0
    %892 = vmatpush1.bf16.xpose.msra.mxu0 %v868
    %893 = vmatprep.subr.bf16.mxu0 0
    %894 = vmatpush1.bf16.xpose.msra.mxu0 %v871
    %895 = vmatprep.subr.bf16.mxu0 0
    %896 = vmatpush1.bf16.xpose.msra.mxu0 %v874
    %897 = vmatprep.subr.bf16.mxu0 0
    %898 = vmatpush1.bf16.xpose.msra.mxu0 %v877
    %899 = vmatprep.subr.bf16.mxu0 0
    %900 = vmatpush1.bf16.xpose.msra.mxu0 %v880
    %901 = vmatprep.subr.bf16.mxu0 0
    %902 = vmatpush1.bf16.xpose.msra.mxu0 %v883
    %903 = vmatprep.subr.bf16.mxu0 0
    %904 = vmatpush1.bf16.xpose.msra.mxu0 0
    %905 = vmatprep.subr.bf16.mxu0 0
    %906 = vmatpush1.bf16.xpose.msra.mxu0 0
    %907 = vmatprep.subr.bf16.mxu0 0
    %908 = vmatpush1.bf16.xpose.msra.mxu0 0
    %909 = vmatprep.subr.bf16.mxu0 0
    %910 = vmatpush1.bf16.xpose.msra.mxu0 0
    %911 = vmatprep.subr.bf16.mxu0 0
    %912 = vmatpush1.bf16.xpose.msra.mxu0 0
    %913 = vmatprep.subr.bf16.mxu0 0
    %914 = vmatpush1.bf16.xpose.msra.mxu0 0
    %915 = vmatprep.subr.bf16.mxu0 0
    %916 = vmatpush1.bf16.xpose.msra.mxu0 0
    %917 = vmatprep.mubr.bf16.mxu0 0
    %918 = vmatmul.mubr.bf16.gmra.mrb[0].mxu0 %v856
    %v919 = vpop.f32.mrb[0].mxu0
    %v920 = vadd.f32 0.0, %v919
    %v921 = vpop.f32.mrb[0].mxu0
    %v922 = vadd.f32 0.0, %v921
    %v923 = vpop.f32.mrb[0].mxu0
    %v924 = vpop.f32.mrb[0].mxu0
    %925 = vdwg.mxu0
    %v927 = vsel %vm854, %v439, 0
    %v930 = vsel %vm854, %v621, 0
    %v933 = vsel %vm854, %v622, 0
    %v936 = vsel %vm854, %v623, 0
    %v939 = vsel %vm854, %v624, 0
    %v942 = vsel %vm854, %v625, 0
    %v945 = vsel %vm854, %v626, 0
    %v948 = vsel %vm854, %v627, 0
    %v951 = vsel %vm854, %v628, 0
    %v954 = vsel %vm854, %v629, 0
    %956 = vmatprep.subr.bf16.mxu0 0
    %957 = vmatpush1.bf16.xpose.msra.mxu0 %v930
    %958 = vmatprep.subr.bf16.mxu0 0
    %959 = vmatpush1.bf16.xpose.msra.mxu0 %v933
    %960 = vmatprep.subr.bf16.mxu0 0
    %961 = vmatpush1.bf16.xpose.msra.mxu0 %v936
    %962 = vmatprep.subr.bf16.mxu0 0
    %963 = vmatpush1.bf16.xpose.msra.mxu0 %v939
    %964 = vmatprep.subr.bf16.mxu0 0
    %965 = vmatpush1.bf16.xpose.msra.mxu0 %v942
    %966 = vmatprep.subr.bf16.mxu0 0
    %967 = vmatpush1.bf16.xpose.msra.mxu0 %v945
    %968 = vmatprep.subr.bf16.mxu0 0
    %969 = vmatpush1.bf16.xpose.msra.mxu0 %v948
    %970 = vmatprep.subr.bf16.mxu0 0
    %971 = vmatpush1.bf16.xpose.msra.mxu0 %v951
    %972 = vmatprep.subr.bf16.mxu0 0
    %973 = vmatpush1.bf16.xpose.msra.mxu0 %v954
    %974 = vmatprep.subr.bf16.mxu0 0
    %975 = vmatpush1.bf16.xpose.msra.mxu0 0
    %976 = vmatprep.subr.bf16.mxu0 0
    %977 = vmatpush1.bf16.xpose.msra.mxu0 0
    %978 = vmatprep.subr.bf16.mxu0 0
    %979 = vmatpush1.bf16.xpose.msra.mxu0 0
    %980 = vmatprep.subr.bf16.mxu0 0
    %981 = vmatpush1.bf16.xpose.msra.mxu0 0
    %982 = vmatprep.subr.bf16.mxu0 0
    %983 = vmatpush1.bf16.xpose.msra.mxu0 0
    %984 = vmatprep.subr.bf16.mxu0 0
    %985 = vmatpush1.bf16.xpose.msra.mxu0 0
    %986 = vmatprep.subr.bf16.mxu0 0
    %987 = vmatpush1.bf16.xpose.msra.mxu0 0
    %988 = vmatprep.mubr.bf16.mxu0 0
    %989 = vmatmul.mubr.bf16.gmra.mrb[0].mxu0 %v927
    %v990 = vpop.f32.mrb[0].mxu0
    %v991 = vadd.f32 0.0, %v990
    %v992 = vpop.f32.mrb[0].mxu0
    %v993 = vadd.f32 0.0, %v992
    %v994 = vpop.f32.mrb[0].mxu0
    %v995 = vpop.f32.mrb[0].mxu0
    %996 = vdwg.mxu0
    %v998 = vsel %vm854, %v440, 0
    %v1001 = vsel %vm854, %v630, 0
    %v1004 = vsel %vm854, %v631, 0
    %v1007 = vsel %vm854, %v632, 0
    %v1010 = vsel %vm854, %v633, 0
    %v1013 = vsel %vm854, %v634, 0
    %v1016 = vsel %vm854, %v635, 0
    %v1019 = vsel %vm854, %v636, 0
    %v1022 = vsel %vm854, %v637, 0
    %v1025 = vsel %vm854, %v638, 0
    %1027 = vmatprep.subr.bf16.mxu0 0
    %1028 = vmatpush1.bf16.xpose.msra.mxu0 %v1001
    %1029 = vmatprep.subr.bf16.mxu0 0
    %1030 = vmatpush1.bf16.xpose.msra.mxu0 %v1004
    %1031 = vmatprep.subr.bf16.mxu0 0
    %1032 = vmatpush1.bf16.xpose.msra.mxu0 %v1007
    %1033 = vmatprep.subr.bf16.mxu0 0
    %1034 = vmatpush1.bf16.xpose.msra.mxu0 %v1010
    %1035 = vmatprep.subr.bf16.mxu0 0
    %1036 = vmatpush1.bf16.xpose.msra.mxu0 %v1013
    %1037 = vmatprep.subr.bf16.mxu0 0
    %1038 = vmatpush1.bf16.xpose.msra.mxu0 %v1016
    %1039 = vmatprep.subr.bf16.mxu0 0
    %1040 = vmatpush1.bf16.xpose.msra.mxu0 %v1019
    %1041 = vmatprep.subr.bf16.mxu0 0
    %1042 = vmatpush1.bf16.xpose.msra.mxu0 %v1022
    %1043 = vmatprep.subr.bf16.mxu0 0
    %1044 = vmatpush1.bf16.xpose.msra.mxu0 %v1025
    %1045 = vmatprep.subr.bf16.mxu0 0
    %1046 = vmatpush1.bf16.xpose.msra.mxu0 0
    %1047 = vmatprep.subr.bf16.mxu0 0
    %1048 = vmatpush1.bf16.xpose.msra.mxu0 0
    %1049 = vmatprep.subr.bf16.mxu0 0
    %1050 = vmatpush1.bf16.xpose.msra.mxu0 0
    %1051 = vmatprep.subr.bf16.mxu0 0
    %1052 = vmatpush1.bf16.xpose.msra.mxu0 0
    %1053 = vmatprep.subr.bf16.mxu0 0
    %1054 = vmatpush1.bf16.xpose.msra.mxu0 0
    %1055 = vmatprep.subr.bf16.mxu0 0
    %1056 = vmatpush1.bf16.xpose.msra.mxu0 0
    %1057 = vmatprep.subr.bf16.mxu0 0
    %1058 = vmatpush1.bf16.xpose.msra.mxu0 0
    %1059 = vmatprep.mubr.bf16.mxu0 0
    %1060 = vmatmul.mubr.bf16.gmra.mrb[0].mxu0 %v998
    %v1061 = vpop.f32.mrb[0].mxu0
    %v1062 = vadd.f32 0.0, %v1061
    %v1063 = vpop.f32.mrb[0].mxu0
    %v1064 = vadd.f32 0.0, %v1063
    %v1065 = vpop.f32.mrb[0].mxu0
    %v1066 = vpop.f32.mrb[0].mxu0
    %1067 = vdwg.mxu0
    %v1069 = vsel %vm854, %v441, 0
    %v1072 = vsel %vm854, %v639, 0
    %v1075 = vsel %vm854, %v640, 0
    %v1078 = vsel %vm854, %v641, 0
    %v1081 = vsel %vm854, %v642, 0
    %v1084 = vsel %vm854, %v643, 0
    %v1087 = vsel %vm854, %v644, 0
    %v1090 = vsel %vm854, %v645, 0
    %v1093 = vsel %vm854, %v646, 0
    %v1096 = vsel %vm854, %v647, 0
    %1098 = vmatprep.subr.bf16.mxu0 0
    %1099 = vmatpush1.bf16.xpose.msra.mxu0 %v1072
    %1100 = vmatprep.subr.bf16.mxu0 0
    %1101 = vmatpush1.bf16.xpose.msra.mxu0 %v1075
    %1102 = vmatprep.subr.bf16.mxu0 0
    %1103 = vmatpush1.bf16.xpose.msra.mxu0 %v1078
    %1104 = vmatprep.subr.bf16.mxu0 0
    %1105 = vmatpush1.bf16.xpose.msra.mxu0 %v1081
    %1106 = vmatprep.subr.bf16.mxu0 0
    %1107 = vmatpush1.bf16.xpose.msra.mxu0 %v1084
    %1108 = vmatprep.subr.bf16.mxu0 0
    %1109 = vmatpush1.bf16.xpose.msra.mxu0 %v1087
    %1110 = vmatprep.subr.bf16.mxu0 0
    %1111 = vmatpush1.bf16.xpose.msra.mxu0 %v1090
    %1112 = vmatprep.subr.bf16.mxu0 0
    %1113 = vmatpush1.bf16.xpose.msra.mxu0 %v1093
    %1114 = vmatprep.subr.bf16.mxu0 0
    %1115 = vmatpush1.bf16.xpose.msra.mxu0 %v1096
    %1116 = vmatprep.subr.bf16.mxu0 0
    %1117 = vmatpush1.bf16.xpose.msra.mxu0 0
    %1118 = vmatprep.subr.bf16.mxu0 0
    %1119 = vmatpush1.bf16.xpose.msra.mxu0 0
    %1120 = vmatprep.subr.bf16.mxu0 0
    %1121 = vmatpush1.bf16.xpose.msra.mxu0 0
    %1122 = vmatprep.subr.bf16.mxu0 0
    %1123 = vmatpush1.bf16.xpose.msra.mxu0 0
    %1124 = vmatprep.subr.bf16.mxu0 0
    %1125 = vmatpush1.bf16.xpose.msra.mxu0 0
    %1126 = vmatprep.subr.bf16.mxu0 0
    %1127 = vmatpush1.bf16.xpose.msra.mxu0 0
    %1128 = vmatprep.subr.bf16.mxu0 0
    %1129 = vmatpush1.bf16.xpose.msra.mxu0 0
    %1130 = vmatprep.mubr.bf16.mxu0 0
    %1131 = vmatmul.mubr.bf16.gmra.mrb[0].mxu0 %v1069
    %v1132 = vpop.f32.mrb[0].mxu0
    %v1133 = vadd.f32 0.0, %v1132
    %v1134 = vpop.f32.mrb[0].mxu0
    %v1135 = vadd.f32 0.0, %v1134
    %v1136 = vpop.f32.mrb[0].mxu0
    %v1137 = vpop.f32.mrb[0].mxu0
    %1138 = vdwg.mxu0
    %v1139 = vmul.f32 %v920, 0.17677669
    %v1140 = vmul.f32 %v922, 0.17677669
    %v1141 = vmul.f32 %v991, 0.17677669
    %v1142 = vmul.f32 %v993, 0.17677669
    %v1143 = vmul.f32 %v1062, 0.17677669
    %v1144 = vmul.f32 %v1064, 0.17677669
    %v1145 = vmul.f32 %v1133, 0.17677669
    %v1146 = vmul.f32 %v1135, 0.17677669
    %vm1147 = vcmask 1042432
    %v1148 = vsel %vm1147, %v1139, -inf
    %vm1149 = vcmask 26624
    %v1150 = vsel %vm1149, %v1140, -inf
    %v1151 = vmax.f32 %v1148, %v1150
    %1152 = vmax.xlane.f32.xlu0 %v1151
    %v1153 = vpop.xlane.xlu0 %1152
    %v1154 = vsel %vm1147, %v1141, -inf
    %v1155 = vsel %vm1149, %v1142, -inf
    %v1156 = vmax.f32 %v1154, %v1155
    %1157 = vmax.xlane.f32.xlu0 %v1156
    %v1158 = vpop.xlane.xlu0 %1157
    %v1159 = vsel %vm1147, %v1143, -inf
    %v1160 = vsel %vm1149, %v1144, -inf
    %v1161 = vmax.f32 %v1159, %v1160
    %1162 = vmax.xlane.f32.xlu0 %v1161
    %v1163 = vpop.xlane.xlu0 %1162
    %v1164 = vsel %vm1147, %v1145, -inf
    %v1165 = vsel %vm1149, %v1146, -inf
    %v1166 = vmax.f32 %v1164, %v1165
    %1167 = vmax.xlane.f32.xlu0 %v1166
    %v1168 = vpop.xlane.xlu0 %1167
    %v1169 = vsub.f32 %v1139, %v1153
    %v1170 = vsub.f32 %v1140, %v1153
    %v1171 = vsub.f32 %v1141, %v1158
    %v1172 = vsub.f32 %v1142, %v1158
    %v1173 = vsub.f32 %v1143, %v1163
    %v1174 = vsub.f32 %v1144, %v1163
    %v1175 = vsub.f32 %v1145, %v1168
    %v1176 = vsub.f32 %v1146, %v1168
    %v1177 = vmul.f32 %v1169, 1.442695
    %v1178 = vpow.pop %v1177
    %v1179 = vmul.f32 %v1170, 1.442695
    %v1180 = vpow.pop %v1179
    %v1181 = vmul.f32 %v1171, 1.442695
    %v1182 = vpow.pop %v1181
    %v1183 = vmul.f32 %v1172, 1.442695
    %v1184 = vpow.pop %v1183
    %v1185 = vmul.f32 %v1173, 1.442695
    %v1186 = vpow.pop %v1185
    %v1187 = vmul.f32 %v1174, 1.442695
    %v1188 = vpow.pop %v1187
    %v1189 = vmul.f32 %v1175, 1.442695
    %v1190 = vpow.pop %v1189
    %v1191 = vmul.f32 %v1176, 1.442695
    %v1192 = vpow.pop %v1191
    %v1193 = vsel %vm1147, %v1178, 0.0
    %v1194 = vsel %vm1149, %v1180, 0.0
    %v1195 = vadd.f32 %v1193, %v1194
    %1196 = vadd.xlane.f32.xlu0 %v1195
    %v1197 = vpop.xlane.xlu0 %1196
    %v1198 = vsel %vm1147, %v1182, 0.0
    %v1199 = vsel %vm1149, %v1184, 0.0
    %v1200 = vadd.f32 %v1198, %v1199
    %1201 = vadd.xlane.f32.xlu0 %v1200
    %v1202 = vpop.xlane.xlu0 %1201
    %v1203 = vsel %vm1147, %v1186, 0.0
    %v1204 = vsel %vm1149, %v1188, 0.0
    %v1205 = vadd.f32 %v1203, %v1204
    %1206 = vadd.xlane.f32.xlu0 %v1205
    %v1207 = vpop.xlane.xlu0 %1206
    %v1208 = vsel %vm1147, %v1190, 0.0
    %v1209 = vsel %vm1149, %v1192, 0.0
    %v1210 = vadd.f32 %v1208, %v1209
    %1211 = vadd.xlane.f32.xlu0 %v1210
    %v1212 = vpop.xlane.xlu0 %1211
    %v1213 = vrcp.pop %v1197
    %v1214 = vrcp.pop %v1202
    %v1215 = vrcp.pop %v1207
    %v1216 = vrcp.pop %v1212
    %v1217 = vmul.f32 %v1178, %v1213
    %v1218 = vmul.f32 %v1180, %v1213
    %v1219 = vmul.f32 %v1182, %v1214
    %v1220 = vmul.f32 %v1184, %v1214
    %v1221 = vmul.f32 %v1186, %v1215
    %v1222 = vmul.f32 %v1188, %v1215
    %v1223 = vmul.f32 %v1190, %v1216
    %v1224 = vmul.f32 %v1192, %v1216
    %v1225 = vpack.c.bf16 %v1217, %v1217
    %v1226 = vpack.c.bf16 %v1218, %v1218
    %v1227 = vpack.c.bf16 %v1219, %v1219
    %v1228 = vpack.c.bf16 %v1220, %v1220
    %v1229 = vpack.c.bf16 %v1221, %v1221
    %v1230 = vpack.c.bf16 %v1222, %v1222
    %v1231 = vpack.c.bf16 %v1223, %v1223
    %v1232 = vpack.c.bf16 %v1224, %v1224
    %vm1233 = vcmask 31744
    %v1235 = vsel %vm1233, %v1226, 0
    %vm1237 = vcmask 1041408
    %v1239 = vsel %vm1237, %v826, 0
    %1241 = vmatprep.subr.bf16.mxu0 0
    %1242 = vmatpush1.bf16.msra.mxu0 %v818
    %1243 = vmatprep.subr.bf16.mxu0 0
    %1244 = vmatpush1.bf16.msra.mxu0 %v819
    %1245 = vmatprep.subr.bf16.mxu0 0
    %1246 = vmatpush1.bf16.msra.mxu0 %v820
    %1247 = vmatprep.subr.bf16.mxu0 0
    %1248 = vmatpush1.bf16.msra.mxu0 %v821
    %1249 = vmatprep.subr.bf16.mxu0 0
    %1250 = vmatpush1.bf16.msra.mxu0 %v822
    %1251 = vmatprep.subr.bf16.mxu0 0
    %1252 = vmatpush1.bf16.msra.mxu0 %v823
    %1253 = vmatprep.subr.bf16.mxu0 0
    %1254 = vmatpush1.bf16.msra.mxu0 %v824
    %1255 = vmatprep.subr.bf16.mxu0 0
    %1256 = vmatpush1.bf16.msra.mxu0 %v825
    %1257 = vmatprep.subr.bf16.mxu0 0
    %1258 = vmatpush1.bf16.msra.mxu0 %v1239
    %1259 = vmatprep.subr.bf16.mxu0 0
    %1260 = vmatpush1.bf16.msra.mxu0 0
    %1261 = vmatprep.subr.bf16.mxu0 0
    %1262 = vmatpush1.bf16.msra.mxu0 0
    %1263 = vmatprep.subr.bf16.mxu0 0
    %1264 = vmatpush1.bf16.msra.mxu0 0
    %1265 = vmatprep.subr.bf16.mxu0 0
    %1266 = vmatpush1.bf16.msra.mxu0 0
    %1267 = vmatprep.subr.bf16.mxu0 0
    %1268 = vmatpush1.bf16.msra.mxu0 0
    %1269 = vmatprep.subr.bf16.mxu0 0
    %1270 = vmatpush1.bf16.msra.mxu0 0
    %1271 = vmatprep.subr.bf16.mxu0 0
    %1272 = vmatpush1.bf16.msra.mxu0 0
    %1273 = vmatprep.mubr.bf16.mxu0 %v1235
    %1274 = vmatmul.mubr.bf16.gmra.mrb[0].mxu0 %v1225
    %v1275 = vpop.f32.mrb[0].mxu0
    %v1276 = vadd.f32 0.0, %v1275
    %v1277 = vpop.f32.mrb[0].mxu0
    %v1278 = vpop.f32.mrb[0].mxu0
    %v1279 = vpop.f32.mrb[0].mxu0
    %1280 = vdwg.mxu0
    %v1282 = vsel %vm1233, %v1228, 0
    %v1285 = vsel %vm1237, %v835, 0
    %1287 = vmatprep.subr.bf16.mxu0 0
    %1288 = vmatpush1.bf16.msra.mxu0 %v827
    %1289 = vmatprep.subr.bf16.mxu0 0
    %1290 = vmatpush1.bf16.msra.mxu0 %v828
    %1291 = vmatprep.subr.bf16.mxu0 0
    %1292 = vmatpush1.bf16.msra.mxu0 %v829
    %1293 = vmatprep.subr.bf16.mxu0 0
    %1294 = vmatpush1.bf16.msra.mxu0 %v830
    %1295 = vmatprep.subr.bf16.mxu0 0
    %1296 = vmatpush1.bf16.msra.mxu0 %v831
    %1297 = vmatprep.subr.bf16.mxu0 0
    %1298 = vmatpush1.bf16.msra.mxu0 %v832
    %1299 = vmatprep.subr.bf16.mxu0 0
    %1300 = vmatpush1.bf16.msra.mxu0 %v833
    %1301 = vmatprep.subr.bf16.mxu0 0
    %1302 = vmatpush1.bf16.msra.mxu0 %v834
    %1303 = vmatprep.subr.bf16.mxu0 0
    %1304 = vmatpush1.bf16.msra.mxu0 %v1285
    %1305 = vmatprep.subr.bf16.mxu0 0
    %1306 = vmatpush1.bf16.msra.mxu0 0
    %1307 = vmatprep.subr.bf16.mxu0 0
    %1308 = vmatpush1.bf16.msra.mxu0 0
    %1309 = vmatprep.subr.bf16.mxu0 0
    %1310 = vmatpush1.bf16.msra.mxu0 0
    %1311 = vmatprep.subr.bf16.mxu0 0
    %1312 = vmatpush1.bf16.msra.mxu0 0
    %1313 = vmatprep.subr.bf16.mxu0 0
    %1314 = vmatpush1.bf16.msra.mxu0 0
    %1315 = vmatprep.subr.bf16.mxu0 0
    %1316 = vmatpush1.bf16.msra.mxu0 0
    %1317 = vmatprep.subr.bf16.mxu0 0
    %1318 = vmatpush1.bf16.msra.mxu0 0
    %1319 = vmatprep.mubr.bf16.mxu0 %v1282
    %1320 = vmatmul.mubr.bf16.gmra.mrb[0].mxu0 %v1227
    %v1321 = vpop.f32.mrb[0].mxu0
    %v1322 = vadd.f32 0.0, %v1321
    %v1323 = vpop.f32.mrb[0].mxu0
    %v1324 = vpop.f32.mrb[0].mxu0
    %v1325 = vpop.f32.mrb[0].mxu0
    %1326 = vdwg.mxu0
    %v1328 = vsel %vm1233, %v1230, 0
    %v1331 = vsel %vm1237, %v844, 0
    %1333 = vmatprep.subr.bf16.mxu0 0
    %1334 = vmatpush1.bf16.msra.mxu0 %v836
    %1335 = vmatprep.subr.bf16.mxu0 0
    %1336 = vmatpush1.bf16.msra.mxu0 %v837
    %1337 = vmatprep.subr.bf16.mxu0 0
    %1338 = vmatpush1.bf16.msra.mxu0 %v838
    %1339 = vmatprep.subr.bf16.mxu0 0
    %1340 = vmatpush1.bf16.msra.mxu0 %v839
    %1341 = vmatprep.subr.bf16.mxu0 0
    %1342 = vmatpush1.bf16.msra.mxu0 %v840
    %1343 = vmatprep.subr.bf16.mxu0 0
    %1344 = vmatpush1.bf16.msra.mxu0 %v841
    %1345 = vmatprep.subr.bf16.mxu0 0
    %1346 = vmatpush1.bf16.msra.mxu0 %v842
    %1347 = vmatprep.subr.bf16.mxu0 0
    %1348 = vmatpush1.bf16.msra.mxu0 %v843
    %1349 = vmatprep.subr.bf16.mxu0 0
    %1350 = vmatpush1.bf16.msra.mxu0 %v1331
    %1351 = vmatprep.subr.bf16.mxu0 0
    %1352 = vmatpush1.bf16.msra.mxu0 0
    %1353 = vmatprep.subr.bf16.mxu0 0
    %1354 = vmatpush1.bf16.msra.mxu0 0
    %1355 = vmatprep.subr.bf16.mxu0 0
    %1356 = vmatpush1.bf16.msra.mxu0 0
    %1357 = vmatprep.subr.bf16.mxu0 0
    %1358 = vmatpush1.bf16.msra.mxu0 0
    %1359 = vmatprep.subr.bf16.mxu0 0
    %1360 = vmatpush1.bf16.msra.mxu0 0
    %1361 = vmatprep.subr.bf16.mxu0 0
    %1362 = vmatpush1.bf16.msra.mxu0 0
    %1363 = vmatprep.subr.bf16.mxu0 0
    %1364 = vmatpush1.bf16.msra.mxu0 0
    %1365 = vmatprep.mubr.bf16.mxu0 %v1328
    %1366 = vmatmul.mubr.bf16.gmra.mrb[0].mxu0 %v1229
    %v1367 = vpop.f32.mrb[0].mxu0
    %v1368 = vadd.f32 0.0, %v1367
    %v1369 = vpop.f32.mrb[0].mxu0
    %v1370 = vpop.f32.mrb[0].mxu0
    %v1371 = vpop.f32.mrb[0].mxu0
    %1372 = vdwg.mxu0
    %v1374 = vsel %vm1233, %v1232, 0
    %v1377 = vsel %vm1237, %v853, 0
    %1379 = vmatprep.subr.bf16.mxu0 0
    %1380 = vmatpush1.bf16.msra.mxu0 %v845
    %1381 = vmatprep.subr.bf16.mxu0 0
    %1382 = vmatpush1.bf16.msra.mxu0 %v846
    %1383 = vmatprep.subr.bf16.mxu0 0
    %1384 = vmatpush1.bf16.msra.mxu0 %v847
    %1385 = vmatprep.subr.bf16.mxu0 0
    %1386 = vmatpush1.bf16.msra.mxu0 %v848
    %1387 = vmatprep.subr.bf16.mxu0 0
    %1388 = vmatpush1.bf16.msra.mxu0 %v849
    %1389 = vmatprep.subr.bf16.mxu0 0
    %1390 = vmatpush1.bf16.msra.mxu0 %v850
    %1391 = vmatprep.subr.bf16.mxu0 0
    %1392 = vmatpush1.bf16.msra.mxu0 %v851
    %1393 = vmatprep.subr.bf16.mxu0 0
    %1394 = vmatpush1.bf16.msra.mxu0 %v852
    %1395 = vmatprep.subr.bf16.mxu0 0
    %1396 = vmatpush1.bf16.msra.mxu0 %v1377
    %1397 = vmatprep.subr.bf16.mxu0 0
    %1398 = vmatpush1.bf16.msra.mxu0 0
    %1399 = vmatprep.subr.bf16.mxu0 0
    %1400 = vmatpush1.bf16.msra.mxu0 0
    %1401 = vmatprep.subr.bf16.mxu0 0
    %1402 = vmatpush1.bf16.msra.mxu0 0
    %1403 = vmatprep.subr.bf16.mxu0 0
    %1404 = vmatpush1.bf16.msra.mxu0 0
    %1405 = vmatprep.subr.bf16.mxu0 0
    %1406 = vmatpush1.bf16.msra.mxu0 0
    %1407 = vmatprep.subr.bf16.mxu0 0
    %1408 = vmatpush1.bf16.msra.mxu0 0
    %1409 = vmatprep.subr.bf16.mxu0 0
    %1410 = vmatpush1.bf16.msra.mxu0 0
    %1411 = vmatprep.mubr.bf16.mxu0 %v1374
    %1412 = vmatmul.mubr.bf16.gmra.mrb[0].mxu0 %v1231
    %v1413 = vpop.f32.mrb[0].mxu0
    %v1414 = vadd.f32 0.0, %v1413
    %v1415 = vpop.f32.mrb[0].mxu0
    %v1416 = vpop.f32.mrb[0].mxu0
    %v1417 = vpop.f32.mrb[0].mxu0
    %1418 = vdwg.mxu0
    %1420 = vrot.lane.b32.xlu0 %v1322, 32
    %v1421 = vpop.permute.xlu0 %1420
    %1424 = vrot.lane.b32.xlu0 %v1368, 64
    %v1425 = vpop.permute.xlu0 %1424
    %1428 = vrot.lane.b32.xlu0 %v1414, 96
    %v1429 = vpop.permute.xlu0 %1428
    %v1431 = vsel %vm854, %v1276, %v1421
    %vm1432 = vcmask 523264
    %v1433 = vsel %vm1432, %v1431, %v1425
    %vm1434 = vcmask 785408
    %v1435 = vsel %vm1434, %v1433, %v1429
    %v1436 = vpack.c.bf16 %v1435, %v1435
    %v1437 = vld [vmem:[%s4] sm:$0xf]
    %v1438 = vld [vmem:[%s4 + $0x4] sm:$0xf]
    %v1439 = vld [vmem:[%s4 + $0x8] sm:$0xf]
    %v1440 = vld [vmem:[%s4 + $0xc] sm:$0xf]
    %v1441 = vld [vmem:[%s4 + $0x10] sm:$0xf]
    %v1442 = vld [vmem:[%s4 + $0x14] sm:$0xf]
    %v1443 = vld [vmem:[%s4 + $0x18] sm:$0xf]
    %v1444 = vld [vmem:[%s4 + $0x1c] sm:$0xf]
    %v1445 = vld [vmem:[%s4 + $0x20] sm:$0xf]
    %v1446 = vld [vmem:[%s4 + $0x24] sm:$0xf]
    %v1447 = vld [vmem:[%s4 + $0x28] sm:$0xf]
    %v1448 = vld [vmem:[%s4 + $0x2c] sm:$0xf]
    %v1449 = vld [vmem:[%s4 + $0x30] sm:$0xf]
    %v1450 = vld [vmem:[%s4 + $0x34] sm:$0xf]
    %v1451 = vld [vmem:[%s4 + $0x38] sm:$0xf]
    %v1452 = vld [vmem:[%s4 + $0x3c] sm:$0xf]
    %v1453 = vlaneseq
    %v1454 = vshrl.u32 %v1453, 7
    %v1455 = vsub.s32 4, %v1454
    %v1456 = vrot.slane %v64, %v1455
    %v1473 = vunpack.c.l.b16 %v1437
    %v1474 = vunpack.c.l.b16 %v1438
    %v1475 = vunpack.c.l.b16 %v1439
    %v1476 = vunpack.c.l.b16 %v1440
    %v1477 = vunpack.c.l.b16 %v1441
    %v1478 = vunpack.c.l.b16 %v1442
    %v1479 = vunpack.c.l.b16 %v1443
    %v1480 = vunpack.c.l.b16 %v1444
    %v1481 = vunpack.c.l.b16 %v1445
    %v1482 = vunpack.c.l.b16 %v1446
    %v1483 = vunpack.c.l.b16 %v1447
    %v1484 = vunpack.c.l.b16 %v1448
    %v1485 = vunpack.c.l.b16 %v1449
    %v1486 = vunpack.c.l.b16 %v1450
    %v1487 = vunpack.c.l.b16 %v1451
    %v1488 = vunpack.c.l.b16 %v1452
    %v1489 = vpack.c.b16 %v1474, %v1473
    %v1490 = vpack.c.b16 %v1476, %v1475
    %v1491 = vpack.c.b16 %v1478, %v1477
    %v1492 = vpack.c.b16 %v1480, %v1479
    %v1493 = vpack.c.b16 %v1482, %v1481
    %v1494 = vpack.c.b16 %v1484, %v1483
    %v1495 = vpack.c.b16 %v1486, %v1485
    %v1496 = vpack.c.b16 %v1488, %v1487
    %1505 = vmatprep.subr.bf16.mxu0 0
    %1506 = vmatpush1.bf16.msra.mxu0 %v1489
    %1507 = vmatprep.subr.bf16.mxu0 0
    %1508 = vmatpush1.bf16.msra.mxu0 %v1490
    %1509 = vmatprep.subr.bf16.mxu0 0
    %1510 = vmatpush1.bf16.msra.mxu0 %v1491
    %1511 = vmatprep.subr.bf16.mxu0 0
    %1512 = vmatpush1.bf16.msra.mxu0 %v1492
    %1513 = vmatprep.subr.bf16.mxu0 0
    %1514 = vmatpush1.bf16.msra.mxu0 %v1493
    %1515 = vmatprep.subr.bf16.mxu0 0
    %1516 = vmatpush1.bf16.msra.mxu0 %v1494
    %1517 = vmatprep.subr.bf16.mxu0 0
    %1518 = vmatpush1.bf16.msra.mxu0 %v1495
    %1519 = vmatprep.subr.bf16.mxu0 0
    %1520 = vmatpush1.bf16.msra.mxu0 %v1496
    %1521 = vmatprep.subr.bf16.mxu0 0
    %1522 = vmatpush1.bf16.msra.mxu0 0
    %1523 = vmatprep.subr.bf16.mxu0 0
    %1524 = vmatpush1.bf16.msra.mxu0 0
    %1525 = vmatprep.subr.bf16.mxu0 0
    %1526 = vmatpush1.bf16.msra.mxu0 0
    %1527 = vmatprep.subr.bf16.mxu0 0
    %1528 = vmatpush1.bf16.msra.mxu0 0
    %1529 = vmatprep.subr.bf16.mxu0 0
    %1530 = vmatpush1.bf16.msra.mxu0 0
    %1531 = vmatprep.subr.bf16.mxu0 0
    %1532 = vmatpush1.bf16.msra.mxu0 0
    %1533 = vmatprep.subr.bf16.mxu0 0
    %1534 = vmatpush1.bf16.msra.mxu0 0
    %1535 = vmatprep.subr.bf16.mxu0 0
    %1536 = vmatpush1.bf16.msra.mxu0 0
    %1537 = vmatprep.mubr.bf16.mxu0 0
    %1538 = vmatmul.mubr.bf16.gmra.mrb[0].mxu0 %v1436
    %v1539 = vpop.f32.mrb[0].mxu0
    %v1540 = vadd.f32 %v1456, %v1539
    %v1541 = vpop.f32.mrb[0].mxu0
    %v1542 = vpop.f32.mrb[0].mxu0
    %v1543 = vpop.f32.mrb[0].mxu0
    %1544 = vdwg.mxu0
    %v1545 = vadd.f32 %v81, %v1540
    %v1546 = vsel %vm1147, %v1545, 0.0
    %1547 = vadd.xlane.f32.xlu0 %v1546
    %v1548 = vpop.xlane.xlu0 %1547
    %v1549 = vrcp.pop 128.0
    %v1550 = vmul.f32 %v1548, %v1549
    %v1551 = vsub.f32 %v1545, %v1550
    %v1552 = vmul.f32 %v1551, %v1551
    %v1553 = vsel %vm1147, %v1552, 0.0
    %1554 = vadd.xlane.f32.xlu0 %v1553
    %v1555 = vpop.xlane.xlu0 %1554
    %v1556 = vmul.f32 %v1555, %v1549
    %v1557 = vadd.f32 %v1556, 1e-05
    %v1558 = vrsqrt.pop %v1557
    %v1559 = vmul.f32 %v1551, %v1558
    %v1560 = vlaneseq
    %v1561 = vshrl.u32 %v1560, 7
    %v1562 = vsub.s32 0, %v1561
    %v1563 = vrot.slane %v64, %v1562
    %v1564 = vmul.f32 %v1559, %v1563
    %v1565 = vlaneseq
    %v1566 = vshrl.u32 %v1565, 7
    %v1567 = vsub.s32 1, %v1566
    %v1568 = vrot.slane %v64, %v1567
    %v1569 = vadd.f32 %v1564, %v1568
    %v1570 = vpack.c.bf16 %v1569, %v1569
    %v1571 = vld [vmem:[#allocation2] sm:$0xff]
    %v1572 = vld [vmem:[#allocation2 + $0x8] sm:$0xff]
    %v1573 = vld [vmem:[#allocation2 + $0x10] sm:$0xff]
    %v1574 = vld [vmem:[#allocation2 + $0x18] sm:$0xff]
    %v1575 = vld [vmem:[#allocation2 + $0x20] sm:$0xff]
    %v1576 = vld [vmem:[#allocation2 + $0x28] sm:$0xff]
    %v1577 = vld [vmem:[#allocation2 + $0x30] sm:$0xff]
    %v1578 = vld [vmem:[#allocation2 + $0x38] sm:$0xff]
    %v1579 = vld [vmem:[#allocation2 + $0x40] sm:$0xff]
    %v1580 = vld [vmem:[#allocation2 + $0x48] sm:$0xff]
    %v1581 = vld [vmem:[#allocation2 + $0x50] sm:$0xff]
    %v1582 = vld [vmem:[#allocation2 + $0x58] sm:$0xff]
    %v1583 = vld [vmem:[#allocation2 + $0x60] sm:$0xff]
    %v1584 = vld [vmem:[#allocation2 + $0x68] sm:$0xff]
    %v1585 = vld [vmem:[#allocation2 + $0x70] sm:$0xff]
    %v1586 = vld [vmem:[#allocation2 + $0x78] sm:$0xff]
    %v1587 = vld [vmem:[#allocation2 + $0x80] sm:$0xff]
    %v1588 = vld [vmem:[#allocation2 + $0x88] sm:$0xff]
    %v1589 = vld [vmem:[#allocation2 + $0x90] sm:$0xff]
    %v1590 = vld [vmem:[#allocation2 + $0x98] sm:$0xff]
    %v1591 = vld [vmem:[#allocation2 + $0xa0] sm:$0xff]
    %v1592 = vld [vmem:[#allocation2 + $0xa8] sm:$0xff]
    %v1593 = vld [vmem:[#allocation2 + $0xb0] sm:$0xff]
    %v1594 = vld [vmem:[#allocation2 + $0xb8] sm:$0xff]
    %v1595 = vld [vmem:[#allocation2 + $0xc0] sm:$0xff]
    %v1596 = vld [vmem:[#allocation2 + $0xc8] sm:$0xff]
    %v1597 = vld [vmem:[#allocation2 + $0xd0] sm:$0xff]
    %v1598 = vld [vmem:[#allocation2 + $0xd8] sm:$0xff]
    %v1599 = vld [vmem:[#allocation2 + $0xe0] sm:$0xff]
    %v1600 = vld [vmem:[#allocation2 + $0xe8] sm:$0xff]
    %v1601 = vld [vmem:[#allocation2 + $0xf0] sm:$0xff]
    %v1602 = vld [vmem:[#allocation2 + $0xf8] sm:$0xff]
    %v1603 = vld [vmem:[#allocation2 + $0x100] sm:$0xff]
    %v1604 = vld [vmem:[#allocation2 + $0x108] sm:$0xff]
    %v1605 = vld [vmem:[#allocation2 + $0x110] sm:$0xff]
    %v1606 = vld [vmem:[#allocation2 + $0x118] sm:$0xff]
    %v1607 = vld [vmem:[#allocation2 + $0x120] sm:$0xff]
    %v1608 = vld [vmem:[#allocation2 + $0x128] sm:$0xff]
    %v1609 = vld [vmem:[#allocation2 + $0x130] sm:$0xff]
    %v1610 = vld [vmem:[#allocation2 + $0x138] sm:$0xff]
    %v1611 = vld [vmem:[#allocation2 + $0x140] sm:$0xff]
    %v1612 = vld [vmem:[#allocation2 + $0x148] sm:$0xff]
    %v1613 = vld [vmem:[#allocation2 + $0x150] sm:$0xff]
    %v1614 = vld [vmem:[#allocation2 + $0x158] sm:$0xff]
    %v1615 = vld [vmem:[#allocation2 + $0x160] sm:$0xff]
    %v1616 = vld [vmem:[#allocation2 + $0x168] sm:$0xff]
    %v1617 = vld [vmem:[#allocation2 + $0x170] sm:$0xff]
    %v1618 = vld [vmem:[#allocation2 + $0x178] sm:$0xff]
    %v1619 = vld [vmem:[#allocation2 + $0x180] sm:$0xff]
    %v1620 = vld [vmem:[#allocation2 + $0x188] sm:$0xff]
    %v1621 = vld [vmem:[#allocation2 + $0x190] sm:$0xff]
    %v1622 = vld [vmem:[#allocation2 + $0x198] sm:$0xff]
    %v1623 = vld [vmem:[#allocation2 + $0x1a0] sm:$0xff]
    %v1624 = vld [vmem:[#allocation2 + $0x1a8] sm:$0xff]
    %v1625 = vld [vmem:[#allocation2 + $0x1b0] sm:$0xff]
    %v1626 = vld [vmem:[#allocation2 + $0x1b8] sm:$0xff]
    %v1627 = vld [vmem:[#allocation2 + $0x1c0] sm:$0xff]
    %v1628 = vld [vmem:[#allocation2 + $0x1c8] sm:$0xff]
    %v1629 = vld [vmem:[#allocation2 + $0x1d0] sm:$0xff]
    %v1630 = vld [vmem:[#allocation2 + $0x1d8] sm:$0xff]
    %v1631 = vld [vmem:[#allocation2 + $0x1e0] sm:$0xff]
    %v1632 = vld [vmem:[#allocation2 + $0x1e8] sm:$0xff]
    %v1633 = vld [vmem:[#allocation2 + $0x1f0] sm:$0xff]
    %v1634 = vld [vmem:[#allocation2 + $0x1f8] sm:$0xff]
    %v1635 = vld [vmem:[#allocation2 + $0x200] sm:$0xff]
    %v1636 = vld [vmem:[#allocation2 + $0x208] sm:$0xff]
    %v1637 = vld [vmem:[#allocation2 + $0x210] sm:$0xff]
    %v1638 = vld [vmem:[#allocation2 + $0x218] sm:$0xff]
    %v1639 = vld [vmem:[#allocation2 + $0x220] sm:$0xff]
    %v1640 = vld [vmem:[#allocation2 + $0x228] sm:$0xff]
    %v1641 = vld [vmem:[#allocation2 + $0x230] sm:$0xff]
    %v1642 = vld [vmem:[#allocation2 + $0x238] sm:$0xff]
    %v1643 = vld [vmem:[#allocation2 + $0x240] sm:$0xff]
    %v1644 = vld [vmem:[#allocation2 + $0x248] sm:$0xff]
    %v1645 = vld [vmem:[#allocation2 + $0x250] sm:$0xff]
    %v1646 = vld [vmem:[#allocation2 + $0x258] sm:$0xff]
    %v1647 = vld [vmem:[#allocation2 + $0x260] sm:$0xff]
    %v1648 = vld [vmem:[#allocation2 + $0x268] sm:$0xff]
    %v1649 = vld [vmem:[#allocation2 + $0x270] sm:$0xff]
    %v1650 = vld [vmem:[#allocation2 + $0x278] sm:$0xff]
    %v1651 = vld [vmem:[#allocation2 + $0x280] sm:$0xff]
    %v1652 = vld [vmem:[#allocation2 + $0x288] sm:$0xff]
    %v1653 = vld [vmem:[#allocation2 + $0x290] sm:$0xff]
    %v1654 = vld [vmem:[#allocation2 + $0x298] sm:$0xff]
    %v1655 = vld [vmem:[#allocation2 + $0x2a0] sm:$0xff]
    %v1656 = vld [vmem:[#allocation2 + $0x2a8] sm:$0xff]
    %v1657 = vld [vmem:[#allocation2 + $0x2b0] sm:$0xff]
    %v1658 = vld [vmem:[#allocation2 + $0x2b8] sm:$0xff]
    %v1659 = vld [vmem:[#allocation2 + $0x2c0] sm:$0xff]
    %v1660 = vld [vmem:[#allocation2 + $0x2c8] sm:$0xff]
    %v1661 = vld [vmem:[#allocation2 + $0x2d0] sm:$0xff]
    %v1662 = vld [vmem:[#allocation2 + $0x2d8] sm:$0xff]
    %v1663 = vld [vmem:[#allocation2 + $0x2e0] sm:$0xff]
    %v1664 = vld [vmem:[#allocation2 + $0x2e8] sm:$0xff]
    %v1665 = vld [vmem:[#allocation2 + $0x2f0] sm:$0xff]
    %v1666 = vld [vmem:[#allocation2 + $0x2f8] sm:$0xff]
    %v1667 = vld [vmem:[#allocation2 + $0x300] sm:$0xff]
    %v1668 = vld [vmem:[#allocation2 + $0x308] sm:$0xff]
    %v1669 = vld [vmem:[#allocation2 + $0x310] sm:$0xff]
    %v1670 = vld [vmem:[#allocation2 + $0x318] sm:$0xff]
    %v1671 = vld [vmem:[#allocation2 + $0x320] sm:$0xff]
    %v1672 = vld [vmem:[#allocation2 + $0x328] sm:$0xff]
    %v1673 = vld [vmem:[#allocation2 + $0x330] sm:$0xff]
    %v1674 = vld [vmem:[#allocation2 + $0x338] sm:$0xff]
    %v1675 = vld [vmem:[#allocation2 + $0x340] sm:$0xff]
    %v1676 = vld [vmem:[#allocation2 + $0x348] sm:$0xff]
    %v1677 = vld [vmem:[#allocation2 + $0x350] sm:$0xff]
    %v1678 = vld [vmem:[#allocation2 + $0x358] sm:$0xff]
    %v1679 = vld [vmem:[#allocation2 + $0x360] sm:$0xff]
    %v1680 = vld [vmem:[#allocation2 + $0x368] sm:$0xff]
    %v1681 = vld [vmem:[#allocation2 + $0x370] sm:$0xff]
    %v1682 = vld [vmem:[#allocation2 + $0x378] sm:$0xff]
    %v1683 = vld [vmem:[#allocation2 + $0x380] sm:$0xff]
    %v1684 = vld [vmem:[#allocation2 + $0x388] sm:$0xff]
    %v1685 = vld [vmem:[#allocation2 + $0x390] sm:$0xff]
    %v1686 = vld [vmem:[#allocation2 + $0x398] sm:$0xff]
    %v1687 = vld [vmem:[#allocation2 + $0x3a0] sm:$0xff]
    %v1688 = vld [vmem:[#allocation2 + $0x3a8] sm:$0xff]
    %v1689 = vld [vmem:[#allocation2 + $0x3b0] sm:$0xff]
    %v1690 = vld [vmem:[#allocation2 + $0x3b8] sm:$0xff]
    %v1691 = vld [vmem:[#allocation2 + $0x3c0] sm:$0xff]
    %v1692 = vld [vmem:[#allocation2 + $0x3c8] sm:$0xff]
    %v1693 = vld [vmem:[#allocation2 + $0x3d0] sm:$0xff]
    %v1694 = vld [vmem:[#allocation2 + $0x3d8] sm:$0xff]
    %v1695 = vld [vmem:[#allocation2 + $0x3e0] sm:$0xff]
    %v1696 = vld [vmem:[#allocation2 + $0x3e8] sm:$0xff]
    %v1697 = vld [vmem:[#allocation2 + $0x3f0] sm:$0xff]
    %v1698 = vld [vmem:[#allocation2 + $0x3f8] sm:$0xff]
    %v1699 = vld [vmem:[%s6] sm:$0xff]
    %v1700 = vld [vmem:[%s6 + $0x8] sm:$0xff]
    %v1703 = vlaneseq
    %v1704 = vshrl.u32 %v1703, 7
    %v1705 = vsub.s32 0, %v1704
    %v1706 = vrot.slane %v1699, %v1705
    %v1707 = vlaneseq
    %v1708 = vshrl.u32 %v1707, 7
    %v1709 = vsub.s32 1, %v1708
    %v1710 = vrot.slane %v1699, %v1709
    %v1711 = vlaneseq
    %v1712 = vshrl.u32 %v1711, 7
    %v1713 = vsub.s32 2, %v1712
    %v1714 = vrot.slane %v1699, %v1713
    %v1715 = vlaneseq
    %v1716 = vshrl.u32 %v1715, 7
    %v1717 = vsub.s32 3, %v1716
    %v1718 = vrot.slane %v1699, %v1717
    %v1719 = vlaneseq
    %v1720 = vshrl.u32 %v1719, 7
    %v1721 = vsub.s32 4, %v1720
    %v1722 = vrot.slane %v1699, %v1721
    %v1723 = vlaneseq
    %v1724 = vshrl.u32 %v1723, 7
    %v1725 = vsub.s32 5, %v1724
    %v1726 = vrot.slane %v1699, %v1725
    %v1727 = vlaneseq
    %v1728 = vshrl.u32 %v1727, 7
    %v1729 = vsub.s32 6, %v1728
    %v1730 = vrot.slane %v1699, %v1729
    %v1731 = vlaneseq
    %v1732 = vshrl.u32 %v1731, 7
    %v1733 = vsub.s32 7, %v1732
    %v1734 = vrot.slane %v1699, %v1733
    %v1735 = vlaneseq
    %v1736 = vshrl.u32 %v1735, 7
    %v1737 = vsub.s32 0, %v1736
    %v1738 = vrot.slane %v1700, %v1737
    %v1739 = vlaneseq
    %v1740 = vshrl.u32 %v1739, 7
    %v1741 = vsub.s32 1, %v1740
    %v1742 = vrot.slane %v1700, %v1741
    %v1743 = vlaneseq
    %v1744 = vshrl.u32 %v1743, 7
    %v1745 = vsub.s32 2, %v1744
    %v1746 = vrot.slane %v1700, %v1745
    %v1747 = vlaneseq
    %v1748 = vshrl.u32 %v1747, 7
    %v1749 = vsub.s32 3, %v1748
    %v1750 = vrot.slane %v1700, %v1749
    %v1751 = vlaneseq
    %v1752 = vshrl.u32 %v1751, 7
    %v1753 = vsub.s32 4, %v1752
    %v1754 = vrot.slane %v1700, %v1753
    %v1755 = vlaneseq
    %v1756 = vshrl.u32 %v1755, 7
    %v1757 = vsub.s32 5, %v1756
    %v1758 = vrot.slane %v1700, %v1757
    %v1759 = vlaneseq
    %v1760 = vshrl.u32 %v1759, 7
    %v1761 = vsub.s32 6, %v1760
    %v1762 = vrot.slane %v1700, %v1761
    %v1763 = vlaneseq
    %v1764 = vshrl.u32 %v1763, 7
    %v1765 = vsub.s32 7, %v1764
    %v1766 = vrot.slane %v1700, %v1765
    %v1911 = vunpack.c.l.b16 %v1571
    %v1912 = vunpack.c.h.b16 %v1571
    %v1913 = vunpack.c.l.b16 %v1572
    %v1914 = vunpack.c.h.b16 %v1572
    %v1915 = vunpack.c.l.b16 %v1573
    %v1916 = vunpack.c.h.b16 %v1573
    %v1917 = vunpack.c.l.b16 %v1574
    %v1918 = vunpack.c.h.b16 %v1574
    %v1919 = vunpack.c.l.b16 %v1575
    %v1920 = vunpack.c.h.b16 %v1575
    %v1921 = vunpack.c.l.b16 %v1576
    %v1922 = vunpack.c.h.b16 %v1576
    %v1923 = vunpack.c.l.b16 %v1577
    %v1924 = vunpack.c.h.b16 %v1577
    %v1925 = vunpack.c.l.b16 %v1578
    %v1926 = vunpack.c.h.b16 %v1578
    %v1927 = vunpack.c.l.b16 %v1579
    %v1928 = vunpack.c.h.b16 %v1579
    %v1929 = vunpack.c.l.b16 %v1580
    %v1930 = vunpack.c.h.b16 %v1580
    %v1931 = vunpack.c.l.b16 %v1581
    %v1932 = vunpack.c.h.b16 %v1581
    %v1933 = vunpack.c.l.b16 %v1582
    %v1934 = vunpack.c.h.b16 %v1582
    %v1935 = vunpack.c.l.b16 %v1583
    %v1936 = vunpack.c.h.b16 %v1583
    %v1937 = vunpack.c.l.b16 %v1584
    %v1938 = vunpack.c.h.b16 %v1584
    %v1939 = vunpack.c.l.b16 %v1585
    %v1940 = vunpack.c.h.b16 %v1585
    %v1941 = vunpack.c.l.b16 %v1586
    %v1942 = vunpack.c.h.b16 %v1586
    %v1943 = vunpack.c.l.b16 %v1587
    %v1944 = vunpack.c.h.b16 %v1587
    %v1945 = vunpack.c.l.b16 %v1588
    %v1946 = vunpack.c.h.b16 %v1588
    %v1947 = vunpack.c.l.b16 %v1589
    %v1948 = vunpack.c.h.b16 %v1589
    %v1949 = vunpack.c.l.b16 %v1590
    %v1950 = vunpack.c.h.b16 %v1590
    %v1951 = vunpack.c.l.b16 %v1591
    %v1952 = vunpack.c.h.b16 %v1591
    %v1953 = vunpack.c.l.b16 %v1592
    %v1954 = vunpack.c.h.b16 %v1592
    %v1955 = vunpack.c.l.b16 %v1593
    %v1956 = vunpack.c.h.b16 %v1593
    %v1957 = vunpack.c.l.b16 %v1594
    %v1958 = vunpack.c.h.b16 %v1594
    %v1959 = vunpack.c.l.b16 %v1595
    %v1960 = vunpack.c.h.b16 %v1595
    %v1961 = vunpack.c.l.b16 %v1596
    %v1962 = vunpack.c.h.b16 %v1596
    %v1963 = vunpack.c.l.b16 %v1597
    %v1964 = vunpack.c.h.b16 %v1597
    %v1965 = vunpack.c.l.b16 %v1598
    %v1966 = vunpack.c.h.b16 %v1598
    %v1967 = vunpack.c.l.b16 %v1599
    %v1968 = vunpack.c.h.b16 %v1599
    %v1969 = vunpack.c.l.b16 %v1600
    %v1970 = vunpack.c.h.b16 %v1600
    %v1971 = vunpack.c.l.b16 %v1601
    %v1972 = vunpack.c.h.b16 %v1601
    %v1973 = vunpack.c.l.b16 %v1602
    %v1974 = vunpack.c.h.b16 %v1602
    %v1975 = vunpack.c.l.b16 %v1603
    %v1976 = vunpack.c.h.b16 %v1603
    %v1977 = vunpack.c.l.b16 %v1604
    %v1978 = vunpack.c.h.b16 %v1604
    %v1979 = vunpack.c.l.b16 %v1605
    %v1980 = vunpack.c.h.b16 %v1605
    %v1981 = vunpack.c.l.b16 %v1606
    %v1982 = vunpack.c.h.b16 %v1606
    %v1983 = vunpack.c.l.b16 %v1607
    %v1984 = vunpack.c.h.b16 %v1607
    %v1985 = vunpack.c.l.b16 %v1608
    %v1986 = vunpack.c.h.b16 %v1608
    %v1987 = vunpack.c.l.b16 %v1609
    %v1988 = vunpack.c.h.b16 %v1609
    %v1989 = vunpack.c.l.b16 %v1610
    %v1990 = vunpack.c.h.b16 %v1610
    %v1991 = vunpack.c.l.b16 %v1611
    %v1992 = vunpack.c.h.b16 %v1611
    %v1993 = vunpack.c.l.b16 %v1612
    %v1994 = vunpack.c.h.b16 %v1612
    %v1995 = vunpack.c.l.b16 %v1613
    %v1996 = vunpack.c.h.b16 %v1613
    %v1997 = vunpack.c.l.b16 %v1614
    %v1998 = vunpack.c.h.b16 %v1614
    %v1999 = vunpack.c.l.b16 %v1615
    %v2000 = vunpack.c.h.b16 %v1615
    %v2001 = vunpack.c.l.b16 %v1616
    %v2002 = vunpack.c.h.b16 %v1616
    %v2003 = vunpack.c.l.b16 %v1617
    %v2004 = vunpack.c.h.b16 %v1617
    %v2005 = vunpack.c.l.b16 %v1618
    %v2006 = vunpack.c.h.b16 %v1618
    %v2007 = vunpack.c.l.b16 %v1619
    %v2008 = vunpack.c.h.b16 %v1619
    %v2009 = vunpack.c.l.b16 %v1620
    %v2010 = vunpack.c.h.b16 %v1620
    %v2011 = vunpack.c.l.b16 %v1621
    %v2012 = vunpack.c.h.b16 %v1621
    %v2013 = vunpack.c.l.b16 %v1622
    %v2014 = vunpack.c.h.b16 %v1622
    %v2015 = vunpack.c.l.b16 %v1623
    %v2016 = vunpack.c.h.b16 %v1623
    %v2017 = vunpack.c.l.b16 %v1624
    %v2018 = vunpack.c.h.b16 %v1624
    %v2019 = vunpack.c.l.b16 %v1625
    %v2020 = vunpack.c.h.b16 %v1625
    %v2021 = vunpack.c.l.b16 %v1626
    %v2022 = vunpack.c.h.b16 %v1626
    %v2023 = vunpack.c.l.b16 %v1627
    %v2024 = vunpack.c.h.b16 %v1627
    %v2025 = vunpack.c.l.b16 %v1628
    %v2026 = vunpack.c.h.b16 %v1628
    %v2027 = vunpack.c.l.b16 %v1629
    %v2028 = vunpack.c.h.b16 %v1629
    %v2029 = vunpack.c.l.b16 %v1630
    %v2030 = vunpack.c.h.b16 %v1630
    %v2031 = vunpack.c.l.b16 %v1631
    %v2032 = vunpack.c.h.b16 %v1631
    %v2033 = vunpack.c.l.b16 %v1632
    %v2034 = vunpack.c.h.b16 %v1632
    %v2035 = vunpack.c.l.b16 %v1633
    %v2036 = vunpack.c.h.b16 %v1633
    %v2037 = vunpack.c.l.b16 %v1634
    %v2038 = vunpack.c.h.b16 %v1634
    %v2039 = vunpack.c.l.b16 %v1635
    %v2040 = vunpack.c.h.b16 %v1635
    %v2041 = vunpack.c.l.b16 %v1636
    %v2042 = vunpack.c.h.b16 %v1636
    %v2043 = vunpack.c.l.b16 %v1637
    %v2044 = vunpack.c.h.b16 %v1637
    %v2045 = vunpack.c.l.b16 %v1638
    %v2046 = vunpack.c.h.b16 %v1638
    %v2047 = vunpack.c.l.b16 %v1639
    %v2048 = vunpack.c.h.b16 %v1639
    %v2049 = vunpack.c.l.b16 %v1640
    %v2050 = vunpack.c.h.b16 %v1640
    %v2051 = vunpack.c.l.b16 %v1641
    %v2052 = vunpack.c.h.b16 %v1641
    %v2053 = vunpack.c.l.b16 %v1642
    %v2054 = vunpack.c.h.b16 %v1642
    %v2055 = vunpack.c.l.b16 %v1643
    %v2056 = vunpack.c.h.b16 %v1643
    %v2057 = vunpack.c.l.b16 %v1644
    %v2058 = vunpack.c.h.b16 %v1644
    %v2059 = vunpack.c.l.b16 %v1645
    %v2060 = vunpack.c.h.b16 %v1645
    %v2061 = vunpack.c.l.b16 %v1646
    %v2062 = vunpack.c.h.b16 %v1646
    %v2063 = vunpack.c.l.b16 %v1647
    %v2064 = vunpack.c.h.b16 %v1647
    %v2065 = vunpack.c.l.b16 %v1648
    %v2066 = vunpack.c.h.b16 %v1648
    %v2067 = vunpack.c.l.b16 %v1649
    %v2068 = vunpack.c.h.b16 %v1649
    %v2069 = vunpack.c.l.b16 %v1650
    %v2070 = vunpack.c.h.b16 %v1650
    %v2071 = vunpack.c.l.b16 %v1651
    %v2072 = vunpack.c.h.b16 %v1651
    %v2073 = vunpack.c.l.b16 %v1652
    %v2074 = vunpack.c.h.b16 %v1652
    %v2075 = vunpack.c.l.b16 %v1653
    %v2076 = vunpack.c.h.b16 %v1653
    %v2077 = vunpack.c.l.b16 %v1654
    %v2078 = vunpack.c.h.b16 %v1654
    %v2079 = vunpack.c.l.b16 %v1655
    %v2080 = vunpack.c.h.b16 %v1655
    %v2081 = vunpack.c.l.b16 %v1656
    %v2082 = vunpack.c.h.b16 %v1656
    %v2083 = vunpack.c.l.b16 %v1657
    %v2084 = vunpack.c.h.b16 %v1657
    %v2085 = vunpack.c.l.b16 %v1658
    %v2086 = vunpack.c.h.b16 %v1658
    %v2087 = vunpack.c.l.b16 %v1659
    %v2088 = vunpack.c.h.b16 %v1659
    %v2089 = vunpack.c.l.b16 %v1660
    %v2090 = vunpack.c.h.b16 %v1660
    %v2091 = vunpack.c.l.b16 %v1661
    %v2092 = vunpack.c.h.b16 %v1661
    %v2093 = vunpack.c.l.b16 %v1662
    %v2094 = vunpack.c.h.b16 %v1662
    %v2095 = vunpack.c.l.b16 %v1663
    %v2096 = vunpack.c.h.b16 %v1663
    %v2097 = vunpack.c.l.b16 %v1664
    %v2098 = vunpack.c.h.b16 %v1664
    %v2099 = vunpack.c.l.b16 %v1665
    %v2100 = vunpack.c.h.b16 %v1665
    %v2101 = vunpack.c.l.b16 %v1666
    %v2102 = vunpack.c.h.b16 %v1666
    %v2103 = vunpack.c.l.b16 %v1667
    %v2104 = vunpack.c.h.b16 %v1667
    %v2105 = vunpack.c.l.b16 %v1668
    %v2106 = vunpack.c.h.b16 %v1668
    %v2107 = vunpack.c.l.b16 %v1669
    %v2108 = vunpack.c.h.b16 %v1669
    %v2109 = vunpack.c.l.b16 %v1670
    %v2110 = vunpack.c.h.b16 %v1670
    %v2111 = vunpack.c.l.b16 %v1671
    %v2112 = vunpack.c.h.b16 %v1671
    %v2113 = vunpack.c.l.b16 %v1672
    %v2114 = vunpack.c.h.b16 %v1672
    %v2115 = vunpack.c.l.b16 %v1673
    %v2116 = vunpack.c.h.b16 %v1673
    %v2117 = vunpack.c.l.b16 %v1674
    %v2118 = vunpack.c.h.b16 %v1674
    %v2119 = vunpack.c.l.b16 %v1675
    %v2120 = vunpack.c.h.b16 %v1675
    %v2121 = vunpack.c.l.b16 %v1676
    %v2122 = vunpack.c.h.b16 %v1676
    %v2123 = vunpack.c.l.b16 %v1677
    %v2124 = vunpack.c.h.b16 %v1677
    %v2125 = vunpack.c.l.b16 %v1678
    %v2126 = vunpack.c.h.b16 %v1678
    %v2127 = vunpack.c.l.b16 %v1679
    %v2128 = vunpack.c.h.b16 %v1679
    %v2129 = vunpack.c.l.b16 %v1680
    %v2130 = vunpack.c.h.b16 %v1680
    %v2131 = vunpack.c.l.b16 %v1681
    %v2132 = vunpack.c.h.b16 %v1681
    %v2133 = vunpack.c.l.b16 %v1682
    %v2134 = vunpack.c.h.b16 %v1682
    %v2135 = vunpack.c.l.b16 %v1683
    %v2136 = vunpack.c.h.b16 %v1683
    %v2137 = vunpack.c.l.b16 %v1684
    %v2138 = vunpack.c.h.b16 %v1684
    %v2139 = vunpack.c.l.b16 %v1685
    %v2140 = vunpack.c.h.b16 %v1685
    %v2141 = vunpack.c.l.b16 %v1686
    %v2142 = vunpack.c.h.b16 %v1686
    %v2143 = vunpack.c.l.b16 %v1687
    %v2144 = vunpack.c.h.b16 %v1687
    %v2145 = vunpack.c.l.b16 %v1688
    %v2146 = vunpack.c.h.b16 %v1688
    %v2147 = vunpack.c.l.b16 %v1689
    %v2148 = vunpack.c.h.b16 %v1689
    %v2149 = vunpack.c.l.b16 %v1690
    %v2150 = vunpack.c.h.b16 %v1690
    %v2151 = vunpack.c.l.b16 %v1691
    %v2152 = vunpack.c.h.b16 %v1691
    %v2153 = vunpack.c.l.b16 %v1692
    %v2154 = vunpack.c.h.b16 %v1692
    %v2155 = vunpack.c.l.b16 %v1693
    %v2156 = vunpack.c.h.b16 %v1693
    %v2157 = vunpack.c.l.b16 %v1694
    %v2158 = vunpack.c.h.b16 %v1694
    %v2159 = vunpack.c.l.b16 %v1695
    %v2160 = vunpack.c.h.b16 %v1695
    %v2161 = vunpack.c.l.b16 %v1696
    %v2162 = vunpack.c.h.b16 %v1696
    %v2163 = vunpack.c.l.b16 %v1697
    %v2164 = vunpack.c.h.b16 %v1697
    %v2165 = vunpack.c.l.b16 %v1698
    %v2166 = vunpack.c.h.b16 %v1698
    %v2167 = vpack.c.b16 %v1927, %v1911
    %v2168 = vpack.c.b16 %v1928, %v1912
    %v2169 = vpack.c.b16 %v1929, %v1913
    %v2170 = vpack.c.b16 %v1930, %v1914
    %v2171 = vpack.c.b16 %v1931, %v1915
    %v2172 = vpack.c.b16 %v1932, %v1916
    %v2173 = vpack.c.b16 %v1933, %v1917
    %v2174 = vpack.c.b16 %v1934, %v1918
    %v2175 = vpack.c.b16 %v1935, %v1919
    %v2176 = vpack.c.b16 %v1936, %v1920
    %v2177 = vpack.c.b16 %v1937, %v1921
    %v2178 = vpack.c.b16 %v1938, %v1922
    %v2179 = vpack.c.b16 %v1939, %v1923
    %v2180 = vpack.c.b16 %v1940, %v1924
    %v2181 = vpack.c.b16 %v1941, %v1925
    %v2182 = vpack.c.b16 %v1942, %v1926
    %v2183 = vpack.c.b16 %v1959, %v1943
    %v2184 = vpack.c.b16 %v1960, %v1944
    %v2185 = vpack.c.b16 %v1961, %v1945
    %v2186 = vpack.c.b16 %v1962, %v1946
    %v2187 = vpack.c.b16 %v1963, %v1947
    %v2188 = vpack.c.b16 %v1964, %v1948
    %v2189 = vpack.c.b16 %v1965, %v1949
    %v2190 = vpack.c.b16 %v1966, %v1950
    %v2191 = vpack.c.b16 %v1967, %v1951
    %v2192 = vpack.c.b16 %v1968, %v1952
    %v2193 = vpack.c.b16 %v1969, %v1953
    %v2194 = vpack.c.b16 %v1970, %v1954
    %v2195 = vpack.c.b16 %v1971, %v1955
    %v2196 = vpack.c.b16 %v1972, %v1956
    %v2197 = vpack.c.b16 %v1973, %v1957
    %v2198 = vpack.c.b16 %v1974, %v1958
    %v2199 = vpack.c.b16 %v1991, %v1975
    %v2200 = vpack.c.b16 %v1992, %v1976
    %v2201 = vpack.c.b16 %v1993, %v1977
    %v2202 = vpack.c.b16 %v1994, %v1978
    %v2203 = vpack.c.b16 %v1995, %v1979
    %v2204 = vpack.c.b16 %v1996, %v1980
    %v2205 = vpack.c.b16 %v1997, %v1981
    %v2206 = vpack.c.b16 %v1998, %v1982
    %v2207 = vpack.c.b16 %v1999, %v1983
    %v2208 = vpack.c.b16 %v2000, %v1984
    %v2209 = vpack.c.b16 %v2001, %v1985
    %v2210 = vpack.c.b16 %v2002, %v1986
    %v2211 = vpack.c.b16 %v2003, %v1987
    %v2212 = vpack.c.b16 %v2004, %v1988
    %v2213 = vpack.c.b16 %v2005, %v1989
    %v2214 = vpack.c.b16 %v2006, %v1990
    %v2215 = vpack.c.b16 %v2023, %v2007
    %v2216 = vpack.c.b16 %v2024, %v2008
    %v2217 = vpack.c.b16 %v2025, %v2009
    %v2218 = vpack.c.b16 %v2026, %v2010
    %v2219 = vpack.c.b16 %v2027, %v2011
    %v2220 = vpack.c.b16 %v2028, %v2012
    %v2221 = vpack.c.b16 %v2029, %v2013
    %v2222 = vpack.c.b16 %v2030, %v2014
    %v2223 = vpack.c.b16 %v2031, %v2015
    %v2224 = vpack.c.b16 %v2032, %v2016
    %v2225 = vpack.c.b16 %v2033, %v2017
    %v2226 = vpack.c.b16 %v2034, %v2018
    %v2227 = vpack.c.b16 %v2035, %v2019
    %v2228 = vpack.c.b16 %v2036, %v2020
    %v2229 = vpack.c.b16 %v2037, %v2021
    %v2230 = vpack.c.b16 %v2038, %v2022
    %v2231 = vpack.c.b16 %v2055, %v2039
    %v2232 = vpack.c.b16 %v2056, %v2040
    %v2233 = vpack.c.b16 %v2057, %v2041
    %v2234 = vpack.c.b16 %v2058, %v2042
    %v2235 = vpack.c.b16 %v2059, %v2043
    %v2236 = vpack.c.b16 %v2060, %v2044
    %v2237 = vpack.c.b16 %v2061, %v2045
    %v2238 = vpack.c.b16 %v2062, %v2046
    %v2239 = vpack.c.b16 %v2063, %v2047
    %v2240 = vpack.c.b16 %v2064, %v2048
    %v2241 = vpack.c.b16 %v2065, %v2049
    %v2242 = vpack.c.b16 %v2066, %v2050
    %v2243 = vpack.c.b16 %v2067, %v2051
    %v2244 = vpack.c.b16 %v2068, %v2052
    %v2245 = vpack.c.b16 %v2069, %v2053
    %v2246 = vpack.c.b16 %v2070, %v2054
    %v2247 = vpack.c.b16 %v2087, %v2071
    %v2248 = vpack.c.b16 %v2088, %v2072
    %v2249 = vpack.c.b16 %v2089, %v2073
    %v2250 = vpack.c.b16 %v2090, %v2074
    %v2251 = vpack.c.b16 %v2091, %v2075
    %v2252 = vpack.c.b16 %v2092, %v2076
    %v2253 = vpack.c.b16 %v2093, %v2077
    %v2254 = vpack.c.b16 %v2094, %v2078
    %v2255 = vpack.c.b16 %v2095, %v2079
    %v2256 = vpack.c.b16 %v2096, %v2080
    %v2257 = vpack.c.b16 %v2097, %v2081
    %v2258 = vpack.c.b16 %v2098, %v2082
    %v2259 = vpack.c.b16 %v2099, %v2083
    %v2260 = vpack.c.b16 %v2100, %v2084
    %v2261 = vpack.c.b16 %v2101, %v2085
    %v2262 = vpack.c.b16 %v2102, %v2086
    %v2263 = vpack.c.b16 %v2119, %v2103
    %v2264 = vpack.c.b16 %v2120, %v2104
    %v2265 = vpack.c.b16 %v2121, %v2105
    %v2266 = vpack.c.b16 %v2122, %v2106
    %v2267 = vpack.c.b16 %v2123, %v2107
    %v2268 = vpack.c.b16 %v2124, %v2108
    %v2269 = vpack.c.b16 %v2125, %v2109
    %v2270 = vpack.c.b16 %v2126, %v2110
    %v2271 = vpack.c.b16 %v2127, %v2111
    %v2272 = vpack.c.b16 %v2128, %v2112
    %v2273 = vpack.c.b16 %v2129, %v2113
    %v2274 = vpack.c.b16 %v2130, %v2114
    %v2275 = vpack.c.b16 %v2131, %v2115
    %v2276 = vpack.c.b16 %v2132, %v2116
    %v2277 = vpack.c.b16 %v2133, %v2117
    %v2278 = vpack.c.b16 %v2134, %v2118
    %v2279 = vpack.c.b16 %v2151, %v2135
    %v2280 = vpack.c.b16 %v2152, %v2136
    %v2281 = vpack.c.b16 %v2153, %v2137
    %v2282 = vpack.c.b16 %v2154, %v2138
    %v2283 = vpack.c.b16 %v2155, %v2139
    %v2284 = vpack.c.b16 %v2156, %v2140
    %v2285 = vpack.c.b16 %v2157, %v2141
    %v2286 = vpack.c.b16 %v2158, %v2142
    %v2287 = vpack.c.b16 %v2159, %v2143
    %v2288 = vpack.c.b16 %v2160, %v2144
    %v2289 = vpack.c.b16 %v2161, %v2145
    %v2290 = vpack.c.b16 %v2162, %v2146
    %v2291 = vpack.c.b16 %v2163, %v2147
    %v2292 = vpack.c.b16 %v2164, %v2148
    %v2293 = vpack.c.b16 %v2165, %v2149
    %v2294 = vpack.c.b16 %v2166, %v2150
    %2423 = vmatprep.subr.bf16.mxu0 %v2168
    %2424 = vmatpush1.bf16.msra.mxu0 %v2167
    %2425 = vmatprep.subr.bf16.mxu0 %v2184
    %2426 = vmatpush1.bf16.msra.mxu0 %v2183
    %2427 = vmatprep.subr.bf16.mxu0 %v2200
    %2428 = vmatpush1.bf16.msra.mxu0 %v2199
    %2429 = vmatprep.subr.bf16.mxu0 %v2216
    %2430 = vmatpush1.bf16.msra.mxu0 %v2215
    %2431 = vmatprep.subr.bf16.mxu0 %v2232
    %2432 = vmatpush1.bf16.msra.mxu0 %v2231
    %2433 = vmatprep.subr.bf16.mxu0 %v2248
    %2434 = vmatpush1.bf16.msra.mxu0 %v2247
    %2435 = vmatprep.subr.bf16.mxu0 %v2264
    %2436 = vmatpush1.bf16.msra.mxu0 %v2263
    %2437 = vmatprep.subr.bf16.mxu0 %v2280
    %2438 = vmatpush1.bf16.msra.mxu0 %v2279
    %2439 = vmatprep.subr.bf16.mxu0 0
    %2440 = vmatpush1.bf16.msra.mxu0 0
    %2441 = vmatprep.subr.bf16.mxu0 0
    %2442 = vmatpush1.bf16.msra.mxu0 0
    %2443 = vmatprep.subr.bf16.mxu0 0
    %2444 = vmatpush1.bf16.msra.mxu0 0
    %2445 = vmatprep.subr.bf16.mxu0 0
    %2446 = vmatpush1.bf16.msra.mxu0 0
    %2447 = vmatprep.subr.bf16.mxu0 0
    %2448 = vmatpush1.bf16.msra.mxu0 0
    %2449 = vmatprep.subr.bf16.mxu0 0
    %2450 = vmatpush1.bf16.msra.mxu0 0
    %2451 = vmatprep.subr.bf16.mxu0 0
    %2452 = vmatpush1.bf16.msra.mxu0 0
    %2453 = vmatprep.subr.bf16.mxu0 0
    %2454 = vmatpush1.bf16.msra.mxu0 0
    %2455 = vmatprep.mubr.bf16.mxu0 0
    %2456 = vmatmul.mubr.bf16.gmra.mrb[0].mxu0 %v1570
    %v2457 = vpop.f32.mrb[0].mxu0
    %v2458 = vadd.f32 %v1706, %v2457
    %v2459 = vpop.f32.mrb[0].mxu0
    %v2460 = vadd.f32 %v1710, %v2459
    %v2461 = vpop.f32.mrb[0].mxu0
    %v2462 = vpop.f32.mrb[0].mxu0
    %2463 = vdwg.mxu0
    %2464 = vmatprep.subr.bf16.mxu0 %v2170
    %2465 = vmatpush1.bf16.msra.mxu0 %v2169
    %2466 = vmatprep.subr.bf16.mxu0 %v2186
    %2467 = vmatpush1.bf16.msra.mxu0 %v2185
    %2468 = vmatprep.subr.bf16.mxu0 %v2202
    %2469 = vmatpush1.bf16.msra.mxu0 %v2201
    %2470 = vmatprep.subr.bf16.mxu0 %v2218
    %2471 = vmatpush1.bf16.msra.mxu0 %v2217
    %2472 = vmatprep.subr.bf16.mxu0 %v2234
    %2473 = vmatpush1.bf16.msra.mxu0 %v2233
    %2474 = vmatprep.subr.bf16.mxu0 %v2250
    %2475 = vmatpush1.bf16.msra.mxu0 %v2249
    %2476 = vmatprep.subr.bf16.mxu0 %v2266
    %2477 = vmatpush1.bf16.msra.mxu0 %v2265
    %2478 = vmatprep.subr.bf16.mxu0 %v2282
    %2479 = vmatpush1.bf16.msra.mxu0 %v2281
    %2480 = vmatprep.subr.bf16.mxu0 0
    %2481 = vmatpush1.bf16.msra.mxu0 0
    %2482 = vmatprep.subr.bf16.mxu0 0
    %2483 = vmatpush1.bf16.msra.mxu0 0
    %2484 = vmatprep.subr.bf16.mxu0 0
    %2485 = vmatpush1.bf16.msra.mxu0 0
    %2486 = vmatprep.subr.bf16.mxu0 0
    %2487 = vmatpush1.bf16.msra.mxu0 0
    %2488 = vmatprep.subr.bf16.mxu0 0
    %2489 = vmatpush1.bf16.msra.mxu0 0
    %2490 = vmatprep.subr.bf16.mxu0 0
    %2491 = vmatpush1.bf16.msra.mxu0 0
    %2492 = vmatprep.subr.bf16.mxu0 0
    %2493 = vmatpush1.bf16.msra.mxu0 0
    %2494 = vmatprep.subr.bf16.mxu0 0
    %2495 = vmatpush1.bf16.msra.mxu0 0
    %2496 = vmatprep.mubr.bf16.mxu0 0
    %2497 = vmatmul.mubr.bf16.gmra.mrb[0].mxu0 %v1570
    %v2498 = vpop.f32.mrb[0].mxu0
    %v2499 = vadd.f32 %v1714, %v2498
    %v2500 = vpop.f32.mrb[0].mxu0
    %v2501 = vadd.f32 %v1718, %v2500
    %v2502 = vpop.f32.mrb[0].mxu0
    %v2503 = vpop.f32.mrb[0].mxu0
    %2504 = vdwg.mxu0
    %2505 = vmatprep.subr.bf16.mxu0 %v2172
    %2506 = vmatpush1.bf16.msra.mxu0 %v2171
    %2507 = vmatprep.subr.bf16.mxu0 %v2188
    %2508 = vmatpush1.bf16.msra.mxu0 %v2187
    %2509 = vmatprep.subr.bf16.mxu0 %v2204
    %2510 = vmatpush1.bf16.msra.mxu0 %v2203
    %2511 = vmatprep.subr.bf16.mxu0 %v2220
    %2512 = vmatpush1.bf16.msra.mxu0 %v2219
    %2513 = vmatprep.subr.bf16.mxu0 %v2236
    %2514 = vmatpush1.bf16.msra.mxu0 %v2235
    %2515 = vmatprep.subr.bf16.mxu0 %v2252
    %2516 = vmatpush1.bf16.msra.mxu0 %v2251
    %2517 = vmatprep.subr.bf16.mxu0 %v2268
    %2518 = vmatpush1.bf16.msra.mxu0 %v2267
    %2519 = vmatprep.subr.bf16.mxu0 %v2284
    %2520 = vmatpush1.bf16.msra.mxu0 %v2283
    %2521 = vmatprep.subr.bf16.mxu0 0
    %2522 = vmatpush1.bf16.msra.mxu0 0
    %2523 = vmatprep.subr.bf16.mxu0 0
    %2524 = vmatpush1.bf16.msra.mxu0 0
    %2525 = vmatprep.subr.bf16.mxu0 0
    %2526 = vmatpush1.bf16.msra.mxu0 0
    %2527 = vmatprep.subr.bf16.mxu0 0
    %2528 = vmatpush1.bf16.msra.mxu0 0
    %2529 = vmatprep.subr.bf16.mxu0 0
    %2530 = vmatpush1.bf16.msra.mxu0 0
    %2531 = vmatprep.subr.bf16.mxu0 0
    %2532 = vmatpush1.bf16.msra.mxu0 0
    %2533 = vmatprep.subr.bf16.mxu0 0
    %2534 = vmatpush1.bf16.msra.mxu0 0
    %2535 = vmatprep.subr.bf16.mxu0 0
    %2536 = vmatpush1.bf16.msra.mxu0 0
    %2537 = vmatprep.mubr.bf16.mxu0 0
    %2538 = vmatmul.mubr.bf16.gmra.mrb[0].mxu0 %v1570
    %v2539 = vpop.f32.mrb[0].mxu0
    %v2540 = vadd.f32 %v1722, %v2539
    %v2541 = vpop.f32.mrb[0].mxu0
    %v2542 = vadd.f32 %v1726, %v2541
    %v2543 = vpop.f32.mrb[0].mxu0
    %v2544 = vpop.f32.mrb[0].mxu0
    %2545 = vdwg.mxu0
    %2546 = vmatprep.subr.bf16.mxu0 %v2174
    %2547 = vmatpush1.bf16.msra.mxu0 %v2173
    %2548 = vmatprep.subr.bf16.mxu0 %v2190
    %2549 = vmatpush1.bf16.msra.mxu0 %v2189
    %2550 = vmatprep.subr.bf16.mxu0 %v2206
    %2551 = vmatpush1.bf16.msra.mxu0 %v2205
    %2552 = vmatprep.subr.bf16.mxu0 %v2222
    %2553 = vmatpush1.bf16.msra.mxu0 %v2221
    %2554 = vmatprep.subr.bf16.mxu0 %v2238
    %2555 = vmatpush1.bf16.msra.mxu0 %v2237
    %2556 = vmatprep.subr.bf16.mxu0 %v2254
    %2557 = vmatpush1.bf16.msra.mxu0 %v2253
    %2558 = vmatprep.subr.bf16.mxu0 %v2270
    %2559 = vmatpush1.bf16.msra.mxu0 %v2269
    %2560 = vmatprep.subr.bf16.mxu0 %v2286
    %2561 = vmatpush1.bf16.msra.mxu0 %v2285
    %2562 = vmatprep.subr.bf16.mxu0 0
    %2563 = vmatpush1.bf16.msra.mxu0 0
    %2564 = vmatprep.subr.bf16.mxu0 0
    %2565 = vmatpush1.bf16.msra.mxu0 0
    %2566 = vmatprep.subr.bf16.mxu0 0
    %2567 = vmatpush1.bf16.msra.mxu0 0
    %2568 = vmatprep.subr.bf16.mxu0 0
    %2569 = vmatpush1.bf16.msra.mxu0 0
    %2570 = vmatprep.subr.bf16.mxu0 0
    %2571 = vmatpush1.bf16.msra.mxu0 0
    %2572 = vmatprep.subr.bf16.mxu0 0
    %2573 = vmatpush1.bf16.msra.mxu0 0
    %2574 = vmatprep.subr.bf16.mxu0 0
    %2575 = vmatpush1.bf16.msra.mxu0 0
    %2576 = vmatprep.subr.bf16.mxu0 0
    %2577 = vmatpush1.bf16.msra.mxu0 0
    %2578 = vmatprep.mubr.bf16.mxu0 0
    %2579 = vmatmul.mubr.bf16.gmra.mrb[0].mxu0 %v1570
    %v2580 = vpop.f32.mrb[0].mxu0
    %v2581 = vadd.f32 %v1730, %v2580
    %v2582 = vpop.f32.mrb[0].mxu0
    %v2583 = vadd.f32 %v1734, %v2582
    %v2584 = vpop.f32.mrb[0].mxu0
    %v2585 = vpop.f32.mrb[0].mxu0
    %2586 = vdwg.mxu0
    %2587 = vmatprep.subr.bf16.mxu0 %v2176
    %2588 = vmatpush1.bf16.msra.mxu0 %v2175
    %2589 = vmatprep.subr.bf16.mxu0 %v2192
    %2590 = vmatpush1.bf16.msra.mxu0 %v2191
    %2591 = vmatprep.subr.bf16.mxu0 %v2208
    %2592 = vmatpush1.bf16.msra.mxu0 %v2207
    %2593 = vmatprep.subr.bf16.mxu0 %v2224
    %2594 = vmatpush1.bf16.msra.mxu0 %v2223
    %2595 = vmatprep.subr.bf16.mxu0 %v2240
    %2596 = vmatpush1.bf16.msra.mxu0 %v2239
    %2597 = vmatprep.subr.bf16.mxu0 %v2256
    %2598 = vmatpush1.bf16.msra.mxu0 %v2255
    %2599 = vmatprep.subr.bf16.mxu0 %v2272
    %2600 = vmatpush1.bf16.msra.mxu0 %v2271
    %2601 = vmatprep.subr.bf16.mxu0 %v2288
    %2602 = vmatpush1.bf16.msra.mxu0 %v2287
    %2603 = vmatprep.subr.bf16.mxu0 0
    %2604 = vmatpush1.bf16.msra.mxu0 0
    %2605 = vmatprep.subr.bf16.mxu0 0
    %2606 = vmatpush1.bf16.msra.mxu0 0
    %2607 = vmatprep.subr.bf16.mxu0 0
    %2608 = vmatpush1.bf16.msra.mxu0 0
    %2609 = vmatprep.subr.bf16.mxu0 0
    %2610 = vmatpush1.bf16.msra.mxu0 0
    %2611 = vmatprep.subr.bf16.mxu0 0
    %2612 = vmatpush1.bf16.msra.mxu0 0
    %2613 = vmatprep.subr.bf16.mxu0 0
    %2614 = vmatpush1.bf16.msra.mxu0 0
    %2615 = vmatprep.subr.bf16.mxu0 0
    %2616 = vmatpush1.bf16.msra.mxu0 0
    %2617 = vmatprep.subr.bf16.mxu0 0
    %2618 = vmatpush1.bf16.msra.mxu0 0
    %2619 = vmatprep.mubr.bf16.mxu0 0
    %2620 = vmatmul.mubr.bf16.gmra.mrb[0].mxu0 %v1570
    %v2621 = vpop.f32.mrb[0].mxu0
    %v2622 = vadd.f32 %v1738, %v2621
    %v2623 = vpop.f32.mrb[0].mxu0
    %v2624 = vadd.f32 %v1742, %v2623
    %v2625 = vpop.f32.mrb[0].mxu0
    %v2626 = vpop.f32.mrb[0].mxu0
    %2627 = vdwg.mxu0
    %2628 = vmatprep.subr.bf16.mxu0 %v2178
    %2629 = vmatpush1.bf16.msra.mxu0 %v2177
    %2630 = vmatprep.subr.bf16.mxu0 %v2194
    %2631 = vmatpush1.bf16.msra.mxu0 %v2193
    %2632 = vmatprep.subr.bf16.mxu0 %v2210
    %2633 = vmatpush1.bf16.msra.mxu0 %v2209
    %2634 = vmatprep.subr.bf16.mxu0 %v2226
    %2635 = vmatpush1.bf16.msra.mxu0 %v2225
    %2636 = vmatprep.subr.bf16.mxu0 %v2242
    %2637 = vmatpush1.bf16.msra.mxu0 %v2241
    %2638 = vmatprep.subr.bf16.mxu0 %v2258
    %2639 = vmatpush1.bf16.msra.mxu0 %v2257
    %2640 = vmatprep.subr.bf16.mxu0 %v2274
    %2641 = vmatpush1.bf16.msra.mxu0 %v2273
    %2642 = vmatprep.subr.bf16.mxu0 %v2290
    %2643 = vmatpush1.bf16.msra.mxu0 %v2289
    %2644 = vmatprep.subr.bf16.mxu0 0
    %2645 = vmatpush1.bf16.msra.mxu0 0
    %2646 = vmatprep.subr.bf16.mxu0 0
    %2647 = vmatpush1.bf16.msra.mxu0 0
    %2648 = vmatprep.subr.bf16.mxu0 0
    %2649 = vmatpush1.bf16.msra.mxu0 0
    %2650 = vmatprep.subr.bf16.mxu0 0
    %2651 = vmatpush1.bf16.msra.mxu0 0
    %2652 = vmatprep.subr.bf16.mxu0 0
    %2653 = vmatpush1.bf16.msra.mxu0 0
    %2654 = vmatprep.subr.bf16.mxu0 0
    %2655 = vmatpush1.bf16.msra.mxu0 0
    %2656 = vmatprep.subr.bf16.mxu0 0
    %2657 = vmatpush1.bf16.msra.mxu0 0
    %2658 = vmatprep.subr.bf16.mxu0 0
    %2659 = vmatpush1.bf16.msra.mxu0 0
    %2660 = vmatprep.mubr.bf16.mxu0 0
    %2661 = vmatmul.mubr.bf16.gmra.mrb[0].mxu0 %v1570
    %v2662 = vpop.f32.mrb[0].mxu0
    %v2663 = vadd.f32 %v1746, %v2662
    %v2664 = vpop.f32.mrb[0].mxu0
    %v2665 = vadd.f32 %v1750, %v2664
    %v2666 = vpop.f32.mrb[0].mxu0
    %v2667 = vpop.f32.mrb[0].mxu0
    %2668 = vdwg.mxu0
    %2669 = vmatprep.subr.bf16.mxu0 %v2180
    %2670 = vmatpush1.bf16.msra.mxu0 %v2179
    %2671 = vmatprep.subr.bf16.mxu0 %v2196
    %2672 = vmatpush1.bf16.msra.mxu0 %v2195
    %2673 = vmatprep.subr.bf16.mxu0 %v2212
    %2674 = vmatpush1.bf16.msra.mxu0 %v2211
    %2675 = vmatprep.subr.bf16.mxu0 %v2228
    %2676 = vmatpush1.bf16.msra.mxu0 %v2227
    %2677 = vmatprep.subr.bf16.mxu0 %v2244
    %2678 = vmatpush1.bf16.msra.mxu0 %v2243
    %2679 = vmatprep.subr.bf16.mxu0 %v2260
    %2680 = vmatpush1.bf16.msra.mxu0 %v2259
    %2681 = vmatprep.subr.bf16.mxu0 %v2276
    %2682 = vmatpush1.bf16.msra.mxu0 %v2275
    %2683 = vmatprep.subr.bf16.mxu0 %v2292
    %2684 = vmatpush1.bf16.msra.mxu0 %v2291
    %2685 = vmatprep.subr.bf16.mxu0 0
    %2686 = vmatpush1.bf16.msra.mxu0 0
    %2687 = vmatprep.subr.bf16.mxu0 0
    %2688 = vmatpush1.bf16.msra.mxu0 0
    %2689 = vmatprep.subr.bf16.mxu0 0
    %2690 = vmatpush1.bf16.msra.mxu0 0
    %2691 = vmatprep.subr.bf16.mxu0 0
    %2692 = vmatpush1.bf16.msra.mxu0 0
    %2693 = vmatprep.subr.bf16.mxu0 0
    %2694 = vmatpush1.bf16.msra.mxu0 0
    %2695 = vmatprep.subr.bf16.mxu0 0
    %2696 = vmatpush1.bf16.msra.mxu0 0
    %2697 = vmatprep.subr.bf16.mxu0 0
    %2698 = vmatpush1.bf16.msra.mxu0 0
    %2699 = vmatprep.subr.bf16.mxu0 0
    %2700 = vmatpush1.bf16.msra.mxu0 0
    %2701 = vmatprep.mubr.bf16.mxu0 0
    %2702 = vmatmul.mubr.bf16.gmra.mrb[0].mxu0 %v1570
    %v2703 = vpop.f32.mrb[0].mxu0
    %v2704 = vadd.f32 %v1754, %v2703
    %v2705 = vpop.f32.mrb[0].mxu0
    %v2706 = vadd.f32 %v1758, %v2705
    %v2707 = vpop.f32.mrb[0].mxu0
    %v2708 = vpop.f32.mrb[0].mxu0
    %2709 = vdwg.mxu0
    %2710 = vmatprep.subr.bf16.mxu0 %v2182
    %2711 = vmatpush1.bf16.msra.mxu0 %v2181
    %2712 = vmatprep.subr.bf16.mxu0 %v2198
    %2713 = vmatpush1.bf16.msra.mxu0 %v2197
    %2714 = vmatprep.subr.bf16.mxu0 %v2214
    %2715 = vmatpush1.bf16.msra.mxu0 %v2213
    %2716 = vmatprep.subr.bf16.mxu0 %v2230
    %2717 = vmatpush1.bf16.msra.mxu0 %v2229
    %2718 = vmatprep.subr.bf16.mxu0 %v2246
    %2719 = vmatpush1.bf16.msra.mxu0 %v2245
    %2720 = vmatprep.subr.bf16.mxu0 %v2262
    %2721 = vmatpush1.bf16.msra.mxu0 %v2261
    %2722 = vmatprep.subr.bf16.mxu0 %v2278
    %2723 = vmatpush1.bf16.msra.mxu0 %v2277
    %2724 = vmatprep.subr.bf16.mxu0 %v2294
    %2725 = vmatpush1.bf16.msra.mxu0 %v2293
    %2726 = vmatprep.subr.bf16.mxu0 0
    %2727 = vmatpush1.bf16.msra.mxu0 0
    %2728 = vmatprep.subr.bf16.mxu0 0
    %2729 = vmatpush1.bf16.msra.mxu0 0
    %2730 = vmatprep.subr.bf16.mxu0 0
    %2731 = vmatpush1.bf16.msra.mxu0 0
    %2732 = vmatprep.subr.bf16.mxu0 0
    %2733 = vmatpush1.bf16.msra.mxu0 0
    %2734 = vmatprep.subr.bf16.mxu0 0
    %2735 = vmatpush1.bf16.msra.mxu0 0
    %2736 = vmatprep.subr.bf16.mxu0 0
    %2737 = vmatpush1.bf16.msra.mxu0 0
    %2738 = vmatprep.subr.bf16.mxu0 0
    %2739 = vmatpush1.bf16.msra.mxu0 0
    %2740 = vmatprep.subr.bf16.mxu0 0
    %2741 = vmatpush1.bf16.msra.mxu0 0
    %2742 = vmatprep.mubr.bf16.mxu0 0
    %2743 = vmatmul.mubr.bf16.gmra.mrb[0].mxu0 %v1570
    %v2744 = vpop.f32.mrb[0].mxu0
    %v2745 = vadd.f32 %v1762, %v2744
    %v2746 = vpop.f32.mrb[0].mxu0
    %v2747 = vadd.f32 %v1766, %v2746
    %v2748 = vpop.f32.mrb[0].mxu0
    %v2749 = vpop.f32.mrb[0].mxu0
    %2750 = vdwg.mxu0
    %v2751 = vmul.f32 %v2458, 0.5
    %v2752 = vmul.f32 %v2460, 0.5
    %v2753 = vmul.f32 %v2499, 0.5
    %v2754 = vmul.f32 %v2501, 0.5
    %v2755 = vmul.f32 %v2540, 0.5
    %v2756 = vmul.f32 %v2542, 0.5
    %v2757 = vmul.f32 %v2581, 0.5
    %v2758 = vmul.f32 %v2583, 0.5
    %v2759 = vmul.f32 %v2622, 0.5
    %v2760 = vmul.f32 %v2624, 0.5
    %v2761 = vmul.f32 %v2663, 0.5
    %v2762 = vmul.f32 %v2665, 0.5
    %v2763 = vmul.f32 %v2704, 0.5
    %v2764 = vmul.f32 %v2706, 0.5
    %v2765 = vmul.f32 %v2745, 0.5
    %v2766 = vmul.f32 %v2747, 0.5
    %v2767 = vmul.f32 %v2458, 0.70710677
    %v2768 = vmul.f32 %v2460, 0.70710677
    %v2769 = vmul.f32 %v2499, 0.70710677
    %v2770 = vmul.f32 %v2501, 0.70710677
    %v2771 = vmul.f32 %v2540, 0.70710677
    %v2772 = vmul.f32 %v2542, 0.70710677
    %v2773 = vmul.f32 %v2581, 0.70710677
    %v2774 = vmul.f32 %v2583, 0.70710677
    %v2775 = vmul.f32 %v2622, 0.70710677
    %v2776 = vmul.f32 %v2624, 0.70710677
    %v2777 = vmul.f32 %v2663, 0.70710677
    %v2778 = vmul.f32 %v2665, 0.70710677
    %v2779 = vmul.f32 %v2704, 0.70710677
    %v2780 = vmul.f32 %v2706, 0.70710677
    %v2781 = vmul.f32 %v2745, 0.70710677
    %v2782 = vmul.f32 %v2747, 0.70710677
    %v2783 = vand.u32 2147483647, %v2767
    %v2784 = vand.u32 2147483647, %v2768
    %v2785 = vand.u32 2147483647, %v2769
    %v2786 = vand.u32 2147483647, %v2770
    %v2787 = vand.u32 2147483647, %v2771
    %v2788 = vand.u32 2147483647, %v2772
    %v2789 = vand.u32 2147483647, %v2773
    %v2790 = vand.u32 2147483647, %v2774
    %v2791 = vand.u32 2147483647, %v2775
    %v2792 = vand.u32 2147483647, %v2776
    %v2793 = vand.u32 2147483647, %v2777
    %v2794 = vand.u32 2147483647, %v2778
    %v2795 = vand.u32 2147483647, %v2779
    %v2796 = vand.u32 2147483647, %v2780
    %v2797 = vand.u32 2147483647, %v2781
    %v2798 = vand.u32 2147483647, %v2782
    %v2799 = vmul.f32 %v2783, 0.3275911
    %v2800 = vmul.f32 %v2784, 0.3275911
    %v2801 = vmul.f32 %v2785, 0.3275911
    %v2802 = vmul.f32 %v2786, 0.3275911
    %v2803 = vmul.f32 %v2787, 0.3275911
    %v2804 = vmul.f32 %v2788, 0.3275911
    %v2805 = vmul.f32 %v2789, 0.3275911
    %v2806 = vmul.f32 %v2790, 0.3275911
    %v2807 = vmul.f32 %v2791, 0.3275911
    %v2808 = vmul.f32 %v2792, 0.3275911
    %v2809 = vmul.f32 %v2793, 0.3275911
    %v2810 = vmul.f32 %v2794, 0.3275911
    %v2811 = vmul.f32 %v2795, 0.3275911
    %v2812 = vmul.f32 %v2796, 0.3275911
    %v2813 = vmul.f32 %v2797, 0.3275911
    %v2814 = vmul.f32 %v2798, 0.3275911
    %v2815 = vadd.f32 %v2799, 1.0
    %v2816 = vadd.f32 %v2800, 1.0
    %v2817 = vadd.f32 %v2801, 1.0
    %v2818 = vadd.f32 %v2802, 1.0
    %v2819 = vadd.f32 %v2803, 1.0
    %v2820 = vadd.f32 %v2804, 1.0
    %v2821 = vadd.f32 %v2805, 1.0
    %v2822 = vadd.f32 %v2806, 1.0
    %v2823 = vadd.f32 %v2807, 1.0
    %v2824 = vadd.f32 %v2808, 1.0
    %v2825 = vadd.f32 %v2809, 1.0
    %v2826 = vadd.f32 %v2810, 1.0
    %v2827 = vadd.f32 %v2811, 1.0
    %v2828 = vadd.f32 %v2812, 1.0
    %v2829 = vadd.f32 %v2813, 1.0
    %v2830 = vadd.f32 %v2814, 1.0
    %v2831 = vrcp.pop %v2815
    %v2832 = vmul.f32 1.0, %v2831
    %v2833 = vrcp.pop %v2816
    %v2834 = vmul.f32 1.0, %v2833
    %v2835 = vrcp.pop %v2817
    %v2836 = vmul.f32 1.0, %v2835
    %v2837 = vrcp.pop %v2818
    %v2838 = vmul.f32 1.0, %v2837
    %v2839 = vrcp.pop %v2819
    %v2840 = vmul.f32 1.0, %v2839
    %v2841 = vrcp.pop %v2820
    %v2842 = vmul.f32 1.0, %v2841
    %v2843 = vrcp.pop %v2821
    %v2844 = vmul.f32 1.0, %v2843
    %v2845 = vrcp.pop %v2822
    %v2846 = vmul.f32 1.0, %v2845
    %v2847 = vrcp.pop %v2823
    %v2848 = vmul.f32 1.0, %v2847
    %v2849 = vrcp.pop %v2824
    %v2850 = vmul.f32 1.0, %v2849
    %v2851 = vrcp.pop %v2825
    %v2852 = vmul.f32 1.0, %v2851
    %v2853 = vrcp.pop %v2826
    %v2854 = vmul.f32 1.0, %v2853
    %v2855 = vrcp.pop %v2827
    %v2856 = vmul.f32 1.0, %v2855
    %v2857 = vrcp.pop %v2828
    %v2858 = vmul.f32 1.0, %v2857
    %v2859 = vrcp.pop %v2829
    %v2860 = vmul.f32 1.0, %v2859
    %v2861 = vrcp.pop %v2830
    %v2862 = vmul.f32 1.0, %v2861
    %v2863 = vmul.f32 %v2832, 1.0614054
    %v2864 = vmul.f32 %v2834, 1.0614054
    %v2865 = vmul.f32 %v2836, 1.0614054
    %v2866 = vmul.f32 %v2838, 1.0614054
    %v2867 = vmul.f32 %v2840, 1.0614054
    %v2868 = vmul.f32 %v2842, 1.0614054
    %v2869 = vmul.f32 %v2844, 1.0614054
    %v2870 = vmul.f32 %v2846, 1.0614054
    %v2871 = vmul.f32 %v2848, 1.0614054
    %v2872 = vmul.f32 %v2850, 1.0614054
    %v2873 = vmul.f32 %v2852, 1.0614054
    %v2874 = vmul.f32 %v2854, 1.0614054
    %v2875 = vmul.f32 %v2856, 1.0614054
    %v2876 = vmul.f32 %v2858, 1.0614054
    %v2877 = vmul.f32 %v2860, 1.0614054
    %v2878 = vmul.f32 %v2862, 1.0614054
    %v2879 = vadd.f32 %v2863, -1.4531521
    %v2880 = vadd.f32 %v2864, -1.4531521
    %v2881 = vadd.f32 %v2865, -1.4531521
    %v2882 = vadd.f32 %v2866, -1.4531521
    %v2883 = vadd.f32 %v2867, -1.4531521
    %v2884 = vadd.f32 %v2868, -1.4531521
    %v2885 = vadd.f32 %v2869, -1.4531521
    %v2886 = vadd.f32 %v2870, -1.4531521
    %v2887 = vadd.f32 %v2871, -1.4531521
    %v2888 = vadd.f32 %v2872, -1.4531521
    %v2889 = vadd.f32 %v2873, -1.4531521
    %v2890 = vadd.f32 %v2874, -1.4531521
    %v2891 = vadd.f32 %v2875, -1.4531521
    %v2892 = vadd.f32 %v2876, -1.4531521
    %v2893 = vadd.f32 %v2877, -1.4531521
    %v2894 = vadd.f32 %v2878, -1.4531521
    %v2895 = vmul.f32 %v2879, %v2832
    %v2896 = vmul.f32 %v2880, %v2834
    %v2897 = vmul.f32 %v2881, %v2836
    %v2898 = vmul.f32 %v2882, %v2838
    %v2899 = vmul.f32 %v2883, %v2840
    %v2900 = vmul.f32 %v2884, %v2842
    %v2901 = vmul.f32 %v2885, %v2844
    %v2902 = vmul.f32 %v2886, %v2846
    %v2903 = vmul.f32 %v2887, %v2848
    %v2904 = vmul.f32 %v2888, %v2850
    %v2905 = vmul.f32 %v2889, %v2852
    %v2906 = vmul.f32 %v2890, %v2854
    %v2907 = vmul.f32 %v2891, %v2856
    %v2908 = vmul.f32 %v2892, %v2858
    %v2909 = vmul.f32 %v2893, %v2860
    %v2910 = vmul.f32 %v2894, %v2862
    %v2911 = vadd.f32 %v2895, 1.4214138
    %v2912 = vadd.f32 %v2896, 1.4214138
    %v2913 = vadd.f32 %v2897, 1.4214138
    %v2914 = vadd.f32 %v2898, 1.4214138
    %v2915 = vadd.f32 %v2899, 1.4214138
    %v2916 = vadd.f32 %v2900, 1.4214138
    %v2917 = vadd.f32 %v2901, 1.4214138
    %v2918 = vadd.f32 %v2902, 1.4214138
    %v2919 = vadd.f32 %v2903, 1.4214138
    %v2920 = vadd.f32 %v2904, 1.4214138
    %v2921 = vadd.f32 %v2905, 1.4214138
    %v2922 = vadd.f32 %v2906, 1.4214138
    %v2923 = vadd.f32 %v2907, 1.4214138
    %v2924 = vadd.f32 %v2908, 1.4214138
    %v2925 = vadd.f32 %v2909, 1.4214138
    %v2926 = vadd.f32 %v2910, 1.4214138
    %v2927 = vmul.f32 %v2911, %v2832
    %v2928 = vmul.f32 %v2912, %v2834
    %v2929 = vmul.f32 %v2913, %v2836
    %v2930 = vmul.f32 %v2914, %v2838
    %v2931 = vmul.f32 %v2915, %v2840
    %v2932 = vmul.f32 %v2916, %v2842
    %v2933 = vmul.f32 %v2917, %v2844
    %v2934 = vmul.f32 %v2918, %v2846
    %v2935 = vmul.f32 %v2919, %v2848
    %v2936 = vmul.f32 %v2920, %v2850
    %v2937 = vmul.f32 %v2921, %v2852
    %v2938 = vmul.f32 %v2922, %v2854
    %v2939 = vmul.f32 %v2923, %v2856
    %v2940 = vmul.f32 %v2924, %v2858
    %v2941 = vmul.f32 %v2925, %v2860
    %v2942 = vmul.f32 %v2926, %v2862
    %v2943 = vadd.f32 %v2927, -0.28449672
    %v2944 = vadd.f32 %v2928, -0.28449672
    %v2945 = vadd.f32 %v2929, -0.28449672
    %v2946 = vadd.f32 %v2930, -0.28449672
    %v2947 = vadd.f32 %v2931, -0.28449672
    %v2948 = vadd.f32 %v2932, -0.28449672
    %v2949 = vadd.f32 %v2933, -0.28449672
    %v2950 = vadd.f32 %v2934, -0.28449672
    %v2951 = vadd.f32 %v2935, -0.28449672
    %v2952 = vadd.f32 %v2936, -0.28449672
    %v2953 = vadd.f32 %v2937, -0.28449672
    %v2954 = vadd.f32 %v2938, -0.28449672
    %v2955 = vadd.f32 %v2939, -0.28449672
    %v2956 = vadd.f32 %v2940, -0.28449672
    %v2957 = vadd.f32 %v2941, -0.28449672
    %v2958 = vadd.f32 %v2942, -0.28449672
    %v2959 = vmul.f32 %v2943, %v2832
    %v2960 = vmul.f32 %v2944, %v2834
    %v2961 = vmul.f32 %v2945, %v2836
    %v2962 = vmul.f32 %v2946, %v2838
    %v2963 = vmul.f32 %v2947, %v2840
    %v2964 = vmul.f32 %v2948, %v2842
    %v2965 = vmul.f32 %v2949, %v2844
    %v2966 = vmul.f32 %v2950, %v2846
    %v2967 = vmul.f32 %v2951, %v2848
    %v2968 = vmul.f32 %v2952, %v2850
    %v2969 = vmul.f32 %v2953, %v2852
    %v2970 = vmul.f32 %v2954, %v2854
    %v2971 = vmul.f32 %v2955, %v2856
    %v2972 = vmul.f32 %v2956, %v2858
    %v2973 = vmul.f32 %v2957, %v2860
    %v2974 = vmul.f32 %v2958, %v2862
    %v2975 = vadd.f32 %v2959, 0.2548296
    %v2976 = vadd.f32 %v2960, 0.2548296
    %v2977 = vadd.f32 %v2961, 0.2548296
    %v2978 = vadd.f32 %v2962, 0.2548296
    %v2979 = vadd.f32 %v2963, 0.2548296
    %v2980 = vadd.f32 %v2964, 0.2548296
    %v2981 = vadd.f32 %v2965, 0.2548296
    %v2982 = vadd.f32 %v2966, 0.2548296
    %v2983 = vadd.f32 %v2967, 0.2548296
    %v2984 = vadd.f32 %v2968, 0.2548296
    %v2985 = vadd.f32 %v2969, 0.2548296
    %v2986 = vadd.f32 %v2970, 0.2548296
    %v2987 = vadd.f32 %v2971, 0.2548296
    %v2988 = vadd.f32 %v2972, 0.2548296
    %v2989 = vadd.f32 %v2973, 0.2548296
    %v2990 = vadd.f32 %v2974, 0.2548296
    %v2991 = vmul.f32 %v2975, %v2832
    %v2992 = vmul.f32 %v2976, %v2834
    %v2993 = vmul.f32 %v2977, %v2836
    %v2994 = vmul.f32 %v2978, %v2838
    %v2995 = vmul.f32 %v2979, %v2840
    %v2996 = vmul.f32 %v2980, %v2842
    %v2997 = vmul.f32 %v2981, %v2844
    %v2998 = vmul.f32 %v2982, %v2846
    %v2999 = vmul.f32 %v2983, %v2848
    %v3000 = vmul.f32 %v2984, %v2850
    %v3001 = vmul.f32 %v2985, %v2852
    %v3002 = vmul.f32 %v2986, %v2854
    %v3003 = vmul.f32 %v2987, %v2856
    %v3004 = vmul.f32 %v2988, %v2858
    %v3005 = vmul.f32 %v2989, %v2860
    %v3006 = vmul.f32 %v2990, %v2862
    %v3007 = vsub.f32 0.0, %v2783
    %v3008 = vsub.f32 0.0, %v2784
    %v3009 = vsub.f32 0.0, %v2785
    %v3010 = vsub.f32 0.0, %v2786
    %v3011 = vsub.f32 0.0, %v2787
    %v3012 = vsub.f32 0.0, %v2788
    %v3013 = vsub.f32 0.0, %v2789
    %v3014 = vsub.f32 0.0, %v2790
    %v3015 = vsub.f32 0.0, %v2791
    %v3016 = vsub.f32 0.0, %v2792
    %v3017 = vsub.f32 0.0, %v2793
    %v3018 = vsub.f32 0.0, %v2794
    %v3019 = vsub.f32 0.0, %v2795
    %v3020 = vsub.f32 0.0, %v2796
    %v3021 = vsub.f32 0.0, %v2797
    %v3022 = vsub.f32 0.0, %v2798
    %v3023 = vmul.f32 %v3007, %v2783
    %v3024 = vmul.f32 %v3008, %v2784
    %v3025 = vmul.f32 %v3009, %v2785
    %v3026 = vmul.f32 %v3010, %v2786
    %v3027 = vmul.f32 %v3011, %v2787
    %v3028 = vmul.f32 %v3012, %v2788
    %v3029 = vmul.f32 %v3013, %v2789
    %v3030 = vmul.f32 %v3014, %v2790
    %v3031 = vmul.f32 %v3015, %v2791
    %v3032 = vmul.f32 %v3016, %v2792
    %v3033 = vmul.f32 %v3017, %v2793
    %v3034 = vmul.f32 %v3018, %v2794
    %v3035 = vmul.f32 %v3019, %v2795
    %v3036 = vmul.f32 %v3020, %v2796
    %v3037 = vmul.f32 %v3021, %v2797
    %v3038 = vmul.f32 %v3022, %v2798
    %v3039 = vmul.f32 %v3023, 1.442695
    %v3040 = vpow.pop %v3039
    %v3041 = vmul.f32 %v3024, 1.442695
    %v3042 = vpow.pop %v3041
    %v3043 = vmul.f32 %v3025, 1.442695
    %v3044 = vpow.pop %v3043
    %v3045 = vmul.f32 %v3026, 1.442695
    %v3046 = vpow.pop %v3045
    %v3047 = vmul.f32 %v3027, 1.442695
    %v3048 = vpow.pop %v3047
    %v3049 = vmul.f32 %v3028, 1.442695
    %v3050 = vpow.pop %v3049
    %v3051 = vmul.f32 %v3029, 1.442695
    %v3052 = vpow.pop %v3051
    %v3053 = vmul.f32 %v3030, 1.442695
    %v3054 = vpow.pop %v3053
    %v3055 = vmul.f32 %v3031, 1.442695
    %v3056 = vpow.pop %v3055
    %v3057 = vmul.f32 %v3032, 1.442695
    %v3058 = vpow.pop %v3057
    %v3059 = vmul.f32 %v3033, 1.442695
    %v3060 = vpow.pop %v3059
    %v3061 = vmul.f32 %v3034, 1.442695
    %v3062 = vpow.pop %v3061
    %v3063 = vmul.f32 %v3035, 1.442695
    %v3064 = vpow.pop %v3063
    %v3065 = vmul.f32 %v3036, 1.442695
    %v3066 = vpow.pop %v3065
    %v3067 = vmul.f32 %v3037, 1.442695
    %v3068 = vpow.pop %v3067
    %v3069 = vmul.f32 %v3038, 1.442695
    %v3070 = vpow.pop %v3069
    %v3071 = vmul.f32 %v2991, %v3040
    %v3072 = vmul.f32 %v2992, %v3042
    %v3073 = vmul.f32 %v2993, %v3044
    %v3074 = vmul.f32 %v2994, %v3046
    %v3075 = vmul.f32 %v2995, %v3048
    %v3076 = vmul.f32 %v2996, %v3050
    %v3077 = vmul.f32 %v2997, %v3052
    %v3078 = vmul.f32 %v2998, %v3054
    %v3079 = vmul.f32 %v2999, %v3056
    %v3080 = vmul.f32 %v3000, %v3058
    %v3081 = vmul.f32 %v3001, %v3060
    %v3082 = vmul.f32 %v3002, %v3062
    %v3083 = vmul.f32 %v3003, %v3064
    %v3084 = vmul.f32 %v3004, %v3066
    %v3085 = vmul.f32 %v3005, %v3068
    %v3086 = vmul.f32 %v3006, %v3070
    %v3087 = vsub.f32 1.0, %v3071
    %v3088 = vsub.f32 1.0, %v3072
    %v3089 = vsub.f32 1.0, %v3073
    %v3090 = vsub.f32 1.0, %v3074
    %v3091 = vsub.f32 1.0, %v3075
    %v3092 = vsub.f32 1.0, %v3076
    %v3093 = vsub.f32 1.0, %v3077
    %v3094 = vsub.f32 1.0, %v3078
    %v3095 = vsub.f32 1.0, %v3079
    %v3096 = vsub.f32 1.0, %v3080
    %v3097 = vsub.f32 1.0, %v3081
    %v3098 = vsub.f32 1.0, %v3082
    %v3099 = vsub.f32 1.0, %v3083
    %v3100 = vsub.f32 1.0, %v3084
    %v3101 = vsub.f32 1.0, %v3085
    %v3102 = vsub.f32 1.0, %v3086
    %vm3103 = vcmp.lt.f32.partialorder %v2767, 0.0
    %vm3104 = vcmp.lt.f32.partialorder %v2768, 0.0
    %vm3105 = vcmp.lt.f32.partialorder %v2769, 0.0
    %vm3106 = vcmp.lt.f32.partialorder %v2770, 0.0
    %vm3107 = vcmp.lt.f32.partialorder %v2771, 0.0
    %vm3108 = vcmp.lt.f32.partialorder %v2772, 0.0
    %vm3109 = vcmp.lt.f32.partialorder %v2773, 0.0
    %vm3110 = vcmp.lt.f32.partialorder %v2774, 0.0
    %vm3111 = vcmp.lt.f32.partialorder %v2775, 0.0
    %vm3112 = vcmp.lt.f32.partialorder %v2776, 0.0
    %vm3113 = vcmp.lt.f32.partialorder %v2777, 0.0
    %vm3114 = vcmp.lt.f32.partialorder %v2778, 0.0
    %vm3115 = vcmp.lt.f32.partialorder %v2779, 0.0
    %vm3116 = vcmp.lt.f32.partialorder %v2780, 0.0
    %vm3117 = vcmp.lt.f32.partialorder %v2781, 0.0
    %vm3118 = vcmp.lt.f32.partialorder %v2782, 0.0
    %v3119 = vsub.f32 0.0, %v3087
    %v3120 = vsub.f32 0.0, %v3088
    %v3121 = vsub.f32 0.0, %v3089
    %v3122 = vsub.f32 0.0, %v3090
    %v3123 = vsub.f32 0.0, %v3091
    %v3124 = vsub.f32 0.0, %v3092
    %v3125 = vsub.f32 0.0, %v3093
    %v3126 = vsub.f32 0.0, %v3094
    %v3127 = vsub.f32 0.0, %v3095
    %v3128 = vsub.f32 0.0, %v3096
    %v3129 = vsub.f32 0.0, %v3097
    %v3130 = vsub.f32 0.0, %v3098
    %v3131 = vsub.f32 0.0, %v3099
    %v3132 = vsub.f32 0.0, %v3100
    %v3133 = vsub.f32 0.0, %v3101
    %v3134 = vsub.f32 0.0, %v3102
    %v3135 = vsel %vm3103, %v3119, %v3087
    %v3136 = vsel %vm3104, %v3120, %v3088
    %v3137 = vsel %vm3105, %v3121, %v3089
    %v3138 = vsel %vm3106, %v3122, %v3090
    %v3139 = vsel %vm3107, %v3123, %v3091
    %v3140 = vsel %vm3108, %v3124, %v3092
    %v3141 = vsel %vm3109, %v3125, %v3093
    %v3142 = vsel %vm3110, %v3126, %v3094
    %v3143 = vsel %vm3111, %v3127, %v3095
    %v3144 = vsel %vm3112, %v3128, %v3096
    %v3145 = vsel %vm3113, %v3129, %v3097
    %v3146 = vsel %vm3114, %v3130, %v3098
    %v3147 = vsel %vm3115, %v3131, %v3099
    %v3148 = vsel %vm3116, %v3132, %v3100
    %v3149 = vsel %vm3117, %v3133, %v3101
    %v3150 = vsel %vm3118, %v3134, %v3102
    %v3151 = vadd.f32 %v3135, 1.0
    %v3152 = vadd.f32 %v3136, 1.0
    %v3153 = vadd.f32 %v3137, 1.0
    %v3154 = vadd.f32 %v3138, 1.0
    %v3155 = vadd.f32 %v3139, 1.0
    %v3156 = vadd.f32 %v3140, 1.0
    %v3157 = vadd.f32 %v3141, 1.0
    %v3158 = vadd.f32 %v3142, 1.0
    %v3159 = vadd.f32 %v3143, 1.0
    %v3160 = vadd.f32 %v3144, 1.0
    %v3161 = vadd.f32 %v3145, 1.0
    %v3162 = vadd.f32 %v3146, 1.0
    %v3163 = vadd.f32 %v3147, 1.0
    %v3164 = vadd.f32 %v3148, 1.0
    %v3165 = vadd.f32 %v3149, 1.0
    %v3166 = vadd.f32 %v3150, 1.0
    %v3167 = vmul.f32 %v2751, %v3151
    %v3168 = vmul.f32 %v2752, %v3152
    %v3169 = vmul.f32 %v2753, %v3153
    %v3170 = vmul.f32 %v2754, %v3154
    %v3171 = vmul.f32 %v2755, %v3155
    %v3172 = vmul.f32 %v2756, %v3156
    %v3173 = vmul.f32 %v2757, %v3157
    %v3174 = vmul.f32 %v2758, %v3158
    %v3175 = vmul.f32 %v2759, %v3159
    %v3176 = vmul.f32 %v2760, %v3160
    %v3177 = vmul.f32 %v2761, %v3161
    %v3178 = vmul.f32 %v2762, %v3162
    %v3179 = vmul.f32 %v2763, %v3163
    %v3180 = vmul.f32 %v2764, %v3164
    %v3181 = vmul.f32 %v2765, %v3165
    %v3182 = vmul.f32 %v2766, %v3166
    %v3183 = vpack.c.bf16 %v3167, %v3167
    %v3184 = vpack.c.bf16 %v3168, %v3168
    %v3185 = vpack.c.bf16 %v3169, %v3169
    %v3186 = vpack.c.bf16 %v3170, %v3170
    %v3187 = vpack.c.bf16 %v3171, %v3171
    %v3188 = vpack.c.bf16 %v3172, %v3172
    %v3189 = vpack.c.bf16 %v3173, %v3173
    %v3190 = vpack.c.bf16 %v3174, %v3174
    %v3191 = vpack.c.bf16 %v3175, %v3175
    %v3192 = vpack.c.bf16 %v3176, %v3176
    %v3193 = vpack.c.bf16 %v3177, %v3177
    %v3194 = vpack.c.bf16 %v3178, %v3178
    %v3195 = vpack.c.bf16 %v3179, %v3179
    %v3196 = vpack.c.bf16 %v3180, %v3180
    %v3197 = vpack.c.bf16 %v3181, %v3181
    %v3198 = vpack.c.bf16 %v3182, %v3182
    %v3199 = vld [vmem:[#allocation4] sm:$0xf]
    %v3200 = vld [vmem:[#allocation4 + $0x4] sm:$0xf]
    %v3201 = vld [vmem:[#allocation4 + $0x8] sm:$0xf]
    %v3202 = vld [vmem:[#allocation4 + $0xc] sm:$0xf]
    %v3203 = vld [vmem:[#allocation4 + $0x10] sm:$0xf]
    %v3204 = vld [vmem:[#allocation4 + $0x14] sm:$0xf]
    %v3205 = vld [vmem:[#allocation4 + $0x18] sm:$0xf]
    %v3206 = vld [vmem:[#allocation4 + $0x1c] sm:$0xf]
    %v3207 = vld [vmem:[#allocation4 + $0x20] sm:$0xf]
    %v3208 = vld [vmem:[#allocation4 + $0x24] sm:$0xf]
    %v3209 = vld [vmem:[#allocation4 + $0x28] sm:$0xf]
    %v3210 = vld [vmem:[#allocation4 + $0x2c] sm:$0xf]
    %v3211 = vld [vmem:[#allocation4 + $0x30] sm:$0xf]
    %v3212 = vld [vmem:[#allocation4 + $0x34] sm:$0xf]
    %v3213 = vld [vmem:[#allocation4 + $0x38] sm:$0xf]
    %v3214 = vld [vmem:[#allocation4 + $0x3c] sm:$0xf]
    %v3215 = vld [vmem:[#allocation4 + $0x40] sm:$0xf]
    %v3216 = vld [vmem:[#allocation4 + $0x44] sm:$0xf]
    %v3217 = vld [vmem:[#allocation4 + $0x48] sm:$0xf]
    %v3218 = vld [vmem:[#allocation4 + $0x4c] sm:$0xf]
    %v3219 = vld [vmem:[#allocation4 + $0x50] sm:$0xf]
    %v3220 = vld [vmem:[#allocation4 + $0x54] sm:$0xf]
    %v3221 = vld [vmem:[#allocation4 + $0x58] sm:$0xf]
    %v3222 = vld [vmem:[#allocation4 + $0x5c] sm:$0xf]
    %v3223 = vld [vmem:[#allocation4 + $0x60] sm:$0xf]
    %v3224 = vld [vmem:[#allocation4 + $0x64] sm:$0xf]
    %v3225 = vld [vmem:[#allocation4 + $0x68] sm:$0xf]
    %v3226 = vld [vmem:[#allocation4 + $0x6c] sm:$0xf]
    %v3227 = vld [vmem:[#allocation4 + $0x70] sm:$0xf]
    %v3228 = vld [vmem:[#allocation4 + $0x74] sm:$0xf]
    %v3229 = vld [vmem:[#allocation4 + $0x78] sm:$0xf]
    %v3230 = vld [vmem:[#allocation4 + $0x7c] sm:$0xf]
    %v3231 = vld [vmem:[#allocation4 + $0x80] sm:$0xf]
    %v3232 = vld [vmem:[#allocation4 + $0x84] sm:$0xf]
    %v3233 = vld [vmem:[#allocation4 + $0x88] sm:$0xf]
    %v3234 = vld [vmem:[#allocation4 + $0x8c] sm:$0xf]
    %v3235 = vld [vmem:[#allocation4 + $0x90] sm:$0xf]
    %v3236 = vld [vmem:[#allocation4 + $0x94] sm:$0xf]
    %v3237 = vld [vmem:[#allocation4 + $0x98] sm:$0xf]
    %v3238 = vld [vmem:[#allocation4 + $0x9c] sm:$0xf]
    %v3239 = vld [vmem:[#allocation4 + $0xa0] sm:$0xf]
    %v3240 = vld [vmem:[#allocation4 + $0xa4] sm:$0xf]
    %v3241 = vld [vmem:[#allocation4 + $0xa8] sm:$0xf]
    %v3242 = vld [vmem:[#allocation4 + $0xac] sm:$0xf]
    %v3243 = vld [vmem:[#allocation4 + $0xb0] sm:$0xf]
    %v3244 = vld [vmem:[#allocation4 + $0xb4] sm:$0xf]
    %v3245 = vld [vmem:[#allocation4 + $0xb8] sm:$0xf]
    %v3246 = vld [vmem:[#allocation4 + $0xbc] sm:$0xf]
    %v3247 = vld [vmem:[#allocation4 + $0xc0] sm:$0xf]
    %v3248 = vld [vmem:[#allocation4 + $0xc4] sm:$0xf]
    %v3249 = vld [vmem:[#allocation4 + $0xc8] sm:$0xf]
    %v3250 = vld [vmem:[#allocation4 + $0xcc] sm:$0xf]
    %v3251 = vld [vmem:[#allocation4 + $0xd0] sm:$0xf]
    %v3252 = vld [vmem:[#allocation4 + $0xd4] sm:$0xf]
    %v3253 = vld [vmem:[#allocation4 + $0xd8] sm:$0xf]
    %v3254 = vld [vmem:[#allocation4 + $0xdc] sm:$0xf]
    %v3255 = vld [vmem:[#allocation4 + $0xe0] sm:$0xf]
    %v3256 = vld [vmem:[#allocation4 + $0xe4] sm:$0xf]
    %v3257 = vld [vmem:[#allocation4 + $0xe8] sm:$0xf]
    %v3258 = vld [vmem:[#allocation4 + $0xec] sm:$0xf]
    %v3259 = vld [vmem:[#allocation4 + $0xf0] sm:$0xf]
    %v3260 = vld [vmem:[#allocation4 + $0xf4] sm:$0xf]
    %v3261 = vld [vmem:[#allocation4 + $0xf8] sm:$0xf]
    %v3262 = vld [vmem:[#allocation4 + $0xfc] sm:$0xf]
    %v3263 = vld [vmem:[#allocation4 + $0x100] sm:$0xf]
    %v3264 = vld [vmem:[#allocation4 + $0x104] sm:$0xf]
    %v3265 = vld [vmem:[#allocation4 + $0x108] sm:$0xf]
    %v3266 = vld [vmem:[#allocation4 + $0x10c] sm:$0xf]
    %v3267 = vld [vmem:[#allocation4 + $0x110] sm:$0xf]
    %v3268 = vld [vmem:[#allocation4 + $0x114] sm:$0xf]
    %v3269 = vld [vmem:[#allocation4 + $0x118] sm:$0xf]
    %v3270 = vld [vmem:[#allocation4 + $0x11c] sm:$0xf]
    %v3271 = vld [vmem:[#allocation4 + $0x120] sm:$0xf]
    %v3272 = vld [vmem:[#allocation4 + $0x124] sm:$0xf]
    %v3273 = vld [vmem:[#allocation4 + $0x128] sm:$0xf]
    %v3274 = vld [vmem:[#allocation4 + $0x12c] sm:$0xf]
    %v3275 = vld [vmem:[#allocation4 + $0x130] sm:$0xf]
    %v3276 = vld [vmem:[#allocation4 + $0x134] sm:$0xf]
    %v3277 = vld [vmem:[#allocation4 + $0x138] sm:$0xf]
    %v3278 = vld [vmem:[#allocation4 + $0x13c] sm:$0xf]
    %v3279 = vld [vmem:[#allocation4 + $0x140] sm:$0xf]
    %v3280 = vld [vmem:[#allocation4 + $0x144] sm:$0xf]
    %v3281 = vld [vmem:[#allocation4 + $0x148] sm:$0xf]
    %v3282 = vld [vmem:[#allocation4 + $0x14c] sm:$0xf]
    %v3283 = vld [vmem:[#allocation4 + $0x150] sm:$0xf]
    %v3284 = vld [vmem:[#allocation4 + $0x154] sm:$0xf]
    %v3285 = vld [vmem:[#allocation4 + $0x158] sm:$0xf]
    %v3286 = vld [vmem:[#allocation4 + $0x15c] sm:$0xf]
    %v3287 = vld [vmem:[#allocation4 + $0x160] sm:$0xf]
    %v3288 = vld [vmem:[#allocation4 + $0x164] sm:$0xf]
    %v3289 = vld [vmem:[#allocation4 + $0x168] sm:$0xf]
    %v3290 = vld [vmem:[#allocation4 + $0x16c] sm:$0xf]
    %v3291 = vld [vmem:[#allocation4 + $0x170] sm:$0xf]
    %v3292 = vld [vmem:[#allocation4 + $0x174] sm:$0xf]
    %v3293 = vld [vmem:[#allocation4 + $0x178] sm:$0xf]
    %v3294 = vld [vmem:[#allocation4 + $0x17c] sm:$0xf]
    %v3295 = vld [vmem:[#allocation4 + $0x180] sm:$0xf]
    %v3296 = vld [vmem:[#allocation4 + $0x184] sm:$0xf]
    %v3297 = vld [vmem:[#allocation4 + $0x188] sm:$0xf]
    %v3298 = vld [vmem:[#allocation4 + $0x18c] sm:$0xf]
    %v3299 = vld [vmem:[#allocation4 + $0x190] sm:$0xf]
    %v3300 = vld [vmem:[#allocation4 + $0x194] sm:$0xf]
    %v3301 = vld [vmem:[#allocation4 + $0x198] sm:$0xf]
    %v3302 = vld [vmem:[#allocation4 + $0x19c] sm:$0xf]
    %v3303 = vld [vmem:[#allocation4 + $0x1a0] sm:$0xf]
    %v3304 = vld [vmem:[#allocation4 + $0x1a4] sm:$0xf]
    %v3305 = vld [vmem:[#allocation4 + $0x1a8] sm:$0xf]
    %v3306 = vld [vmem:[#allocation4 + $0x1ac] sm:$0xf]
    %v3307 = vld [vmem:[#allocation4 + $0x1b0] sm:$0xf]
    %v3308 = vld [vmem:[#allocation4 + $0x1b4] sm:$0xf]
    %v3309 = vld [vmem:[#allocation4 + $0x1b8] sm:$0xf]
    %v3310 = vld [vmem:[#allocation4 + $0x1bc] sm:$0xf]
    %v3311 = vld [vmem:[#allocation4 + $0x1c0] sm:$0xf]
    %v3312 = vld [vmem:[#allocation4 + $0x1c4] sm:$0xf]
    %v3313 = vld [vmem:[#allocation4 + $0x1c8] sm:$0xf]
    %v3314 = vld [vmem:[#allocation4 + $0x1cc] sm:$0xf]
    %v3315 = vld [vmem:[#allocation4 + $0x1d0] sm:$0xf]
    %v3316 = vld [vmem:[#allocation4 + $0x1d4] sm:$0xf]
    %v3317 = vld [vmem:[#allocation4 + $0x1d8] sm:$0xf]
    %v3318 = vld [vmem:[#allocation4 + $0x1dc] sm:$0xf]
    %v3319 = vld [vmem:[#allocation4 + $0x1e0] sm:$0xf]
    %v3320 = vld [vmem:[#allocation4 + $0x1e4] sm:$0xf]
    %v3321 = vld [vmem:[#allocation4 + $0x1e8] sm:$0xf]
    %v3322 = vld [vmem:[#allocation4 + $0x1ec] sm:$0xf]
    %v3323 = vld [vmem:[#allocation4 + $0x1f0] sm:$0xf]
    %v3324 = vld [vmem:[#allocation4 + $0x1f4] sm:$0xf]
    %v3325 = vld [vmem:[#allocation4 + $0x1f8] sm:$0xf]
    %v3326 = vld [vmem:[#allocation4 + $0x1fc] sm:$0xf]
    %v3327 = vld [vmem:[#allocation4 + $0x200] sm:$0xf]
    %v3328 = vld [vmem:[#allocation4 + $0x204] sm:$0xf]
    %v3329 = vld [vmem:[#allocation4 + $0x208] sm:$0xf]
    %v3330 = vld [vmem:[#allocation4 + $0x20c] sm:$0xf]
    %v3331 = vld [vmem:[#allocation4 + $0x210] sm:$0xf]
    %v3332 = vld [vmem:[#allocation4 + $0x214] sm:$0xf]
    %v3333 = vld [vmem:[#allocation4 + $0x218] sm:$0xf]
    %v3334 = vld [vmem:[#allocation4 + $0x21c] sm:$0xf]
    %v3335 = vld [vmem:[#allocation4 + $0x220] sm:$0xf]
    %v3336 = vld [vmem:[#allocation4 + $0x224] sm:$0xf]
    %v3337 = vld [vmem:[#allocation4 + $0x228] sm:$0xf]
    %v3338 = vld [vmem:[#allocation4 + $0x22c] sm:$0xf]
    %v3339 = vld [vmem:[#allocation4 + $0x230] sm:$0xf]
    %v3340 = vld [vmem:[#allocation4 + $0x234] sm:$0xf]
    %v3341 = vld [vmem:[#allocation4 + $0x238] sm:$0xf]
    %v3342 = vld [vmem:[#allocation4 + $0x23c] sm:$0xf]
    %v3343 = vld [vmem:[#allocation4 + $0x240] sm:$0xf]
    %v3344 = vld [vmem:[#allocation4 + $0x244] sm:$0xf]
    %v3345 = vld [vmem:[#allocation4 + $0x248] sm:$0xf]
    %v3346 = vld [vmem:[#allocation4 + $0x24c] sm:$0xf]
    %v3347 = vld [vmem:[#allocation4 + $0x250] sm:$0xf]
    %v3348 = vld [vmem:[#allocation4 + $0x254] sm:$0xf]
    %v3349 = vld [vmem:[#allocation4 + $0x258] sm:$0xf]
    %v3350 = vld [vmem:[#allocation4 + $0x25c] sm:$0xf]
    %v3351 = vld [vmem:[#allocation4 + $0x260] sm:$0xf]
    %v3352 = vld [vmem:[#allocation4 + $0x264] sm:$0xf]
    %v3353 = vld [vmem:[#allocation4 + $0x268] sm:$0xf]
    %v3354 = vld [vmem:[#allocation4 + $0x26c] sm:$0xf]
    %v3355 = vld [vmem:[#allocation4 + $0x270] sm:$0xf]
    %v3356 = vld [vmem:[#allocation4 + $0x274] sm:$0xf]
    %v3357 = vld [vmem:[#allocation4 + $0x278] sm:$0xf]
    %v3358 = vld [vmem:[#allocation4 + $0x27c] sm:$0xf]
    %v3359 = vld [vmem:[#allocation4 + $0x280] sm:$0xf]
    %v3360 = vld [vmem:[#allocation4 + $0x284] sm:$0xf]
    %v3361 = vld [vmem:[#allocation4 + $0x288] sm:$0xf]
    %v3362 = vld [vmem:[#allocation4 + $0x28c] sm:$0xf]
    %v3363 = vld [vmem:[#allocation4 + $0x290] sm:$0xf]
    %v3364 = vld [vmem:[#allocation4 + $0x294] sm:$0xf]
    %v3365 = vld [vmem:[#allocation4 + $0x298] sm:$0xf]
    %v3366 = vld [vmem:[#allocation4 + $0x29c] sm:$0xf]
    %v3367 = vld [vmem:[#allocation4 + $0x2a0] sm:$0xf]
    %v3368 = vld [vmem:[#allocation4 + $0x2a4] sm:$0xf]
    %v3369 = vld [vmem:[#allocation4 + $0x2a8] sm:$0xf]
    %v3370 = vld [vmem:[#allocation4 + $0x2ac] sm:$0xf]
    %v3371 = vld [vmem:[#allocation4 + $0x2b0] sm:$0xf]
    %v3372 = vld [vmem:[#allocation4 + $0x2b4] sm:$0xf]
    %v3373 = vld [vmem:[#allocation4 + $0x2b8] sm:$0xf]
    %v3374 = vld [vmem:[#allocation4 + $0x2bc] sm:$0xf]
    %v3375 = vld [vmem:[#allocation4 + $0x2c0] sm:$0xf]
    %v3376 = vld [vmem:[#allocation4 + $0x2c4] sm:$0xf]
    %v3377 = vld [vmem:[#allocation4 + $0x2c8] sm:$0xf]
    %v3378 = vld [vmem:[#allocation4 + $0x2cc] sm:$0xf]
    %v3379 = vld [vmem:[#allocation4 + $0x2d0] sm:$0xf]
    %v3380 = vld [vmem:[#allocation4 + $0x2d4] sm:$0xf]
    %v3381 = vld [vmem:[#allocation4 + $0x2d8] sm:$0xf]
    %v3382 = vld [vmem:[#allocation4 + $0x2dc] sm:$0xf]
    %v3383 = vld [vmem:[#allocation4 + $0x2e0] sm:$0xf]
    %v3384 = vld [vmem:[#allocation4 + $0x2e4] sm:$0xf]
    %v3385 = vld [vmem:[#allocation4 + $0x2e8] sm:$0xf]
    %v3386 = vld [vmem:[#allocation4 + $0x2ec] sm:$0xf]
    %v3387 = vld [vmem:[#allocation4 + $0x2f0] sm:$0xf]
    %v3388 = vld [vmem:[#allocation4 + $0x2f4] sm:$0xf]
    %v3389 = vld [vmem:[#allocation4 + $0x2f8] sm:$0xf]
    %v3390 = vld [vmem:[#allocation4 + $0x2fc] sm:$0xf]
    %v3391 = vld [vmem:[#allocation4 + $0x300] sm:$0xf]
    %v3392 = vld [vmem:[#allocation4 + $0x304] sm:$0xf]
    %v3393 = vld [vmem:[#allocation4 + $0x308] sm:$0xf]
    %v3394 = vld [vmem:[#allocation4 + $0x30c] sm:$0xf]
    %v3395 = vld [vmem:[#allocation4 + $0x310] sm:$0xf]
    %v3396 = vld [vmem:[#allocation4 + $0x314] sm:$0xf]
    %v3397 = vld [vmem:[#allocation4 + $0x318] sm:$0xf]
    %v3398 = vld [vmem:[#allocation4 + $0x31c] sm:$0xf]
    %v3399 = vld [vmem:[#allocation4 + $0x320] sm:$0xf]
    %v3400 = vld [vmem:[#allocation4 + $0x324] sm:$0xf]
    %v3401 = vld [vmem:[#allocation4 + $0x328] sm:$0xf]
    %v3402 = vld [vmem:[#allocation4 + $0x32c] sm:$0xf]
    %v3403 = vld [vmem:[#allocation4 + $0x330] sm:$0xf]
    %v3404 = vld [vmem:[#allocation4 + $0x334] sm:$0xf]
    %v3405 = vld [vmem:[#allocation4 + $0x338] sm:$0xf]
    %v3406 = vld [vmem:[#allocation4 + $0x33c] sm:$0xf]
    %v3407 = vld [vmem:[#allocation4 + $0x340] sm:$0xf]
    %v3408 = vld [vmem:[#allocation4 + $0x344] sm:$0xf]
    %v3409 = vld [vmem:[#allocation4 + $0x348] sm:$0xf]
    %v3410 = vld [vmem:[#allocation4 + $0x34c] sm:$0xf]
    %v3411 = vld [vmem:[#allocation4 + $0x350] sm:$0xf]
    %v3412 = vld [vmem:[#allocation4 + $0x354] sm:$0xf]
    %v3413 = vld [vmem:[#allocation4 + $0x358] sm:$0xf]
    %v3414 = vld [vmem:[#allocation4 + $0x35c] sm:$0xf]
    %v3415 = vld [vmem:[#allocation4 + $0x360] sm:$0xf]
    %v3416 = vld [vmem:[#allocation4 + $0x364] sm:$0xf]
    %v3417 = vld [vmem:[#allocation4 + $0x368] sm:$0xf]
    %v3418 = vld [vmem:[#allocation4 + $0x36c] sm:$0xf]
    %v3419 = vld [vmem:[#allocation4 + $0x370] sm:$0xf]
    %v3420 = vld [vmem:[#allocation4 + $0x374] sm:$0xf]
    %v3421 = vld [vmem:[#allocation4 + $0x378] sm:$0xf]
    %v3422 = vld [vmem:[#allocation4 + $0x37c] sm:$0xf]
    %v3423 = vld [vmem:[#allocation4 + $0x380] sm:$0xf]
    %v3424 = vld [vmem:[#allocation4 + $0x384] sm:$0xf]
    %v3425 = vld [vmem:[#allocation4 + $0x388] sm:$0xf]
    %v3426 = vld [vmem:[#allocation4 + $0x38c] sm:$0xf]
    %v3427 = vld [vmem:[#allocation4 + $0x390] sm:$0xf]
    %v3428 = vld [vmem:[#allocation4 + $0x394] sm:$0xf]
    %v3429 = vld [vmem:[#allocation4 + $0x398] sm:$0xf]
    %v3430 = vld [vmem:[#allocation4 + $0x39c] sm:$0xf]
    %v3431 = vld [vmem:[#allocation4 + $0x3a0] sm:$0xf]
    %v3432 = vld [vmem:[#allocation4 + $0x3a4] sm:$0xf]
    %v3433 = vld [vmem:[#allocation4 + $0x3a8] sm:$0xf]
    %v3434 = vld [vmem:[#allocation4 + $0x3ac] sm:$0xf]
    %v3435 = vld [vmem:[#allocation4 + $0x3b0] sm:$0xf]
    %v3436 = vld [vmem:[#allocation4 + $0x3b4] sm:$0xf]
    %v3437 = vld [vmem:[#allocation4 + $0x3b8] sm:$0xf]
    %v3438 = vld [vmem:[#allocation4 + $0x3bc] sm:$0xf]
    %v3439 = vld [vmem:[#allocation4 + $0x3c0] sm:$0xf]
    %v3440 = vld [vmem:[#allocation4 + $0x3c4] sm:$0xf]
    %v3441 = vld [vmem:[#allocation4 + $0x3c8] sm:$0xf]
    %v3442 = vld [vmem:[#allocation4 + $0x3cc] sm:$0xf]
    %v3443 = vld [vmem:[#allocation4 + $0x3d0] sm:$0xf]
    %v3444 = vld [vmem:[#allocation4 + $0x3d4] sm:$0xf]
    %v3445 = vld [vmem:[#allocation4 + $0x3d8] sm:$0xf]
    %v3446 = vld [vmem:[#allocation4 + $0x3dc] sm:$0xf]
    %v3447 = vld [vmem:[#allocation4 + $0x3e0] sm:$0xf]
    %v3448 = vld [vmem:[#allocation4 + $0x3e4] sm:$0xf]
    %v3449 = vld [vmem:[#allocation4 + $0x3e8] sm:$0xf]
    %v3450 = vld [vmem:[#allocation4 + $0x3ec] sm:$0xf]
    %v3451 = vld [vmem:[#allocation4 + $0x3f0] sm:$0xf]
    %v3452 = vld [vmem:[#allocation4 + $0x3f4] sm:$0xf]
    %v3453 = vld [vmem:[#allocation4 + $0x3f8] sm:$0xf]
    %v3454 = vld [vmem:[#allocation4 + $0x3fc] sm:$0xf]
    %v3455 = vlaneseq
    %v3456 = vshrl.u32 %v3455, 7
    %v3457 = vsub.s32 5, %v3456
    %v3458 = vrot.slane %v64, %v3457
    %v3715 = vunpack.c.l.b16 %v3199
    %v3716 = vunpack.c.l.b16 %v3200
    %v3717 = vunpack.c.l.b16 %v3201
    %v3718 = vunpack.c.l.b16 %v3202
    %v3719 = vunpack.c.l.b16 %v3203
    %v3720 = vunpack.c.l.b16 %v3204
    %v3721 = vunpack.c.l.b16 %v3205
    %v3722 = vunpack.c.l.b16 %v3206
    %v3723 = vunpack.c.l.b16 %v3207
    %v3724 = vunpack.c.l.b16 %v3208
    %v3725 = vunpack.c.l.b16 %v3209
    %v3726 = vunpack.c.l.b16 %v3210
    %v3727 = vunpack.c.l.b16 %v3211
    %v3728 = vunpack.c.l.b16 %v3212
    %v3729 = vunpack.c.l.b16 %v3213
    %v3730 = vunpack.c.l.b16 %v3214
    %v3731 = vunpack.c.l.b16 %v3215
    %v3732 = vunpack.c.l.b16 %v3216
    %v3733 = vunpack.c.l.b16 %v3217
    %v3734 = vunpack.c.l.b16 %v3218
    %v3735 = vunpack.c.l.b16 %v3219
    %v3736 = vunpack.c.l.b16 %v3220
    %v3737 = vunpack.c.l.b16 %v3221
    %v3738 = vunpack.c.l.b16 %v3222
    %v3739 = vunpack.c.l.b16 %v3223
    %v3740 = vunpack.c.l.b16 %v3224
    %v3741 = vunpack.c.l.b16 %v3225
    %v3742 = vunpack.c.l.b16 %v3226
    %v3743 = vunpack.c.l.b16 %v3227
    %v3744 = vunpack.c.l.b16 %v3228
    %v3745 = vunpack.c.l.b16 %v3229
    %v3746 = vunpack.c.l.b16 %v3230
    %v3747 = vunpack.c.l.b16 %v3231
    %v3748 = vunpack.c.l.b16 %v3232
    %v3749 = vunpack.c.l.b16 %v3233
    %v3750 = vunpack.c.l.b16 %v3234
    %v3751 = vunpack.c.l.b16 %v3235
    %v3752 = vunpack.c.l.b16 %v3236
    %v3753 = vunpack.c.l.b16 %v3237
    %v3754 = vunpack.c.l.b16 %v3238
    %v3755 = vunpack.c.l.b16 %v3239
    %v3756 = vunpack.c.l.b16 %v3240
    %v3757 = vunpack.c.l.b16 %v3241
    %v3758 = vunpack.c.l.b16 %v3242
    %v3759 = vunpack.c.l.b16 %v3243
    %v3760 = vunpack.c.l.b16 %v3244
    %v3761 = vunpack.c.l.b16 %v3245
    %v3762 = vunpack.c.l.b16 %v3246
    %v3763 = vunpack.c.l.b16 %v3247
    %v3764 = vunpack.c.l.b16 %v3248
    %v3765 = vunpack.c.l.b16 %v3249
    %v3766 = vunpack.c.l.b16 %v3250
    %v3767 = vunpack.c.l.b16 %v3251
    %v3768 = vunpack.c.l.b16 %v3252
    %v3769 = vunpack.c.l.b16 %v3253
    %v3770 = vunpack.c.l.b16 %v3254
    %v3771 = vunpack.c.l.b16 %v3255
    %v3772 = vunpack.c.l.b16 %v3256
    %v3773 = vunpack.c.l.b16 %v3257
    %v3774 = vunpack.c.l.b16 %v3258
    %v3775 = vunpack.c.l.b16 %v3259
    %v3776 = vunpack.c.l.b16 %v3260
    %v3777 = vunpack.c.l.b16 %v3261
    %v3778 = vunpack.c.l.b16 %v3262
    %v3779 = vunpack.c.l.b16 %v3263
    %v3780 = vunpack.c.l.b16 %v3264
    %v3781 = vunpack.c.l.b16 %v3265
    %v3782 = vunpack.c.l.b16 %v3266
    %v3783 = vunpack.c.l.b16 %v3267
    %v3784 = vunpack.c.l.b16 %v3268
    %v3785 = vunpack.c.l.b16 %v3269
    %v3786 = vunpack.c.l.b16 %v3270
    %v3787 = vunpack.c.l.b16 %v3271
    %v3788 = vunpack.c.l.b16 %v3272
    %v3789 = vunpack.c.l.b16 %v3273
    %v3790 = vunpack.c.l.b16 %v3274
    %v3791 = vunpack.c.l.b16 %v3275
    %v3792 = vunpack.c.l.b16 %v3276
    %v3793 = vunpack.c.l.b16 %v3277
    %v3794 = vunpack.c.l.b16 %v3278
    %v3795 = vunpack.c.l.b16 %v3279
    %v3796 = vunpack.c.l.b16 %v3280
    %v3797 = vunpack.c.l.b16 %v3281
    %v3798 = vunpack.c.l.b16 %v3282
    %v3799 = vunpack.c.l.b16 %v3283
    %v3800 = vunpack.c.l.b16 %v3284
    %v3801 = vunpack.c.l.b16 %v3285
    %v3802 = vunpack.c.l.b16 %v3286
    %v3803 = vunpack.c.l.b16 %v3287
    %v3804 = vunpack.c.l.b16 %v3288
    %v3805 = vunpack.c.l.b16 %v3289
    %v3806 = vunpack.c.l.b16 %v3290
    %v3807 = vunpack.c.l.b16 %v3291
    %v3808 = vunpack.c.l.b16 %v3292
    %v3809 = vunpack.c.l.b16 %v3293
    %v3810 = vunpack.c.l.b16 %v3294
    %v3811 = vunpack.c.l.b16 %v3295
    %v3812 = vunpack.c.l.b16 %v3296
    %v3813 = vunpack.c.l.b16 %v3297
    %v3814 = vunpack.c.l.b16 %v3298
    %v3815 = vunpack.c.l.b16 %v3299
    %v3816 = vunpack.c.l.b16 %v3300
    %v3817 = vunpack.c.l.b16 %v3301
    %v3818 = vunpack.c.l.b16 %v3302
    %v3819 = vunpack.c.l.b16 %v3303
    %v3820 = vunpack.c.l.b16 %v3304
    %v3821 = vunpack.c.l.b16 %v3305
    %v3822 = vunpack.c.l.b16 %v3306
    %v3823 = vunpack.c.l.b16 %v3307
    %v3824 = vunpack.c.l.b16 %v3308
    %v3825 = vunpack.c.l.b16 %v3309
    %v3826 = vunpack.c.l.b16 %v3310
    %v3827 = vunpack.c.l.b16 %v3311
    %v3828 = vunpack.c.l.b16 %v3312
    %v3829 = vunpack.c.l.b16 %v3313
    %v3830 = vunpack.c.l.b16 %v3314
    %v3831 = vunpack.c.l.b16 %v3315
    %v3832 = vunpack.c.l.b16 %v3316
    %v3833 = vunpack.c.l.b16 %v3317
    %v3834 = vunpack.c.l.b16 %v3318
    %v3835 = vunpack.c.l.b16 %v3319
    %v3836 = vunpack.c.l.b16 %v3320
    %v3837 = vunpack.c.l.b16 %v3321
    %v3838 = vunpack.c.l.b16 %v3322
    %v3839 = vunpack.c.l.b16 %v3323
    %v3840 = vunpack.c.l.b16 %v3324
    %v3841 = vunpack.c.l.b16 %v3325
    %v3842 = vunpack.c.l.b16 %v3326
    %v3843 = vunpack.c.l.b16 %v3327
    %v3844 = vunpack.c.l.b16 %v3328
    %v3845 = vunpack.c.l.b16 %v3329
    %v3846 = vunpack.c.l.b16 %v3330
    %v3847 = vunpack.c.l.b16 %v3331
    %v3848 = vunpack.c.l.b16 %v3332
    %v3849 = vunpack.c.l.b16 %v3333
    %v3850 = vunpack.c.l.b16 %v3334
    %v3851 = vunpack.c.l.b16 %v3335
    %v3852 = vunpack.c.l.b16 %v3336
    %v3853 = vunpack.c.l.b16 %v3337
    %v3854 = vunpack.c.l.b16 %v3338
    %v3855 = vunpack.c.l.b16 %v3339
    %v3856 = vunpack.c.l.b16 %v3340
    %v3857 = vunpack.c.l.b16 %v3341
    %v3858 = vunpack.c.l.b16 %v3342
    %v3859 = vunpack.c.l.b16 %v3343
    %v3860 = vunpack.c.l.b16 %v3344
    %v3861 = vunpack.c.l.b16 %v3345
    %v3862 = vunpack.c.l.b16 %v3346
    %v3863 = vunpack.c.l.b16 %v3347
    %v3864 = vunpack.c.l.b16 %v3348
    %v3865 = vunpack.c.l.b16 %v3349
    %v3866 = vunpack.c.l.b16 %v3350
    %v3867 = vunpack.c.l.b16 %v3351
    %v3868 = vunpack.c.l.b16 %v3352
    %v3869 = vunpack.c.l.b16 %v3353
    %v3870 = vunpack.c.l.b16 %v3354
    %v3871 = vunpack.c.l.b16 %v3355
    %v3872 = vunpack.c.l.b16 %v3356
    %v3873 = vunpack.c.l.b16 %v3357
    %v3874 = vunpack.c.l.b16 %v3358
    %v3875 = vunpack.c.l.b16 %v3359
    %v3876 = vunpack.c.l.b16 %v3360
    %v3877 = vunpack.c.l.b16 %v3361
    %v3878 = vunpack.c.l.b16 %v3362
    %v3879 = vunpack.c.l.b16 %v3363
    %v3880 = vunpack.c.l.b16 %v3364
    %v3881 = vunpack.c.l.b16 %v3365
    %v3882 = vunpack.c.l.b16 %v3366
    %v3883 = vunpack.c.l.b16 %v3367
    %v3884 = vunpack.c.l.b16 %v3368
    %v3885 = vunpack.c.l.b16 %v3369
    %v3886 = vunpack.c.l.b16 %v3370
    %v3887 = vunpack.c.l.b16 %v3371
    %v3888 = vunpack.c.l.b16 %v3372
    %v3889 = vunpack.c.l.b16 %v3373
    %v3890 = vunpack.c.l.b16 %v3374
    %v3891 = vunpack.c.l.b16 %v3375
    %v3892 = vunpack.c.l.b16 %v3376
    %v3893 = vunpack.c.l.b16 %v3377
    %v3894 = vunpack.c.l.b16 %v3378
    %v3895 = vunpack.c.l.b16 %v3379
    %v3896 = vunpack.c.l.b16 %v3380
    %v3897 = vunpack.c.l.b16 %v3381
    %v3898 = vunpack.c.l.b16 %v3382
    %v3899 = vunpack.c.l.b16 %v3383
    %v3900 = vunpack.c.l.b16 %v3384
    %v3901 = vunpack.c.l.b16 %v3385
    %v3902 = vunpack.c.l.b16 %v3386
    %v3903 = vunpack.c.l.b16 %v3387
    %v3904 = vunpack.c.l.b16 %v3388
    %v3905 = vunpack.c.l.b16 %v3389
    %v3906 = vunpack.c.l.b16 %v3390
    %v3907 = vunpack.c.l.b16 %v3391
    %v3908 = vunpack.c.l.b16 %v3392
    %v3909 = vunpack.c.l.b16 %v3393
    %v3910 = vunpack.c.l.b16 %v3394
    %v3911 = vunpack.c.l.b16 %v3395
    %v3912 = vunpack.c.l.b16 %v3396
    %v3913 = vunpack.c.l.b16 %v3397
    %v3914 = vunpack.c.l.b16 %v3398
    %v3915 = vunpack.c.l.b16 %v3399
    %v3916 = vunpack.c.l.b16 %v3400
    %v3917 = vunpack.c.l.b16 %v3401
    %v3918 = vunpack.c.l.b16 %v3402
    %v3919 = vunpack.c.l.b16 %v3403
    %v3920 = vunpack.c.l.b16 %v3404
    %v3921 = vunpack.c.l.b16 %v3405
    %v3922 = vunpack.c.l.b16 %v3406
    %v3923 = vunpack.c.l.b16 %v3407
    %v3924 = vunpack.c.l.b16 %v3408
    %v3925 = vunpack.c.l.b16 %v3409
    %v3926 = vunpack.c.l.b16 %v3410
    %v3927 = vunpack.c.l.b16 %v3411
    %v3928 = vunpack.c.l.b16 %v3412
    %v3929 = vunpack.c.l.b16 %v3413
    %v3930 = vunpack.c.l.b16 %v3414
    %v3931 = vunpack.c.l.b16 %v3415
    %v3932 = vunpack.c.l.b16 %v3416
    %v3933 = vunpack.c.l.b16 %v3417
    %v3934 = vunpack.c.l.b16 %v3418
    %v3935 = vunpack.c.l.b16 %v3419
    %v3936 = vunpack.c.l.b16 %v3420
    %v3937 = vunpack.c.l.b16 %v3421
    %v3938 = vunpack.c.l.b16 %v3422
    %v3939 = vunpack.c.l.b16 %v3423
    %v3940 = vunpack.c.l.b16 %v3424
    %v3941 = vunpack.c.l.b16 %v3425
    %v3942 = vunpack.c.l.b16 %v3426
    %v3943 = vunpack.c.l.b16 %v3427
    %v3944 = vunpack.c.l.b16 %v3428
    %v3945 = vunpack.c.l.b16 %v3429
    %v3946 = vunpack.c.l.b16 %v3430
    %v3947 = vunpack.c.l.b16 %v3431
    %v3948 = vunpack.c.l.b16 %v3432
    %v3949 = vunpack.c.l.b16 %v3433
    %v3950 = vunpack.c.l.b16 %v3434
    %v3951 = vunpack.c.l.b16 %v3435
    %v3952 = vunpack.c.l.b16 %v3436
    %v3953 = vunpack.c.l.b16 %v3437
    %v3954 = vunpack.c.l.b16 %v3438
    %v3955 = vunpack.c.l.b16 %v3439
    %v3956 = vunpack.c.l.b16 %v3440
    %v3957 = vunpack.c.l.b16 %v3441
    %v3958 = vunpack.c.l.b16 %v3442
    %v3959 = vunpack.c.l.b16 %v3443
    %v3960 = vunpack.c.l.b16 %v3444
    %v3961 = vunpack.c.l.b16 %v3445
    %v3962 = vunpack.c.l.b16 %v3446
    %v3963 = vunpack.c.l.b16 %v3447
    %v3964 = vunpack.c.l.b16 %v3448
    %v3965 = vunpack.c.l.b16 %v3449
    %v3966 = vunpack.c.l.b16 %v3450
    %v3967 = vunpack.c.l.b16 %v3451
    %v3968 = vunpack.c.l.b16 %v3452
    %v3969 = vunpack.c.l.b16 %v3453
    %v3970 = vunpack.c.l.b16 %v3454
    %v3971 = vpack.c.b16 %v3716, %v3715
    %v3972 = vpack.c.b16 %v3718, %v3717
    %v3973 = vpack.c.b16 %v3720, %v3719
    %v3974 = vpack.c.b16 %v3722, %v3721
    %v3975 = vpack.c.b16 %v3724, %v3723
    %v3976 = vpack.c.b16 %v3726, %v3725
    %v3977 = vpack.c.b16 %v3728, %v3727
    %v3978 = vpack.c.b16 %v3730, %v3729
    %v3979 = vpack.c.b16 %v3732, %v3731
    %v3980 = vpack.c.b16 %v3734, %v3733
    %v3981 = vpack.c.b16 %v3736, %v3735
    %v3982 = vpack.c.b16 %v3738, %v3737
    %v3983 = vpack.c.b16 %v3740, %v3739
    %v3984 = vpack.c.b16 %v3742, %v3741
    %v3985 = vpack.c.b16 %v3744, %v3743
    %v3986 = vpack.c.b16 %v3746, %v3745
    %v3987 = vpack.c.b16 %v3748, %v3747
    %v3988 = vpack.c.b16 %v3750, %v3749
    %v3989 = vpack.c.b16 %v3752, %v3751
    %v3990 = vpack.c.b16 %v3754, %v3753
    %v3991 = vpack.c.b16 %v3756, %v3755
    %v3992 = vpack.c.b16 %v3758, %v3757
    %v3993 = vpack.c.b16 %v3760, %v3759
    %v3994 = vpack.c.b16 %v3762, %v3761
    %v3995 = vpack.c.b16 %v3764, %v3763
    %v3996 = vpack.c.b16 %v3766, %v3765
    %v3997 = vpack.c.b16 %v3768, %v3767
    %v3998 = vpack.c.b16 %v3770, %v3769
    %v3999 = vpack.c.b16 %v3772, %v3771
    %v4000 = vpack.c.b16 %v3774, %v3773
    %v4001 = vpack.c.b16 %v3776, %v3775
    %v4002 = vpack.c.b16 %v3778, %v3777
    %v4003 = vpack.c.b16 %v3780, %v3779
    %v4004 = vpack.c.b16 %v3782, %v3781
    %v4005 = vpack.c.b16 %v3784, %v3783
    %v4006 = vpack.c.b16 %v3786, %v3785
    %v4007 = vpack.c.b16 %v3788, %v3787
    %v4008 = vpack.c.b16 %v3790, %v3789
    %v4009 = vpack.c.b16 %v3792, %v3791
    %v4010 = vpack.c.b16 %v3794, %v3793
    %v4011 = vpack.c.b16 %v3796, %v3795
    %v4012 = vpack.c.b16 %v3798, %v3797
    %v4013 = vpack.c.b16 %v3800, %v3799
    %v4014 = vpack.c.b16 %v3802, %v3801
    %v4015 = vpack.c.b16 %v3804, %v3803
    %v4016 = vpack.c.b16 %v3806, %v3805
    %v4017 = vpack.c.b16 %v3808, %v3807
    %v4018 = vpack.c.b16 %v3810, %v3809
    %v4019 = vpack.c.b16 %v3812, %v3811
    %v4020 = vpack.c.b16 %v3814, %v3813
    %v4021 = vpack.c.b16 %v3816, %v3815
    %v4022 = vpack.c.b16 %v3818, %v3817
    %v4023 = vpack.c.b16 %v3820, %v3819
    %v4024 = vpack.c.b16 %v3822, %v3821
    %v4025 = vpack.c.b16 %v3824, %v3823
    %v4026 = vpack.c.b16 %v3826, %v3825
    %v4027 = vpack.c.b16 %v3828, %v3827
    %v4028 = vpack.c.b16 %v3830, %v3829
    %v4029 = vpack.c.b16 %v3832, %v3831
    %v4030 = vpack.c.b16 %v3834, %v3833
    %v4031 = vpack.c.b16 %v3836, %v3835
    %v4032 = vpack.c.b16 %v3838, %v3837
    %v4033 = vpack.c.b16 %v3840, %v3839
    %v4034 = vpack.c.b16 %v3842, %v3841
    %v4035 = vpack.c.b16 %v3844, %v3843
    %v4036 = vpack.c.b16 %v3846, %v3845
    %v4037 = vpack.c.b16 %v3848, %v3847
    %v4038 = vpack.c.b16 %v3850, %v3849
    %v4039 = vpack.c.b16 %v3852, %v3851
    %v4040 = vpack.c.b16 %v3854, %v3853
    %v4041 = vpack.c.b16 %v3856, %v3855
    %v4042 = vpack.c.b16 %v3858, %v3857
    %v4043 = vpack.c.b16 %v3860, %v3859
    %v4044 = vpack.c.b16 %v3862, %v3861
    %v4045 = vpack.c.b16 %v3864, %v3863
    %v4046 = vpack.c.b16 %v3866, %v3865
    %v4047 = vpack.c.b16 %v3868, %v3867
    %v4048 = vpack.c.b16 %v3870, %v3869
    %v4049 = vpack.c.b16 %v3872, %v3871
    %v4050 = vpack.c.b16 %v3874, %v3873
    %v4051 = vpack.c.b16 %v3876, %v3875
    %v4052 = vpack.c.b16 %v3878, %v3877
    %v4053 = vpack.c.b16 %v3880, %v3879
    %v4054 = vpack.c.b16 %v3882, %v3881
    %v4055 = vpack.c.b16 %v3884, %v3883
    %v4056 = vpack.c.b16 %v3886, %v3885
    %v4057 = vpack.c.b16 %v3888, %v3887
    %v4058 = vpack.c.b16 %v3890, %v3889
    %v4059 = vpack.c.b16 %v3892, %v3891
    %v4060 = vpack.c.b16 %v3894, %v3893
    %v4061 = vpack.c.b16 %v3896, %v3895
    %v4062 = vpack.c.b16 %v3898, %v3897
    %v4063 = vpack.c.b16 %v3900, %v3899
    %v4064 = vpack.c.b16 %v3902, %v3901
    %v4065 = vpack.c.b16 %v3904, %v3903
    %v4066 = vpack.c.b16 %v3906, %v3905
    %v4067 = vpack.c.b16 %v3908, %v3907
    %v4068 = vpack.c.b16 %v3910, %v3909
    %v4069 = vpack.c.b16 %v3912, %v3911
    %v4070 = vpack.c.b16 %v3914, %v3913
    %v4071 = vpack.c.b16 %v3916, %v3915
    %v4072 = vpack.c.b16 %v3918, %v3917
    %v4073 = vpack.c.b16 %v3920, %v3919
    %v4074 = vpack.c.b16 %v3922, %v3921
    %v4075 = vpack.c.b16 %v3924, %v3923
    %v4076 = vpack.c.b16 %v3926, %v3925
    %v4077 = vpack.c.b16 %v3928, %v3927
    %v4078 = vpack.c.b16 %v3930, %v3929
    %v4079 = vpack.c.b16 %v3932, %v3931
    %v4080 = vpack.c.b16 %v3934, %v3933
    %v4081 = vpack.c.b16 %v3936, %v3935
    %v4082 = vpack.c.b16 %v3938, %v3937
    %v4083 = vpack.c.b16 %v3940, %v3939
    %v4084 = vpack.c.b16 %v3942, %v3941
    %v4085 = vpack.c.b16 %v3944, %v3943
    %v4086 = vpack.c.b16 %v3946, %v3945
    %v4087 = vpack.c.b16 %v3948, %v3947
    %v4088 = vpack.c.b16 %v3950, %v3949
    %v4089 = vpack.c.b16 %v3952, %v3951
    %v4090 = vpack.c.b16 %v3954, %v3953
    %v4091 = vpack.c.b16 %v3956, %v3955
    %v4092 = vpack.c.b16 %v3958, %v3957
    %v4093 = vpack.c.b16 %v3960, %v3959
    %v4094 = vpack.c.b16 %v3962, %v3961
    %v4095 = vpack.c.b16 %v3964, %v3963
    %v4096 = vpack.c.b16 %v3966, %v3965
    %v4097 = vpack.c.b16 %v3968, %v3967
    %v4098 = vpack.c.b16 %v3970, %v3969
    %4227 = vmatprep.subr.bf16.mxu0 0
    %4228 = vmatpush1.bf16.msra.mxu0 %v3971
    %4229 = vmatprep.subr.bf16.mxu0 0
    %4230 = vmatpush1.bf16.msra.mxu0 %v3972
    %4231 = vmatprep.subr.bf16.mxu0 0
    %4232 = vmatpush1.bf16.msra.mxu0 %v3973
    %4233 = vmatprep.subr.bf16.mxu0 0
    %4234 = vmatpush1.bf16.msra.mxu0 %v3974
    %4235 = vmatprep.subr.bf16.mxu0 0
    %4236 = vmatpush1.bf16.msra.mxu0 %v3975
    %4237 = vmatprep.subr.bf16.mxu0 0
    %4238 = vmatpush1.bf16.msra.mxu0 %v3976
    %4239 = vmatprep.subr.bf16.mxu0 0
    %4240 = vmatpush1.bf16.msra.mxu0 %v3977
    %4241 = vmatprep.subr.bf16.mxu0 0
    %4242 = vmatpush1.bf16.msra.mxu0 %v3978
    %4243 = vmatprep.subr.bf16.mxu0 0
    %4244 = vmatpush1.bf16.msra.mxu0 %v3979
    %4245 = vmatprep.subr.bf16.mxu0 0
    %4246 = vmatpush1.bf16.msra.mxu0 %v3980
    %4247 = vmatprep.subr.bf16.mxu0 0
    %4248 = vmatpush1.bf16.msra.mxu0 %v3981
    %4249 = vmatprep.subr.bf16.mxu0 0
    %4250 = vmatpush1.bf16.msra.mxu0 %v3982
    %4251 = vmatprep.subr.bf16.mxu0 0
    %4252 = vmatpush1.bf16.msra.mxu0 %v3983
    %4253 = vmatprep.subr.bf16.mxu0 0
    %4254 = vmatpush1.bf16.msra.mxu0 %v3984
    %4255 = vmatprep.subr.bf16.mxu0 0
    %4256 = vmatpush1.bf16.msra.mxu0 %v3985
    %4257 = vmatprep.subr.bf16.mxu0 0
    %4258 = vmatpush1.bf16.msra.mxu0 %v3986
    %4259 = vmatprep.mubr.bf16.mxu0 %v3184
    %4260 = vmatmul.mubr.bf16.gmra.mrb[0].mxu0 %v3183
    %v4261 = vpop.f32.mrb[0].mxu0
    %v4262 = vadd.f32 %v3458, %v4261
    %v4263 = vpop.f32.mrb[0].mxu0
    %v4264 = vpop.f32.mrb[0].mxu0
    %v4265 = vpop.f32.mrb[0].mxu0
    %4266 = vdwg.mxu0
    %4267 = vmatprep.subr.bf16.mxu0 0
    %4268 = vmatpush1.bf16.msra.mxu0 %v3987
    %4269 = vmatprep.subr.bf16.mxu0 0
    %4270 = vmatpush1.bf16.msra.mxu0 %v3988
    %4271 = vmatprep.subr.bf16.mxu0 0
    %4272 = vmatpush1.bf16.msra.mxu0 %v3989
    %4273 = vmatprep.subr.bf16.mxu0 0
    %4274 = vmatpush1.bf16.msra.mxu0 %v3990
    %4275 = vmatprep.subr.bf16.mxu0 0
    %4276 = vmatpush1.bf16.msra.mxu0 %v3991
    %4277 = vmatprep.subr.bf16.mxu0 0
    %4278 = vmatpush1.bf16.msra.mxu0 %v3992
    %4279 = vmatprep.subr.bf16.mxu0 0
    %4280 = vmatpush1.bf16.msra.mxu0 %v3993
    %4281 = vmatprep.subr.bf16.mxu0 0
    %4282 = vmatpush1.bf16.msra.mxu0 %v3994
    %4283 = vmatprep.subr.bf16.mxu0 0
    %4284 = vmatpush1.bf16.msra.mxu0 %v3995
    %4285 = vmatprep.subr.bf16.mxu0 0
    %4286 = vmatpush1.bf16.msra.mxu0 %v3996
    %4287 = vmatprep.subr.bf16.mxu0 0
    %4288 = vmatpush1.bf16.msra.mxu0 %v3997
    %4289 = vmatprep.subr.bf16.mxu0 0
    %4290 = vmatpush1.bf16.msra.mxu0 %v3998
    %4291 = vmatprep.subr.bf16.mxu0 0
    %4292 = vmatpush1.bf16.msra.mxu0 %v3999
    %4293 = vmatprep.subr.bf16.mxu0 0
    %4294 = vmatpush1.bf16.msra.mxu0 %v4000
    %4295 = vmatprep.subr.bf16.mxu0 0
    %4296 = vmatpush1.bf16.msra.mxu0 %v4001
    %4297 = vmatprep.subr.bf16.mxu0 0
    %4298 = vmatpush1.bf16.msra.mxu0 %v4002
    %4299 = vmatprep.mubr.bf16.mxu0 %v3186
    %4300 = vmatmul.mubr.bf16.gmra.mrb[0].mxu0 %v3185
    %v4301 = vpop.f32.mrb[0].mxu0
    %v4302 = vadd.f32 %v4262, %v4301
    %v4303 = vpop.f32.mrb[0].mxu0
    %v4304 = vpop.f32.mrb[0].mxu0
    %v4305 = vpop.f32.mrb[0].mxu0
    %4306 = vdwg.mxu0
    %4307 = vmatprep.subr.bf16.mxu0 0
    %4308 = vmatpush1.bf16.msra.mxu0 %v4003
    %4309 = vmatprep.subr.bf16.mxu0 0
    %4310 = vmatpush1.bf16.msra.mxu0 %v4004
    %4311 = vmatprep.subr.bf16.mxu0 0
    %4312 = vmatpush1.bf16.msra.mxu0 %v4005
    %4313 = vmatprep.subr.bf16.mxu0 0
    %4314 = vmatpush1.bf16.msra.mxu0 %v4006
    %4315 = vmatprep.subr.bf16.mxu0 0
    %4316 = vmatpush1.bf16.msra.mxu0 %v4007
    %4317 = vmatprep.subr.bf16.mxu0 0
    %4318 = vmatpush1.bf16.msra.mxu0 %v4008
    %4319 = vmatprep.subr.bf16.mxu0 0
    %4320 = vmatpush1.bf16.msra.mxu0 %v4009
    %4321 = vmatprep.subr.bf16.mxu0 0
    %4322 = vmatpush1.bf16.msra.mxu0 %v4010
    %4323 = vmatprep.subr.bf16.mxu0 0
    %4324 = vmatpush1.bf16.msra.mxu0 %v4011
    %4325 = vmatprep.subr.bf16.mxu0 0
    %4326 = vmatpush1.bf16.msra.mxu0 %v4012
    %4327 = vmatprep.subr.bf16.mxu0 0
    %4328 = vmatpush1.bf16.msra.mxu0 %v4013
    %4329 = vmatprep.subr.bf16.mxu0 0
    %4330 = vmatpush1.bf16.msra.mxu0 %v4014
    %4331 = vmatprep.subr.bf16.mxu0 0
    %4332 = vmatpush1.bf16.msra.mxu0 %v4015
    %4333 = vmatprep.subr.bf16.mxu0 0
    %4334 = vmatpush1.bf16.msra.mxu0 %v4016
    %4335 = vmatprep.subr.bf16.mxu0 0
    %4336 = vmatpush1.bf16.msra.mxu0 %v4017
    %4337 = vmatprep.subr.bf16.mxu0 0
    %4338 = vmatpush1.bf16.msra.mxu0 %v4018
    %4339 = vmatprep.mubr.bf16.mxu0 %v3188
    %4340 = vmatmul.mubr.bf16.gmra.mrb[0].mxu0 %v3187
    %v4341 = vpop.f32.mrb[0].mxu0
    %v4342 = vadd.f32 %v4302, %v4341
    %v4343 = vpop.f32.mrb[0].mxu0
    %v4344 = vpop.f32.mrb[0].mxu0
    %v4345 = vpop.f32.mrb[0].mxu0
    %4346 = vdwg.mxu0
    %4347 = vmatprep.subr.bf16.mxu0 0
    %4348 = vmatpush1.bf16.msra.mxu0 %v4019
    %4349 = vmatprep.subr.bf16.mxu0 0
    %4350 = vmatpush1.bf16.msra.mxu0 %v4020
    %4351 = vmatprep.subr.bf16.mxu0 0
    %4352 = vmatpush1.bf16.msra.mxu0 %v4021
    %4353 = vmatprep.subr.bf16.mxu0 0
    %4354 = vmatpush1.bf16.msra.mxu0 %v4022
    %4355 = vmatprep.subr.bf16.mxu0 0
    %4356 = vmatpush1.bf16.msra.mxu0 %v4023
    %4357 = vmatprep.subr.bf16.mxu0 0
    %4358 = vmatpush1.bf16.msra.mxu0 %v4024
    %4359 = vmatprep.subr.bf16.mxu0 0
    %4360 = vmatpush1.bf16.msra.mxu0 %v4025
    %4361 = vmatprep.subr.bf16.mxu0 0
    %4362 = vmatpush1.bf16.msra.mxu0 %v4026
    %4363 = vmatprep.subr.bf16.mxu0 0
    %4364 = vmatpush1.bf16.msra.mxu0 %v4027
    %4365 = vmatprep.subr.bf16.mxu0 0
    %4366 = vmatpush1.bf16.msra.mxu0 %v4028
    %4367 = vmatprep.subr.bf16.mxu0 0
    %4368 = vmatpush1.bf16.msra.mxu0 %v4029
    %4369 = vmatprep.subr.bf16.mxu0 0
    %4370 = vmatpush1.bf16.msra.mxu0 %v4030
    %4371 = vmatprep.subr.bf16.mxu0 0
    %4372 = vmatpush1.bf16.msra.mxu0 %v4031
    %4373 = vmatprep.subr.bf16.mxu0 0
    %4374 = vmatpush1.bf16.msra.mxu0 %v4032
    %4375 = vmatprep.subr.bf16.mxu0 0
    %4376 = vmatpush1.bf16.msra.mxu0 %v4033
    %4377 = vmatprep.subr.bf16.mxu0 0
    %4378 = vmatpush1.bf16.msra.mxu0 %v4034
    %4379 = vmatprep.mubr.bf16.mxu0 %v3190
    %4380 = vmatmul.mubr.bf16.gmra.mrb[0].mxu0 %v3189
    %v4381 = vpop.f32.mrb[0].mxu0
    %v4382 = vadd.f32 %v4342, %v4381
    %v4383 = vpop.f32.mrb[0].mxu0
    %v4384 = vpop.f32.mrb[0].mxu0
    %v4385 = vpop.f32.mrb[0].mxu0
    %4386 = vdwg.mxu0
    %4387 = vmatprep.subr.bf16.mxu0 0
    %4388 = vmatpush1.bf16.msra.mxu0 %v4035
    %4389 = vmatprep.subr.bf16.mxu0 0
    %4390 = vmatpush1.bf16.msra.mxu0 %v4036
    %4391 = vmatprep.subr.bf16.mxu0 0
    %4392 = vmatpush1.bf16.msra.mxu0 %v4037
    %4393 = vmatprep.subr.bf16.mxu0 0
    %4394 = vmatpush1.bf16.msra.mxu0 %v4038
    %4395 = vmatprep.subr.bf16.mxu0 0
    %4396 = vmatpush1.bf16.msra.mxu0 %v4039
    %4397 = vmatprep.subr.bf16.mxu0 0
    %4398 = vmatpush1.bf16.msra.mxu0 %v4040
    %4399 = vmatprep.subr.bf16.mxu0 0
    %4400 = vmatpush1.bf16.msra.mxu0 %v4041
    %4401 = vmatprep.subr.bf16.mxu0 0
    %4402 = vmatpush1.bf16.msra.mxu0 %v4042
    %4403 = vmatprep.subr.bf16.mxu0 0
    %4404 = vmatpush1.bf16.msra.mxu0 %v4043
    %4405 = vmatprep.subr.bf16.mxu0 0
    %4406 = vmatpush1.bf16.msra.mxu0 %v4044
    %4407 = vmatprep.subr.bf16.mxu0 0
    %4408 = vmatpush1.bf16.msra.mxu0 %v4045
    %4409 = vmatprep.subr.bf16.mxu0 0
    %4410 = vmatpush1.bf16.msra.mxu0 %v4046
    %4411 = vmatprep.subr.bf16.mxu0 0
    %4412 = vmatpush1.bf16.msra.mxu0 %v4047
    %4413 = vmatprep.subr.bf16.mxu0 0
    %4414 = vmatpush1.bf16.msra.mxu0 %v4048
    %4415 = vmatprep.subr.bf16.mxu0 0
    %4416 = vmatpush1.bf16.msra.mxu0 %v4049
    %4417 = vmatprep.subr.bf16.mxu0 0
    %4418 = vmatpush1.bf16.msra.mxu0 %v4050
    %4419 = vmatprep.mubr.bf16.mxu0 %v3192
    %4420 = vmatmul.mubr.bf16.gmra.mrb[0].mxu0 %v3191
    %v4421 = vpop.f32.mrb[0].mxu0
    %v4422 = vadd.f32 %v4382, %v4421
    %v4423 = vpop.f32.mrb[0].mxu0
    %v4424 = vpop.f32.mrb[0].mxu0
    %v4425 = vpop.f32.mrb[0].mxu0
    %4426 = vdwg.mxu0
    %4427 = vmatprep.subr.bf16.mxu0 0
    %4428 = vmatpush1.bf16.msra.mxu0 %v4051
    %4429 = vmatprep.subr.bf16.mxu0 0
    %4430 = vmatpush1.bf16.msra.mxu0 %v4052
    %4431 = vmatprep.subr.bf16.mxu0 0
    %4432 = vmatpush1.bf16.msra.mxu0 %v4053
    %4433 = vmatprep.subr.bf16.mxu0 0
    %4434 = vmatpush1.bf16.msra.mxu0 %v4054
    %4435 = vmatprep.subr.bf16.mxu0 0
    %4436 = vmatpush1.bf16.msra.mxu0 %v4055
    %4437 = vmatprep.subr.bf16.mxu0 0
    %4438 = vmatpush1.bf16.msra.mxu0 %v4056
    %4439 = vmatprep.subr.bf16.mxu0 0
    %4440 = vmatpush1.bf16.msra.mxu0 %v4057
    %4441 = vmatprep.subr.bf16.mxu0 0
    %4442 = vmatpush1.bf16.msra.mxu0 %v4058
    %4443 = vmatprep.subr.bf16.mxu0 0
    %4444 = vmatpush1.bf16.msra.mxu0 %v4059
    %4445 = vmatprep.subr.bf16.mxu0 0
    %4446 = vmatpush1.bf16.msra.mxu0 %v4060
    %4447 = vmatprep.subr.bf16.mxu0 0
    %4448 = vmatpush1.bf16.msra.mxu0 %v4061
    %4449 = vmatprep.subr.bf16.mxu0 0
    %4450 = vmatpush1.bf16.msra.mxu0 %v4062
    %4451 = vmatprep.subr.bf16.mxu0 0
    %4452 = vmatpush1.bf16.msra.mxu0 %v4063
    %4453 = vmatprep.subr.bf16.mxu0 0
    %4454 = vmatpush1.bf16.msra.mxu0 %v4064
    %4455 = vmatprep.subr.bf16.mxu0 0
    %4456 = vmatpush1.bf16.msra.mxu0 %v4065
    %4457 = vmatprep.subr.bf16.mxu0 0
    %4458 = vmatpush1.bf16.msra.mxu0 %v4066
    %4459 = vmatprep.mubr.bf16.mxu0 %v3194
    %4460 = vmatmul.mubr.bf16.gmra.mrb[0].mxu0 %v3193
    %v4461 = vpop.f32.mrb[0].mxu0
    %v4462 = vadd.f32 %v4422, %v4461
    %v4463 = vpop.f32.mrb[0].mxu0
    %v4464 = vpop.f32.mrb[0].mxu0
    %v4465 = vpop.f32.mrb[0].mxu0
    %4466 = vdwg.mxu0
    %4467 = vmatprep.subr.bf16.mxu0 0
    %4468 = vmatpush1.bf16.msra.mxu0 %v4067
    %4469 = vmatprep.subr.bf16.mxu0 0
    %4470 = vmatpush1.bf16.msra.mxu0 %v4068
    %4471 = vmatprep.subr.bf16.mxu0 0
    %4472 = vmatpush1.bf16.msra.mxu0 %v4069
    %4473 = vmatprep.subr.bf16.mxu0 0
    %4474 = vmatpush1.bf16.msra.mxu0 %v4070
    %4475 = vmatprep.subr.bf16.mxu0 0
    %4476 = vmatpush1.bf16.msra.mxu0 %v4071
    %4477 = vmatprep.subr.bf16.mxu0 0
    %4478 = vmatpush1.bf16.msra.mxu0 %v4072
    %4479 = vmatprep.subr.bf16.mxu0 0
    %4480 = vmatpush1.bf16.msra.mxu0 %v4073
    %4481 = vmatprep.subr.bf16.mxu0 0
    %4482 = vmatpush1.bf16.msra.mxu0 %v4074
    %4483 = vmatprep.subr.bf16.mxu0 0
    %4484 = vmatpush1.bf16.msra.mxu0 %v4075
    %4485 = vmatprep.subr.bf16.mxu0 0
    %4486 = vmatpush1.bf16.msra.mxu0 %v4076
    %4487 = vmatprep.subr.bf16.mxu0 0
    %4488 = vmatpush1.bf16.msra.mxu0 %v4077
    %4489 = vmatprep.subr.bf16.mxu0 0
    %4490 = vmatpush1.bf16.msra.mxu0 %v4078
    %4491 = vmatprep.subr.bf16.mxu0 0
    %4492 = vmatpush1.bf16.msra.mxu0 %v4079
    %4493 = vmatprep.subr.bf16.mxu0 0
    %4494 = vmatpush1.bf16.msra.mxu0 %v4080
    %4495 = vmatprep.subr.bf16.mxu0 0
    %4496 = vmatpush1.bf16.msra.mxu0 %v4081
    %4497 = vmatprep.subr.bf16.mxu0 0
    %4498 = vmatpush1.bf16.msra.mxu0 %v4082
    %4499 = vmatprep.mubr.bf16.mxu0 %v3196
    %4500 = vmatmul.mubr.bf16.gmra.mrb[0].mxu0 %v3195
    %v4501 = vpop.f32.mrb[0].mxu0
    %v4502 = vadd.f32 %v4462, %v4501
    %v4503 = vpop.f32.mrb[0].mxu0
    %v4504 = vpop.f32.mrb[0].mxu0
    %v4505 = vpop.f32.mrb[0].mxu0
    %4506 = vdwg.mxu0
    %4507 = vmatprep.subr.bf16.mxu0 0
    %4508 = vmatpush1.bf16.msra.mxu0 %v4083
    %4509 = vmatprep.subr.bf16.mxu0 0
    %4510 = vmatpush1.bf16.msra.mxu0 %v4084
    %4511 = vmatprep.subr.bf16.mxu0 0
    %4512 = vmatpush1.bf16.msra.mxu0 %v4085
    %4513 = vmatprep.subr.bf16.mxu0 0
    %4514 = vmatpush1.bf16.msra.mxu0 %v4086
    %4515 = vmatprep.subr.bf16.mxu0 0
    %4516 = vmatpush1.bf16.msra.mxu0 %v4087
    %4517 = vmatprep.subr.bf16.mxu0 0
    %4518 = vmatpush1.bf16.msra.mxu0 %v4088
    %4519 = vmatprep.subr.bf16.mxu0 0
    %4520 = vmatpush1.bf16.msra.mxu0 %v4089
    %4521 = vmatprep.subr.bf16.mxu0 0
    %4522 = vmatpush1.bf16.msra.mxu0 %v4090
    %4523 = vmatprep.subr.bf16.mxu0 0
    %4524 = vmatpush1.bf16.msra.mxu0 %v4091
    %4525 = vmatprep.subr.bf16.mxu0 0
    %4526 = vmatpush1.bf16.msra.mxu0 %v4092
    %4527 = vmatprep.subr.bf16.mxu0 0
    %4528 = vmatpush1.bf16.msra.mxu0 %v4093
    %4529 = vmatprep.subr.bf16.mxu0 0
    %4530 = vmatpush1.bf16.msra.mxu0 %v4094
    %4531 = vmatprep.subr.bf16.mxu0 0
    %4532 = vmatpush1.bf16.msra.mxu0 %v4095
    %4533 = vmatprep.subr.bf16.mxu0 0
    %4534 = vmatpush1.bf16.msra.mxu0 %v4096
    %4535 = vmatprep.subr.bf16.mxu0 0
    %4536 = vmatpush1.bf16.msra.mxu0 %v4097
    %4537 = vmatprep.subr.bf16.mxu0 0
    %4538 = vmatpush1.bf16.msra.mxu0 %v4098
    %4539 = vmatprep.mubr.bf16.mxu0 %v3198
    %4540 = vmatmul.mubr.bf16.gmra.mrb[0].mxu0 %v3197
    %v4541 = vpop.f32.mrb[0].mxu0
    %v4542 = vadd.f32 %v4502, %v4541
    %v4543 = vpop.f32.mrb[0].mxu0
    %v4544 = vpop.f32.mrb[0].mxu0
    %v4545 = vpop.f32.mrb[0].mxu0
    %4546 = vdwg.mxu0
    %v4547 = vadd.f32 %v1569, %v4542
    %v4548 = vsel %vm1147, %v4547, 0.0
    %4549 = vadd.xlane.f32.xlu0 %v4548
    %v4550 = vpop.xlane.xlu0 %4549
    %v4551 = vmul.f32 %v4550, %v1549
    %v4552 = vsub.f32 %v4547, %v4551
    %v4553 = vmul.f32 %v4552, %v4552
    %v4554 = vsel %vm1147, %v4553, 0.0
    %4555 = vadd.xlane.f32.xlu0 %v4554
    %v4556 = vpop.xlane.xlu0 %4555
    %v4557 = vmul.f32 %v4556, %v1549
    %v4558 = vadd.f32 %v4557, 1e-05
    %v4559 = vrsqrt.pop %v4558
    %v4560 = vmul.f32 %v4552, %v4559
    %v4561 = vlaneseq
    %v4562 = vshrl.u32 %v4561, 7
    %v4563 = vsub.s32 2, %v4562
    %v4564 = vrot.slane %v64, %v4563
    %v4565 = vmul.f32 %v4560, %v4564
    %v4566 = vlaneseq
    %v4567 = vshrl.u32 %v4566, 7
    %v4568 = vsub.s32 3, %v4567
    %v4569 = vrot.slane %v64, %v4568
    %v4570 = vadd.f32 %v4565, %v4569
    %v4571 = vadd.f32 %v4570, %v81
    %v4572 = vld [vmem:[%s8] sm:$0xff]
    %v4573 = vld [vmem:[%s8 + $0x8] sm:$0xff]
    %v4574 = vld [vmem:[%s8 + $0x10] sm:$0xff]
    %v4575 = vld [vmem:[%s8 + $0x18] sm:$0xff]
    %v4576 = vld [vmem:[%s8 + $0x20] sm:$0xff]
    %v4577 = vld [vmem:[%s8 + $0x28] sm:$0xff]
    %v4578 = vld [vmem:[%s8 + $0x30] sm:$0xff]
    %v4579 = vld [vmem:[%s8 + $0x38] sm:$0xff]
    %v4580 = vld [vmem:[%s8 + $0x40] sm:$0xff]
    %v4581 = vld [vmem:[%s8 + $0x48] sm:$0xff]
    %v4582 = vld [vmem:[%s8 + $0x50] sm:$0xff]
    %v4583 = vld [vmem:[%s8 + $0x58] sm:$0xff]
    %v4584 = vld [vmem:[%s8 + $0x60] sm:$0xff]
    %v4585 = vld [vmem:[%s8 + $0x68] sm:$0xff]
    %v4586 = vld [vmem:[%s8 + $0x70] sm:$0xff]
    %v4587 = vld [vmem:[%s8 + $0x78] sm:$0xff]
    %v4588 = vlaneseq
    %v4589 = vshrl.u32 %v4588, 7
    %v4590 = vsub.s32 6, %v4589
    %v4591 = vrot.slane %v64, %v4590
    %4592 = vmatprep.subr.mxu0 0.0
    %4593 = vmatpush1.msra.mxu0 %v4572
    %4594 = vmatprep.subr.mxu0 0.0
    %4595 = vmatpush1.msra.mxu0 %v4573
    %4596 = vmatprep.subr.mxu0 0.0
    %4597 = vmatpush1.msra.mxu0 %v4574
    %4598 = vmatprep.subr.mxu0 0.0
    %4599 = vmatpush1.msra.mxu0 %v4575
    %4600 = vmatprep.subr.mxu0 0.0
    %4601 = vmatpush1.msra.mxu0 %v4576
    %4602 = vmatprep.subr.mxu0 0.0
    %4603 = vmatpush1.msra.mxu0 %v4577
    %4604 = vmatprep.subr.mxu0 0.0
    %4605 = vmatpush1.msra.mxu0 %v4578
    %4606 = vmatprep.subr.mxu0 0.0
    %4607 = vmatpush1.msra.mxu0 %v4579
    %4608 = vmatprep.subr.mxu0 0.0
    %4609 = vmatpush1.msra.mxu0 %v4580
    %4610 = vmatprep.subr.mxu0 0.0
    %4611 = vmatpush1.msra.mxu0 %v4581
    %4612 = vmatprep.subr.mxu0 0.0
    %4613 = vmatpush1.msra.mxu0 %v4582
    %4614 = vmatprep.subr.mxu0 0.0
    %4615 = vmatpush1.msra.mxu0 %v4583
    %4616 = vmatprep.subr.mxu0 0.0
    %4617 = vmatpush1.msra.mxu0 %v4584
    %4618 = vmatprep.subr.mxu0 0.0
    %4619 = vmatpush1.msra.mxu0 %v4585
    %4620 = vmatprep.subr.mxu0 0.0
    %4621 = vmatpush1.msra.mxu0 %v4586
    %4622 = vmatprep.subr.mxu0 0.0
    %4623 = vmatpush1.msra.mxu0 %v4587
    %4624 = vmatprep.subr.mxu0 0.0
    %4625 = vmatpush1.msra.mxu0 0.0
    %4626 = vmatprep.subr.mxu0 0.0
    %4627 = vmatpush1.msra.mxu0 0.0
    %4628 = vmatprep.subr.mxu0 0.0
    %4629 = vmatpush1.msra.mxu0 0.0
    %4630 = vmatprep.subr.mxu0 0.0
    %4631 = vmatpush1.msra.mxu0 0.0
    %4632 = vmatprep.subr.mxu0 0.0
    %4633 = vmatpush1.msra.mxu0 0.0
    %4634 = vmatprep.subr.mxu0 0.0
    %4635 = vmatpush1.msra.mxu0 0.0
    %4636 = vmatprep.subr.mxu0 0.0
    %4637 = vmatpush1.msra.mxu0 0.0
    %4638 = vmatprep.subr.mxu0 0.0
    %4639 = vmatpush1.msra.mxu0 0.0
    %4640 = vmatprep.subr.mxu0 0.0
    %4641 = vmatpush1.msra.mxu0 0.0
    %4642 = vmatprep.subr.mxu0 0.0
    %4643 = vmatpush1.msra.mxu0 0.0
    %4644 = vmatprep.subr.mxu0 0.0
    %4645 = vmatpush1.msra.mxu0 0.0
    %4646 = vmatprep.subr.mxu0 0.0
    %4647 = vmatpush1.msra.mxu0 0.0
    %4648 = vmatprep.subr.mxu0 0.0
    %4649 = vmatpush1.msra.mxu0 0.0
    %4650 = vmatprep.subr.mxu0 0.0
    %4651 = vmatpush1.msra.mxu0 0.0
    %4652 = vmatprep.subr.mxu0 0.0
    %4653 = vmatpush1.msra.mxu0 0.0
    %4654 = vmatprep.subr.mxu0 0.0
    %4655 = vmatpush1.msra.mxu0 0.0
    %4656 = vmatprep.mubr.f32.mxu0 0.0
    %4657 = vmatmul.mubr.f32.gmra.mrb[0].mxu0 %v4571
    %v4658 = vpop.f32.mrb[0].mxu0
    %v4659 = vadd.f32 %v4591, %v4658
    %v4660 = vpop.f32.mrb[0].mxu0
    %4661 = vdwg.mxu0
    %4662 = vst [vmem:[%s10] sm:$0x7] %v4659
    // Predicated region
    $region50: #{clay_decoder_forward.3} parent=1 // pred_check
      _
    $region51: #{clay_decoder_forward.3} parent=1 // pred_check_branch
      %4664 = sbr.rel (0) target = $region53
    $region52: #{clay_decoder_forward.3} parent=1 // pred_region
      _
    $region53: #{clay_decoder_forward.3} parent=1 // pred_fallthru
      _
    // Predicated region
    $region54: #{clay_decoder_forward.3} parent=1 // pred_check
      _
    $region55: #{clay_decoder_forward.3} parent=1 // pred_check_branch
      %4666 = sbr.rel (0) target = $region57
    $region56: #{clay_decoder_forward.3} parent=1 // pred_region
      _
    $region57: #{clay_decoder_forward.3} parent=1 // pred_fallthru
      _
    %4667 = vsyncpa [#allocation3], 1
    %4668 = vsyncpa [#allocation5], 1

</llo_original>
